<compile_context>
chip_gen: v7x
topology: tpu7x:2x2x1
jax: 0.10.0
libtpu: 0.0.40
codegen_flags: <defaults>
</compile_context>

<pallas_src>
import jax
import jax.numpy as jnp
from jax.experimental import pallas as pl
from jax.experimental.pallas import tpu as pltpu


# ---------------------------------------------------------------------------
# Static geometry (forced by the PyTorch module: fc expects 18*18*64 inputs,
# which pins the input spatial size to 84x84).
# ---------------------------------------------------------------------------
IN_H = IN_W = 84
C_IN = 3
C1, K1 = 32, 5            # conv1: 5x5 stride 2 -> 40x40
H1 = W1 = 40
HP = WP = 20              # after 2x2 max pool
SUP = 7                   # 7x7 super-patch covers all 4 pool corners
K1_PACK = SUP * SUP * C_IN          # 147
N1_PACK = 4 * C1                    # 128 (corner-packed, lane dense)
C3, K3 = 64, 3            # conv3: 3x3 stride 1 -> 18x18
H3 = W3 = 18
PAIRS = W3 // 2                     # 9 column pairs per output row
K3_PACK = K3 * 4 * C1               # 384 (3 rows x 4 cols x 32 ch band)
N3_PACK = 2 * C3                    # 128 (pair-packed, lane dense)
FC_IN = H3 * W3 * C3      # 20736
FC_OUT = 128
BN_EPS = 1e-5


# ---------------------------------------------------------------------------
# Kernel 1: conv1 GEMM (corner-packed RHS) + max-pool + bias + ReLU
# ---------------------------------------------------------------------------
def conv1_relu_pool_kernel(p_ref, w_ref, b_ref, o_ref):
    # p_ref: (400, 147) bf16 7x7x3 super-patch rows (one per pooled position).
    # w_ref: (147, 128) bf16 conv1 weights scattered for the 4 pool corners.
    # o_ref: (400, 32)  bf16 pooled conv1 activations, rows in (hp, wp) order.
    r = jnp.dot(p_ref[...], w_ref[...], preferred_element_type=jnp.float32)
    # 2x2 max-pool = max over the four 32-lane corner blocks of the GEMM.
    m = jnp.maximum(jnp.maximum(r[:, 0:C1], r[:, C1:2 * C1]),
                    jnp.maximum(r[:, 2 * C1:3 * C1], r[:, 3 * C1:4 * C1]))
    # Shared bias + ReLU are monotonic, so they commute with the corner max.
    o_ref[...] = jnp.maximum(m + b_ref[...], 0.0).astype(o_ref.dtype)


def conv1_relu_pool(p1, w, b):
    batch = p1.shape[0]
    pos = HP * WP
    return pl.pallas_call(
        conv1_relu_pool_kernel,
        out_shape=jax.ShapeDtypeStruct((batch, pos, C1), jnp.bfloat16),
        grid_spec=pltpu.PrefetchScalarGridSpec(
            num_scalar_prefetch=0,
            grid=(batch,),
            in_specs=[
                pl.BlockSpec((None, pos, K1_PACK), lambda bi: (bi, 0, 0)),
                pl.BlockSpec((K1_PACK, N1_PACK), lambda bi: (0, 0)),
                pl.BlockSpec((1, C1), lambda bi: (0, 0)),
            ],
            out_specs=pl.BlockSpec((None, pos, C1), lambda bi: (bi, 0, 0)),
        ),
        compiler_params=pltpu.CompilerParams(
            dimension_semantics=("parallel",),
            vmem_limit_bytes=32 * 1024 * 1024),
    )(p1, w, b.reshape(1, C1))


# ---------------------------------------------------------------------------
# Kernel 2: conv3 GEMM (pair-packed RHS, lane-dense N=128 output) + bias+ReLU
# ---------------------------------------------------------------------------
def conv3_relu_kernel(p_ref, w_ref, b_ref, o_ref):
    # p_ref: (162, 384) bf16 band rows (3x4x32) for two output columns each.
    # o_ref: (162, 128) bf16; row-major bytes == NHWC flatten of (18,18,64).
    r = jnp.dot(p_ref[...], w_ref[...], preferred_element_type=jnp.float32)
    o_ref[...] = jnp.maximum(r + b_ref[...], 0.0).astype(o_ref.dtype)


def conv3_relu(p3, w, b):
    batch = p3.shape[0]
    m = H3 * PAIRS
    return pl.pallas_call(
        conv3_relu_kernel,
        out_shape=jax.ShapeDtypeStruct((batch, m, N3_PACK), jnp.bfloat16),
        grid_spec=pltpu.PrefetchScalarGridSpec(
            num_scalar_prefetch=0,
            grid=(batch,),
            in_specs=[
                pl.BlockSpec((None, m, K3_PACK), lambda bi: (bi, 0, 0)),
                pl.BlockSpec((K3_PACK, N3_PACK), lambda bi: (0, 0)),
                pl.BlockSpec((1, N3_PACK), lambda bi: (0, 0)),
            ],
            out_specs=pl.BlockSpec((None, m, N3_PACK), lambda bi: (bi, 0, 0)),
        ),
        compiler_params=pltpu.CompilerParams(
            dimension_semantics=("parallel",),
            vmem_limit_bytes=32 * 1024 * 1024),
    )(p3, w, b.reshape(1, N3_PACK))


# ---------------------------------------------------------------------------
# Kernel 3: Linear(20736,128) (bf16 weights) + bias + BatchNorm1d(128), K-tiled
# ---------------------------------------------------------------------------
def fc_bn_kernel(x_ref, w_ref, b_ref, gamma_ref, beta_ref, o_ref):
    k = pl.program_id(0)

    @pl.when(k == 0)
    def _():
        o_ref[...] = jnp.zeros_like(o_ref)

    # Output block index is constant across k -> o_ref stays resident and is
    # the f32 accumulator; operands are bf16 (MXU native, f32 accumulation).
    o_ref[...] += jnp.dot(x_ref[...], w_ref[...],
                          preferred_element_type=jnp.float32)

    @pl.when(k == pl.num_programs(0) - 1)
    def _():
        # Fused bias + BatchNorm1d in training mode (biased batch statistics,
        # eps=1e-5) over the resident (B, 128) block.
        # TODO(synk): eval-mode (running_mean/var) path and running-stat
        # updates are not implemented; B=1 degenerates (var=0 -> beta).
        z = o_ref[...] + b_ref[...]
        mean = jnp.mean(z, axis=0, keepdims=True)
        var = jnp.mean(jnp.square(z - mean), axis=0, keepdims=True)
        o_ref[...] = ((z - mean) * jax.lax.rsqrt(var + BN_EPS)
                      * gamma_ref[...] + beta_ref[...])


def fc_batchnorm(x, w, b, gamma, beta, *, tk=6912):
    # tk=6912 -> three pipelined bf16 weight blocks of ~1.8 MB each.
    batch, kdim = x.shape
    n = w.shape[1]
    assert kdim % tk == 0
    return pl.pallas_call(
        fc_bn_kernel,
        out_shape=jax.ShapeDtypeStruct((batch, n), jnp.float32),
        grid_spec=pltpu.PrefetchScalarGridSpec(
            num_scalar_prefetch=0,
            grid=(kdim // tk,),
            in_specs=[
                pl.BlockSpec((batch, tk), lambda k: (0, k)),
                pl.BlockSpec((tk, n), lambda k: (k, 0)),
                pl.BlockSpec((1, n), lambda k: (0, 0)),
                pl.BlockSpec((1, n), lambda k: (0, 0)),
                pl.BlockSpec((1, n), lambda k: (0, 0)),
            ],
            out_specs=pl.BlockSpec((batch, n), lambda k: (0, 0)),
        ),
        compiler_params=pltpu.CompilerParams(
            dimension_semantics=("arbitrary",),
            vmem_limit_bytes=32 * 1024 * 1024),
    )(x, w, b.reshape(1, n), gamma.reshape(1, n), beta.reshape(1, n))


# ---------------------------------------------------------------------------
# Glue: light patch extraction (plain JAX, bf16, small blow-up)
# ---------------------------------------------------------------------------
def conv1_pool_patches(x):
    """x: (B,84,84,3) NHWC -> (B, 400, 147) bf16 super-patches.

    Row (hp, wp) holds the 7x7x3 input window anchored at (4*hp, 4*wp), which
    covers the 5x5 receptive fields of all four pool-window corners.  The
    corner selection lives in the packed weight matrix, so the kernel needs a
    single GEMM.  Bytes: 1.4x of x (vs 5.7x for a full per-corner im2col).
    """
    batch = x.shape[0]
    taps = []
    for u in range(SUP):
        for v in range(SUP):
            taps.append(x[:, u:u + 4 * (HP - 1) + 1:4,
                          v:v + 4 * (WP - 1) + 1:4, :])
    p = jnp.stack(taps, axis=3)                       # (B, 20, 20, 49, 3)
    return p.reshape(batch, HP * WP, K1_PACK).astype(jnp.bfloat16)


def conv3_pair_patches(y2):
    """y2: (B, 400, 32) bf16 pooled activations -> (B, 162, 384) bf16 bands.

    Row (h, wg) holds the (3 rows x 4 cols x 32 ch) band feeding the output
    column pair (2*wg, 2*wg+1) of output row h; columns flatten (i, jj, c).
    """
    batch = y2.shape[0]
    y2 = y2.reshape(batch, HP, WP, C1)
    taps = []
    for i in range(K3):
        for jj in range(4):
            taps.append(y2[:, i:i + H3, jj:jj + 2 * (PAIRS - 1) + 1:2, :])
    p = jnp.stack(taps, axis=3)                       # (B, 18, 9, 12, 32)
    return p.reshape(batch, H3 * PAIRS, K3_PACK)


# ---------------------------------------------------------------------------
# Parameters: PyTorch layouts + one-time conversion to packed kernel layouts
# ---------------------------------------------------------------------------
def init_torch_params(key):
    """Synthetic parameters in the native PyTorch layouts."""
    ks = jax.random.split(key, 6)
    return {
        "conv1_w": 0.05 * jax.random.normal(ks[0], (C1, C_IN, K1, K1), jnp.float32),
        "conv1_b": 0.05 * jax.random.normal(ks[1], (C1,), jnp.float32),
        "conv3_w": 0.05 * jax.random.normal(ks[2], (C3, C1, K3, K3), jnp.float32),
        "conv3_b": 0.05 * jax.random.normal(ks[3], (C3,), jnp.float32),
        "fc_w": 0.01 * jax.random.normal(ks[4], (FC_OUT, FC_IN), jnp.float32),
        "fc_b": 0.01 * jax.random.normal(ks[5], (FC_OUT,), jnp.float32),
        "bn_gamma": jnp.ones((FC_OUT,), jnp.float32),
        "bn_beta": jnp.zeros((FC_OUT,), jnp.float32),
    }


def convert_params(tp):
    """One-time layout plumbing (init time, not per forward pass).

    * conv1: (32,3,5,5) -> HWIO, scattered into a (147,128) matrix: column
      block (r*2+s)*32..+32 holds the weights shifted to pool corner (r,s)
      inside the 7x7 super-patch (zeros elsewhere).
    * conv3: (64,32,3,3) -> HWIO, pair-packed into (384,128): column block
      t*64..+64 holds the weights shifted by output-column offset t in the
      4-wide band (zeros elsewhere); bias tiled twice to 128 lanes.
    * fc: (128,20736) NCHW-flatten columns -> (20736,128) NHWC-flatten rows,
      so the conv3 output bytes feed the fc with no runtime transpose.
    * All GEMM weights stored in bf16 (f32 accumulation in-kernel).
    """
    w1_hwio = jnp.transpose(tp["conv1_w"], (2, 3, 1, 0))          # (5,5,3,32)
    w1p = jnp.zeros((2, 2, SUP, SUP, C_IN, C1), jnp.float32)
    for r in range(2):
        for s in range(2):
            w1p = w1p.at[r, s, 2 * r:2 * r + K1, 2 * s:2 * s + K1].set(w1_hwio)
    w1p = jnp.transpose(w1p, (2, 3, 4, 0, 1, 5)).reshape(K1_PACK, N1_PACK)

    w3_hwio = jnp.transpose(tp["conv3_w"], (2, 3, 1, 0))          # (3,3,32,64)
    w3p = jnp.zeros((2, K3, 4, C1, C3), jnp.float32)              # [t,i,jj,c,o]
    for t in range(2):
        w3p = w3p.at[t, :, t:t + K3].set(w3_hwio)
    w3p = jnp.transpose(w3p, (1, 2, 3, 0, 4)).reshape(K3_PACK, N3_PACK)

    fc_w = tp["fc_w"].T.reshape(C3, H3, W3, FC_OUT)               # (c,h,w,o)
    fc_w = jnp.transpose(fc_w, (1, 2, 0, 3)).reshape(FC_IN, FC_OUT)  # (h,w,c)

    return {
        "conv1_w": w1p.astype(jnp.bfloat16), "conv1_b": tp["conv1_b"],
        "conv3_w": w3p.astype(jnp.bfloat16),
        "conv3_b": jnp.concatenate([tp["conv3_b"], tp["conv3_b"]]),
        "fc_w": fc_w.astype(jnp.bfloat16), "fc_b": tp["fc_b"],
        "bn_gamma": tp["bn_gamma"], "bn_beta": tp["bn_beta"],
    }


# ---------------------------------------------------------------------------
# Forward pass
# ---------------------------------------------------------------------------
def vision_feature_extractor(params, x_nchw):
    """x_nchw: (B, 3, 84, 84) float32 -> (B, 128) float32."""
    batch = x_nchw.shape[0]
    x = jnp.transpose(x_nchw, (0, 2, 3, 1)).astype(jnp.float32)  # NCHW -> NHWC

    # conv1 (5x5, s=2) + ReLU + 2x2 max-pool, one lane-dense GEMM per image.
    p1 = conv1_pool_patches(x)                                   # (B,400,147)
    y2 = conv1_relu_pool(p1, params["conv1_w"], params["conv1_b"])  # (B,400,32)

    # conv3 (3x3) + ReLU, pair-packed lane-dense GEMM; output bytes == NHWC
    # flatten of (B,18,18,64).
    p3 = conv3_pair_patches(y2)                                  # (B,162,384)
    y3 = conv3_relu(p3, params["conv3_w"], params["conv3_b"])    # (B,162,128)

    # Flatten (free) + fused Linear(20736,128) + BatchNorm1d(128).
    flat = y3.reshape(batch, FC_IN)
    return fc_batchnorm(flat, params["fc_w"], params["fc_b"],
                        params["bn_gamma"], params["bn_beta"])


if __name__ == "__main__":
    key = jax.random.PRNGKey(0)
    kx, kp = jax.random.split(key)
    # The fc layer (18*18*64 inputs) forces 84x84 spatial input; batch = 2.
    x = jax.random.normal(kx, (2, 3, 84, 84), jnp.float32)
    params = convert_params(init_torch_params(kp))

    fwd = jax.jit(vision_feature_extractor)
    out = jax.block_until_ready(fwd(params, x))
    assert out.shape == (2, 128) and out.dtype == jnp.float32
    assert bool(jnp.all(jnp.isfinite(out)))
    print("KERNEL_OK")
</pallas_src>

<mosaic_0001>
module attributes {stable_mosaic.version = 11 : i64} {
  func.func @conv1_relu_pool_kernel(%arg0: i32, %arg1: memref<1x400x147xbf16, #tpu.memory_space<vmem>>, %arg2: memref<147x128xbf16, #tpu.memory_space<vmem>>, %arg3: memref<1x32xf32, #tpu.memory_space<vmem>>, %arg4: memref<1x400x32xbf16, #tpu.memory_space<vmem>>) attributes {dimension_semantics = [#tpu.dimension_semantics<parallel>], iteration_bounds = array<i64: 2>, scalar_prefetch = 0 : i64, scratch_operands = 0 : i64, tpu.core_type = #tpu.core_type<tc>, window_params = [{transform_indices = @transform_0, window_bounds = array<i64: 1, 400, 147>}, {pipeline_mode = #tpu.pipeline_mode<synchronous>, transform_indices = @transform_1, window_bounds = array<i64: 147, 128>}, {pipeline_mode = #tpu.pipeline_mode<synchronous>, transform_indices = @transform_2, window_bounds = array<i64: 1, 32>}, {transform_indices = @transform_3, window_bounds = array<i64: 1, 400, 32>}]} {
    %c0 = arith.constant 0 : index
    %c0_0 = arith.constant 0 : index
    %c0_1 = arith.constant 0 : index
    %0 = vector.load %arg1[%c0, %c0_0, %c0_1] : memref<1x400x147xbf16, #tpu.memory_space<vmem>>, vector<1x400x147xbf16>
    %1 = vector.shape_cast %0 : vector<1x400x147xbf16> to vector<400x147xbf16>
    %c0_2 = arith.constant 0 : index
    %c0_3 = arith.constant 0 : index
    %2 = vector.load %arg2[%c0_2, %c0_3] : memref<147x128xbf16, #tpu.memory_space<vmem>>, vector<147x128xbf16>
    %cst = arith.constant dense<0.000000e+00> : vector<400x128xf32>
    %3 = tpu.matmul %1, %2, %cst {dimension_numbers = #tpu.dot_dimension_numbers<[1], [0], [0], [1], [0, 0, 1, 1], [], []>} : vector<400x147xbf16>, vector<147x128xbf16>, vector<400x128xf32> -> vector<400x128xf32>
    %4 = vector.extract_strided_slice %3 {offsets = [0, 0], sizes = [400, 32], strides = [1, 1]} : vector<400x128xf32> to vector<400x32xf32>
    %5 = vector.extract_strided_slice %3 {offsets = [0, 32], sizes = [400, 32], strides = [1, 1]} : vector<400x128xf32> to vector<400x32xf32>
    %6 = arith.maximumf %4, %5 : vector<400x32xf32>
    %7 = vector.extract_strided_slice %3 {offsets = [0, 64], sizes = [400, 32], strides = [1, 1]} : vector<400x128xf32> to vector<400x32xf32>
    %8 = vector.extract_strided_slice %3 {offsets = [0, 96], sizes = [400, 32], strides = [1, 1]} : vector<400x128xf32> to vector<400x32xf32>
    %9 = arith.maximumf %7, %8 : vector<400x32xf32>
    %10 = arith.maximumf %6, %9 : vector<400x32xf32>
    %c0_4 = arith.constant 0 : index
    %c0_5 = arith.constant 0 : index
    %11 = vector.load %arg3[%c0_4, %c0_5] : memref<1x32xf32, #tpu.memory_space<vmem>>, vector<1x32xf32>
    %12 = vector.broadcast %11 : vector<1x32xf32> to vector<400x32xf32>
    %13 = arith.addf %10, %12 : vector<400x32xf32>
    %cst_6 = arith.constant 0.000000e+00 : f32
    %14 = vector.broadcast %cst_6 : f32 to vector<400x32xf32>
    %15 = arith.maximumf %13, %14 : vector<400x32xf32>
    %16 = arith.truncf %15 : vector<400x32xf32> to vector<400x32xbf16>
    %c0_7 = arith.constant 0 : index
    %c0_8 = arith.constant 0 : index
    %c0_9 = arith.constant 0 : index
    %17 = vector.load %arg4[%c0_7, %c0_8, %c0_9] : memref<1x400x32xbf16, #tpu.memory_space<vmem>>, vector<1x400x32xbf16>
    %18 = vector.shape_cast %17 : vector<1x400x32xbf16> to vector<400x32xbf16>
    %19 = vector.shape_cast %16 : vector<400x32xbf16> to vector<1x400x32xbf16>
    tpu.vector_store %arg4[%c0_7, %c0_8, %c0_9], %19 {strides = array<i32>} : memref<1x400x32xbf16, #tpu.memory_space<vmem>>, vector<1x400x32xbf16>,
    return
  }
  func.func @transform_0(%arg0: i32) -> (i32, i32, i32) {
    %c0_i32 = arith.constant 0 : i32
    %c0_i32_0 = arith.constant 0 : i32
    %c0_i32_1 = arith.constant 0 : i32
    return %arg0, %c0_i32, %c0_i32_0 : i32, i32, i32
  }
  func.func @transform_1(%arg0: i32) -> (i32, i32) {
    %c0_i32 = arith.constant 0 : i32
    %c0_i32_0 = arith.constant 0 : i32
    %c0_i32_1 = arith.constant 0 : i32
    return %c0_i32, %c0_i32_0 : i32, i32
  }
  func.func @transform_2(%arg0: i32) -> (i32, i32) {
    %c0_i32 = arith.constant 0 : i32
    %c0_i32_0 = arith.constant 0 : i32
    %c0_i32_1 = arith.constant 0 : i32
    return %c0_i32, %c0_i32_0 : i32, i32
  }
  func.func @transform_3(%arg0: i32) -> (i32, i32, i32) {
    %c0_i32 = arith.constant 0 : i32
    %c0_i32_0 = arith.constant 0 : i32
    %c0_i32_1 = arith.constant 0 : i32
    return %arg0, %c0_i32, %c0_i32_0 : i32, i32, i32
  }
}

module attributes {stable_mosaic.version = 11 : i64} {
  func.func @conv3_relu_kernel(%arg0: i32, %arg1: memref<1x162x384xbf16, #tpu.memory_space<vmem>>, %arg2: memref<384x128xbf16, #tpu.memory_space<vmem>>, %arg3: memref<1x128xf32, #tpu.memory_space<vmem>>, %arg4: memref<1x162x128xbf16, #tpu.memory_space<vmem>>) attributes {dimension_semantics = [#tpu.dimension_semantics<parallel>], iteration_bounds = array<i64: 2>, scalar_prefetch = 0 : i64, scratch_operands = 0 : i64, tpu.core_type = #tpu.core_type<tc>, window_params = [{transform_indices = @transform_0, window_bounds = array<i64: 1, 162, 384>}, {pipeline_mode = #tpu.pipeline_mode<synchronous>, transform_indices = @transform_1, window_bounds = array<i64: 384, 128>}, {pipeline_mode = #tpu.pipeline_mode<synchronous>, transform_indices = @transform_2, window_bounds = array<i64: 1, 128>}, {transform_indices = @transform_3, window_bounds = array<i64: 1, 162, 128>}]} {
    %c0 = arith.constant 0 : index
    %c0_0 = arith.constant 0 : index
    %c0_1 = arith.constant 0 : index
    %0 = vector.load %arg1[%c0, %c0_0, %c0_1] : memref<1x162x384xbf16, #tpu.memory_space<vmem>>, vector<1x162x384xbf16>
    %1 = vector.shape_cast %0 : vector<1x162x384xbf16> to vector<162x384xbf16>
    %c0_2 = arith.constant 0 : index
    %c0_3 = arith.constant 0 : index
    %2 = vector.load %arg2[%c0_2, %c0_3] : memref<384x128xbf16, #tpu.memory_space<vmem>>, vector<384x128xbf16>
    %cst = arith.constant dense<0.000000e+00> : vector<162x128xf32>
    %3 = tpu.matmul %1, %2, %cst {dimension_numbers = #tpu.dot_dimension_numbers<[1], [0], [0], [1], [0, 0, 1, 1], [], []>} : vector<162x384xbf16>, vector<384x128xbf16>, vector<162x128xf32> -> vector<162x128xf32>
    %c0_4 = arith.constant 0 : index
    %c0_5 = arith.constant 0 : index
    %4 = vector.load %arg3[%c0_4, %c0_5] : memref<1x128xf32, #tpu.memory_space<vmem>>, vector<1x128xf32>
    %5 = vector.broadcast %4 : vector<1x128xf32> to vector<162x128xf32>
    %6 = arith.addf %3, %5 : vector<162x128xf32>
    %cst_6 = arith.constant 0.000000e+00 : f32
    %7 = vector.broadcast %cst_6 : f32 to vector<162x128xf32>
    %8 = arith.maximumf %6, %7 : vector<162x128xf32>
    %9 = arith.truncf %8 : vector<162x128xf32> to vector<162x128xbf16>
    %c0_7 = arith.constant 0 : index
    %c0_8 = arith.constant 0 : index
    %c0_9 = arith.constant 0 : index
    %10 = vector.load %arg4[%c0_7, %c0_8, %c0_9] : memref<1x162x128xbf16, #tpu.memory_space<vmem>>, vector<1x162x128xbf16>
    %11 = vector.shape_cast %10 : vector<1x162x128xbf16> to vector<162x128xbf16>
    %12 = vector.shape_cast %9 : vector<162x128xbf16> to vector<1x162x128xbf16>
    tpu.vector_store %arg4[%c0_7, %c0_8, %c0_9], %12 {strides = array<i32>} : memref<1x162x128xbf16, #tpu.memory_space<vmem>>, vector<1x162x128xbf16>,
    return
  }
  func.func @transform_0(%arg0: i32) -> (i32, i32, i32) {
    %c0_i32 = arith.constant 0 : i32
    %c0_i32_0 = arith.constant 0 : i32
    %c0_i32_1 = arith.constant 0 : i32
    return %arg0, %c0_i32, %c0_i32_0 : i32, i32, i32
  }
  func.func @transform_1(%arg0: i32) -> (i32, i32) {
    %c0_i32 = arith.constant 0 : i32
    %c0_i32_0 = arith.constant 0 : i32
    %c0_i32_1 = arith.constant 0 : i32
    return %c0_i32, %c0_i32_0 : i32, i32
  }
  func.func @transform_2(%arg0: i32) -> (i32, i32) {
    %c0_i32 = arith.constant 0 : i32
    %c0_i32_0 = arith.constant 0 : i32
    %c0_i32_1 = arith.constant 0 : i32
    return %c0_i32, %c0_i32_0 : i32, i32
  }
  func.func @transform_3(%arg0: i32) -> (i32, i32, i32) {
    %c0_i32 = arith.constant 0 : i32
    %c0_i32_0 = arith.constant 0 : i32
    %c0_i32_1 = arith.constant 0 : i32
    return %arg0, %c0_i32, %c0_i32_0 : i32, i32, i32
  }
}

module attributes {stable_mosaic.version = 11 : i64} {
  func.func @fc_bn_kernel(%arg0: i32, %arg1: memref<2x6912xbf16, #tpu.memory_space<vmem>>, %arg2: memref<6912x128xbf16, #tpu.memory_space<vmem>>, %arg3: memref<1x128xf32, #tpu.memory_space<vmem>>, %arg4: memref<1x128xf32, #tpu.memory_space<vmem>>, %arg5: memref<1x128xf32, #tpu.memory_space<vmem>>, %arg6: memref<2x128xf32, #tpu.memory_space<vmem>>) attributes {dimension_semantics = [#tpu.dimension_semantics<arbitrary>], iteration_bounds = array<i64: 3>, scalar_prefetch = 0 : i64, scratch_operands = 0 : i64, tpu.core_type = #tpu.core_type<tc>, window_params = [{transform_indices = @transform_0, window_bounds = array<i64: 2, 6912>}, {transform_indices = @transform_1, window_bounds = array<i64: 6912, 128>}, {pipeline_mode = #tpu.pipeline_mode<synchronous>, transform_indices = @transform_2, window_bounds = array<i64: 1, 128>}, {pipeline_mode = #tpu.pipeline_mode<synchronous>, transform_indices = @transform_3, window_bounds = array<i64: 1, 128>}, {pipeline_mode = #tpu.pipeline_mode<synchronous>, transform_indices = @transform_4, window_bounds = array<i64: 1, 128>}, {pipeline_mode = #tpu.pipeline_mode<synchronous>, transform_indices = @transform_5, window_bounds = array<i64: 2, 128>}]} {
    %c0_i32 = arith.constant 0 : i32
    %0 = arith.cmpi eq, %arg0, %c0_i32 : i32
    %1 = arith.extui %0 : i1 to i32
    %c0_i32_0 = arith.constant 0 : i32
    %2 = arith.cmpi ne, %1, %c0_i32_0 : i32
    scf.if %2 {
      %cst_9 = arith.constant 0.000000e+00 : f32
      %12 = vector.broadcast %cst_9 : f32 to vector<2x128xf32>
      %c0_10 = arith.constant 0 : index
      %c0_11 = arith.constant 0 : index
      %13 = vector.load %arg6[%c0_10, %c0_11] : memref<2x128xf32, #tpu.memory_space<vmem>>, vector<2x128xf32>
      tpu.vector_store %arg6[%c0_10, %c0_11], %12 {strides = array<i32>} : memref<2x128xf32, #tpu.memory_space<vmem>>, vector<2x128xf32>,
    } else {
    }
    %c0 = arith.constant 0 : index
    %c0_1 = arith.constant 0 : index
    %3 = vector.load %arg6[%c0, %c0_1] : memref<2x128xf32, #tpu.memory_space<vmem>>, vector<2x128xf32>
    %c0_2 = arith.constant 0 : index
    %c0_3 = arith.constant 0 : index
    %4 = vector.load %arg1[%c0_2, %c0_3] : memref<2x6912xbf16, #tpu.memory_space<vmem>>, vector<2x6912xbf16>
    %c0_4 = arith.constant 0 : index
    %c0_5 = arith.constant 0 : index
    %5 = vector.load %arg2[%c0_4, %c0_5] : memref<6912x128xbf16, #tpu.memory_space<vmem>>, vector<6912x128xbf16>
    %cst = arith.constant dense<0.000000e+00> : vector<2x128xf32>
    %6 = tpu.matmul %4, %5, %cst {dimension_numbers = #tpu.dot_dimension_numbers<[1], [0], [0], [1], [0, 0, 1, 1], [], []>} : vector<2x6912xbf16>, vector<6912x128xbf16>, vector<2x128xf32> -> vector<2x128xf32>
    %7 = arith.addf %3, %6 : vector<2x128xf32>
    %c0_6 = arith.constant 0 : index
    %c0_7 = arith.constant 0 : index
    %8 = vector.load %arg6[%c0_6, %c0_7] : memref<2x128xf32, #tpu.memory_space<vmem>>, vector<2x128xf32>
    tpu.vector_store %arg6[%c0_6, %c0_7], %7 {strides = array<i32>} : memref<2x128xf32, #tpu.memory_space<vmem>>, vector<2x128xf32>,
    %c2_i32 = arith.constant 2 : i32
    %9 = arith.cmpi eq, %arg0, %c2_i32 : i32
    %10 = arith.extui %9 : i1 to i32
    %c0_i32_8 = arith.constant 0 : i32
    %11 = arith.cmpi ne, %10, %c0_i32_8 : i32
    scf.if %11 {
      %c0_9 = arith.constant 0 : index
      %c0_10 = arith.constant 0 : index
      %12 = vector.load %arg6[%c0_9, %c0_10] : memref<2x128xf32, #tpu.memory_space<vmem>>, vector<2x128xf32>
      %c0_11 = arith.constant 0 : index
      %c0_12 = arith.constant 0 : index
      %13 = vector.load %arg3[%c0_11, %c0_12] : memref<1x128xf32, #tpu.memory_space<vmem>>, vector<1x128xf32>
      %14 = vector.broadcast %13 : vector<1x128xf32> to vector<2x128xf32>
      %15 = arith.addf %12, %14 : vector<2x128xf32>
      %cst_13 = arith.constant dense<0.000000e+00> : vector<128xf32>
      %16 = vector.multi_reduction <add>, %15, %cst_13 [0] : vector<2x128xf32> to vector<128xf32>
      %17 = vector.shape_cast %16 : vector<128xf32> to vector<1x128xf32>
      %cst_14 = arith.constant 2.000000e+00 : f32
      %18 = vector.broadcast %cst_14 : f32 to vector<1x128xf32>
      %19 = arith.divf %17, %18 : vector<1x128xf32>
      %20 = vector.broadcast %19 : vector<1x128xf32> to vector<2x128xf32>
      %21 = arith.subf %15, %20 : vector<2x128xf32>
      %22 = arith.mulf %21, %21 : vector<2x128xf32>
      %cst_15 = arith.constant dense<0.000000e+00> : vector<128xf32>
      %23 = vector.multi_reduction <add>, %22, %cst_15 [0] : vector<2x128xf32> to vector<128xf32>
      %24 = vector.shape_cast %23 : vector<128xf32> to vector<1x128xf32>
      %cst_16 = arith.constant 2.000000e+00 : f32
      %25 = vector.broadcast %cst_16 : f32 to vector<1x128xf32>
      %26 = arith.divf %24, %25 : vector<1x128xf32>
      %27 = vector.broadcast %19 : vector<1x128xf32> to vector<2x128xf32>
      %28 = arith.subf %15, %27 : vector<2x128xf32>
      %cst_17 = arith.constant 9.99999974E-6 : f32
      %29 = vector.broadcast %cst_17 : f32 to vector<1x128xf32>
      %30 = arith.addf %26, %29 : vector<1x128xf32>
      %31 = math.rsqrt %30 : vector<1x128xf32>
      %32 = vector.broadcast %31 : vector<1x128xf32> to vector<2x128xf32>
      %33 = arith.mulf %28, %32 : vector<2x128xf32>
      %c0_18 = arith.constant 0 : index
      %c0_19 = arith.constant 0 : index
      %34 = vector.load %arg4[%c0_18, %c0_19] : memref<1x128xf32, #tpu.memory_space<vmem>>, vector<1x128xf32>
      %35 = vector.broadcast %34 : vector<1x128xf32> to vector<2x128xf32>
      %36 = arith.mulf %33, %35 : vector<2x128xf32>
      %c0_20 = arith.constant 0 : index
      %c0_21 = arith.constant 0 : index
      %37 = vector.load %arg5[%c0_20, %c0_21] : memref<1x128xf32, #tpu.memory_space<vmem>>, vector<1x128xf32>
      %38 = vector.broadcast %37 : vector<1x128xf32> to vector<2x128xf32>
      %39 = arith.addf %36, %38 : vector<2x128xf32>
      %c0_22 = arith.constant 0 : index
      %c0_23 = arith.constant 0 : index
      %40 = vector.load %arg6[%c0_22, %c0_23] : memref<2x128xf32, #tpu.memory_space<vmem>>, vector<2x128xf32>
      tpu.vector_store %arg6[%c0_22, %c0_23], %39 {strides = array<i32>} : memref<2x128xf32, #tpu.memory_space<vmem>>, vector<2x128xf32>,
    } else {
    }
    return
  }
  func.func @transform_0(%arg0: i32) -> (i32, i32) {
    %c0_i32 = arith.constant 0 : i32
    %c0_i32_0 = arith.constant 0 : i32
    return %c0_i32, %arg0 : i32, i32
  }
  func.func @transform_1(%arg0: i32) -> (i32, i32) {
    %c0_i32 = arith.constant 0 : i32
    %c0_i32_0 = arith.constant 0 : i32
    return %arg0, %c0_i32 : i32, i32
  }
  func.func @transform_2(%arg0: i32) -> (i32, i32) {
    %c0_i32 = arith.constant 0 : i32
    %c0_i32_0 = arith.constant 0 : i32
    %c0_i32_1 = arith.constant 0 : i32
    return %c0_i32, %c0_i32_0 : i32, i32
  }
  func.func @transform_3(%arg0: i32) -> (i32, i32) {
    %c0_i32 = arith.constant 0 : i32
    %c0_i32_0 = arith.constant 0 : i32
    %c0_i32_1 = arith.constant 0 : i32
    return %c0_i32, %c0_i32_0 : i32, i32
  }
  func.func @transform_4(%arg0: i32) -> (i32, i32) {
    %c0_i32 = arith.constant 0 : i32
    %c0_i32_0 = arith.constant 0 : i32
    %c0_i32_1 = arith.constant 0 : i32
    return %c0_i32, %c0_i32_0 : i32, i32
  }
  func.func @transform_5(%arg0: i32) -> (i32, i32) {
    %c0_i32 = arith.constant 0 : i32
    %c0_i32_0 = arith.constant 0 : i32
    %c0_i32_1 = arith.constant 0 : i32
    return %c0_i32, %c0_i32_0 : i32, i32
  }
}

</mosaic_0001>

<llo_original>
// kernel: vision_feature_extractor.3
$region0: #{vision_feature_extractor.3}
  #allocation0 [shape = 'u32[]', space=smem, size = 0x4, offset = 0x4, fixed_abs, tag = 'smem constant byte address 0x4 - core index']
  #allocation1 [shape = 'u32[144,128]{1,0:T(1,128)}', space=vmem, size = 0x12000, scoped, tag = 'internal scratch']
  %s0 = inlined_call_operand.vmem [shape: bf16[2,400,147], index: 0, kind: input, shape index: {}]
  %s1 = inlined_call_operand.vmem [shape: bf16[147,128], index: 1, kind: input, shape index: {}]
  %s2 = inlined_call_operand.vmem [shape: f32[1,32], index: 2, kind: input, shape index: {}]
  %s3 = inlined_call_operand.vmem [shape: bf16[2,400,32], index: 3, kind: output, shape index: {}]
  %s4 = sld [smem:[#allocation0]]
  $region45: #{vision_feature_extractor.3} parent=0
    _
  %s6 = ssub.s32 1, %s4
  %s7 = scalar_select 0, %s6, %s4
  loop: start=0, step=1, limit=4
  $region2: #{vision_feature_extractor.3} parent=0 // loop_pre_header
    _
  $region3: #{vision_feature_extractor.3} parent=0 // loop_header
    %s9 = sphi 0, %s13
    %p10 = scmp.ge.s32.totalorder %s9, 4
    %s19 = sphi 0, %s21
    %s22 = sphi 0, %s19
    %s23 = sphi 0, %s22
    %s39 = sphi 0, %s23
    %s43 = sphi 0, %s43
    %s45 = sphi 0, %s43
    %s46 = sphi 0, %s45
    %s60 = sphi 0, %s46
    %s64 = sphi 0, %s64
    %s66 = sphi 0, %s64
    %s67 = sphi 0, %s66
    %s81 = sphi 0, %s67
    %s87 = sphi 0, %s89
    %s90 = sphi 0, %s87
    %s91 = sphi 0, %s90
    %s107 = sphi 0, %s91
  $region4: #{vision_feature_extractor.3} parent=0 // loop_header_branch
    %12 = sbr.rel (%p10) target = $region8
  $region5: #{vision_feature_extractor.3} parent=0 // loop_body
    %s14 = ssub.s32 %s9, 1
    %s15 = ssub.s32 %s9, 2
    %s16 = sadd.s32 %s9, 1
    %s17 = ssub.s32 %s9, %s16
    %p18 = scmp.eq.s32.totalorder %s17, 0
    %s20 = sadd.s32 %s19, 1
    %s21 = scalar_select %p18, %s19, %s20
    %p24 = pneg %p18
    %p25 = scmp.eq.s32.totalorder %s9, 1
    %p26 = por %p24, %p25
    %p27 = scmp.ne.s32.totalorder %s19, %s22
    %p28 = scmp.eq.s32.totalorder %s9, 0
    %p29 = por %p27, %p28
    %p30 = scmp.ne.s32.totalorder %s19, %s22
    %p31 = scmp.eq.s32.totalorder %s14, 1
    %p32 = por %p30, %p31
    %p33 = scmp.ne.s32.totalorder %s22, %s23
    %p34 = scmp.eq.s32.totalorder %s14, 0
    %p35 = por %p33, %p34
    %p36 = scmp.ne.s32.totalorder %s22, %s23
    %p37 = scmp.eq.s32.totalorder %s15, 1
    %p38 = por %p36, %p37
    %p40 = scmp.ne.s32.totalorder %s23, %s39
    %p41 = scmp.eq.s32.totalorder %s15, 0
    %p42 = por %p40, %p41
    %s44 = sadd.s32 %s43, 1
    %p47 = scmp.eq.s32.totalorder %s9, 1
    %p48 = scmp.ne.s32.totalorder %s43, %s45
    %p49 = scmp.eq.s32.totalorder %s9, 0
    %p50 = por %p48, %p49
    %p51 = scmp.ne.s32.totalorder %s43, %s45
    %p52 = scmp.eq.s32.totalorder %s14, 1
    %p53 = por %p51, %p52
    %p54 = scmp.ne.s32.totalorder %s45, %s46
    %p55 = scmp.eq.s32.totalorder %s14, 0
    %p56 = por %p54, %p55
    %p57 = scmp.ne.s32.totalorder %s45, %s46
    %p58 = scmp.eq.s32.totalorder %s15, 1
    %p59 = por %p57, %p58
    %p61 = scmp.ne.s32.totalorder %s46, %s60
    %p62 = scmp.eq.s32.totalorder %s15, 0
    %p63 = por %p61, %p62
    %s65 = sadd.s32 %s64, 1
    %p68 = scmp.eq.s32.totalorder %s9, 1
    %p69 = scmp.ne.s32.totalorder %s64, %s66
    %p70 = scmp.eq.s32.totalorder %s9, 0
    %p71 = por %p69, %p70
    %p72 = scmp.ne.s32.totalorder %s64, %s66
    %p73 = scmp.eq.s32.totalorder %s14, 1
    %p74 = por %p72, %p73
    %p75 = scmp.ne.s32.totalorder %s66, %s67
    %p76 = scmp.eq.s32.totalorder %s14, 0
    %p77 = por %p75, %p76
    %p78 = scmp.ne.s32.totalorder %s66, %s67
    %p79 = scmp.eq.s32.totalorder %s15, 1
    %p80 = por %p78, %p79
    %p82 = scmp.ne.s32.totalorder %s67, %s81
    %p83 = scmp.eq.s32.totalorder %s15, 0
    %p84 = por %p82, %p83
    %s85 = ssub.s32 %s9, %s16
    %p86 = scmp.eq.s32.totalorder %s85, 0
    %s88 = sadd.s32 %s87, 1
    %s89 = scalar_select %p86, %s87, %s88
    %p92 = pneg %p86
    %p93 = scmp.eq.s32.totalorder %s9, 1
    %p94 = por %p92, %p93
    %p95 = scmp.ne.s32.totalorder %s87, %s90
    %p96 = scmp.eq.s32.totalorder %s9, 0
    %p97 = por %p95, %p96
    %p98 = scmp.ne.s32.totalorder %s87, %s90
    %p99 = scmp.eq.s32.totalorder %s14, 1
    %p100 = por %p98, %p99
    %p101 = scmp.ne.s32.totalorder %s90, %s91
    %p102 = scmp.eq.s32.totalorder %s14, 0
    %p103 = por %p101, %p102
    %p104 = scmp.ne.s32.totalorder %s90, %s91
    %p105 = scmp.eq.s32.totalorder %s15, 1
    %p106 = por %p104, %p105
    %p108 = scmp.ne.s32.totalorder %s91, %s107
    %p109 = scmp.eq.s32.totalorder %s15, 0
    %p110 = por %p108, %p109
    %p111 = scmp.le.s32.totalorder 1, %s9
    %p112 = scmp.lt.s32.totalorder %s9, 3
    %p113 = pnand %p111, %p112
    %p114 = pneg %p113
    // Predicated region
    $region9: #{vision_feature_extractor.3} parent=5 // pred_check
      _
    $region10: #{vision_feature_extractor.3} parent=5 // pred_check_branch
      %116 = sbr.rel (%p113) target = $region12
    $region11: #{vision_feature_extractor.3} parent=5 // pred_region
      %s117 = ssub.s32 %s9, 1
      // Predicated region
      $region13: #{vision_feature_extractor.3} parent=11 // pred_check
        %p118 = pneg %p56
      $region14: #{vision_feature_extractor.3} parent=11 // pred_check_branch
        %120 = sbr.rel (%p118) target = $region16
      $region15: #{vision_feature_extractor.3} parent=11 // pred_region
        _
      $region16: #{vision_feature_extractor.3} parent=11 // pred_fallthru
        _
      // Predicated region
      $region17: #{vision_feature_extractor.3} parent=11 // pred_check
        %p121 = pneg %p77
      $region18: #{vision_feature_extractor.3} parent=11 // pred_check_branch
        %123 = sbr.rel (%p121) target = $region20
      $region19: #{vision_feature_extractor.3} parent=11 // pred_region
        _
      $region20: #{vision_feature_extractor.3} parent=11 // pred_fallthru
        _
    $region12: #{vision_feature_extractor.3} parent=5 // pred_fallthru
      _
    %p124 = scmp.lt.s32.totalorder %s9, 2
    // Predicated region
    $region21: #{vision_feature_extractor.3} parent=5 // pred_check
      %p125 = pneg %p124
    $region22: #{vision_feature_extractor.3} parent=5 // pred_check_branch
      %127 = sbr.rel (%p125) target = $region24
    $region23: #{vision_feature_extractor.3} parent=5 // pred_region
      // Predicated region
      $region25: #{vision_feature_extractor.3} parent=23 // pred_check
        %p128 = pneg %p29
      $region26: #{vision_feature_extractor.3} parent=23 // pred_check_branch
        %130 = sbr.rel (%p128) target = $region28
      $region27: #{vision_feature_extractor.3} parent=23 // pred_region
        %p131 = scmp.lt.s32.totalorder %s9, 1
        %s132 = scalar_select %p131, %s9, 1
        %s133 = smul.addr %s132, 100
        %s134 = smul.addr %s133, 4
        %s135 = scalar_lea.vmem %s0, %s134
      $region28: #{vision_feature_extractor.3} parent=23 // pred_fallthru
        _
    $region24: #{vision_feature_extractor.3} parent=5 // pred_fallthru
      _
    %p136 = scmp.le.s32.totalorder 1, %s9
    %p137 = scmp.lt.s32.totalorder %s9, 3
    %p138 = pnand %p136, %p137
    %p139 = pneg %p138
    // Predicated region
    $region29: #{vision_feature_extractor.3} parent=5 // pred_check
      _
    $region30: #{vision_feature_extractor.3} parent=5 // pred_check_branch
      %141 = sbr.rel (%p138) target = $region32
    $region31: #{vision_feature_extractor.3} parent=5 // pred_region
      %s142 = ssub.s32 %s9, 1
      %p143 = scmp.lt.s32.totalorder %s14, 1
      %s144 = scalar_select %p143, %s14, 1
      %s145 = smul.addr %s144, 100
      %s146 = smul.addr %s145, 4
      %s147 = scalar_lea.vmem %s0, %s146
      %p148 = pneg %p35
      %p149 = pneg %p32
      %p150 = pneg %p56
      %p151 = pneg %p53
      %p152 = pneg %p77
      %p153 = pneg %p74
      %p154 = pneg %p103
      %p155 = pneg %p100
      %p156 = scmp.lt.s32.totalorder %s14, 1
      %s157 = scalar_select %p156, %s14, 1
      %s158 = smul.addr %s157, 50
      %s159 = smul.addr %s158, 4
      %s160 = scalar_lea.vmem %s3, %s159
      %p161 = scmp.lt.s32.totalorder %s14, 1
      %s162 = scalar_select %p161, %s14, 1
      %s163 = smul.addr %s162, 100
      %s164 = smul.addr %s163, 4
      %s165 = scalar_lea.vmem %s0, %s164
      %p166 = scmp.lt.s32.totalorder %s14, 1
      %s167 = scalar_select %p166, %s14, 1
      %s168 = smul.addr %s167, 50
      %s169 = smul.addr %s168, 4
      %s170 = scalar_lea.vmem %s3, %s169
      %v172 = vld [vmem:[%s165] sm:$0xff]
      %v173 = vld [vmem:[%s165 + $0x8] sm:$0xff]
      %v174 = vld [vmem:[%s165 + $0x10] sm:$0xff]
      %v175 = vld [vmem:[%s165 + $0x18] sm:$0xff]
      %v176 = vld [vmem:[%s165 + $0x20] sm:$0xff]
      %v177 = vld [vmem:[%s165 + $0x28] sm:$0xff]
      %v178 = vld [vmem:[%s165 + $0x30] sm:$0xff]
      %v179 = vld [vmem:[%s165 + $0x38] sm:$0xff]
      %v180 = vld [vmem:[%s165 + $0x40] sm:$0xff]
      %v181 = vld [vmem:[%s165 + $0x48] sm:$0xff]
      %v182 = vld [vmem:[%s165 + $0x50] sm:$0xff]
      %v183 = vld [vmem:[%s165 + $0x58] sm:$0xff]
      %v184 = vld [vmem:[%s165 + $0x60] sm:$0xff]
      %v185 = vld [vmem:[%s165 + $0x68] sm:$0xff]
      %v186 = vld [vmem:[%s165 + $0x70] sm:$0xff]
      %v187 = vld [vmem:[%s165 + $0x78] sm:$0xff]
      %v188 = vld [vmem:[%s165 + $0x80] sm:$0xff]
      %v189 = vld [vmem:[%s165 + $0x88] sm:$0xff]
      %v190 = vld [vmem:[%s165 + $0x90] sm:$0xff]
      %v191 = vld [vmem:[%s165 + $0x98] sm:$0xff]
      %v192 = vld [vmem:[%s165 + $0xa0] sm:$0xff]
      %v193 = vld [vmem:[%s165 + $0xa8] sm:$0xff]
      %v194 = vld [vmem:[%s165 + $0xb0] sm:$0xff]
      %v195 = vld [vmem:[%s165 + $0xb8] sm:$0xff]
      %v196 = vld [vmem:[%s165 + $0xc0] sm:$0xff]
      %v197 = vld [vmem:[%s165 + $0xc8] sm:$0xff]
      %v198 = vld [vmem:[%s165 + $0xd0] sm:$0xff]
      %v199 = vld [vmem:[%s165 + $0xd8] sm:$0xff]
      %v200 = vld [vmem:[%s165 + $0xe0] sm:$0xff]
      %v201 = vld [vmem:[%s165 + $0xe8] sm:$0xff]
      %v202 = vld [vmem:[%s165 + $0xf0] sm:$0xff]
      %v203 = vld [vmem:[%s165 + $0xf8] sm:$0xff]
      %v204 = vld [vmem:[%s165 + $0x100] sm:$0xff]
      %v205 = vld [vmem:[%s165 + $0x108] sm:$0xff]
      %v206 = vld [vmem:[%s165 + $0x110] sm:$0xff]
      %v207 = vld [vmem:[%s165 + $0x118] sm:$0xff]
      %v208 = vld [vmem:[%s165 + $0x120] sm:$0xff]
      %v209 = vld [vmem:[%s165 + $0x128] sm:$0xff]
      %v210 = vld [vmem:[%s165 + $0x130] sm:$0xff]
      %v211 = vld [vmem:[%s165 + $0x138] sm:$0xff]
      %v212 = vld [vmem:[%s165 + $0x140] sm:$0xff]
      %v213 = vld [vmem:[%s165 + $0x148] sm:$0xff]
      %v214 = vld [vmem:[%s165 + $0x150] sm:$0xff]
      %v215 = vld [vmem:[%s165 + $0x158] sm:$0xff]
      %v216 = vld [vmem:[%s165 + $0x160] sm:$0xff]
      %v217 = vld [vmem:[%s165 + $0x168] sm:$0xff]
      %v218 = vld [vmem:[%s165 + $0x170] sm:$0xff]
      %v219 = vld [vmem:[%s165 + $0x178] sm:$0xff]
      %v220 = vld [vmem:[%s165 + $0x180] sm:$0xff]
      %v221 = vld [vmem:[%s165 + $0x188] sm:$0xff]
      %v222 = vld [vmem:[%s1] sm:$0xf]
      %v223 = vld [vmem:[%s1 + $0x4] sm:$0xf]
      %v224 = vld [vmem:[%s1 + $0x8] sm:$0xf]
      %v225 = vld [vmem:[%s1 + $0xc] sm:$0xf]
      %v226 = vld [vmem:[%s1 + $0x10] sm:$0xf]
      %v227 = vld [vmem:[%s1 + $0x14] sm:$0xf]
      %v228 = vld [vmem:[%s1 + $0x18] sm:$0xf]
      %v229 = vld [vmem:[%s1 + $0x1c] sm:$0xf]
      %v230 = vld [vmem:[%s1 + $0x20] sm:$0xf]
      %v231 = vld [vmem:[%s1 + $0x24] sm:$0xf]
      %v232 = vld [vmem:[%s1 + $0x28] sm:$0xf]
      %v233 = vld [vmem:[%s1 + $0x2c] sm:$0xf]
      %v234 = vld [vmem:[%s1 + $0x30] sm:$0xf]
      %v235 = vld [vmem:[%s1 + $0x34] sm:$0xf]
      %v236 = vld [vmem:[%s1 + $0x38] sm:$0xf]
      %v237 = vld [vmem:[%s1 + $0x3c] sm:$0xf]
      %v238 = vld [vmem:[%s1 + $0x40] sm:$0xf]
      %v239 = vld [vmem:[%s1 + $0x44] sm:$0xf]
      %v240 = vld [vmem:[%s1 + $0x48] sm:$0x3]
      %v291 = vunpack.c.l.b16 %v172
      %v292 = vunpack.c.h.b16 %v172
      %v293 = vunpack.c.l.b16 %v173
      %v294 = vunpack.c.h.b16 %v173
      %v295 = vunpack.c.l.b16 %v174
      %v296 = vunpack.c.h.b16 %v174
      %v297 = vunpack.c.l.b16 %v175
      %v298 = vunpack.c.h.b16 %v175
      %v299 = vunpack.c.l.b16 %v176
      %v300 = vunpack.c.h.b16 %v176
      %v301 = vunpack.c.l.b16 %v177
      %v302 = vunpack.c.h.b16 %v177
      %v303 = vunpack.c.l.b16 %v178
      %v304 = vunpack.c.h.b16 %v178
      %v305 = vunpack.c.l.b16 %v179
      %v306 = vunpack.c.h.b16 %v179
      %v307 = vunpack.c.l.b16 %v180
      %v308 = vunpack.c.h.b16 %v180
      %v309 = vunpack.c.l.b16 %v181
      %v310 = vunpack.c.h.b16 %v181
      %v311 = vunpack.c.l.b16 %v182
      %v312 = vunpack.c.h.b16 %v182
      %v313 = vunpack.c.l.b16 %v183
      %v314 = vunpack.c.h.b16 %v183
      %v315 = vunpack.c.l.b16 %v184
      %v316 = vunpack.c.h.b16 %v184
      %v317 = vunpack.c.l.b16 %v185
      %v318 = vunpack.c.h.b16 %v185
      %v319 = vunpack.c.l.b16 %v186
      %v320 = vunpack.c.h.b16 %v186
      %v321 = vunpack.c.l.b16 %v187
      %v322 = vunpack.c.h.b16 %v187
      %v323 = vunpack.c.l.b16 %v188
      %v324 = vunpack.c.h.b16 %v188
      %v325 = vunpack.c.l.b16 %v189
      %v326 = vunpack.c.h.b16 %v189
      %v327 = vunpack.c.l.b16 %v190
      %v328 = vunpack.c.h.b16 %v190
      %v329 = vunpack.c.l.b16 %v191
      %v330 = vunpack.c.h.b16 %v191
      %v331 = vunpack.c.l.b16 %v192
      %v332 = vunpack.c.h.b16 %v192
      %v333 = vunpack.c.l.b16 %v193
      %v334 = vunpack.c.h.b16 %v193
      %v335 = vunpack.c.l.b16 %v194
      %v336 = vunpack.c.h.b16 %v194
      %v337 = vunpack.c.l.b16 %v195
      %v338 = vunpack.c.h.b16 %v195
      %v339 = vunpack.c.l.b16 %v196
      %v340 = vunpack.c.h.b16 %v196
      %v341 = vunpack.c.l.b16 %v197
      %v342 = vunpack.c.h.b16 %v197
      %v343 = vunpack.c.l.b16 %v198
      %v344 = vunpack.c.h.b16 %v198
      %v345 = vunpack.c.l.b16 %v199
      %v346 = vunpack.c.h.b16 %v199
      %v347 = vunpack.c.l.b16 %v200
      %v348 = vunpack.c.h.b16 %v200
      %v349 = vunpack.c.l.b16 %v201
      %v350 = vunpack.c.h.b16 %v201
      %v351 = vunpack.c.l.b16 %v202
      %v352 = vunpack.c.h.b16 %v202
      %v353 = vunpack.c.l.b16 %v203
      %v354 = vunpack.c.h.b16 %v203
      %v355 = vunpack.c.l.b16 %v204
      %v356 = vunpack.c.h.b16 %v204
      %v357 = vunpack.c.l.b16 %v205
      %v358 = vunpack.c.h.b16 %v205
      %v359 = vunpack.c.l.b16 %v206
      %v360 = vunpack.c.h.b16 %v206
      %v361 = vunpack.c.l.b16 %v207
      %v362 = vunpack.c.h.b16 %v207
      %v363 = vunpack.c.l.b16 %v208
      %v364 = vunpack.c.h.b16 %v208
      %v365 = vunpack.c.l.b16 %v209
      %v366 = vunpack.c.h.b16 %v209
      %v367 = vunpack.c.l.b16 %v210
      %v368 = vunpack.c.h.b16 %v210
      %v369 = vunpack.c.l.b16 %v211
      %v370 = vunpack.c.h.b16 %v211
      %v371 = vunpack.c.l.b16 %v212
      %v372 = vunpack.c.h.b16 %v212
      %v373 = vunpack.c.l.b16 %v213
      %v374 = vunpack.c.h.b16 %v213
      %v375 = vunpack.c.l.b16 %v214
      %v376 = vunpack.c.h.b16 %v214
      %v377 = vunpack.c.l.b16 %v215
      %v378 = vunpack.c.h.b16 %v215
      %v379 = vunpack.c.l.b16 %v216
      %v380 = vunpack.c.h.b16 %v216
      %v381 = vunpack.c.l.b16 %v217
      %v382 = vunpack.c.h.b16 %v217
      %v383 = vunpack.c.l.b16 %v218
      %v384 = vunpack.c.h.b16 %v218
      %v385 = vunpack.c.l.b16 %v219
      %v386 = vunpack.c.h.b16 %v219
      %v387 = vunpack.c.l.b16 %v220
      %v388 = vunpack.c.h.b16 %v220
      %v389 = vunpack.c.l.b16 %v221
      %v390 = vunpack.c.h.b16 %v221
      %v391 = vpack.c.b16 %v293, %v291
      %v392 = vpack.c.b16 %v294, %v292
      %v393 = vpack.c.b16 %v297, %v295
      %v394 = vpack.c.b16 %v298, %v296
      %v395 = vpack.c.b16 %v301, %v299
      %v396 = vpack.c.b16 %v302, %v300
      %v397 = vpack.c.b16 %v305, %v303
      %v398 = vpack.c.b16 %v306, %v304
      %v399 = vpack.c.b16 %v309, %v307
      %v400 = vpack.c.b16 %v310, %v308
      %v401 = vpack.c.b16 %v313, %v311
      %v402 = vpack.c.b16 %v314, %v312
      %v403 = vpack.c.b16 %v317, %v315
      %v404 = vpack.c.b16 %v318, %v316
      %v405 = vpack.c.b16 %v321, %v319
      %v406 = vpack.c.b16 %v322, %v320
      %v407 = vpack.c.b16 %v325, %v323
      %v408 = vpack.c.b16 %v326, %v324
      %v409 = vpack.c.b16 %v329, %v327
      %v410 = vpack.c.b16 %v330, %v328
      %v411 = vpack.c.b16 %v333, %v331
      %v412 = vpack.c.b16 %v334, %v332
      %v413 = vpack.c.b16 %v337, %v335
      %v414 = vpack.c.b16 %v338, %v336
      %v415 = vpack.c.b16 %v341, %v339
      %v416 = vpack.c.b16 %v342, %v340
      %v417 = vpack.c.b16 %v345, %v343
      %v418 = vpack.c.b16 %v346, %v344
      %v419 = vpack.c.b16 %v349, %v347
      %v420 = vpack.c.b16 %v350, %v348
      %v421 = vpack.c.b16 %v353, %v351
      %v422 = vpack.c.b16 %v354, %v352
      %v423 = vpack.c.b16 %v357, %v355
      %v424 = vpack.c.b16 %v358, %v356
      %v425 = vpack.c.b16 %v361, %v359
      %v426 = vpack.c.b16 %v362, %v360
      %v427 = vpack.c.b16 %v365, %v363
      %v428 = vpack.c.b16 %v366, %v364
      %v429 = vpack.c.b16 %v369, %v367
      %v430 = vpack.c.b16 %v370, %v368
      %v431 = vpack.c.b16 %v373, %v371
      %v432 = vpack.c.b16 %v374, %v372
      %v433 = vpack.c.b16 %v377, %v375
      %v434 = vpack.c.b16 %v378, %v376
      %v435 = vpack.c.b16 %v381, %v379
      %v436 = vpack.c.b16 %v382, %v380
      %v437 = vpack.c.b16 %v385, %v383
      %v438 = vpack.c.b16 %v386, %v384
      %v439 = vpack.c.b16 %v389, %v387
      %v440 = vpack.c.b16 %v390, %v388
      %v485 = vunpack.c.l.b16 %v222
      %v486 = vunpack.c.l.b16 %v223
      %v487 = vunpack.c.l.b16 %v224
      %v488 = vunpack.c.l.b16 %v225
      %v489 = vunpack.c.l.b16 %v226
      %v490 = vunpack.c.l.b16 %v227
      %v491 = vunpack.c.l.b16 %v228
      %v492 = vunpack.c.l.b16 %v229
      %v493 = vunpack.c.l.b16 %v230
      %v494 = vunpack.c.l.b16 %v231
      %v495 = vunpack.c.l.b16 %v232
      %v496 = vunpack.c.l.b16 %v233
      %v497 = vunpack.c.l.b16 %v234
      %v498 = vunpack.c.l.b16 %v235
      %v499 = vunpack.c.l.b16 %v236
      %v500 = vunpack.c.l.b16 %v237
      %v501 = vunpack.c.l.b16 %v238
      %v502 = vunpack.c.l.b16 %v239
      %v503 = vunpack.c.l.b16 %v240
      %v504 = vpack.c.b16 %v486, %v485
      %v505 = vpack.c.b16 %v488, %v487
      %v506 = vpack.c.b16 %v490, %v489
      %v507 = vpack.c.b16 %v492, %v491
      %v508 = vpack.c.b16 %v494, %v493
      %v509 = vpack.c.b16 %v496, %v495
      %v510 = vpack.c.b16 %v498, %v497
      %v511 = vpack.c.b16 %v500, %v499
      %v512 = vpack.c.b16 %v502, %v501
      %v513 = vpack.c.b16 %v503, %v503
      %vm523 = vcmask 154624
      %v525 = vsel %vm523, %v392, 0
      %v528 = vsel %vm523, %v394, 0
      %v531 = vsel %vm523, %v396, 0
      %v534 = vsel %vm523, %v398, 0
      %v537 = vsel %vm523, %v400, 0
      %v540 = vsel %vm523, %v402, 0
      %v543 = vsel %vm523, %v404, 0
      %v546 = vsel %vm523, %v406, 0
      %v549 = vsel %vm523, %v408, 0
      %v552 = vsel %vm523, %v410, 0
      %v555 = vsel %vm523, %v412, 0
      %v558 = vsel %vm523, %v414, 0
      %v561 = vsel %vm523, %v416, 0
      %v564 = vsel %vm523, %v418, 0
      %v567 = vsel %vm523, %v420, 0
      %v570 = vsel %vm523, %v422, 0
      %v573 = vsel %vm523, %v424, 0
      %v576 = vsel %vm523, %v426, 0
      %v579 = vsel %vm523, %v428, 0
      %v582 = vsel %vm523, %v430, 0
      %v585 = vsel %vm523, %v432, 0
      %v588 = vsel %vm523, %v434, 0
      %v591 = vsel %vm523, %v436, 0
      %v594 = vsel %vm523, %v438, 0
      %v597 = vsel %vm523, %v440, 0
      %vm599 = vcmask 1040384
      %vm600 = vcmask 1041408
      %v601 = vsel %vm599, 4294967295, 65535
      %v602 = vsel %vm600, %v601, 0
      %v604 = vand.u32 %v513, %v602
      %606 = vmatprep.subr.bf16.mxu0 0
      %607 = vmatpush1.bf16.msra.mxu0 %v504
      %608 = vmatprep.subr.bf16.mxu0 0
      %609 = vmatpush1.bf16.msra.mxu0 %v505
      %610 = vmatprep.subr.bf16.mxu0 0
      %611 = vmatpush1.bf16.msra.mxu0 %v506
      %612 = vmatprep.subr.bf16.mxu0 0
      %613 = vmatpush1.bf16.msra.mxu0 %v507
      %614 = vmatprep.subr.bf16.mxu0 0
      %615 = vmatpush1.bf16.msra.mxu0 %v508
      %616 = vmatprep.subr.bf16.mxu0 0
      %617 = vmatpush1.bf16.msra.mxu0 %v509
      %618 = vmatprep.subr.bf16.mxu0 0
      %619 = vmatpush1.bf16.msra.mxu0 %v510
      %620 = vmatprep.subr.bf16.mxu0 0
      %621 = vmatpush1.bf16.msra.mxu0 %v511
      %622 = vmatprep.subr.bf16.mxu0 0
      %623 = vmatpush1.bf16.msra.mxu0 %v512
      %624 = vmatprep.subr.bf16.mxu0 0
      %625 = vmatpush1.bf16.msra.mxu0 %v604
      %626 = vmatprep.subr.bf16.mxu0 0
      %627 = vmatpush1.bf16.msra.mxu0 0
      %628 = vmatprep.subr.bf16.mxu0 0
      %629 = vmatpush1.bf16.msra.mxu0 0
      %630 = vmatprep.subr.bf16.mxu0 0
      %631 = vmatpush1.bf16.msra.mxu0 0
      %632 = vmatprep.subr.bf16.mxu0 0
      %633 = vmatpush1.bf16.msra.mxu0 0
      %634 = vmatprep.subr.bf16.mxu0 0
      %635 = vmatpush1.bf16.msra.mxu0 0
      %636 = vmatprep.subr.bf16.mxu0 0
      %637 = vmatpush1.bf16.msra.mxu0 0
      %638 = vmatprep.mubr.bf16.mxu0 %v525
      %639 = vmatmul.mubr.bf16.gmra.mrb[0].mxu0 %v391
      %v640 = vpop.f32.mrb[0].mxu0
      %v641 = vadd.f32 0.0, %v640
      %v642 = vpop.f32.mrb[0].mxu0
      %v643 = vpop.f32.mrb[0].mxu0
      %v644 = vadd.f32 0.0, %v643
      %v645 = vpop.f32.mrb[0].mxu0
      %646 = vmatprep.mubr.bf16.mxu0 %v528
      %647 = vmatmul.mubr.bf16.gmra.mrb[0].mxu0 %v393
      %v648 = vpop.f32.mrb[0].mxu0
      %v649 = vadd.f32 0.0, %v648
      %v650 = vpop.f32.mrb[0].mxu0
      %v651 = vpop.f32.mrb[0].mxu0
      %v652 = vadd.f32 0.0, %v651
      %v653 = vpop.f32.mrb[0].mxu0
      %654 = vmatprep.mubr.bf16.mxu0 %v531
      %655 = vmatmul.mubr.bf16.gmra.mrb[0].mxu0 %v395
      %v656 = vpop.f32.mrb[0].mxu0
      %v657 = vadd.f32 0.0, %v656
      %v658 = vpop.f32.mrb[0].mxu0
      %v659 = vpop.f32.mrb[0].mxu0
      %v660 = vadd.f32 0.0, %v659
      %v661 = vpop.f32.mrb[0].mxu0
      %662 = vmatprep.mubr.bf16.mxu0 %v534
      %663 = vmatmul.mubr.bf16.gmra.mrb[0].mxu0 %v397
      %v664 = vpop.f32.mrb[0].mxu0
      %v665 = vadd.f32 0.0, %v664
      %v666 = vpop.f32.mrb[0].mxu0
      %v667 = vpop.f32.mrb[0].mxu0
      %v668 = vadd.f32 0.0, %v667
      %v669 = vpop.f32.mrb[0].mxu0
      %670 = vmatprep.mubr.bf16.mxu0 %v537
      %671 = vmatmul.mubr.bf16.gmra.mrb[0].mxu0 %v399
      %v672 = vpop.f32.mrb[0].mxu0
      %v673 = vadd.f32 0.0, %v672
      %v674 = vpop.f32.mrb[0].mxu0
      %v675 = vpop.f32.mrb[0].mxu0
      %v676 = vadd.f32 0.0, %v675
      %v677 = vpop.f32.mrb[0].mxu0
      %678 = vmatprep.mubr.bf16.mxu0 %v540
      %679 = vmatmul.mubr.bf16.gmra.mrb[0].mxu0 %v401
      %v680 = vpop.f32.mrb[0].mxu0
      %v681 = vadd.f32 0.0, %v680
      %v682 = vpop.f32.mrb[0].mxu0
      %v683 = vpop.f32.mrb[0].mxu0
      %v684 = vadd.f32 0.0, %v683
      %v685 = vpop.f32.mrb[0].mxu0
      %686 = vmatprep.mubr.bf16.mxu0 %v543
      %687 = vmatmul.mubr.bf16.gmra.mrb[0].mxu0 %v403
      %v688 = vpop.f32.mrb[0].mxu0
      %v689 = vadd.f32 0.0, %v688
      %v690 = vpop.f32.mrb[0].mxu0
      %v691 = vpop.f32.mrb[0].mxu0
      %v692 = vadd.f32 0.0, %v691
      %v693 = vpop.f32.mrb[0].mxu0
      %694 = vmatprep.mubr.bf16.mxu0 %v546
      %695 = vmatmul.mubr.bf16.gmra.mrb[0].mxu0 %v405
      %v696 = vpop.f32.mrb[0].mxu0
      %v697 = vadd.f32 0.0, %v696
      %v698 = vpop.f32.mrb[0].mxu0
      %v699 = vpop.f32.mrb[0].mxu0
      %v700 = vadd.f32 0.0, %v699
      %v701 = vpop.f32.mrb[0].mxu0
      %702 = vmatprep.mubr.bf16.mxu0 %v549
      %703 = vmatmul.mubr.bf16.gmra.mrb[0].mxu0 %v407
      %v704 = vpop.f32.mrb[0].mxu0
      %v705 = vadd.f32 0.0, %v704
      %v706 = vpop.f32.mrb[0].mxu0
      %v707 = vpop.f32.mrb[0].mxu0
      %v708 = vadd.f32 0.0, %v707
      %v709 = vpop.f32.mrb[0].mxu0
      %710 = vmatprep.mubr.bf16.mxu0 %v552
      %711 = vmatmul.mubr.bf16.gmra.mrb[0].mxu0 %v409
      %v712 = vpop.f32.mrb[0].mxu0
      %v713 = vadd.f32 0.0, %v712
      %v714 = vpop.f32.mrb[0].mxu0
      %v715 = vpop.f32.mrb[0].mxu0
      %v716 = vadd.f32 0.0, %v715
      %v717 = vpop.f32.mrb[0].mxu0
      %718 = vmatprep.mubr.bf16.mxu0 %v555
      %719 = vmatmul.mubr.bf16.gmra.mrb[0].mxu0 %v411
      %v720 = vpop.f32.mrb[0].mxu0
      %v721 = vadd.f32 0.0, %v720
      %v722 = vpop.f32.mrb[0].mxu0
      %v723 = vpop.f32.mrb[0].mxu0
      %v724 = vadd.f32 0.0, %v723
      %v725 = vpop.f32.mrb[0].mxu0
      %726 = vmatprep.mubr.bf16.mxu0 %v558
      %727 = vmatmul.mubr.bf16.gmra.mrb[0].mxu0 %v413
      %v728 = vpop.f32.mrb[0].mxu0
      %v729 = vadd.f32 0.0, %v728
      %v730 = vpop.f32.mrb[0].mxu0
      %v731 = vpop.f32.mrb[0].mxu0
      %v732 = vadd.f32 0.0, %v731
      %v733 = vpop.f32.mrb[0].mxu0
      %734 = vmatprep.mubr.bf16.mxu0 %v561
      %735 = vmatmul.mubr.bf16.gmra.mrb[0].mxu0 %v415
      %v736 = vpop.f32.mrb[0].mxu0
      %v737 = vadd.f32 0.0, %v736
      %v738 = vpop.f32.mrb[0].mxu0
      %v739 = vpop.f32.mrb[0].mxu0
      %v740 = vadd.f32 0.0, %v739
      %v741 = vpop.f32.mrb[0].mxu0
      %742 = vmatprep.mubr.bf16.mxu0 %v564
      %743 = vmatmul.mubr.bf16.gmra.mrb[0].mxu0 %v417
      %v744 = vpop.f32.mrb[0].mxu0
      %v745 = vadd.f32 0.0, %v744
      %v746 = vpop.f32.mrb[0].mxu0
      %v747 = vpop.f32.mrb[0].mxu0
      %v748 = vadd.f32 0.0, %v747
      %v749 = vpop.f32.mrb[0].mxu0
      %750 = vmatprep.mubr.bf16.mxu0 %v567
      %751 = vmatmul.mubr.bf16.gmra.mrb[0].mxu0 %v419
      %v752 = vpop.f32.mrb[0].mxu0
      %v753 = vadd.f32 0.0, %v752
      %v754 = vpop.f32.mrb[0].mxu0
      %v755 = vpop.f32.mrb[0].mxu0
      %v756 = vadd.f32 0.0, %v755
      %v757 = vpop.f32.mrb[0].mxu0
      %758 = vmatprep.mubr.bf16.mxu0 %v570
      %759 = vmatmul.mubr.bf16.gmra.mrb[0].mxu0 %v421
      %v760 = vpop.f32.mrb[0].mxu0
      %v761 = vadd.f32 0.0, %v760
      %v762 = vpop.f32.mrb[0].mxu0
      %v763 = vpop.f32.mrb[0].mxu0
      %v764 = vadd.f32 0.0, %v763
      %v765 = vpop.f32.mrb[0].mxu0
      %766 = vmatprep.mubr.bf16.mxu0 %v573
      %767 = vmatmul.mubr.bf16.gmra.mrb[0].mxu0 %v423
      %v768 = vpop.f32.mrb[0].mxu0
      %v769 = vadd.f32 0.0, %v768
      %v770 = vpop.f32.mrb[0].mxu0
      %v771 = vpop.f32.mrb[0].mxu0
      %v772 = vadd.f32 0.0, %v771
      %v773 = vpop.f32.mrb[0].mxu0
      %774 = vmatprep.mubr.bf16.mxu0 %v576
      %775 = vmatmul.mubr.bf16.gmra.mrb[0].mxu0 %v425
      %v776 = vpop.f32.mrb[0].mxu0
      %v777 = vadd.f32 0.0, %v776
      %v778 = vpop.f32.mrb[0].mxu0
      %v779 = vpop.f32.mrb[0].mxu0
      %v780 = vadd.f32 0.0, %v779
      %v781 = vpop.f32.mrb[0].mxu0
      %782 = vmatprep.mubr.bf16.mxu0 %v579
      %783 = vmatmul.mubr.bf16.gmra.mrb[0].mxu0 %v427
      %v784 = vpop.f32.mrb[0].mxu0
      %v785 = vadd.f32 0.0, %v784
      %v786 = vpop.f32.mrb[0].mxu0
      %v787 = vpop.f32.mrb[0].mxu0
      %v788 = vadd.f32 0.0, %v787
      %v789 = vpop.f32.mrb[0].mxu0
      %790 = vmatprep.mubr.bf16.mxu0 %v582
      %791 = vmatmul.mubr.bf16.gmra.mrb[0].mxu0 %v429
      %v792 = vpop.f32.mrb[0].mxu0
      %v793 = vadd.f32 0.0, %v792
      %v794 = vpop.f32.mrb[0].mxu0
      %v795 = vpop.f32.mrb[0].mxu0
      %v796 = vadd.f32 0.0, %v795
      %v797 = vpop.f32.mrb[0].mxu0
      %798 = vmatprep.mubr.bf16.mxu0 %v585
      %799 = vmatmul.mubr.bf16.gmra.mrb[0].mxu0 %v431
      %v800 = vpop.f32.mrb[0].mxu0
      %v801 = vadd.f32 0.0, %v800
      %v802 = vpop.f32.mrb[0].mxu0
      %v803 = vpop.f32.mrb[0].mxu0
      %v804 = vadd.f32 0.0, %v803
      %v805 = vpop.f32.mrb[0].mxu0
      %806 = vmatprep.mubr.bf16.mxu0 %v588
      %807 = vmatmul.mubr.bf16.gmra.mrb[0].mxu0 %v433
      %v808 = vpop.f32.mrb[0].mxu0
      %v809 = vadd.f32 0.0, %v808
      %v810 = vpop.f32.mrb[0].mxu0
      %v811 = vpop.f32.mrb[0].mxu0
      %v812 = vadd.f32 0.0, %v811
      %v813 = vpop.f32.mrb[0].mxu0
      %814 = vmatprep.mubr.bf16.mxu0 %v591
      %815 = vmatmul.mubr.bf16.gmra.mrb[0].mxu0 %v435
      %v816 = vpop.f32.mrb[0].mxu0
      %v817 = vadd.f32 0.0, %v816
      %v818 = vpop.f32.mrb[0].mxu0
      %v819 = vpop.f32.mrb[0].mxu0
      %v820 = vadd.f32 0.0, %v819
      %v821 = vpop.f32.mrb[0].mxu0
      %822 = vmatprep.mubr.bf16.mxu0 %v594
      %823 = vmatmul.mubr.bf16.gmra.mrb[0].mxu0 %v437
      %v824 = vpop.f32.mrb[0].mxu0
      %v825 = vadd.f32 0.0, %v824
      %v826 = vpop.f32.mrb[0].mxu0
      %v827 = vpop.f32.mrb[0].mxu0
      %v828 = vadd.f32 0.0, %v827
      %v829 = vpop.f32.mrb[0].mxu0
      %830 = vmatprep.mubr.bf16.mxu0 %v597
      %831 = vmatmul.mubr.bf16.gmra.mrb[0].mxu0 %v439
      %v832 = vpop.f32.mrb[0].mxu0
      %v833 = vadd.f32 0.0, %v832
      %v834 = vpop.f32.mrb[0].mxu0
      %v835 = vpop.f32.mrb[0].mxu0
      %v836 = vadd.f32 0.0, %v835
      %v837 = vpop.f32.mrb[0].mxu0
      %838 = vdwg.mxu0
      %889 = vrot.lane.b32.xlu0 %v641, 96
      %v890 = vpop.permute.xlu0 %889
      %891 = vrot.lane.b32.xlu0 %v644, 96
      %v892 = vpop.permute.xlu0 %891
      %893 = vrot.lane.b32.xlu0 %v649, 96
      %v894 = vpop.permute.xlu0 %893
      %895 = vrot.lane.b32.xlu0 %v652, 96
      %v896 = vpop.permute.xlu0 %895
      %897 = vrot.lane.b32.xlu0 %v657, 96
      %v898 = vpop.permute.xlu0 %897
      %899 = vrot.lane.b32.xlu0 %v660, 96
      %v900 = vpop.permute.xlu0 %899
      %901 = vrot.lane.b32.xlu0 %v665, 96
      %v902 = vpop.permute.xlu0 %901
      %903 = vrot.lane.b32.xlu0 %v668, 96
      %v904 = vpop.permute.xlu0 %903
      %905 = vrot.lane.b32.xlu0 %v673, 96
      %v906 = vpop.permute.xlu0 %905
      %907 = vrot.lane.b32.xlu0 %v676, 96
      %v908 = vpop.permute.xlu0 %907
      %909 = vrot.lane.b32.xlu0 %v681, 96
      %v910 = vpop.permute.xlu0 %909
      %911 = vrot.lane.b32.xlu0 %v684, 96
      %v912 = vpop.permute.xlu0 %911
      %913 = vrot.lane.b32.xlu0 %v689, 96
      %v914 = vpop.permute.xlu0 %913
      %915 = vrot.lane.b32.xlu0 %v692, 96
      %v916 = vpop.permute.xlu0 %915
      %917 = vrot.lane.b32.xlu0 %v697, 96
      %v918 = vpop.permute.xlu0 %917
      %919 = vrot.lane.b32.xlu0 %v700, 96
      %v920 = vpop.permute.xlu0 %919
      %921 = vrot.lane.b32.xlu0 %v705, 96
      %v922 = vpop.permute.xlu0 %921
      %923 = vrot.lane.b32.xlu0 %v708, 96
      %v924 = vpop.permute.xlu0 %923
      %925 = vrot.lane.b32.xlu0 %v713, 96
      %v926 = vpop.permute.xlu0 %925
      %927 = vrot.lane.b32.xlu0 %v716, 96
      %v928 = vpop.permute.xlu0 %927
      %929 = vrot.lane.b32.xlu0 %v721, 96
      %v930 = vpop.permute.xlu0 %929
      %931 = vrot.lane.b32.xlu0 %v724, 96
      %v932 = vpop.permute.xlu0 %931
      %933 = vrot.lane.b32.xlu0 %v729, 96
      %v934 = vpop.permute.xlu0 %933
      %935 = vrot.lane.b32.xlu0 %v732, 96
      %v936 = vpop.permute.xlu0 %935
      %937 = vrot.lane.b32.xlu0 %v737, 96
      %v938 = vpop.permute.xlu0 %937
      %939 = vrot.lane.b32.xlu0 %v740, 96
      %v940 = vpop.permute.xlu0 %939
      %941 = vrot.lane.b32.xlu0 %v745, 96
      %v942 = vpop.permute.xlu0 %941
      %943 = vrot.lane.b32.xlu0 %v748, 96
      %v944 = vpop.permute.xlu0 %943
      %945 = vrot.lane.b32.xlu0 %v753, 96
      %v946 = vpop.permute.xlu0 %945
      %947 = vrot.lane.b32.xlu0 %v756, 96
      %v948 = vpop.permute.xlu0 %947
      %949 = vrot.lane.b32.xlu0 %v761, 96
      %v950 = vpop.permute.xlu0 %949
      %951 = vrot.lane.b32.xlu0 %v764, 96
      %v952 = vpop.permute.xlu0 %951
      %953 = vrot.lane.b32.xlu0 %v769, 96
      %v954 = vpop.permute.xlu0 %953
      %955 = vrot.lane.b32.xlu0 %v772, 96
      %v956 = vpop.permute.xlu0 %955
      %957 = vrot.lane.b32.xlu0 %v777, 96
      %v958 = vpop.permute.xlu0 %957
      %959 = vrot.lane.b32.xlu0 %v780, 96
      %v960 = vpop.permute.xlu0 %959
      %961 = vrot.lane.b32.xlu0 %v785, 96
      %v962 = vpop.permute.xlu0 %961
      %963 = vrot.lane.b32.xlu0 %v788, 96
      %v964 = vpop.permute.xlu0 %963
      %965 = vrot.lane.b32.xlu0 %v793, 96
      %v966 = vpop.permute.xlu0 %965
      %967 = vrot.lane.b32.xlu0 %v796, 96
      %v968 = vpop.permute.xlu0 %967
      %969 = vrot.lane.b32.xlu0 %v801, 96
      %v970 = vpop.permute.xlu0 %969
      %971 = vrot.lane.b32.xlu0 %v804, 96
      %v972 = vpop.permute.xlu0 %971
      %973 = vrot.lane.b32.xlu0 %v809, 96
      %v974 = vpop.permute.xlu0 %973
      %975 = vrot.lane.b32.xlu0 %v812, 96
      %v976 = vpop.permute.xlu0 %975
      %977 = vrot.lane.b32.xlu0 %v817, 96
      %v978 = vpop.permute.xlu0 %977
      %979 = vrot.lane.b32.xlu0 %v820, 96
      %v980 = vpop.permute.xlu0 %979
      %981 = vrot.lane.b32.xlu0 %v825, 96
      %v982 = vpop.permute.xlu0 %981
      %983 = vrot.lane.b32.xlu0 %v828, 96
      %v984 = vpop.permute.xlu0 %983
      %985 = vrot.lane.b32.xlu0 %v833, 96
      %v986 = vpop.permute.xlu0 %985
      %987 = vrot.lane.b32.xlu0 %v836, 96
      %v988 = vpop.permute.xlu0 %987
      %v1039 = vmax.f32 %v641, %v890
      %v1040 = vmax.f32 %v644, %v892
      %v1041 = vmax.f32 %v649, %v894
      %v1042 = vmax.f32 %v652, %v896
      %v1043 = vmax.f32 %v657, %v898
      %v1044 = vmax.f32 %v660, %v900
      %v1045 = vmax.f32 %v665, %v902
      %v1046 = vmax.f32 %v668, %v904
      %v1047 = vmax.f32 %v673, %v906
      %v1048 = vmax.f32 %v676, %v908
      %v1049 = vmax.f32 %v681, %v910
      %v1050 = vmax.f32 %v684, %v912
      %v1051 = vmax.f32 %v689, %v914
      %v1052 = vmax.f32 %v692, %v916
      %v1053 = vmax.f32 %v697, %v918
      %v1054 = vmax.f32 %v700, %v920
      %v1055 = vmax.f32 %v705, %v922
      %v1056 = vmax.f32 %v708, %v924
      %v1057 = vmax.f32 %v713, %v926
      %v1058 = vmax.f32 %v716, %v928
      %v1059 = vmax.f32 %v721, %v930
      %v1060 = vmax.f32 %v724, %v932
      %v1061 = vmax.f32 %v729, %v934
      %v1062 = vmax.f32 %v732, %v936
      %v1063 = vmax.f32 %v737, %v938
      %v1064 = vmax.f32 %v740, %v940
      %v1065 = vmax.f32 %v745, %v942
      %v1066 = vmax.f32 %v748, %v944
      %v1067 = vmax.f32 %v753, %v946
      %v1068 = vmax.f32 %v756, %v948
      %v1069 = vmax.f32 %v761, %v950
      %v1070 = vmax.f32 %v764, %v952
      %v1071 = vmax.f32 %v769, %v954
      %v1072 = vmax.f32 %v772, %v956
      %v1073 = vmax.f32 %v777, %v958
      %v1074 = vmax.f32 %v780, %v960
      %v1075 = vmax.f32 %v785, %v962
      %v1076 = vmax.f32 %v788, %v964
      %v1077 = vmax.f32 %v793, %v966
      %v1078 = vmax.f32 %v796, %v968
      %v1079 = vmax.f32 %v801, %v970
      %v1080 = vmax.f32 %v804, %v972
      %v1081 = vmax.f32 %v809, %v974
      %v1082 = vmax.f32 %v812, %v976
      %v1083 = vmax.f32 %v817, %v978
      %v1084 = vmax.f32 %v820, %v980
      %v1085 = vmax.f32 %v825, %v982
      %v1086 = vmax.f32 %v828, %v984
      %v1087 = vmax.f32 %v833, %v986
      %v1088 = vmax.f32 %v836, %v988
      %1139 = vrot.lane.b32.xlu0 %v1039, 64
      %v1140 = vpop.permute.xlu0 %1139
      %1141 = vrot.lane.b32.xlu0 %v1040, 64
      %v1142 = vpop.permute.xlu0 %1141
      %1143 = vrot.lane.b32.xlu0 %v1041, 64
      %v1144 = vpop.permute.xlu0 %1143
      %1145 = vrot.lane.b32.xlu0 %v1042, 64
      %v1146 = vpop.permute.xlu0 %1145
      %1147 = vrot.lane.b32.xlu0 %v1043, 64
      %v1148 = vpop.permute.xlu0 %1147
      %1149 = vrot.lane.b32.xlu0 %v1044, 64
      %v1150 = vpop.permute.xlu0 %1149
      %1151 = vrot.lane.b32.xlu0 %v1045, 64
      %v1152 = vpop.permute.xlu0 %1151
      %1153 = vrot.lane.b32.xlu0 %v1046, 64
      %v1154 = vpop.permute.xlu0 %1153
      %1155 = vrot.lane.b32.xlu0 %v1047, 64
      %v1156 = vpop.permute.xlu0 %1155
      %1157 = vrot.lane.b32.xlu0 %v1048, 64
      %v1158 = vpop.permute.xlu0 %1157
      %1159 = vrot.lane.b32.xlu0 %v1049, 64
      %v1160 = vpop.permute.xlu0 %1159
      %1161 = vrot.lane.b32.xlu0 %v1050, 64
      %v1162 = vpop.permute.xlu0 %1161
      %1163 = vrot.lane.b32.xlu0 %v1051, 64
      %v1164 = vpop.permute.xlu0 %1163
      %1165 = vrot.lane.b32.xlu0 %v1052, 64
      %v1166 = vpop.permute.xlu0 %1165
      %1167 = vrot.lane.b32.xlu0 %v1053, 64
      %v1168 = vpop.permute.xlu0 %1167
      %1169 = vrot.lane.b32.xlu0 %v1054, 64
      %v1170 = vpop.permute.xlu0 %1169
      %1171 = vrot.lane.b32.xlu0 %v1055, 64
      %v1172 = vpop.permute.xlu0 %1171
      %1173 = vrot.lane.b32.xlu0 %v1056, 64
      %v1174 = vpop.permute.xlu0 %1173
      %1175 = vrot.lane.b32.xlu0 %v1057, 64
      %v1176 = vpop.permute.xlu0 %1175
      %1177 = vrot.lane.b32.xlu0 %v1058, 64
      %v1178 = vpop.permute.xlu0 %1177
      %1179 = vrot.lane.b32.xlu0 %v1059, 64
      %v1180 = vpop.permute.xlu0 %1179
      %1181 = vrot.lane.b32.xlu0 %v1060, 64
      %v1182 = vpop.permute.xlu0 %1181
      %1183 = vrot.lane.b32.xlu0 %v1061, 64
      %v1184 = vpop.permute.xlu0 %1183
      %1185 = vrot.lane.b32.xlu0 %v1062, 64
      %v1186 = vpop.permute.xlu0 %1185
      %1187 = vrot.lane.b32.xlu0 %v1063, 64
      %v1188 = vpop.permute.xlu0 %1187
      %1189 = vrot.lane.b32.xlu0 %v1064, 64
      %v1190 = vpop.permute.xlu0 %1189
      %1191 = vrot.lane.b32.xlu0 %v1065, 64
      %v1192 = vpop.permute.xlu0 %1191
      %1193 = vrot.lane.b32.xlu0 %v1066, 64
      %v1194 = vpop.permute.xlu0 %1193
      %1195 = vrot.lane.b32.xlu0 %v1067, 64
      %v1196 = vpop.permute.xlu0 %1195
      %1197 = vrot.lane.b32.xlu0 %v1068, 64
      %v1198 = vpop.permute.xlu0 %1197
      %1199 = vrot.lane.b32.xlu0 %v1069, 64
      %v1200 = vpop.permute.xlu0 %1199
      %1201 = vrot.lane.b32.xlu0 %v1070, 64
      %v1202 = vpop.permute.xlu0 %1201
      %1203 = vrot.lane.b32.xlu0 %v1071, 64
      %v1204 = vpop.permute.xlu0 %1203
      %1205 = vrot.lane.b32.xlu0 %v1072, 64
      %v1206 = vpop.permute.xlu0 %1205
      %1207 = vrot.lane.b32.xlu0 %v1073, 64
      %v1208 = vpop.permute.xlu0 %1207
      %1209 = vrot.lane.b32.xlu0 %v1074, 64
      %v1210 = vpop.permute.xlu0 %1209
      %1211 = vrot.lane.b32.xlu0 %v1075, 64
      %v1212 = vpop.permute.xlu0 %1211
      %1213 = vrot.lane.b32.xlu0 %v1076, 64
      %v1214 = vpop.permute.xlu0 %1213
      %1215 = vrot.lane.b32.xlu0 %v1077, 64
      %v1216 = vpop.permute.xlu0 %1215
      %1217 = vrot.lane.b32.xlu0 %v1078, 64
      %v1218 = vpop.permute.xlu0 %1217
      %1219 = vrot.lane.b32.xlu0 %v1079, 64
      %v1220 = vpop.permute.xlu0 %1219
      %1221 = vrot.lane.b32.xlu0 %v1080, 64
      %v1222 = vpop.permute.xlu0 %1221
      %1223 = vrot.lane.b32.xlu0 %v1081, 64
      %v1224 = vpop.permute.xlu0 %1223
      %1225 = vrot.lane.b32.xlu0 %v1082, 64
      %v1226 = vpop.permute.xlu0 %1225
      %1227 = vrot.lane.b32.xlu0 %v1083, 64
      %v1228 = vpop.permute.xlu0 %1227
      %1229 = vrot.lane.b32.xlu0 %v1084, 64
      %v1230 = vpop.permute.xlu0 %1229
      %1231 = vrot.lane.b32.xlu0 %v1085, 64
      %v1232 = vpop.permute.xlu0 %1231
      %1233 = vrot.lane.b32.xlu0 %v1086, 64
      %v1234 = vpop.permute.xlu0 %1233
      %1235 = vrot.lane.b32.xlu0 %v1087, 64
      %v1236 = vpop.permute.xlu0 %1235
      %1237 = vrot.lane.b32.xlu0 %v1088, 64
      %v1238 = vpop.permute.xlu0 %1237
      %v1289 = vmax.f32 %v1039, %v1140
      %v1290 = vmax.f32 %v1040, %v1142
      %v1291 = vmax.f32 %v1041, %v1144
      %v1292 = vmax.f32 %v1042, %v1146
      %v1293 = vmax.f32 %v1043, %v1148
      %v1294 = vmax.f32 %v1044, %v1150
      %v1295 = vmax.f32 %v1045, %v1152
      %v1296 = vmax.f32 %v1046, %v1154
      %v1297 = vmax.f32 %v1047, %v1156
      %v1298 = vmax.f32 %v1048, %v1158
      %v1299 = vmax.f32 %v1049, %v1160
      %v1300 = vmax.f32 %v1050, %v1162
      %v1301 = vmax.f32 %v1051, %v1164
      %v1302 = vmax.f32 %v1052, %v1166
      %v1303 = vmax.f32 %v1053, %v1168
      %v1304 = vmax.f32 %v1054, %v1170
      %v1305 = vmax.f32 %v1055, %v1172
      %v1306 = vmax.f32 %v1056, %v1174
      %v1307 = vmax.f32 %v1057, %v1176
      %v1308 = vmax.f32 %v1058, %v1178
      %v1309 = vmax.f32 %v1059, %v1180
      %v1310 = vmax.f32 %v1060, %v1182
      %v1311 = vmax.f32 %v1061, %v1184
      %v1312 = vmax.f32 %v1062, %v1186
      %v1313 = vmax.f32 %v1063, %v1188
      %v1314 = vmax.f32 %v1064, %v1190
      %v1315 = vmax.f32 %v1065, %v1192
      %v1316 = vmax.f32 %v1066, %v1194
      %v1317 = vmax.f32 %v1067, %v1196
      %v1318 = vmax.f32 %v1068, %v1198
      %v1319 = vmax.f32 %v1069, %v1200
      %v1320 = vmax.f32 %v1070, %v1202
      %v1321 = vmax.f32 %v1071, %v1204
      %v1322 = vmax.f32 %v1072, %v1206
      %v1323 = vmax.f32 %v1073, %v1208
      %v1324 = vmax.f32 %v1074, %v1210
      %v1325 = vmax.f32 %v1075, %v1212
      %v1326 = vmax.f32 %v1076, %v1214
      %v1327 = vmax.f32 %v1077, %v1216
      %v1328 = vmax.f32 %v1078, %v1218
      %v1329 = vmax.f32 %v1079, %v1220
      %v1330 = vmax.f32 %v1080, %v1222
      %v1331 = vmax.f32 %v1081, %v1224
      %v1332 = vmax.f32 %v1082, %v1226
      %v1333 = vmax.f32 %v1083, %v1228
      %v1334 = vmax.f32 %v1084, %v1230
      %v1335 = vmax.f32 %v1085, %v1232
      %v1336 = vmax.f32 %v1086, %v1234
      %v1337 = vmax.f32 %v1087, %v1236
      %v1338 = vmax.f32 %v1088, %v1238
      %v1339 = vld [vmem:[%s2] sm:$0x1]
      %v1341 = vlaneseq
      %v1342 = vshrl.u32 %v1341, 7
      %v1343 = vsub.s32 0, %v1342
      %v1344 = vrot.slane %v1339, %v1343
      %v1346 = vadd.f32 %v1289, %v1344
      %v1347 = vadd.f32 %v1290, %v1344
      %v1348 = vadd.f32 %v1291, %v1344
      %v1349 = vadd.f32 %v1292, %v1344
      %v1350 = vadd.f32 %v1293, %v1344
      %v1351 = vadd.f32 %v1294, %v1344
      %v1352 = vadd.f32 %v1295, %v1344
      %v1353 = vadd.f32 %v1296, %v1344
      %v1354 = vadd.f32 %v1297, %v1344
      %v1355 = vadd.f32 %v1298, %v1344
      %v1356 = vadd.f32 %v1299, %v1344
      %v1357 = vadd.f32 %v1300, %v1344
      %v1358 = vadd.f32 %v1301, %v1344
      %v1359 = vadd.f32 %v1302, %v1344
      %v1360 = vadd.f32 %v1303, %v1344
      %v1361 = vadd.f32 %v1304, %v1344
      %v1362 = vadd.f32 %v1305, %v1344
      %v1363 = vadd.f32 %v1306, %v1344
      %v1364 = vadd.f32 %v1307, %v1344
      %v1365 = vadd.f32 %v1308, %v1344
      %v1366 = vadd.f32 %v1309, %v1344
      %v1367 = vadd.f32 %v1310, %v1344
      %v1368 = vadd.f32 %v1311, %v1344
      %v1369 = vadd.f32 %v1312, %v1344
      %v1370 = vadd.f32 %v1313, %v1344
      %v1371 = vadd.f32 %v1314, %v1344
      %v1372 = vadd.f32 %v1315, %v1344
      %v1373 = vadd.f32 %v1316, %v1344
      %v1374 = vadd.f32 %v1317, %v1344
      %v1375 = vadd.f32 %v1318, %v1344
      %v1376 = vadd.f32 %v1319, %v1344
      %v1377 = vadd.f32 %v1320, %v1344
      %v1378 = vadd.f32 %v1321, %v1344
      %v1379 = vadd.f32 %v1322, %v1344
      %v1380 = vadd.f32 %v1323, %v1344
      %v1381 = vadd.f32 %v1324, %v1344
      %v1382 = vadd.f32 %v1325, %v1344
      %v1383 = vadd.f32 %v1326, %v1344
      %v1384 = vadd.f32 %v1327, %v1344
      %v1385 = vadd.f32 %v1328, %v1344
      %v1386 = vadd.f32 %v1329, %v1344
      %v1387 = vadd.f32 %v1330, %v1344
      %v1388 = vadd.f32 %v1331, %v1344
      %v1389 = vadd.f32 %v1332, %v1344
      %v1390 = vadd.f32 %v1333, %v1344
      %v1391 = vadd.f32 %v1334, %v1344
      %v1392 = vadd.f32 %v1335, %v1344
      %v1393 = vadd.f32 %v1336, %v1344
      %v1394 = vadd.f32 %v1337, %v1344
      %v1395 = vadd.f32 %v1338, %v1344
      %v1396 = vmax.f32 %v1346, 0.0
      %v1397 = vmax.f32 %v1347, 0.0
      %v1398 = vmax.f32 %v1348, 0.0
      %v1399 = vmax.f32 %v1349, 0.0
      %v1400 = vmax.f32 %v1350, 0.0
      %v1401 = vmax.f32 %v1351, 0.0
      %v1402 = vmax.f32 %v1352, 0.0
      %v1403 = vmax.f32 %v1353, 0.0
      %v1404 = vmax.f32 %v1354, 0.0
      %v1405 = vmax.f32 %v1355, 0.0
      %v1406 = vmax.f32 %v1356, 0.0
      %v1407 = vmax.f32 %v1357, 0.0
      %v1408 = vmax.f32 %v1358, 0.0
      %v1409 = vmax.f32 %v1359, 0.0
      %v1410 = vmax.f32 %v1360, 0.0
      %v1411 = vmax.f32 %v1361, 0.0
      %v1412 = vmax.f32 %v1362, 0.0
      %v1413 = vmax.f32 %v1363, 0.0
      %v1414 = vmax.f32 %v1364, 0.0
      %v1415 = vmax.f32 %v1365, 0.0
      %v1416 = vmax.f32 %v1366, 0.0
      %v1417 = vmax.f32 %v1367, 0.0
      %v1418 = vmax.f32 %v1368, 0.0
      %v1419 = vmax.f32 %v1369, 0.0
      %v1420 = vmax.f32 %v1370, 0.0
      %v1421 = vmax.f32 %v1371, 0.0
      %v1422 = vmax.f32 %v1372, 0.0
      %v1423 = vmax.f32 %v1373, 0.0
      %v1424 = vmax.f32 %v1374, 0.0
      %v1425 = vmax.f32 %v1375, 0.0
      %v1426 = vmax.f32 %v1376, 0.0
      %v1427 = vmax.f32 %v1377, 0.0
      %v1428 = vmax.f32 %v1378, 0.0
      %v1429 = vmax.f32 %v1379, 0.0
      %v1430 = vmax.f32 %v1380, 0.0
      %v1431 = vmax.f32 %v1381, 0.0
      %v1432 = vmax.f32 %v1382, 0.0
      %v1433 = vmax.f32 %v1383, 0.0
      %v1434 = vmax.f32 %v1384, 0.0
      %v1435 = vmax.f32 %v1385, 0.0
      %v1436 = vmax.f32 %v1386, 0.0
      %v1437 = vmax.f32 %v1387, 0.0
      %v1438 = vmax.f32 %v1388, 0.0
      %v1439 = vmax.f32 %v1389, 0.0
      %v1440 = vmax.f32 %v1390, 0.0
      %v1441 = vmax.f32 %v1391, 0.0
      %v1442 = vmax.f32 %v1392, 0.0
      %v1443 = vmax.f32 %v1393, 0.0
      %v1444 = vmax.f32 %v1394, 0.0
      %v1445 = vmax.f32 %v1395, 0.0
      %v1446 = vpack.c.bf16 %v1397, %v1396
      %v1447 = vpack.c.bf16 %v1399, %v1398
      %v1448 = vpack.c.bf16 %v1401, %v1400
      %v1449 = vpack.c.bf16 %v1403, %v1402
      %v1450 = vpack.c.bf16 %v1405, %v1404
      %v1451 = vpack.c.bf16 %v1407, %v1406
      %v1452 = vpack.c.bf16 %v1409, %v1408
      %v1453 = vpack.c.bf16 %v1411, %v1410
      %v1454 = vpack.c.bf16 %v1413, %v1412
      %v1455 = vpack.c.bf16 %v1415, %v1414
      %v1456 = vpack.c.bf16 %v1417, %v1416
      %v1457 = vpack.c.bf16 %v1419, %v1418
      %v1458 = vpack.c.bf16 %v1421, %v1420
      %v1459 = vpack.c.bf16 %v1423, %v1422
      %v1460 = vpack.c.bf16 %v1425, %v1424
      %v1461 = vpack.c.bf16 %v1427, %v1426
      %v1462 = vpack.c.bf16 %v1429, %v1428
      %v1463 = vpack.c.bf16 %v1431, %v1430
      %v1464 = vpack.c.bf16 %v1433, %v1432
      %v1465 = vpack.c.bf16 %v1435, %v1434
      %v1466 = vpack.c.bf16 %v1437, %v1436
      %v1467 = vpack.c.bf16 %v1439, %v1438
      %v1468 = vpack.c.bf16 %v1441, %v1440
      %v1469 = vpack.c.bf16 %v1443, %v1442
      %v1470 = vpack.c.bf16 %v1445, %v1444
      %v1496 = vunpack.c.l.b16 %v1446
      %v1497 = vunpack.c.h.b16 %v1446
      %v1498 = vunpack.c.l.b16 %v1447
      %v1499 = vunpack.c.h.b16 %v1447
      %v1500 = vunpack.c.l.b16 %v1448
      %v1501 = vunpack.c.h.b16 %v1448
      %v1502 = vunpack.c.l.b16 %v1449
      %v1503 = vunpack.c.h.b16 %v1449
      %v1504 = vunpack.c.l.b16 %v1450
      %v1505 = vunpack.c.h.b16 %v1450
      %v1506 = vunpack.c.l.b16 %v1451
      %v1507 = vunpack.c.h.b16 %v1451
      %v1508 = vunpack.c.l.b16 %v1452
      %v1509 = vunpack.c.h.b16 %v1452
      %v1510 = vunpack.c.l.b16 %v1453
      %v1511 = vunpack.c.h.b16 %v1453
      %v1512 = vunpack.c.l.b16 %v1454
      %v1513 = vunpack.c.h.b16 %v1454
      %v1514 = vunpack.c.l.b16 %v1455
      %v1515 = vunpack.c.h.b16 %v1455
      %v1516 = vunpack.c.l.b16 %v1456
      %v1517 = vunpack.c.h.b16 %v1456
      %v1518 = vunpack.c.l.b16 %v1457
      %v1519 = vunpack.c.h.b16 %v1457
      %v1520 = vunpack.c.l.b16 %v1458
      %v1521 = vunpack.c.h.b16 %v1458
      %v1522 = vunpack.c.l.b16 %v1459
      %v1523 = vunpack.c.h.b16 %v1459
      %v1524 = vunpack.c.l.b16 %v1460
      %v1525 = vunpack.c.h.b16 %v1460
      %v1526 = vunpack.c.l.b16 %v1461
      %v1527 = vunpack.c.h.b16 %v1461
      %v1528 = vunpack.c.l.b16 %v1462
      %v1529 = vunpack.c.h.b16 %v1462
      %v1530 = vunpack.c.l.b16 %v1463
      %v1531 = vunpack.c.h.b16 %v1463
      %v1532 = vunpack.c.l.b16 %v1464
      %v1533 = vunpack.c.h.b16 %v1464
      %v1534 = vunpack.c.l.b16 %v1465
      %v1535 = vunpack.c.h.b16 %v1465
      %v1536 = vunpack.c.l.b16 %v1466
      %v1537 = vunpack.c.h.b16 %v1466
      %v1538 = vunpack.c.l.b16 %v1467
      %v1539 = vunpack.c.h.b16 %v1467
      %v1540 = vunpack.c.l.b16 %v1468
      %v1541 = vunpack.c.h.b16 %v1468
      %v1542 = vunpack.c.l.b16 %v1469
      %v1543 = vunpack.c.h.b16 %v1469
      %v1544 = vunpack.c.l.b16 %v1470
      %v1545 = vunpack.c.h.b16 %v1470
      %v1546 = vpack.c.b16 %v1496, %v1496
      %v1547 = vpack.c.b16 %v1497, %v1497
      %v1548 = vpack.c.b16 %v1498, %v1498
      %v1549 = vpack.c.b16 %v1499, %v1499
      %v1550 = vpack.c.b16 %v1500, %v1500
      %v1551 = vpack.c.b16 %v1501, %v1501
      %v1552 = vpack.c.b16 %v1502, %v1502
      %v1553 = vpack.c.b16 %v1503, %v1503
      %v1554 = vpack.c.b16 %v1504, %v1504
      %v1555 = vpack.c.b16 %v1505, %v1505
      %v1556 = vpack.c.b16 %v1506, %v1506
      %v1557 = vpack.c.b16 %v1507, %v1507
      %v1558 = vpack.c.b16 %v1508, %v1508
      %v1559 = vpack.c.b16 %v1509, %v1509
      %v1560 = vpack.c.b16 %v1510, %v1510
      %v1561 = vpack.c.b16 %v1511, %v1511
      %v1562 = vpack.c.b16 %v1512, %v1512
      %v1563 = vpack.c.b16 %v1513, %v1513
      %v1564 = vpack.c.b16 %v1514, %v1514
      %v1565 = vpack.c.b16 %v1515, %v1515
      %v1566 = vpack.c.b16 %v1516, %v1516
      %v1567 = vpack.c.b16 %v1517, %v1517
      %v1568 = vpack.c.b16 %v1518, %v1518
      %v1569 = vpack.c.b16 %v1519, %v1519
      %v1570 = vpack.c.b16 %v1520, %v1520
      %v1571 = vpack.c.b16 %v1521, %v1521
      %v1572 = vpack.c.b16 %v1522, %v1522
      %v1573 = vpack.c.b16 %v1523, %v1523
      %v1574 = vpack.c.b16 %v1524, %v1524
      %v1575 = vpack.c.b16 %v1525, %v1525
      %v1576 = vpack.c.b16 %v1526, %v1526
      %v1577 = vpack.c.b16 %v1527, %v1527
      %v1578 = vpack.c.b16 %v1528, %v1528
      %v1579 = vpack.c.b16 %v1529, %v1529
      %v1580 = vpack.c.b16 %v1530, %v1530
      %v1581 = vpack.c.b16 %v1531, %v1531
      %v1582 = vpack.c.b16 %v1532, %v1532
      %v1583 = vpack.c.b16 %v1533, %v1533
      %v1584 = vpack.c.b16 %v1534, %v1534
      %v1585 = vpack.c.b16 %v1535, %v1535
      %v1586 = vpack.c.b16 %v1536, %v1536
      %v1587 = vpack.c.b16 %v1537, %v1537
      %v1588 = vpack.c.b16 %v1538, %v1538
      %v1589 = vpack.c.b16 %v1539, %v1539
      %v1590 = vpack.c.b16 %v1540, %v1540
      %v1591 = vpack.c.b16 %v1541, %v1541
      %v1592 = vpack.c.b16 %v1542, %v1542
      %v1593 = vpack.c.b16 %v1543, %v1543
      %v1594 = vpack.c.b16 %v1544, %v1544
      %v1595 = vpack.c.b16 %v1545, %v1545
      %vm1646 = vcmask 257024
      %1647 = vst.msk [vmem:[%s170] sm:$0xf] %vm1646, %v1546
      %1648 = vst.msk [vmem:[%s170 + $0x4] sm:$0xf] %vm1646, %v1547
      %1649 = vst.msk [vmem:[%s170 + $0x8] sm:$0xf] %vm1646, %v1548
      %1650 = vst.msk [vmem:[%s170 + $0xc] sm:$0xf] %vm1646, %v1549
      %1651 = vst.msk [vmem:[%s170 + $0x10] sm:$0xf] %vm1646, %v1550
      %1652 = vst.msk [vmem:[%s170 + $0x14] sm:$0xf] %vm1646, %v1551
      %1653 = vst.msk [vmem:[%s170 + $0x18] sm:$0xf] %vm1646, %v1552
      %1654 = vst.msk [vmem:[%s170 + $0x1c] sm:$0xf] %vm1646, %v1553
      %1655 = vst.msk [vmem:[%s170 + $0x20] sm:$0xf] %vm1646, %v1554
      %1656 = vst.msk [vmem:[%s170 + $0x24] sm:$0xf] %vm1646, %v1555
      %1657 = vst.msk [vmem:[%s170 + $0x28] sm:$0xf] %vm1646, %v1556
      %1658 = vst.msk [vmem:[%s170 + $0x2c] sm:$0xf] %vm1646, %v1557
      %1659 = vst.msk [vmem:[%s170 + $0x30] sm:$0xf] %vm1646, %v1558
      %1660 = vst.msk [vmem:[%s170 + $0x34] sm:$0xf] %vm1646, %v1559
      %1661 = vst.msk [vmem:[%s170 + $0x38] sm:$0xf] %vm1646, %v1560
      %1662 = vst.msk [vmem:[%s170 + $0x3c] sm:$0xf] %vm1646, %v1561
      %1663 = vst.msk [vmem:[%s170 + $0x40] sm:$0xf] %vm1646, %v1562
      %1664 = vst.msk [vmem:[%s170 + $0x44] sm:$0xf] %vm1646, %v1563
      %1665 = vst.msk [vmem:[%s170 + $0x48] sm:$0xf] %vm1646, %v1564
      %1666 = vst.msk [vmem:[%s170 + $0x4c] sm:$0xf] %vm1646, %v1565
      %1667 = vst.msk [vmem:[%s170 + $0x50] sm:$0xf] %vm1646, %v1566
      %1668 = vst.msk [vmem:[%s170 + $0x54] sm:$0xf] %vm1646, %v1567
      %1669 = vst.msk [vmem:[%s170 + $0x58] sm:$0xf] %vm1646, %v1568
      %1670 = vst.msk [vmem:[%s170 + $0x5c] sm:$0xf] %vm1646, %v1569
      %1671 = vst.msk [vmem:[%s170 + $0x60] sm:$0xf] %vm1646, %v1570
      %1672 = vst.msk [vmem:[%s170 + $0x64] sm:$0xf] %vm1646, %v1571
      %1673 = vst.msk [vmem:[%s170 + $0x68] sm:$0xf] %vm1646, %v1572
      %1674 = vst.msk [vmem:[%s170 + $0x6c] sm:$0xf] %vm1646, %v1573
      %1675 = vst.msk [vmem:[%s170 + $0x70] sm:$0xf] %vm1646, %v1574
      %1676 = vst.msk [vmem:[%s170 + $0x74] sm:$0xf] %vm1646, %v1575
      %1677 = vst.msk [vmem:[%s170 + $0x78] sm:$0xf] %vm1646, %v1576
      %1678 = vst.msk [vmem:[%s170 + $0x7c] sm:$0xf] %vm1646, %v1577
      %1679 = vst.msk [vmem:[%s170 + $0x80] sm:$0xf] %vm1646, %v1578
      %1680 = vst.msk [vmem:[%s170 + $0x84] sm:$0xf] %vm1646, %v1579
      %1681 = vst.msk [vmem:[%s170 + $0x88] sm:$0xf] %vm1646, %v1580
      %1682 = vst.msk [vmem:[%s170 + $0x8c] sm:$0xf] %vm1646, %v1581
      %1683 = vst.msk [vmem:[%s170 + $0x90] sm:$0xf] %vm1646, %v1582
      %1684 = vst.msk [vmem:[%s170 + $0x94] sm:$0xf] %vm1646, %v1583
      %1685 = vst.msk [vmem:[%s170 + $0x98] sm:$0xf] %vm1646, %v1584
      %1686 = vst.msk [vmem:[%s170 + $0x9c] sm:$0xf] %vm1646, %v1585
      %1687 = vst.msk [vmem:[%s170 + $0xa0] sm:$0xf] %vm1646, %v1586
      %1688 = vst.msk [vmem:[%s170 + $0xa4] sm:$0xf] %vm1646, %v1587
      %1689 = vst.msk [vmem:[%s170 + $0xa8] sm:$0xf] %vm1646, %v1588
      %1690 = vst.msk [vmem:[%s170 + $0xac] sm:$0xf] %vm1646, %v1589
      %1691 = vst.msk [vmem:[%s170 + $0xb0] sm:$0xf] %vm1646, %v1590
      %1692 = vst.msk [vmem:[%s170 + $0xb4] sm:$0xf] %vm1646, %v1591
      %1693 = vst.msk [vmem:[%s170 + $0xb8] sm:$0xf] %vm1646, %v1592
      %1694 = vst.msk [vmem:[%s170 + $0xbc] sm:$0xf] %vm1646, %v1593
      %1695 = vst.msk [vmem:[%s170 + $0xc0] sm:$0xf] %vm1646, %v1594
      %1696 = vst.msk [vmem:[%s170 + $0xc4] sm:$0xf] %vm1646, %v1595
      %p1697 = scmp.lt.s32.totalorder %s14, 1
      %s1698 = scalar_select %p1697, %s14, 1
      %s1699 = smul.addr %s1698, 50
      %s1700 = smul.addr %s1699, 4
      %s1701 = scalar_lea.vmem %s3, %s1700
      // Predicated region
      $region33: #{vision_feature_extractor.3} parent=31 // pred_check
        %p1702 = pneg %p100
      $region34: #{vision_feature_extractor.3} parent=31 // pred_check_branch
        %1704 = sbr.rel (%p1702) target = $region36
      $region35: #{vision_feature_extractor.3} parent=31 // pred_region
        _
      $region36: #{vision_feature_extractor.3} parent=31 // pred_fallthru
        _
    $region32: #{vision_feature_extractor.3} parent=5 // pred_fallthru
      _
    %p1705 = scmp.le.s32.totalorder 2, %s9
    // Predicated region
    $region37: #{vision_feature_extractor.3} parent=5 // pred_check
      %p1706 = pneg %p1705
    $region38: #{vision_feature_extractor.3} parent=5 // pred_check_branch
      %1708 = sbr.rel (%p1706) target = $region40
    $region39: #{vision_feature_extractor.3} parent=5 // pred_region
      %s1709 = ssub.s32 %s9, 2
      // Predicated region
      $region41: #{vision_feature_extractor.3} parent=39 // pred_check
        %p1710 = pneg %p106
      $region42: #{vision_feature_extractor.3} parent=39 // pred_check_branch
        %1712 = sbr.rel (%p1710) target = $region44
      $region43: #{vision_feature_extractor.3} parent=39 // pred_region
        %p1713 = scmp.lt.s32.totalorder %s15, 1
        %s1714 = scalar_select %p1713, %s15, 1
        %s1715 = smul.addr %s1714, 50
        %s1716 = smul.addr %s1715, 4
        %s1717 = scalar_lea.vmem %s3, %s1716
      $region44: #{vision_feature_extractor.3} parent=39 // pred_fallthru
        _
    $region40: #{vision_feature_extractor.3} parent=5 // pred_fallthru
      _
  $region6: #{vision_feature_extractor.3} parent=0 // loop_footer
    %s13 = sadd.s32 1, %s9
  $region7: #{vision_feature_extractor.3} parent=0 // loop_footer_branch
    %8 = sbr.rel target = $region3
  $region8: #{vision_feature_extractor.3} parent=0 // loop_exit
    _

// kernel: vision_feature_extractor.4
$region0: #{vision_feature_extractor.4}
  #allocation0 [shape = 'u32[]', space=smem, size = 0x4, offset = 0x4, fixed_abs, tag = 'smem constant byte address 0x4 - core index']
  #allocation1 [shape = 'u32[144,128]{1,0:T(1,128)}', space=vmem, size = 0x12000, scoped, tag = 'internal scratch']
  %s0 = inlined_call_operand.vmem [shape: bf16[2,162,384], index: 0, kind: input, shape index: {}]
  %s1 = inlined_call_operand.vmem [shape: bf16[384,128], index: 1, kind: input, shape index: {}]
  %s2 = inlined_call_operand.vmem [shape: f32[1,128], index: 2, kind: input, shape index: {}]
  %s3 = inlined_call_operand.vmem [shape: bf16[2,162,128], index: 3, kind: output, shape index: {}]
  %s4 = sld [smem:[#allocation0]]
  $region45: #{vision_feature_extractor.4} parent=0
    _
  %s6 = ssub.s32 1, %s4
  %s7 = scalar_select 0, %s6, %s4
  loop: start=0, step=1, limit=4
  $region2: #{vision_feature_extractor.4} parent=0 // loop_pre_header
    _
  $region3: #{vision_feature_extractor.4} parent=0 // loop_header
    %s9 = sphi 0, %s13
    %p10 = scmp.ge.s32.totalorder %s9, 4
    %s19 = sphi 0, %s21
    %s22 = sphi 0, %s19
    %s23 = sphi 0, %s22
    %s39 = sphi 0, %s23
    %s43 = sphi 0, %s43
    %s45 = sphi 0, %s43
    %s46 = sphi 0, %s45
    %s60 = sphi 0, %s46
    %s64 = sphi 0, %s64
    %s66 = sphi 0, %s64
    %s67 = sphi 0, %s66
    %s81 = sphi 0, %s67
    %s87 = sphi 0, %s89
    %s90 = sphi 0, %s87
    %s91 = sphi 0, %s90
    %s107 = sphi 0, %s91
  $region4: #{vision_feature_extractor.4} parent=0 // loop_header_branch
    %12 = sbr.rel (%p10) target = $region8
  $region5: #{vision_feature_extractor.4} parent=0 // loop_body
    %s14 = ssub.s32 %s9, 1
    %s15 = ssub.s32 %s9, 2
    %s16 = sadd.s32 %s9, 1
    %s17 = ssub.s32 %s9, %s16
    %p18 = scmp.eq.s32.totalorder %s17, 0
    %s20 = sadd.s32 %s19, 1
    %s21 = scalar_select %p18, %s19, %s20
    %p24 = pneg %p18
    %p25 = scmp.eq.s32.totalorder %s9, 1
    %p26 = por %p24, %p25
    %p27 = scmp.ne.s32.totalorder %s19, %s22
    %p28 = scmp.eq.s32.totalorder %s9, 0
    %p29 = por %p27, %p28
    %p30 = scmp.ne.s32.totalorder %s19, %s22
    %p31 = scmp.eq.s32.totalorder %s14, 1
    %p32 = por %p30, %p31
    %p33 = scmp.ne.s32.totalorder %s22, %s23
    %p34 = scmp.eq.s32.totalorder %s14, 0
    %p35 = por %p33, %p34
    %p36 = scmp.ne.s32.totalorder %s22, %s23
    %p37 = scmp.eq.s32.totalorder %s15, 1
    %p38 = por %p36, %p37
    %p40 = scmp.ne.s32.totalorder %s23, %s39
    %p41 = scmp.eq.s32.totalorder %s15, 0
    %p42 = por %p40, %p41
    %s44 = sadd.s32 %s43, 1
    %p47 = scmp.eq.s32.totalorder %s9, 1
    %p48 = scmp.ne.s32.totalorder %s43, %s45
    %p49 = scmp.eq.s32.totalorder %s9, 0
    %p50 = por %p48, %p49
    %p51 = scmp.ne.s32.totalorder %s43, %s45
    %p52 = scmp.eq.s32.totalorder %s14, 1
    %p53 = por %p51, %p52
    %p54 = scmp.ne.s32.totalorder %s45, %s46
    %p55 = scmp.eq.s32.totalorder %s14, 0
    %p56 = por %p54, %p55
    %p57 = scmp.ne.s32.totalorder %s45, %s46
    %p58 = scmp.eq.s32.totalorder %s15, 1
    %p59 = por %p57, %p58
    %p61 = scmp.ne.s32.totalorder %s46, %s60
    %p62 = scmp.eq.s32.totalorder %s15, 0
    %p63 = por %p61, %p62
    %s65 = sadd.s32 %s64, 1
    %p68 = scmp.eq.s32.totalorder %s9, 1
    %p69 = scmp.ne.s32.totalorder %s64, %s66
    %p70 = scmp.eq.s32.totalorder %s9, 0
    %p71 = por %p69, %p70
    %p72 = scmp.ne.s32.totalorder %s64, %s66
    %p73 = scmp.eq.s32.totalorder %s14, 1
    %p74 = por %p72, %p73
    %p75 = scmp.ne.s32.totalorder %s66, %s67
    %p76 = scmp.eq.s32.totalorder %s14, 0
    %p77 = por %p75, %p76
    %p78 = scmp.ne.s32.totalorder %s66, %s67
    %p79 = scmp.eq.s32.totalorder %s15, 1
    %p80 = por %p78, %p79
    %p82 = scmp.ne.s32.totalorder %s67, %s81
    %p83 = scmp.eq.s32.totalorder %s15, 0
    %p84 = por %p82, %p83
    %s85 = ssub.s32 %s9, %s16
    %p86 = scmp.eq.s32.totalorder %s85, 0
    %s88 = sadd.s32 %s87, 1
    %s89 = scalar_select %p86, %s87, %s88
    %p92 = pneg %p86
    %p93 = scmp.eq.s32.totalorder %s9, 1
    %p94 = por %p92, %p93
    %p95 = scmp.ne.s32.totalorder %s87, %s90
    %p96 = scmp.eq.s32.totalorder %s9, 0
    %p97 = por %p95, %p96
    %p98 = scmp.ne.s32.totalorder %s87, %s90
    %p99 = scmp.eq.s32.totalorder %s14, 1
    %p100 = por %p98, %p99
    %p101 = scmp.ne.s32.totalorder %s90, %s91
    %p102 = scmp.eq.s32.totalorder %s14, 0
    %p103 = por %p101, %p102
    %p104 = scmp.ne.s32.totalorder %s90, %s91
    %p105 = scmp.eq.s32.totalorder %s15, 1
    %p106 = por %p104, %p105
    %p108 = scmp.ne.s32.totalorder %s91, %s107
    %p109 = scmp.eq.s32.totalorder %s15, 0
    %p110 = por %p108, %p109
    %p111 = scmp.le.s32.totalorder 1, %s9
    %p112 = scmp.lt.s32.totalorder %s9, 3
    %p113 = pnand %p111, %p112
    %p114 = pneg %p113
    // Predicated region
    $region9: #{vision_feature_extractor.4} parent=5 // pred_check
      _
    $region10: #{vision_feature_extractor.4} parent=5 // pred_check_branch
      %116 = sbr.rel (%p113) target = $region12
    $region11: #{vision_feature_extractor.4} parent=5 // pred_region
      %s117 = ssub.s32 %s9, 1
      // Predicated region
      $region13: #{vision_feature_extractor.4} parent=11 // pred_check
        %p118 = pneg %p56
      $region14: #{vision_feature_extractor.4} parent=11 // pred_check_branch
        %120 = sbr.rel (%p118) target = $region16
      $region15: #{vision_feature_extractor.4} parent=11 // pred_region
        _
      $region16: #{vision_feature_extractor.4} parent=11 // pred_fallthru
        _
      // Predicated region
      $region17: #{vision_feature_extractor.4} parent=11 // pred_check
        %p121 = pneg %p77
      $region18: #{vision_feature_extractor.4} parent=11 // pred_check_branch
        %123 = sbr.rel (%p121) target = $region20
      $region19: #{vision_feature_extractor.4} parent=11 // pred_region
        _
      $region20: #{vision_feature_extractor.4} parent=11 // pred_fallthru
        _
    $region12: #{vision_feature_extractor.4} parent=5 // pred_fallthru
      _
    %p124 = scmp.lt.s32.totalorder %s9, 2
    // Predicated region
    $region21: #{vision_feature_extractor.4} parent=5 // pred_check
      %p125 = pneg %p124
    $region22: #{vision_feature_extractor.4} parent=5 // pred_check_branch
      %127 = sbr.rel (%p125) target = $region24
    $region23: #{vision_feature_extractor.4} parent=5 // pred_region
      // Predicated region
      $region25: #{vision_feature_extractor.4} parent=23 // pred_check
        %p128 = pneg %p29
      $region26: #{vision_feature_extractor.4} parent=23 // pred_check_branch
        %130 = sbr.rel (%p128) target = $region28
      $region27: #{vision_feature_extractor.4} parent=23 // pred_region
        %p131 = scmp.lt.s32.totalorder %s9, 1
        %s132 = scalar_select %p131, %s9, 1
        %s133 = smul.addr %s132, 63
        %s134 = smul.addr %s133, 4
        %s135 = scalar_lea.vmem %s0, %s134
      $region28: #{vision_feature_extractor.4} parent=23 // pred_fallthru
        _
    $region24: #{vision_feature_extractor.4} parent=5 // pred_fallthru
      _
    %p136 = scmp.le.s32.totalorder 1, %s9
    %p137 = scmp.lt.s32.totalorder %s9, 3
    %p138 = pnand %p136, %p137
    %p139 = pneg %p138
    // Predicated region
    $region29: #{vision_feature_extractor.4} parent=5 // pred_check
      _
    $region30: #{vision_feature_extractor.4} parent=5 // pred_check_branch
      %141 = sbr.rel (%p138) target = $region32
    $region31: #{vision_feature_extractor.4} parent=5 // pred_region
      %s142 = ssub.s32 %s9, 1
      %p143 = scmp.lt.s32.totalorder %s14, 1
      %s144 = scalar_select %p143, %s14, 1
      %s145 = smul.addr %s144, 63
      %s146 = smul.addr %s145, 4
      %s147 = scalar_lea.vmem %s0, %s146
      %p148 = pneg %p35
      %p149 = pneg %p32
      %p150 = pneg %p56
      %p151 = pneg %p53
      %p152 = pneg %p77
      %p153 = pneg %p74
      %p154 = pneg %p103
      %p155 = pneg %p100
      %p156 = scmp.lt.s32.totalorder %s14, 1
      %s157 = scalar_select %p156, %s14, 1
      %s158 = smul.addr %s157, 21
      %s159 = smul.addr %s158, 4
      %s160 = scalar_lea.vmem %s3, %s159
      %p161 = scmp.lt.s32.totalorder %s14, 1
      %s162 = scalar_select %p161, %s14, 1
      %s163 = smul.addr %s162, 63
      %s164 = smul.addr %s163, 4
      %s165 = scalar_lea.vmem %s0, %s164
      %p166 = scmp.lt.s32.totalorder %s14, 1
      %s167 = scalar_select %p166, %s14, 1
      %s168 = smul.addr %s167, 21
      %s169 = smul.addr %s168, 4
      %s170 = scalar_lea.vmem %s3, %s169
      %v172 = vld [vmem:[%s165] sm:$0xff]
      %v173 = vld [vmem:[%s165 + $0x8] sm:$0xf]
      %v174 = vld [vmem:[%s165 + $0xc] sm:$0xff]
      %v175 = vld [vmem:[%s165 + $0x14] sm:$0xf]
      %v176 = vld [vmem:[%s165 + $0x18] sm:$0xff]
      %v177 = vld [vmem:[%s165 + $0x20] sm:$0xf]
      %v178 = vld [vmem:[%s165 + $0x24] sm:$0xff]
      %v179 = vld [vmem:[%s165 + $0x2c] sm:$0xf]
      %v180 = vld [vmem:[%s165 + $0x30] sm:$0xff]
      %v181 = vld [vmem:[%s165 + $0x38] sm:$0xf]
      %v182 = vld [vmem:[%s165 + $0x3c] sm:$0xff]
      %v183 = vld [vmem:[%s165 + $0x44] sm:$0xf]
      %v184 = vld [vmem:[%s165 + $0x48] sm:$0xff]
      %v185 = vld [vmem:[%s165 + $0x50] sm:$0xf]
      %v186 = vld [vmem:[%s165 + $0x54] sm:$0xff]
      %v187 = vld [vmem:[%s165 + $0x5c] sm:$0xf]
      %v188 = vld [vmem:[%s165 + $0x60] sm:$0xff]
      %v189 = vld [vmem:[%s165 + $0x68] sm:$0xf]
      %v190 = vld [vmem:[%s165 + $0x6c] sm:$0xff]
      %v191 = vld [vmem:[%s165 + $0x74] sm:$0xf]
      %v192 = vld [vmem:[%s165 + $0x78] sm:$0xff]
      %v193 = vld [vmem:[%s165 + $0x80] sm:$0xf]
      %v194 = vld [vmem:[%s165 + $0x84] sm:$0xff]
      %v195 = vld [vmem:[%s165 + $0x8c] sm:$0xf]
      %v196 = vld [vmem:[%s165 + $0x90] sm:$0xff]
      %v197 = vld [vmem:[%s165 + $0x98] sm:$0xf]
      %v198 = vld [vmem:[%s165 + $0x9c] sm:$0xff]
      %v199 = vld [vmem:[%s165 + $0xa4] sm:$0xf]
      %v200 = vld [vmem:[%s165 + $0xa8] sm:$0xff]
      %v201 = vld [vmem:[%s165 + $0xb0] sm:$0xf]
      %v202 = vld [vmem:[%s165 + $0xb4] sm:$0xff]
      %v203 = vld [vmem:[%s165 + $0xbc] sm:$0xf]
      %v204 = vld [vmem:[%s165 + $0xc0] sm:$0xff]
      %v205 = vld [vmem:[%s165 + $0xc8] sm:$0xf]
      %v206 = vld [vmem:[%s165 + $0xcc] sm:$0xff]
      %v207 = vld [vmem:[%s165 + $0xd4] sm:$0xf]
      %v208 = vld [vmem:[%s165 + $0xd8] sm:$0xff]
      %v209 = vld [vmem:[%s165 + $0xe0] sm:$0xf]
      %v210 = vld [vmem:[%s165 + $0xe4] sm:$0xff]
      %v211 = vld [vmem:[%s165 + $0xec] sm:$0xf]
      %v212 = vld [vmem:[%s165 + $0xf0] sm:$0x11]
      %v213 = vld [vmem:[%s165 + $0xf8] sm:$0x1]
      %v214 = vld [vmem:[%s1] sm:$0xf]
      %v215 = vld [vmem:[%s1 + $0x4] sm:$0xf]
      %v216 = vld [vmem:[%s1 + $0x8] sm:$0xf]
      %v217 = vld [vmem:[%s1 + $0xc] sm:$0xf]
      %v218 = vld [vmem:[%s1 + $0x10] sm:$0xf]
      %v219 = vld [vmem:[%s1 + $0x14] sm:$0xf]
      %v220 = vld [vmem:[%s1 + $0x18] sm:$0xf]
      %v221 = vld [vmem:[%s1 + $0x1c] sm:$0xf]
      %v222 = vld [vmem:[%s1 + $0x20] sm:$0xf]
      %v223 = vld [vmem:[%s1 + $0x24] sm:$0xf]
      %v224 = vld [vmem:[%s1 + $0x28] sm:$0xf]
      %v225 = vld [vmem:[%s1 + $0x2c] sm:$0xf]
      %v226 = vld [vmem:[%s1 + $0x30] sm:$0xf]
      %v227 = vld [vmem:[%s1 + $0x34] sm:$0xf]
      %v228 = vld [vmem:[%s1 + $0x38] sm:$0xf]
      %v229 = vld [vmem:[%s1 + $0x3c] sm:$0xf]
      %v230 = vld [vmem:[%s1 + $0x40] sm:$0xf]
      %v231 = vld [vmem:[%s1 + $0x44] sm:$0xf]
      %v232 = vld [vmem:[%s1 + $0x48] sm:$0xf]
      %v233 = vld [vmem:[%s1 + $0x4c] sm:$0xf]
      %v234 = vld [vmem:[%s1 + $0x50] sm:$0xf]
      %v235 = vld [vmem:[%s1 + $0x54] sm:$0xf]
      %v236 = vld [vmem:[%s1 + $0x58] sm:$0xf]
      %v237 = vld [vmem:[%s1 + $0x5c] sm:$0xf]
      %v238 = vld [vmem:[%s1 + $0x60] sm:$0xf]
      %v239 = vld [vmem:[%s1 + $0x64] sm:$0xf]
      %v240 = vld [vmem:[%s1 + $0x68] sm:$0xf]
      %v241 = vld [vmem:[%s1 + $0x6c] sm:$0xf]
      %v242 = vld [vmem:[%s1 + $0x70] sm:$0xf]
      %v243 = vld [vmem:[%s1 + $0x74] sm:$0xf]
      %v244 = vld [vmem:[%s1 + $0x78] sm:$0xf]
      %v245 = vld [vmem:[%s1 + $0x7c] sm:$0xf]
      %v246 = vld [vmem:[%s1 + $0x80] sm:$0xf]
      %v247 = vld [vmem:[%s1 + $0x84] sm:$0xf]
      %v248 = vld [vmem:[%s1 + $0x88] sm:$0xf]
      %v249 = vld [vmem:[%s1 + $0x8c] sm:$0xf]
      %v250 = vld [vmem:[%s1 + $0x90] sm:$0xf]
      %v251 = vld [vmem:[%s1 + $0x94] sm:$0xf]
      %v252 = vld [vmem:[%s1 + $0x98] sm:$0xf]
      %v253 = vld [vmem:[%s1 + $0x9c] sm:$0xf]
      %v254 = vld [vmem:[%s1 + $0xa0] sm:$0xf]
      %v255 = vld [vmem:[%s1 + $0xa4] sm:$0xf]
      %v256 = vld [vmem:[%s1 + $0xa8] sm:$0xf]
      %v257 = vld [vmem:[%s1 + $0xac] sm:$0xf]
      %v258 = vld [vmem:[%s1 + $0xb0] sm:$0xf]
      %v259 = vld [vmem:[%s1 + $0xb4] sm:$0xf]
      %v260 = vld [vmem:[%s1 + $0xb8] sm:$0xf]
      %v261 = vld [vmem:[%s1 + $0xbc] sm:$0xf]
      %v262 = vld [vmem:[%s2] sm:$0x1]
      %v264 = vlaneseq
      %v265 = vshrl.u32 %v264, 7
      %v266 = vsub.s32 0, %v265
      %v267 = vrot.slane %v262, %v266
      %v311 = vunpack.c.l.b16 %v172
      %v312 = vunpack.c.h.b16 %v172
      %v313 = vunpack.c.l.b16 %v173
      %v314 = vunpack.c.l.b16 %v174
      %v315 = vunpack.c.h.b16 %v174
      %v316 = vunpack.c.l.b16 %v175
      %v317 = vunpack.c.l.b16 %v176
      %v318 = vunpack.c.h.b16 %v176
      %v319 = vunpack.c.l.b16 %v177
      %v320 = vunpack.c.l.b16 %v178
      %v321 = vunpack.c.h.b16 %v178
      %v322 = vunpack.c.l.b16 %v179
      %v323 = vunpack.c.l.b16 %v180
      %v324 = vunpack.c.h.b16 %v180
      %v325 = vunpack.c.l.b16 %v181
      %v326 = vunpack.c.l.b16 %v182
      %v327 = vunpack.c.h.b16 %v182
      %v328 = vunpack.c.l.b16 %v183
      %v329 = vunpack.c.l.b16 %v184
      %v330 = vunpack.c.h.b16 %v184
      %v331 = vunpack.c.l.b16 %v185
      %v332 = vunpack.c.l.b16 %v186
      %v333 = vunpack.c.h.b16 %v186
      %v334 = vunpack.c.l.b16 %v187
      %v335 = vunpack.c.l.b16 %v188
      %v336 = vunpack.c.h.b16 %v188
      %v337 = vunpack.c.l.b16 %v189
      %v338 = vunpack.c.l.b16 %v190
      %v339 = vunpack.c.h.b16 %v190
      %v340 = vunpack.c.l.b16 %v191
      %v341 = vunpack.c.l.b16 %v192
      %v342 = vunpack.c.h.b16 %v192
      %v343 = vunpack.c.l.b16 %v193
      %v344 = vunpack.c.l.b16 %v194
      %v345 = vunpack.c.h.b16 %v194
      %v346 = vunpack.c.l.b16 %v195
      %v347 = vunpack.c.l.b16 %v196
      %v348 = vunpack.c.h.b16 %v196
      %v349 = vunpack.c.l.b16 %v197
      %v350 = vunpack.c.l.b16 %v198
      %v351 = vunpack.c.h.b16 %v198
      %v352 = vunpack.c.l.b16 %v199
      %v353 = vunpack.c.l.b16 %v200
      %v354 = vunpack.c.h.b16 %v200
      %v355 = vunpack.c.l.b16 %v201
      %v356 = vunpack.c.l.b16 %v202
      %v357 = vunpack.c.h.b16 %v202
      %v358 = vunpack.c.l.b16 %v203
      %v359 = vunpack.c.l.b16 %v204
      %v360 = vunpack.c.h.b16 %v204
      %v361 = vunpack.c.l.b16 %v205
      %v362 = vunpack.c.l.b16 %v206
      %v363 = vunpack.c.h.b16 %v206
      %v364 = vunpack.c.l.b16 %v207
      %v365 = vunpack.c.l.b16 %v208
      %v366 = vunpack.c.h.b16 %v208
      %v367 = vunpack.c.l.b16 %v209
      %v368 = vunpack.c.l.b16 %v210
      %v369 = vunpack.c.h.b16 %v210
      %v370 = vunpack.c.l.b16 %v211
      %v371 = vunpack.c.l.b16 %v212
      %v372 = vunpack.c.h.b16 %v212
      %v373 = vunpack.c.l.b16 %v213
      %v374 = vpack.c.b16 %v314, %v311
      %v375 = vpack.c.b16 %v315, %v312
      %v376 = vpack.c.b16 %v316, %v313
      %v377 = vpack.c.b16 %v320, %v317
      %v378 = vpack.c.b16 %v321, %v318
      %v379 = vpack.c.b16 %v322, %v319
      %v380 = vpack.c.b16 %v326, %v323
      %v381 = vpack.c.b16 %v327, %v324
      %v382 = vpack.c.b16 %v328, %v325
      %v383 = vpack.c.b16 %v332, %v329
      %v384 = vpack.c.b16 %v333, %v330
      %v385 = vpack.c.b16 %v334, %v331
      %v386 = vpack.c.b16 %v338, %v335
      %v387 = vpack.c.b16 %v339, %v336
      %v388 = vpack.c.b16 %v340, %v337
      %v389 = vpack.c.b16 %v344, %v341
      %v390 = vpack.c.b16 %v345, %v342
      %v391 = vpack.c.b16 %v346, %v343
      %v392 = vpack.c.b16 %v350, %v347
      %v393 = vpack.c.b16 %v351, %v348
      %v394 = vpack.c.b16 %v352, %v349
      %v395 = vpack.c.b16 %v356, %v353
      %v396 = vpack.c.b16 %v357, %v354
      %v397 = vpack.c.b16 %v358, %v355
      %v398 = vpack.c.b16 %v362, %v359
      %v399 = vpack.c.b16 %v363, %v360
      %v400 = vpack.c.b16 %v364, %v361
      %v401 = vpack.c.b16 %v368, %v365
      %v402 = vpack.c.b16 %v369, %v366
      %v403 = vpack.c.b16 %v370, %v367
      %v404 = vpack.c.b16 %v371, %v371
      %v405 = vpack.c.b16 %v372, %v372
      %v406 = vpack.c.b16 %v373, %v373
      %v488 = vunpack.c.l.b16 %v214
      %v489 = vunpack.c.l.b16 %v215
      %v490 = vunpack.c.l.b16 %v216
      %v491 = vunpack.c.l.b16 %v217
      %v492 = vunpack.c.l.b16 %v218
      %v493 = vunpack.c.l.b16 %v219
      %v494 = vunpack.c.l.b16 %v220
      %v495 = vunpack.c.l.b16 %v221
      %v496 = vunpack.c.l.b16 %v222
      %v497 = vunpack.c.l.b16 %v223
      %v498 = vunpack.c.l.b16 %v224
      %v499 = vunpack.c.l.b16 %v225
      %v500 = vunpack.c.l.b16 %v226
      %v501 = vunpack.c.l.b16 %v227
      %v502 = vunpack.c.l.b16 %v228
      %v503 = vunpack.c.l.b16 %v229
      %v504 = vunpack.c.l.b16 %v230
      %v505 = vunpack.c.l.b16 %v231
      %v506 = vunpack.c.l.b16 %v232
      %v507 = vunpack.c.l.b16 %v233
      %v508 = vunpack.c.l.b16 %v234
      %v509 = vunpack.c.l.b16 %v235
      %v510 = vunpack.c.l.b16 %v236
      %v511 = vunpack.c.l.b16 %v237
      %v512 = vunpack.c.l.b16 %v238
      %v513 = vunpack.c.l.b16 %v239
      %v514 = vunpack.c.l.b16 %v240
      %v515 = vunpack.c.l.b16 %v241
      %v516 = vunpack.c.l.b16 %v242
      %v517 = vunpack.c.l.b16 %v243
      %v518 = vunpack.c.l.b16 %v244
      %v519 = vunpack.c.l.b16 %v245
      %v520 = vunpack.c.l.b16 %v246
      %v521 = vunpack.c.l.b16 %v247
      %v522 = vunpack.c.l.b16 %v248
      %v523 = vunpack.c.l.b16 %v249
      %v524 = vunpack.c.l.b16 %v250
      %v525 = vunpack.c.l.b16 %v251
      %v526 = vunpack.c.l.b16 %v252
      %v527 = vunpack.c.l.b16 %v253
      %v528 = vunpack.c.l.b16 %v254
      %v529 = vunpack.c.l.b16 %v255
      %v530 = vunpack.c.l.b16 %v256
      %v531 = vunpack.c.l.b16 %v257
      %v532 = vunpack.c.l.b16 %v258
      %v533 = vunpack.c.l.b16 %v259
      %v534 = vunpack.c.l.b16 %v260
      %v535 = vunpack.c.l.b16 %v261
      %v536 = vpack.c.b16 %v489, %v488
      %v537 = vpack.c.b16 %v491, %v490
      %v538 = vpack.c.b16 %v493, %v492
      %v539 = vpack.c.b16 %v495, %v494
      %v540 = vpack.c.b16 %v497, %v496
      %v541 = vpack.c.b16 %v499, %v498
      %v542 = vpack.c.b16 %v501, %v500
      %v543 = vpack.c.b16 %v503, %v502
      %v544 = vpack.c.b16 %v505, %v504
      %v545 = vpack.c.b16 %v507, %v506
      %v546 = vpack.c.b16 %v509, %v508
      %v547 = vpack.c.b16 %v511, %v510
      %v548 = vpack.c.b16 %v513, %v512
      %v549 = vpack.c.b16 %v515, %v514
      %v550 = vpack.c.b16 %v517, %v516
      %v551 = vpack.c.b16 %v519, %v518
      %v552 = vpack.c.b16 %v521, %v520
      %v553 = vpack.c.b16 %v523, %v522
      %v554 = vpack.c.b16 %v525, %v524
      %v555 = vpack.c.b16 %v527, %v526
      %v556 = vpack.c.b16 %v529, %v528
      %v557 = vpack.c.b16 %v531, %v530
      %v558 = vpack.c.b16 %v533, %v532
      %v559 = vpack.c.b16 %v535, %v534
      %584 = vmatprep.subr.bf16.mxu0 0
      %585 = vmatpush1.bf16.msra.mxu0 %v536
      %586 = vmatprep.subr.bf16.mxu0 0
      %587 = vmatpush1.bf16.msra.mxu0 %v537
      %588 = vmatprep.subr.bf16.mxu0 0
      %589 = vmatpush1.bf16.msra.mxu0 %v538
      %590 = vmatprep.subr.bf16.mxu0 0
      %591 = vmatpush1.bf16.msra.mxu0 %v539
      %592 = vmatprep.subr.bf16.mxu0 0
      %593 = vmatpush1.bf16.msra.mxu0 %v540
      %594 = vmatprep.subr.bf16.mxu0 0
      %595 = vmatpush1.bf16.msra.mxu0 %v541
      %596 = vmatprep.subr.bf16.mxu0 0
      %597 = vmatpush1.bf16.msra.mxu0 %v542
      %598 = vmatprep.subr.bf16.mxu0 0
      %599 = vmatpush1.bf16.msra.mxu0 %v543
      %600 = vmatprep.subr.bf16.mxu0 0
      %601 = vmatpush1.bf16.msra.mxu0 %v544
      %602 = vmatprep.subr.bf16.mxu0 0
      %603 = vmatpush1.bf16.msra.mxu0 %v545
      %604 = vmatprep.subr.bf16.mxu0 0
      %605 = vmatpush1.bf16.msra.mxu0 %v546
      %606 = vmatprep.subr.bf16.mxu0 0
      %607 = vmatpush1.bf16.msra.mxu0 %v547
      %608 = vmatprep.subr.bf16.mxu0 0
      %609 = vmatpush1.bf16.msra.mxu0 %v548
      %610 = vmatprep.subr.bf16.mxu0 0
      %611 = vmatpush1.bf16.msra.mxu0 %v549
      %612 = vmatprep.subr.bf16.mxu0 0
      %613 = vmatpush1.bf16.msra.mxu0 %v550
      %614 = vmatprep.subr.bf16.mxu0 0
      %615 = vmatpush1.bf16.msra.mxu0 %v551
      %616 = vmatprep.mubr.bf16.mxu0 %v375
      %617 = vmatmul.mubr.bf16.gmra.mrb[0].mxu0 %v374
      %v618 = vpop.f32.mrb[0].mxu0
      %v619 = vadd.f32 %v267, %v618
      %v620 = vpop.f32.mrb[0].mxu0
      %v621 = vpop.f32.mrb[0].mxu0
      %v622 = vadd.f32 %v267, %v621
      %v623 = vpop.f32.mrb[0].mxu0
      %624 = vmatprep.mubr.bf16.mxu0 %v378
      %625 = vmatmul.mubr.bf16.gmra.mrb[0].mxu0 %v377
      %v626 = vpop.f32.mrb[0].mxu0
      %v627 = vadd.f32 %v267, %v626
      %v628 = vpop.f32.mrb[0].mxu0
      %v629 = vpop.f32.mrb[0].mxu0
      %v630 = vadd.f32 %v267, %v629
      %v631 = vpop.f32.mrb[0].mxu0
      %632 = vmatprep.mubr.bf16.mxu0 %v381
      %633 = vmatmul.mubr.bf16.gmra.mrb[0].mxu0 %v380
      %v634 = vpop.f32.mrb[0].mxu0
      %v635 = vadd.f32 %v267, %v634
      %v636 = vpop.f32.mrb[0].mxu0
      %v637 = vpop.f32.mrb[0].mxu0
      %v638 = vadd.f32 %v267, %v637
      %v639 = vpop.f32.mrb[0].mxu0
      %640 = vmatprep.mubr.bf16.mxu0 %v384
      %641 = vmatmul.mubr.bf16.gmra.mrb[0].mxu0 %v383
      %v642 = vpop.f32.mrb[0].mxu0
      %v643 = vadd.f32 %v267, %v642
      %v644 = vpop.f32.mrb[0].mxu0
      %v645 = vpop.f32.mrb[0].mxu0
      %v646 = vadd.f32 %v267, %v645
      %v647 = vpop.f32.mrb[0].mxu0
      %648 = vmatprep.mubr.bf16.mxu0 %v387
      %649 = vmatmul.mubr.bf16.gmra.mrb[0].mxu0 %v386
      %v650 = vpop.f32.mrb[0].mxu0
      %v651 = vadd.f32 %v267, %v650
      %v652 = vpop.f32.mrb[0].mxu0
      %v653 = vpop.f32.mrb[0].mxu0
      %v654 = vadd.f32 %v267, %v653
      %v655 = vpop.f32.mrb[0].mxu0
      %656 = vmatprep.mubr.bf16.mxu0 %v390
      %657 = vmatmul.mubr.bf16.gmra.mrb[0].mxu0 %v389
      %v658 = vpop.f32.mrb[0].mxu0
      %v659 = vadd.f32 %v267, %v658
      %v660 = vpop.f32.mrb[0].mxu0
      %v661 = vpop.f32.mrb[0].mxu0
      %v662 = vadd.f32 %v267, %v661
      %v663 = vpop.f32.mrb[0].mxu0
      %664 = vmatprep.mubr.bf16.mxu0 %v393
      %665 = vmatmul.mubr.bf16.gmra.mrb[0].mxu0 %v392
      %v666 = vpop.f32.mrb[0].mxu0
      %v667 = vadd.f32 %v267, %v666
      %v668 = vpop.f32.mrb[0].mxu0
      %v669 = vpop.f32.mrb[0].mxu0
      %v670 = vadd.f32 %v267, %v669
      %v671 = vpop.f32.mrb[0].mxu0
      %672 = vmatprep.mubr.bf16.mxu0 %v396
      %673 = vmatmul.mubr.bf16.gmra.mrb[0].mxu0 %v395
      %v674 = vpop.f32.mrb[0].mxu0
      %v675 = vadd.f32 %v267, %v674
      %v676 = vpop.f32.mrb[0].mxu0
      %v677 = vpop.f32.mrb[0].mxu0
      %v678 = vadd.f32 %v267, %v677
      %v679 = vpop.f32.mrb[0].mxu0
      %680 = vmatprep.mubr.bf16.mxu0 %v399
      %681 = vmatmul.mubr.bf16.gmra.mrb[0].mxu0 %v398
      %v682 = vpop.f32.mrb[0].mxu0
      %v683 = vadd.f32 %v267, %v682
      %v684 = vpop.f32.mrb[0].mxu0
      %v685 = vpop.f32.mrb[0].mxu0
      %v686 = vadd.f32 %v267, %v685
      %v687 = vpop.f32.mrb[0].mxu0
      %688 = vmatprep.mubr.bf16.mxu0 %v402
      %689 = vmatmul.mubr.bf16.gmra.mrb[0].mxu0 %v401
      %v690 = vpop.f32.mrb[0].mxu0
      %v691 = vadd.f32 %v267, %v690
      %v692 = vpop.f32.mrb[0].mxu0
      %v693 = vpop.f32.mrb[0].mxu0
      %v694 = vadd.f32 %v267, %v693
      %v695 = vpop.f32.mrb[0].mxu0
      %696 = vmatprep.mubr.bf16.mxu0 %v405
      %697 = vmatmul.mubr.bf16.gmra.mrb[0].mxu0 %v404
      %v698 = vpop.f32.mrb[0].mxu0
      %v699 = vadd.f32 %v267, %v698
      %v700 = vpop.f32.mrb[0].mxu0
      %v701 = vpop.f32.mrb[0].mxu0
      %v702 = vpop.f32.mrb[0].mxu0
      %703 = vdwg.mxu0
      %704 = vmatprep.subr.bf16.mxu0 0
      %705 = vmatpush1.bf16.msra.mxu0 %v552
      %706 = vmatprep.subr.bf16.mxu0 0
      %707 = vmatpush1.bf16.msra.mxu0 %v553
      %708 = vmatprep.subr.bf16.mxu0 0
      %709 = vmatpush1.bf16.msra.mxu0 %v554
      %710 = vmatprep.subr.bf16.mxu0 0
      %711 = vmatpush1.bf16.msra.mxu0 %v555
      %712 = vmatprep.subr.bf16.mxu0 0
      %713 = vmatpush1.bf16.msra.mxu0 %v556
      %714 = vmatprep.subr.bf16.mxu0 0
      %715 = vmatpush1.bf16.msra.mxu0 %v557
      %716 = vmatprep.subr.bf16.mxu0 0
      %717 = vmatpush1.bf16.msra.mxu0 %v558
      %718 = vmatprep.subr.bf16.mxu0 0
      %719 = vmatpush1.bf16.msra.mxu0 %v559
      %720 = vmatprep.subr.bf16.mxu0 0
      %721 = vmatpush1.bf16.msra.mxu0 0
      %722 = vmatprep.subr.bf16.mxu0 0
      %723 = vmatpush1.bf16.msra.mxu0 0
      %724 = vmatprep.subr.bf16.mxu0 0
      %725 = vmatpush1.bf16.msra.mxu0 0
      %726 = vmatprep.subr.bf16.mxu0 0
      %727 = vmatpush1.bf16.msra.mxu0 0
      %728 = vmatprep.subr.bf16.mxu0 0
      %729 = vmatpush1.bf16.msra.mxu0 0
      %730 = vmatprep.subr.bf16.mxu0 0
      %731 = vmatpush1.bf16.msra.mxu0 0
      %732 = vmatprep.subr.bf16.mxu0 0
      %733 = vmatpush1.bf16.msra.mxu0 0
      %734 = vmatprep.subr.bf16.mxu0 0
      %735 = vmatpush1.bf16.msra.mxu0 0
      %736 = vmatprep.mubr.bf16.mxu0 0
      %737 = vmatmul.mubr.bf16.gmra.mrb[0].mxu0 %v376
      %v738 = vpop.f32.mrb[0].mxu0
      %v739 = vadd.f32 %v619, %v738
      %v740 = vpop.f32.mrb[0].mxu0
      %v741 = vpop.f32.mrb[0].mxu0
      %v742 = vadd.f32 %v622, %v741
      %v743 = vpop.f32.mrb[0].mxu0
      %744 = vmatprep.mubr.bf16.mxu0 0
      %745 = vmatmul.mubr.bf16.gmra.mrb[0].mxu0 %v379
      %v746 = vpop.f32.mrb[0].mxu0
      %v747 = vadd.f32 %v627, %v746
      %v748 = vpop.f32.mrb[0].mxu0
      %v749 = vpop.f32.mrb[0].mxu0
      %v750 = vadd.f32 %v630, %v749
      %v751 = vpop.f32.mrb[0].mxu0
      %752 = vmatprep.mubr.bf16.mxu0 0
      %753 = vmatmul.mubr.bf16.gmra.mrb[0].mxu0 %v382
      %v754 = vpop.f32.mrb[0].mxu0
      %v755 = vadd.f32 %v635, %v754
      %v756 = vpop.f32.mrb[0].mxu0
      %v757 = vpop.f32.mrb[0].mxu0
      %v758 = vadd.f32 %v638, %v757
      %v759 = vpop.f32.mrb[0].mxu0
      %760 = vmatprep.mubr.bf16.mxu0 0
      %761 = vmatmul.mubr.bf16.gmra.mrb[0].mxu0 %v385
      %v762 = vpop.f32.mrb[0].mxu0
      %v763 = vadd.f32 %v643, %v762
      %v764 = vpop.f32.mrb[0].mxu0
      %v765 = vpop.f32.mrb[0].mxu0
      %v766 = vadd.f32 %v646, %v765
      %v767 = vpop.f32.mrb[0].mxu0
      %768 = vmatprep.mubr.bf16.mxu0 0
      %769 = vmatmul.mubr.bf16.gmra.mrb[0].mxu0 %v388
      %v770 = vpop.f32.mrb[0].mxu0
      %v771 = vadd.f32 %v651, %v770
      %v772 = vpop.f32.mrb[0].mxu0
      %v773 = vpop.f32.mrb[0].mxu0
      %v774 = vadd.f32 %v654, %v773
      %v775 = vpop.f32.mrb[0].mxu0
      %776 = vmatprep.mubr.bf16.mxu0 0
      %777 = vmatmul.mubr.bf16.gmra.mrb[0].mxu0 %v391
      %v778 = vpop.f32.mrb[0].mxu0
      %v779 = vadd.f32 %v659, %v778
      %v780 = vpop.f32.mrb[0].mxu0
      %v781 = vpop.f32.mrb[0].mxu0
      %v782 = vadd.f32 %v662, %v781
      %v783 = vpop.f32.mrb[0].mxu0
      %784 = vmatprep.mubr.bf16.mxu0 0
      %785 = vmatmul.mubr.bf16.gmra.mrb[0].mxu0 %v394
      %v786 = vpop.f32.mrb[0].mxu0
      %v787 = vadd.f32 %v667, %v786
      %v788 = vpop.f32.mrb[0].mxu0
      %v789 = vpop.f32.mrb[0].mxu0
      %v790 = vadd.f32 %v670, %v789
      %v791 = vpop.f32.mrb[0].mxu0
      %792 = vmatprep.mubr.bf16.mxu0 0
      %793 = vmatmul.mubr.bf16.gmra.mrb[0].mxu0 %v397
      %v794 = vpop.f32.mrb[0].mxu0
      %v795 = vadd.f32 %v675, %v794
      %v796 = vpop.f32.mrb[0].mxu0
      %v797 = vpop.f32.mrb[0].mxu0
      %v798 = vadd.f32 %v678, %v797
      %v799 = vpop.f32.mrb[0].mxu0
      %800 = vmatprep.mubr.bf16.mxu0 0
      %801 = vmatmul.mubr.bf16.gmra.mrb[0].mxu0 %v400
      %v802 = vpop.f32.mrb[0].mxu0
      %v803 = vadd.f32 %v683, %v802
      %v804 = vpop.f32.mrb[0].mxu0
      %v805 = vpop.f32.mrb[0].mxu0
      %v806 = vadd.f32 %v686, %v805
      %v807 = vpop.f32.mrb[0].mxu0
      %808 = vmatprep.mubr.bf16.mxu0 0
      %809 = vmatmul.mubr.bf16.gmra.mrb[0].mxu0 %v403
      %v810 = vpop.f32.mrb[0].mxu0
      %v811 = vadd.f32 %v691, %v810
      %v812 = vpop.f32.mrb[0].mxu0
      %v813 = vpop.f32.mrb[0].mxu0
      %v814 = vadd.f32 %v694, %v813
      %v815 = vpop.f32.mrb[0].mxu0
      %816 = vmatprep.mubr.bf16.mxu0 0
      %817 = vmatmul.mubr.bf16.gmra.mrb[0].mxu0 %v406
      %v818 = vpop.f32.mrb[0].mxu0
      %v819 = vadd.f32 %v699, %v818
      %v820 = vpop.f32.mrb[0].mxu0
      %v821 = vpop.f32.mrb[0].mxu0
      %v822 = vpop.f32.mrb[0].mxu0
      %823 = vdwg.mxu0
      %v824 = vmax.f32 %v739, 0.0
      %v825 = vmax.f32 %v742, 0.0
      %v826 = vmax.f32 %v747, 0.0
      %v827 = vmax.f32 %v750, 0.0
      %v828 = vmax.f32 %v755, 0.0
      %v829 = vmax.f32 %v758, 0.0
      %v830 = vmax.f32 %v763, 0.0
      %v831 = vmax.f32 %v766, 0.0
      %v832 = vmax.f32 %v771, 0.0
      %v833 = vmax.f32 %v774, 0.0
      %v834 = vmax.f32 %v779, 0.0
      %v835 = vmax.f32 %v782, 0.0
      %v836 = vmax.f32 %v787, 0.0
      %v837 = vmax.f32 %v790, 0.0
      %v838 = vmax.f32 %v795, 0.0
      %v839 = vmax.f32 %v798, 0.0
      %v840 = vmax.f32 %v803, 0.0
      %v841 = vmax.f32 %v806, 0.0
      %v842 = vmax.f32 %v811, 0.0
      %v843 = vmax.f32 %v814, 0.0
      %v844 = vmax.f32 %v819, 0.0
      %v845 = vpack.c.bf16 %v825, %v824
      %v846 = vpack.c.bf16 %v827, %v826
      %v847 = vpack.c.bf16 %v829, %v828
      %v848 = vpack.c.bf16 %v831, %v830
      %v849 = vpack.c.bf16 %v833, %v832
      %v850 = vpack.c.bf16 %v835, %v834
      %v851 = vpack.c.bf16 %v837, %v836
      %v852 = vpack.c.bf16 %v839, %v838
      %v853 = vpack.c.bf16 %v841, %v840
      %v854 = vpack.c.bf16 %v843, %v842
      %v855 = vpack.c.bf16 %v844, %v844
      %v867 = vunpack.c.l.b16 %v845
      %v868 = vunpack.c.h.b16 %v845
      %v869 = vunpack.c.l.b16 %v846
      %v870 = vunpack.c.h.b16 %v846
      %v871 = vunpack.c.l.b16 %v847
      %v872 = vunpack.c.h.b16 %v847
      %v873 = vunpack.c.l.b16 %v848
      %v874 = vunpack.c.h.b16 %v848
      %v875 = vunpack.c.l.b16 %v849
      %v876 = vunpack.c.h.b16 %v849
      %v877 = vunpack.c.l.b16 %v850
      %v878 = vunpack.c.h.b16 %v850
      %v879 = vunpack.c.l.b16 %v851
      %v880 = vunpack.c.h.b16 %v851
      %v881 = vunpack.c.l.b16 %v852
      %v882 = vunpack.c.h.b16 %v852
      %v883 = vunpack.c.l.b16 %v853
      %v884 = vunpack.c.h.b16 %v853
      %v885 = vunpack.c.l.b16 %v854
      %v886 = vunpack.c.h.b16 %v854
      %v887 = vunpack.c.l.b16 %v855
      %v888 = vpack.c.b16 %v867, %v867
      %v889 = vpack.c.b16 %v868, %v868
      %v890 = vpack.c.b16 %v869, %v869
      %v891 = vpack.c.b16 %v870, %v870
      %v892 = vpack.c.b16 %v871, %v871
      %v893 = vpack.c.b16 %v872, %v872
      %v894 = vpack.c.b16 %v873, %v873
      %v895 = vpack.c.b16 %v874, %v874
      %v896 = vpack.c.b16 %v875, %v875
      %v897 = vpack.c.b16 %v876, %v876
      %v898 = vpack.c.b16 %v877, %v877
      %v899 = vpack.c.b16 %v878, %v878
      %v900 = vpack.c.b16 %v879, %v879
      %v901 = vpack.c.b16 %v880, %v880
      %v902 = vpack.c.b16 %v881, %v881
      %v903 = vpack.c.b16 %v882, %v882
      %v904 = vpack.c.b16 %v883, %v883
      %v905 = vpack.c.b16 %v884, %v884
      %v906 = vpack.c.b16 %v885, %v885
      %v907 = vpack.c.b16 %v886, %v886
      %v908 = vpack.c.b16 %v887, %v887
      %930 = vst [vmem:[%s170] sm:$0xf] %v888
      %931 = vst [vmem:[%s170 + $0x4] sm:$0xf] %v889
      %932 = vst [vmem:[%s170 + $0x8] sm:$0xf] %v890
      %933 = vst [vmem:[%s170 + $0xc] sm:$0xf] %v891
      %934 = vst [vmem:[%s170 + $0x10] sm:$0xf] %v892
      %935 = vst [vmem:[%s170 + $0x14] sm:$0xf] %v893
      %936 = vst [vmem:[%s170 + $0x18] sm:$0xf] %v894
      %937 = vst [vmem:[%s170 + $0x1c] sm:$0xf] %v895
      %938 = vst [vmem:[%s170 + $0x20] sm:$0xf] %v896
      %939 = vst [vmem:[%s170 + $0x24] sm:$0xf] %v897
      %940 = vst [vmem:[%s170 + $0x28] sm:$0xf] %v898
      %941 = vst [vmem:[%s170 + $0x2c] sm:$0xf] %v899
      %942 = vst [vmem:[%s170 + $0x30] sm:$0xf] %v900
      %943 = vst [vmem:[%s170 + $0x34] sm:$0xf] %v901
      %944 = vst [vmem:[%s170 + $0x38] sm:$0xf] %v902
      %945 = vst [vmem:[%s170 + $0x3c] sm:$0xf] %v903
      %946 = vst [vmem:[%s170 + $0x40] sm:$0xf] %v904
      %947 = vst [vmem:[%s170 + $0x44] sm:$0xf] %v905
      %948 = vst [vmem:[%s170 + $0x48] sm:$0xf] %v906
      %949 = vst [vmem:[%s170 + $0x4c] sm:$0xf] %v907
      %950 = vst [vmem:[%s170 + $0x50] sm:$0x1] %v908
      %p951 = scmp.lt.s32.totalorder %s14, 1
      %s952 = scalar_select %p951, %s14, 1
      %s953 = smul.addr %s952, 21
      %s954 = smul.addr %s953, 4
      %s955 = scalar_lea.vmem %s3, %s954
      // Predicated region
      $region33: #{vision_feature_extractor.4} parent=31 // pred_check
        %p956 = pneg %p100
      $region34: #{vision_feature_extractor.4} parent=31 // pred_check_branch
        %958 = sbr.rel (%p956) target = $region36
      $region35: #{vision_feature_extractor.4} parent=31 // pred_region
        _
      $region36: #{vision_feature_extractor.4} parent=31 // pred_fallthru
        _
    $region32: #{vision_feature_extractor.4} parent=5 // pred_fallthru
      _
    %p959 = scmp.le.s32.totalorder 2, %s9
    // Predicated region
    $region37: #{vision_feature_extractor.4} parent=5 // pred_check
      %p960 = pneg %p959
    $region38: #{vision_feature_extractor.4} parent=5 // pred_check_branch
      %962 = sbr.rel (%p960) target = $region40
    $region39: #{vision_feature_extractor.4} parent=5 // pred_region
      %s963 = ssub.s32 %s9, 2
      // Predicated region
      $region41: #{vision_feature_extractor.4} parent=39 // pred_check
        %p964 = pneg %p106
      $region42: #{vision_feature_extractor.4} parent=39 // pred_check_branch
        %966 = sbr.rel (%p964) target = $region44
      $region43: #{vision_feature_extractor.4} parent=39 // pred_region
        %p967 = scmp.lt.s32.totalorder %s15, 1
        %s968 = scalar_select %p967, %s15, 1
        %s969 = smul.addr %s968, 21
        %s970 = smul.addr %s969, 4
        %s971 = scalar_lea.vmem %s3, %s970
      $region44: #{vision_feature_extractor.4} parent=39 // pred_fallthru
        _
    $region40: #{vision_feature_extractor.4} parent=5 // pred_fallthru
      _
  $region6: #{vision_feature_extractor.4} parent=0 // loop_footer
    %s13 = sadd.s32 1, %s9
  $region7: #{vision_feature_extractor.4} parent=0 // loop_footer_branch
    %8 = sbr.rel target = $region3
  $region8: #{vision_feature_extractor.4} parent=0 // loop_exit
    _

// kernel: vision_feature_extractor.5
$region0: #{vision_feature_extractor.5}
  #allocation0 [shape = 'u32[]', space=smem, size = 0x4, offset = 0x4, fixed_abs, tag = 'smem constant byte address 0x4 - core index']
  #allocation1 [shape = 'u32[144,128]{1,0:T(1,128)}', space=vmem, size = 0x12000, scoped, tag = 'internal scratch']
  %s0 = inlined_call_operand.vmem [shape: bf16[2,20736], index: 0, kind: input, shape index: {}]
  %s1 = inlined_call_operand.vmem [shape: bf16[20736,128], index: 1, kind: input, shape index: {}]
  %s2 = inlined_call_operand.vmem [shape: f32[1,128], index: 2, kind: input, shape index: {}]
  %s3 = inlined_call_operand.vmem [shape: f32[1,128], index: 3, kind: input, shape index: {}]
  %s4 = inlined_call_operand.vmem [shape: f32[1,128], index: 4, kind: input, shape index: {}]
  %s5 = inlined_call_operand.hbm [shape: f32[2,128], index: 5, kind: output, shape index: {}]
  %s6 = sld [smem:[#allocation0]]
  $region61: #{vision_feature_extractor.5} parent=0
    _
  %s8 = ssub.s32 1, %s6
  %s9 = scalar_select 0, %s8, %s6
  $region1: #{vision_feature_extractor.5} parent=0
    #allocation2 [shape = 'u8[1024]{0}', space=vmem, size = 0x400, scoped, tag = 'output window, operand 0, single buffered']
    #allocation3 [shape = 's32[2]{0}', space=sflag, size = 0x8, scoped, tag = 'scoped memory for vision_feature_extractor.5']
    %10 = vsyncpa [#allocation3], 0
    loop: start=0, step=1, limit=5
    $region2: #{vision_feature_extractor.5} parent=1 // loop_pre_header
      _
    $region3: #{vision_feature_extractor.5} parent=1 // loop_header
      %s12 = sphi 0, %s16
      %p13 = scmp.ge.s32.totalorder %s12, 5
      %s22 = sphi 0, %s24
      %s25 = sphi 0, %s22
      %s26 = sphi 0, %s25
      %s42 = sphi 0, %s26
      %s48 = sphi 0, %s50
      %s51 = sphi 0, %s48
      %s52 = sphi 0, %s51
      %s68 = sphi 0, %s52
      %s72 = sphi 0, %s72
      %s74 = sphi 0, %s72
      %s75 = sphi 0, %s74
      %s89 = sphi 0, %s75
      %s93 = sphi 0, %s93
      %s95 = sphi 0, %s93
      %s96 = sphi 0, %s95
      %s110 = sphi 0, %s96
      %s114 = sphi 0, %s114
      %s116 = sphi 0, %s114
      %s117 = sphi 0, %s116
      %s131 = sphi 0, %s117
      %s135 = sphi 0, %s135
      %s137 = sphi 0, %s135
      %s138 = sphi 0, %s137
      %s152 = sphi 0, %s138
    $region4: #{vision_feature_extractor.5} parent=1 // loop_header_branch
      %15 = sbr.rel (%p13) target = $region8
    $region5: #{vision_feature_extractor.5} parent=1 // loop_body
      %s17 = ssub.s32 %s12, 1
      %s18 = ssub.s32 %s12, 2
      %s19 = sadd.s32 %s12, 1
      %s20 = ssub.s32 %s12, %s19
      %p21 = scmp.eq.s32.totalorder %s20, 0
      %s23 = sadd.s32 %s22, 1
      %s24 = scalar_select %p21, %s22, %s23
      %p27 = pneg %p21
      %p28 = scmp.eq.s32.totalorder %s12, 2
      %p29 = por %p27, %p28
      %p30 = scmp.ne.s32.totalorder %s22, %s25
      %p31 = scmp.eq.s32.totalorder %s12, 0
      %p32 = por %p30, %p31
      %p33 = scmp.ne.s32.totalorder %s22, %s25
      %p34 = scmp.eq.s32.totalorder %s17, 2
      %p35 = por %p33, %p34
      %p36 = scmp.ne.s32.totalorder %s25, %s26
      %p37 = scmp.eq.s32.totalorder %s17, 0
      %p38 = por %p36, %p37
      %p39 = scmp.ne.s32.totalorder %s25, %s26
      %p40 = scmp.eq.s32.totalorder %s18, 2
      %p41 = por %p39, %p40
      %p43 = scmp.ne.s32.totalorder %s26, %s42
      %p44 = scmp.eq.s32.totalorder %s18, 0
      %p45 = por %p43, %p44
      %s46 = ssub.s32 %s12, %s19
      %p47 = scmp.eq.s32.totalorder %s46, 0
      %s49 = sadd.s32 %s48, 1
      %s50 = scalar_select %p47, %s48, %s49
      %p53 = pneg %p47
      %p54 = scmp.eq.s32.totalorder %s12, 2
      %p55 = por %p53, %p54
      %p56 = scmp.ne.s32.totalorder %s48, %s51
      %p57 = scmp.eq.s32.totalorder %s12, 0
      %p58 = por %p56, %p57
      %p59 = scmp.ne.s32.totalorder %s48, %s51
      %p60 = scmp.eq.s32.totalorder %s17, 2
      %p61 = por %p59, %p60
      %p62 = scmp.ne.s32.totalorder %s51, %s52
      %p63 = scmp.eq.s32.totalorder %s17, 0
      %p64 = por %p62, %p63
      %p65 = scmp.ne.s32.totalorder %s51, %s52
      %p66 = scmp.eq.s32.totalorder %s18, 2
      %p67 = por %p65, %p66
      %p69 = scmp.ne.s32.totalorder %s52, %s68
      %p70 = scmp.eq.s32.totalorder %s18, 0
      %p71 = por %p69, %p70
      %s73 = sadd.s32 %s72, 1
      %p76 = scmp.eq.s32.totalorder %s12, 2
      %p77 = scmp.ne.s32.totalorder %s72, %s74
      %p78 = scmp.eq.s32.totalorder %s12, 0
      %p79 = por %p77, %p78
      %p80 = scmp.ne.s32.totalorder %s72, %s74
      %p81 = scmp.eq.s32.totalorder %s17, 2
      %p82 = por %p80, %p81
      %p83 = scmp.ne.s32.totalorder %s74, %s75
      %p84 = scmp.eq.s32.totalorder %s17, 0
      %p85 = por %p83, %p84
      %p86 = scmp.ne.s32.totalorder %s74, %s75
      %p87 = scmp.eq.s32.totalorder %s18, 2
      %p88 = por %p86, %p87
      %p90 = scmp.ne.s32.totalorder %s75, %s89
      %p91 = scmp.eq.s32.totalorder %s18, 0
      %p92 = por %p90, %p91
      %s94 = sadd.s32 %s93, 1
      %p97 = scmp.eq.s32.totalorder %s12, 2
      %p98 = scmp.ne.s32.totalorder %s93, %s95
      %p99 = scmp.eq.s32.totalorder %s12, 0
      %p100 = por %p98, %p99
      %p101 = scmp.ne.s32.totalorder %s93, %s95
      %p102 = scmp.eq.s32.totalorder %s17, 2
      %p103 = por %p101, %p102
      %p104 = scmp.ne.s32.totalorder %s95, %s96
      %p105 = scmp.eq.s32.totalorder %s17, 0
      %p106 = por %p104, %p105
      %p107 = scmp.ne.s32.totalorder %s95, %s96
      %p108 = scmp.eq.s32.totalorder %s18, 2
      %p109 = por %p107, %p108
      %p111 = scmp.ne.s32.totalorder %s96, %s110
      %p112 = scmp.eq.s32.totalorder %s18, 0
      %p113 = por %p111, %p112
      %s115 = sadd.s32 %s114, 1
      %p118 = scmp.eq.s32.totalorder %s12, 2
      %p119 = scmp.ne.s32.totalorder %s114, %s116
      %p120 = scmp.eq.s32.totalorder %s12, 0
      %p121 = por %p119, %p120
      %p122 = scmp.ne.s32.totalorder %s114, %s116
      %p123 = scmp.eq.s32.totalorder %s17, 2
      %p124 = por %p122, %p123
      %p125 = scmp.ne.s32.totalorder %s116, %s117
      %p126 = scmp.eq.s32.totalorder %s17, 0
      %p127 = por %p125, %p126
      %p128 = scmp.ne.s32.totalorder %s116, %s117
      %p129 = scmp.eq.s32.totalorder %s18, 2
      %p130 = por %p128, %p129
      %p132 = scmp.ne.s32.totalorder %s117, %s131
      %p133 = scmp.eq.s32.totalorder %s18, 0
      %p134 = por %p132, %p133
      %s136 = sadd.s32 %s135, 1
      %p139 = scmp.eq.s32.totalorder %s12, 2
      %p140 = scmp.ne.s32.totalorder %s135, %s137
      %p141 = scmp.eq.s32.totalorder %s12, 0
      %p142 = por %p140, %p141
      %p143 = scmp.ne.s32.totalorder %s135, %s137
      %p144 = scmp.eq.s32.totalorder %s17, 2
      %p145 = por %p143, %p144
      %p146 = scmp.ne.s32.totalorder %s137, %s138
      %p147 = scmp.eq.s32.totalorder %s17, 0
      %p148 = por %p146, %p147
      %p149 = scmp.ne.s32.totalorder %s137, %s138
      %p150 = scmp.eq.s32.totalorder %s18, 2
      %p151 = por %p149, %p150
      %p153 = scmp.ne.s32.totalorder %s138, %s152
      %p154 = scmp.eq.s32.totalorder %s18, 0
      %p155 = por %p153, %p154
      %p156 = scmp.le.s32.totalorder 1, %s12
      %p157 = scmp.lt.s32.totalorder %s12, 4
      %p158 = pnand %p156, %p157
      %p159 = pneg %p158
      // Predicated region
      $region9: #{vision_feature_extractor.5} parent=5 // pred_check
        _
      $region10: #{vision_feature_extractor.5} parent=5 // pred_check_branch
        %161 = sbr.rel (%p158) target = $region12
      $region11: #{vision_feature_extractor.5} parent=5 // pred_region
        %s162 = ssub.s32 %s12, 1
        // Predicated region
        $region13: #{vision_feature_extractor.5} parent=11 // pred_check
          %p163 = pneg %p85
        $region14: #{vision_feature_extractor.5} parent=11 // pred_check_branch
          %165 = sbr.rel (%p163) target = $region16
        $region15: #{vision_feature_extractor.5} parent=11 // pred_region
          _
        $region16: #{vision_feature_extractor.5} parent=11 // pred_fallthru
          _
        // Predicated region
        $region17: #{vision_feature_extractor.5} parent=11 // pred_check
          %p166 = pneg %p106
        $region18: #{vision_feature_extractor.5} parent=11 // pred_check_branch
          %168 = sbr.rel (%p166) target = $region20
        $region19: #{vision_feature_extractor.5} parent=11 // pred_region
          _
        $region20: #{vision_feature_extractor.5} parent=11 // pred_fallthru
          _
        // Predicated region
        $region21: #{vision_feature_extractor.5} parent=11 // pred_check
          %p169 = pneg %p127
        $region22: #{vision_feature_extractor.5} parent=11 // pred_check_branch
          %171 = sbr.rel (%p169) target = $region24
        $region23: #{vision_feature_extractor.5} parent=11 // pred_region
          _
        $region24: #{vision_feature_extractor.5} parent=11 // pred_fallthru
          _
      $region12: #{vision_feature_extractor.5} parent=5 // pred_fallthru
        _
      %p172 = scmp.lt.s32.totalorder %s12, 3
      // Predicated region
      $region25: #{vision_feature_extractor.5} parent=5 // pred_check
        %p173 = pneg %p172
      $region26: #{vision_feature_extractor.5} parent=5 // pred_check_branch
        %175 = sbr.rel (%p173) target = $region28
      $region27: #{vision_feature_extractor.5} parent=5 // pred_region
        // Predicated region
        $region29: #{vision_feature_extractor.5} parent=27 // pred_check
          %p176 = pneg %p32
        $region30: #{vision_feature_extractor.5} parent=27 // pred_check_branch
          %178 = sbr.rel (%p176) target = $region32
        $region31: #{vision_feature_extractor.5} parent=27 // pred_region
          %s179 = smul.u32 54, %s12
          %p180 = scmp.lt.s32.totalorder %s179, 161
          %s181 = scalar_select %p180, %s179, 161
          %s182 = scalar_lea.vmem %s0, %s181
          %s183 = smul.u32 54, %s12
        $region32: #{vision_feature_extractor.5} parent=27 // pred_fallthru
          _
        // Predicated region
        $region33: #{vision_feature_extractor.5} parent=27 // pred_check
          %p184 = pneg %p58
        $region34: #{vision_feature_extractor.5} parent=27 // pred_check_branch
          %186 = sbr.rel (%p184) target = $region36
        $region35: #{vision_feature_extractor.5} parent=27 // pred_region
          %s187 = smul.u32 864, %s12
          %p188 = scmp.lt.s32.totalorder %s187, 2591
          %s189 = scalar_select %p188, %s187, 2591
          %s190 = smul.addr %s189, 4
          %s191 = scalar_lea.vmem %s1, %s190
          %s192 = smul.u32 864, %s12
        $region36: #{vision_feature_extractor.5} parent=27 // pred_fallthru
          _
      $region28: #{vision_feature_extractor.5} parent=5 // pred_fallthru
        _
      %p193 = scmp.le.s32.totalorder 1, %s12
      %p194 = scmp.lt.s32.totalorder %s12, 4
      %p195 = pnand %p193, %p194
      %p196 = pneg %p195
      // Predicated region
      $region37: #{vision_feature_extractor.5} parent=5 // pred_check
        _
      $region38: #{vision_feature_extractor.5} parent=5 // pred_check_branch
        %198 = sbr.rel (%p195) target = $region40
      $region39: #{vision_feature_extractor.5} parent=5 // pred_region
        %s199 = ssub.s32 %s12, 1
        %s200 = smul.u32 54, %s17
        %p201 = scmp.lt.s32.totalorder %s200, 161
        %s202 = scalar_select %p201, %s200, 161
        %s203 = scalar_lea.vmem %s0, %s202
        %p204 = pneg %p38
        %p205 = pneg %p35
        %s206 = smul.u32 864, %s17
        %p207 = scmp.lt.s32.totalorder %s206, 2591
        %s208 = scalar_select %p207, %s206, 2591
        %s209 = smul.addr %s208, 4
        %s210 = scalar_lea.vmem %s1, %s209
        %p211 = pneg %p64
        %p212 = pneg %p61
        %p213 = pneg %p85
        %p214 = pneg %p82
        %p215 = pneg %p106
        %p216 = pneg %p103
        %p217 = pneg %p127
        %p218 = pneg %p124
        %p219 = pneg %p148
        %p220 = pneg %p145
        %s221 = smul.u32 54, %s17
        %p222 = scmp.lt.s32.totalorder %s221, 161
        %s223 = scalar_select %p222, %s221, 161
        %s224 = scalar_lea.vmem %s0, %s223
        %s225 = smul.u32 54, %s17
        %s226 = smul.u32 864, %s17
        %p227 = scmp.lt.s32.totalorder %s226, 2591
        %s228 = scalar_select %p227, %s226, 2591
        %s229 = smul.addr %s228, 4
        %s230 = scalar_lea.vmem %s1, %s229
        %s231 = smul.u32 864, %s17
        %p233 = scmp.eq.s32.totalorder %s17, 0
        // Predicated region
        $region41: #{vision_feature_extractor.5} parent=39 // pred_check
          %p234 = pneg %p233
        $region42: #{vision_feature_extractor.5} parent=39 // pred_check_branch
          %236 = sbr.rel (%p234) target = $region44
        $region43: #{vision_feature_extractor.5} parent=39 // pred_region
          %237 = vst [vmem:[#allocation2] sm:$0x3] 0.0
        $region44: #{vision_feature_extractor.5} parent=39 // pred_fallthru
          _
        %v238 = vld [vmem:[#allocation2] sm:$0x3]
        %v239 = vld [vmem:[%s224] sm:$0xff]
        %v240 = vld [vmem:[%s224 + $0x8] sm:$0xff]
        %v241 = vld [vmem:[%s224 + $0x10] sm:$0xff]
        %v242 = vld [vmem:[%s224 + $0x18] sm:$0xff]
        %v243 = vld [vmem:[%s224 + $0x20] sm:$0xff]
        %v244 = vld [vmem:[%s224 + $0x28] sm:$0xff]
        %v245 = vld [vmem:[%s224 + $0x30] sm:$0x3f]
        %v246 = vld [vmem:[%s230] sm:$0xf]
        %v247 = vld [vmem:[%s230 + $0x4] sm:$0xf]
        %v248 = vld [vmem:[%s230 + $0x8] sm:$0xf]
        %v249 = vld [vmem:[%s230 + $0xc] sm:$0xf]
        %v250 = vld [vmem:[%s230 + $0x10] sm:$0xf]
        %v251 = vld [vmem:[%s230 + $0x14] sm:$0xf]
        %v252 = vld [vmem:[%s230 + $0x18] sm:$0xf]
        %v253 = vld [vmem:[%s230 + $0x1c] sm:$0xf]
        %v254 = vld [vmem:[%s230 + $0x20] sm:$0xf]
        %v255 = vld [vmem:[%s230 + $0x24] sm:$0xf]
        %v256 = vld [vmem:[%s230 + $0x28] sm:$0xf]
        %v257 = vld [vmem:[%s230 + $0x2c] sm:$0xf]
        %v258 = vld [vmem:[%s230 + $0x30] sm:$0xf]
        %v259 = vld [vmem:[%s230 + $0x34] sm:$0xf]
        %v260 = vld [vmem:[%s230 + $0x38] sm:$0xf]
        %v261 = vld [vmem:[%s230 + $0x3c] sm:$0xf]
        %v262 = vld [vmem:[%s230 + $0x40] sm:$0xf]
        %v263 = vld [vmem:[%s230 + $0x44] sm:$0xf]
        %v264 = vld [vmem:[%s230 + $0x48] sm:$0xf]
        %v265 = vld [vmem:[%s230 + $0x4c] sm:$0xf]
        %v266 = vld [vmem:[%s230 + $0x50] sm:$0xf]
        %v267 = vld [vmem:[%s230 + $0x54] sm:$0xf]
        %v268 = vld [vmem:[%s230 + $0x58] sm:$0xf]
        %v269 = vld [vmem:[%s230 + $0x5c] sm:$0xf]
        %v270 = vld [vmem:[%s230 + $0x60] sm:$0xf]
        %v271 = vld [vmem:[%s230 + $0x64] sm:$0xf]
        %v272 = vld [vmem:[%s230 + $0x68] sm:$0xf]
        %v273 = vld [vmem:[%s230 + $0x6c] sm:$0xf]
        %v274 = vld [vmem:[%s230 + $0x70] sm:$0xf]
        %v275 = vld [vmem:[%s230 + $0x74] sm:$0xf]
        %v276 = vld [vmem:[%s230 + $0x78] sm:$0xf]
        %v277 = vld [vmem:[%s230 + $0x7c] sm:$0xf]
        %v278 = vld [vmem:[%s230 + $0x80] sm:$0xf]
        %v279 = vld [vmem:[%s230 + $0x84] sm:$0xf]
        %v280 = vld [vmem:[%s230 + $0x88] sm:$0xf]
        %v281 = vld [vmem:[%s230 + $0x8c] sm:$0xf]
        %v282 = vld [vmem:[%s230 + $0x90] sm:$0xf]
        %v283 = vld [vmem:[%s230 + $0x94] sm:$0xf]
        %v284 = vld [vmem:[%s230 + $0x98] sm:$0xf]
        %v285 = vld [vmem:[%s230 + $0x9c] sm:$0xf]
        %v286 = vld [vmem:[%s230 + $0xa0] sm:$0xf]
        %v287 = vld [vmem:[%s230 + $0xa4] sm:$0xf]
        %v288 = vld [vmem:[%s230 + $0xa8] sm:$0xf]
        %v289 = vld [vmem:[%s230 + $0xac] sm:$0xf]
        %v290 = vld [vmem:[%s230 + $0xb0] sm:$0xf]
        %v291 = vld [vmem:[%s230 + $0xb4] sm:$0xf]
        %v292 = vld [vmem:[%s230 + $0xb8] sm:$0xf]
        %v293 = vld [vmem:[%s230 + $0xbc] sm:$0xf]
        %v294 = vld [vmem:[%s230 + $0xc0] sm:$0xf]
        %v295 = vld [vmem:[%s230 + $0xc4] sm:$0xf]
        %v296 = vld [vmem:[%s230 + $0xc8] sm:$0xf]
        %v297 = vld [vmem:[%s230 + $0xcc] sm:$0xf]
        %v298 = vld [vmem:[%s230 + $0xd0] sm:$0xf]
        %v299 = vld [vmem:[%s230 + $0xd4] sm:$0xf]
        %v300 = vld [vmem:[%s230 + $0xd8] sm:$0xf]
        %v301 = vld [vmem:[%s230 + $0xdc] sm:$0xf]
        %v302 = vld [vmem:[%s230 + $0xe0] sm:$0xf]
        %v303 = vld [vmem:[%s230 + $0xe4] sm:$0xf]
        %v304 = vld [vmem:[%s230 + $0xe8] sm:$0xf]
        %v305 = vld [vmem:[%s230 + $0xec] sm:$0xf]
        %v306 = vld [vmem:[%s230 + $0xf0] sm:$0xf]
        %v307 = vld [vmem:[%s230 + $0xf4] sm:$0xf]
        %v308 = vld [vmem:[%s230 + $0xf8] sm:$0xf]
        %v309 = vld [vmem:[%s230 + $0xfc] sm:$0xf]
        %v310 = vld [vmem:[%s230 + $0x100] sm:$0xf]
        %v311 = vld [vmem:[%s230 + $0x104] sm:$0xf]
        %v312 = vld [vmem:[%s230 + $0x108] sm:$0xf]
        %v313 = vld [vmem:[%s230 + $0x10c] sm:$0xf]
        %v314 = vld [vmem:[%s230 + $0x110] sm:$0xf]
        %v315 = vld [vmem:[%s230 + $0x114] sm:$0xf]
        %v316 = vld [vmem:[%s230 + $0x118] sm:$0xf]
        %v317 = vld [vmem:[%s230 + $0x11c] sm:$0xf]
        %v318 = vld [vmem:[%s230 + $0x120] sm:$0xf]
        %v319 = vld [vmem:[%s230 + $0x124] sm:$0xf]
        %v320 = vld [vmem:[%s230 + $0x128] sm:$0xf]
        %v321 = vld [vmem:[%s230 + $0x12c] sm:$0xf]
        %v322 = vld [vmem:[%s230 + $0x130] sm:$0xf]
        %v323 = vld [vmem:[%s230 + $0x134] sm:$0xf]
        %v324 = vld [vmem:[%s230 + $0x138] sm:$0xf]
        %v325 = vld [vmem:[%s230 + $0x13c] sm:$0xf]
        %v326 = vld [vmem:[%s230 + $0x140] sm:$0xf]
        %v327 = vld [vmem:[%s230 + $0x144] sm:$0xf]
        %v328 = vld [vmem:[%s230 + $0x148] sm:$0xf]
        %v329 = vld [vmem:[%s230 + $0x14c] sm:$0xf]
        %v330 = vld [vmem:[%s230 + $0x150] sm:$0xf]
        %v331 = vld [vmem:[%s230 + $0x154] sm:$0xf]
        %v332 = vld [vmem:[%s230 + $0x158] sm:$0xf]
        %v333 = vld [vmem:[%s230 + $0x15c] sm:$0xf]
        %v334 = vld [vmem:[%s230 + $0x160] sm:$0xf]
        %v335 = vld [vmem:[%s230 + $0x164] sm:$0xf]
        %v336 = vld [vmem:[%s230 + $0x168] sm:$0xf]
        %v337 = vld [vmem:[%s230 + $0x16c] sm:$0xf]
        %v338 = vld [vmem:[%s230 + $0x170] sm:$0xf]
        %v339 = vld [vmem:[%s230 + $0x174] sm:$0xf]
        %v340 = vld [vmem:[%s230 + $0x178] sm:$0xf]
        %v341 = vld [vmem:[%s230 + $0x17c] sm:$0xf]
        %v342 = vld [vmem:[%s230 + $0x180] sm:$0xf]
        %v343 = vld [vmem:[%s230 + $0x184] sm:$0xf]
        %v344 = vld [vmem:[%s230 + $0x188] sm:$0xf]
        %v345 = vld [vmem:[%s230 + $0x18c] sm:$0xf]
        %v346 = vld [vmem:[%s230 + $0x190] sm:$0xf]
        %v347 = vld [vmem:[%s230 + $0x194] sm:$0xf]
        %v348 = vld [vmem:[%s230 + $0x198] sm:$0xf]
        %v349 = vld [vmem:[%s230 + $0x19c] sm:$0xf]
        %v350 = vld [vmem:[%s230 + $0x1a0] sm:$0xf]
        %v351 = vld [vmem:[%s230 + $0x1a4] sm:$0xf]
        %v352 = vld [vmem:[%s230 + $0x1a8] sm:$0xf]
        %v353 = vld [vmem:[%s230 + $0x1ac] sm:$0xf]
        %v354 = vld [vmem:[%s230 + $0x1b0] sm:$0xf]
        %v355 = vld [vmem:[%s230 + $0x1b4] sm:$0xf]
        %v356 = vld [vmem:[%s230 + $0x1b8] sm:$0xf]
        %v357 = vld [vmem:[%s230 + $0x1bc] sm:$0xf]
        %v358 = vld [vmem:[%s230 + $0x1c0] sm:$0xf]
        %v359 = vld [vmem:[%s230 + $0x1c4] sm:$0xf]
        %v360 = vld [vmem:[%s230 + $0x1c8] sm:$0xf]
        %v361 = vld [vmem:[%s230 + $0x1cc] sm:$0xf]
        %v362 = vld [vmem:[%s230 + $0x1d0] sm:$0xf]
        %v363 = vld [vmem:[%s230 + $0x1d4] sm:$0xf]
        %v364 = vld [vmem:[%s230 + $0x1d8] sm:$0xf]
        %v365 = vld [vmem:[%s230 + $0x1dc] sm:$0xf]
        %v366 = vld [vmem:[%s230 + $0x1e0] sm:$0xf]
        %v367 = vld [vmem:[%s230 + $0x1e4] sm:$0xf]
        %v368 = vld [vmem:[%s230 + $0x1e8] sm:$0xf]
        %v369 = vld [vmem:[%s230 + $0x1ec] sm:$0xf]
        %v370 = vld [vmem:[%s230 + $0x1f0] sm:$0xf]
        %v371 = vld [vmem:[%s230 + $0x1f4] sm:$0xf]
        %v372 = vld [vmem:[%s230 + $0x1f8] sm:$0xf]
        %v373 = vld [vmem:[%s230 + $0x1fc] sm:$0xf]
        %v374 = vld [vmem:[%s230 + $0x200] sm:$0xf]
        %v375 = vld [vmem:[%s230 + $0x204] sm:$0xf]
        %v376 = vld [vmem:[%s230 + $0x208] sm:$0xf]
        %v377 = vld [vmem:[%s230 + $0x20c] sm:$0xf]
        %v378 = vld [vmem:[%s230 + $0x210] sm:$0xf]
        %v379 = vld [vmem:[%s230 + $0x214] sm:$0xf]
        %v380 = vld [vmem:[%s230 + $0x218] sm:$0xf]
        %v381 = vld [vmem:[%s230 + $0x21c] sm:$0xf]
        %v382 = vld [vmem:[%s230 + $0x220] sm:$0xf]
        %v383 = vld [vmem:[%s230 + $0x224] sm:$0xf]
        %v384 = vld [vmem:[%s230 + $0x228] sm:$0xf]
        %v385 = vld [vmem:[%s230 + $0x22c] sm:$0xf]
        %v386 = vld [vmem:[%s230 + $0x230] sm:$0xf]
        %v387 = vld [vmem:[%s230 + $0x234] sm:$0xf]
        %v388 = vld [vmem:[%s230 + $0x238] sm:$0xf]
        %v389 = vld [vmem:[%s230 + $0x23c] sm:$0xf]
        %v390 = vld [vmem:[%s230 + $0x240] sm:$0xf]
        %v391 = vld [vmem:[%s230 + $0x244] sm:$0xf]
        %v392 = vld [vmem:[%s230 + $0x248] sm:$0xf]
        %v393 = vld [vmem:[%s230 + $0x24c] sm:$0xf]
        %v394 = vld [vmem:[%s230 + $0x250] sm:$0xf]
        %v395 = vld [vmem:[%s230 + $0x254] sm:$0xf]
        %v396 = vld [vmem:[%s230 + $0x258] sm:$0xf]
        %v397 = vld [vmem:[%s230 + $0x25c] sm:$0xf]
        %v398 = vld [vmem:[%s230 + $0x260] sm:$0xf]
        %v399 = vld [vmem:[%s230 + $0x264] sm:$0xf]
        %v400 = vld [vmem:[%s230 + $0x268] sm:$0xf]
        %v401 = vld [vmem:[%s230 + $0x26c] sm:$0xf]
        %v402 = vld [vmem:[%s230 + $0x270] sm:$0xf]
        %v403 = vld [vmem:[%s230 + $0x274] sm:$0xf]
        %v404 = vld [vmem:[%s230 + $0x278] sm:$0xf]
        %v405 = vld [vmem:[%s230 + $0x27c] sm:$0xf]
        %v406 = vld [vmem:[%s230 + $0x280] sm:$0xf]
        %v407 = vld [vmem:[%s230 + $0x284] sm:$0xf]
        %v408 = vld [vmem:[%s230 + $0x288] sm:$0xf]
        %v409 = vld [vmem:[%s230 + $0x28c] sm:$0xf]
        %v410 = vld [vmem:[%s230 + $0x290] sm:$0xf]
        %v411 = vld [vmem:[%s230 + $0x294] sm:$0xf]
        %v412 = vld [vmem:[%s230 + $0x298] sm:$0xf]
        %v413 = vld [vmem:[%s230 + $0x29c] sm:$0xf]
        %v414 = vld [vmem:[%s230 + $0x2a0] sm:$0xf]
        %v415 = vld [vmem:[%s230 + $0x2a4] sm:$0xf]
        %v416 = vld [vmem:[%s230 + $0x2a8] sm:$0xf]
        %v417 = vld [vmem:[%s230 + $0x2ac] sm:$0xf]
        %v418 = vld [vmem:[%s230 + $0x2b0] sm:$0xf]
        %v419 = vld [vmem:[%s230 + $0x2b4] sm:$0xf]
        %v420 = vld [vmem:[%s230 + $0x2b8] sm:$0xf]
        %v421 = vld [vmem:[%s230 + $0x2bc] sm:$0xf]
        %v422 = vld [vmem:[%s230 + $0x2c0] sm:$0xf]
        %v423 = vld [vmem:[%s230 + $0x2c4] sm:$0xf]
        %v424 = vld [vmem:[%s230 + $0x2c8] sm:$0xf]
        %v425 = vld [vmem:[%s230 + $0x2cc] sm:$0xf]
        %v426 = vld [vmem:[%s230 + $0x2d0] sm:$0xf]
        %v427 = vld [vmem:[%s230 + $0x2d4] sm:$0xf]
        %v428 = vld [vmem:[%s230 + $0x2d8] sm:$0xf]
        %v429 = vld [vmem:[%s230 + $0x2dc] sm:$0xf]
        %v430 = vld [vmem:[%s230 + $0x2e0] sm:$0xf]
        %v431 = vld [vmem:[%s230 + $0x2e4] sm:$0xf]
        %v432 = vld [vmem:[%s230 + $0x2e8] sm:$0xf]
        %v433 = vld [vmem:[%s230 + $0x2ec] sm:$0xf]
        %v434 = vld [vmem:[%s230 + $0x2f0] sm:$0xf]
        %v435 = vld [vmem:[%s230 + $0x2f4] sm:$0xf]
        %v436 = vld [vmem:[%s230 + $0x2f8] sm:$0xf]
        %v437 = vld [vmem:[%s230 + $0x2fc] sm:$0xf]
        %v438 = vld [vmem:[%s230 + $0x300] sm:$0xf]
        %v439 = vld [vmem:[%s230 + $0x304] sm:$0xf]
        %v440 = vld [vmem:[%s230 + $0x308] sm:$0xf]
        %v441 = vld [vmem:[%s230 + $0x30c] sm:$0xf]
        %v442 = vld [vmem:[%s230 + $0x310] sm:$0xf]
        %v443 = vld [vmem:[%s230 + $0x314] sm:$0xf]
        %v444 = vld [vmem:[%s230 + $0x318] sm:$0xf]
        %v445 = vld [vmem:[%s230 + $0x31c] sm:$0xf]
        %v446 = vld [vmem:[%s230 + $0x320] sm:$0xf]
        %v447 = vld [vmem:[%s230 + $0x324] sm:$0xf]
        %v448 = vld [vmem:[%s230 + $0x328] sm:$0xf]
        %v449 = vld [vmem:[%s230 + $0x32c] sm:$0xf]
        %v450 = vld [vmem:[%s230 + $0x330] sm:$0xf]
        %v451 = vld [vmem:[%s230 + $0x334] sm:$0xf]
        %v452 = vld [vmem:[%s230 + $0x338] sm:$0xf]
        %v453 = vld [vmem:[%s230 + $0x33c] sm:$0xf]
        %v454 = vld [vmem:[%s230 + $0x340] sm:$0xf]
        %v455 = vld [vmem:[%s230 + $0x344] sm:$0xf]
        %v456 = vld [vmem:[%s230 + $0x348] sm:$0xf]
        %v457 = vld [vmem:[%s230 + $0x34c] sm:$0xf]
        %v458 = vld [vmem:[%s230 + $0x350] sm:$0xf]
        %v459 = vld [vmem:[%s230 + $0x354] sm:$0xf]
        %v460 = vld [vmem:[%s230 + $0x358] sm:$0xf]
        %v461 = vld [vmem:[%s230 + $0x35c] sm:$0xf]
        %v462 = vld [vmem:[%s230 + $0x360] sm:$0xf]
        %v463 = vld [vmem:[%s230 + $0x364] sm:$0xf]
        %v464 = vld [vmem:[%s230 + $0x368] sm:$0xf]
        %v465 = vld [vmem:[%s230 + $0x36c] sm:$0xf]
        %v466 = vld [vmem:[%s230 + $0x370] sm:$0xf]
        %v467 = vld [vmem:[%s230 + $0x374] sm:$0xf]
        %v468 = vld [vmem:[%s230 + $0x378] sm:$0xf]
        %v469 = vld [vmem:[%s230 + $0x37c] sm:$0xf]
        %v470 = vld [vmem:[%s230 + $0x380] sm:$0xf]
        %v471 = vld [vmem:[%s230 + $0x384] sm:$0xf]
        %v472 = vld [vmem:[%s230 + $0x388] sm:$0xf]
        %v473 = vld [vmem:[%s230 + $0x38c] sm:$0xf]
        %v474 = vld [vmem:[%s230 + $0x390] sm:$0xf]
        %v475 = vld [vmem:[%s230 + $0x394] sm:$0xf]
        %v476 = vld [vmem:[%s230 + $0x398] sm:$0xf]
        %v477 = vld [vmem:[%s230 + $0x39c] sm:$0xf]
        %v478 = vld [vmem:[%s230 + $0x3a0] sm:$0xf]
        %v479 = vld [vmem:[%s230 + $0x3a4] sm:$0xf]
        %v480 = vld [vmem:[%s230 + $0x3a8] sm:$0xf]
        %v481 = vld [vmem:[%s230 + $0x3ac] sm:$0xf]
        %v482 = vld [vmem:[%s230 + $0x3b0] sm:$0xf]
        %v483 = vld [vmem:[%s230 + $0x3b4] sm:$0xf]
        %v484 = vld [vmem:[%s230 + $0x3b8] sm:$0xf]
        %v485 = vld [vmem:[%s230 + $0x3bc] sm:$0xf]
        %v486 = vld [vmem:[%s230 + $0x3c0] sm:$0xf]
        %v487 = vld [vmem:[%s230 + $0x3c4] sm:$0xf]
        %v488 = vld [vmem:[%s230 + $0x3c8] sm:$0xf]
        %v489 = vld [vmem:[%s230 + $0x3cc] sm:$0xf]
        %v490 = vld [vmem:[%s230 + $0x3d0] sm:$0xf]
        %v491 = vld [vmem:[%s230 + $0x3d4] sm:$0xf]
        %v492 = vld [vmem:[%s230 + $0x3d8] sm:$0xf]
        %v493 = vld [vmem:[%s230 + $0x3dc] sm:$0xf]
        %v494 = vld [vmem:[%s230 + $0x3e0] sm:$0xf]
        %v495 = vld [vmem:[%s230 + $0x3e4] sm:$0xf]
        %v496 = vld [vmem:[%s230 + $0x3e8] sm:$0xf]
        %v497 = vld [vmem:[%s230 + $0x3ec] sm:$0xf]
        %v498 = vld [vmem:[%s230 + $0x3f0] sm:$0xf]
        %v499 = vld [vmem:[%s230 + $0x3f4] sm:$0xf]
        %v500 = vld [vmem:[%s230 + $0x3f8] sm:$0xf]
        %v501 = vld [vmem:[%s230 + $0x3fc] sm:$0xf]
        %v502 = vld [vmem:[%s230 + $0x400] sm:$0xf]
        %v503 = vld [vmem:[%s230 + $0x404] sm:$0xf]
        %v504 = vld [vmem:[%s230 + $0x408] sm:$0xf]
        %v505 = vld [vmem:[%s230 + $0x40c] sm:$0xf]
        %v506 = vld [vmem:[%s230 + $0x410] sm:$0xf]
        %v507 = vld [vmem:[%s230 + $0x414] sm:$0xf]
        %v508 = vld [vmem:[%s230 + $0x418] sm:$0xf]
        %v509 = vld [vmem:[%s230 + $0x41c] sm:$0xf]
        %v510 = vld [vmem:[%s230 + $0x420] sm:$0xf]
        %v511 = vld [vmem:[%s230 + $0x424] sm:$0xf]
        %v512 = vld [vmem:[%s230 + $0x428] sm:$0xf]
        %v513 = vld [vmem:[%s230 + $0x42c] sm:$0xf]
        %v514 = vld [vmem:[%s230 + $0x430] sm:$0xf]
        %v515 = vld [vmem:[%s230 + $0x434] sm:$0xf]
        %v516 = vld [vmem:[%s230 + $0x438] sm:$0xf]
        %v517 = vld [vmem:[%s230 + $0x43c] sm:$0xf]
        %v518 = vld [vmem:[%s230 + $0x440] sm:$0xf]
        %v519 = vld [vmem:[%s230 + $0x444] sm:$0xf]
        %v520 = vld [vmem:[%s230 + $0x448] sm:$0xf]
        %v521 = vld [vmem:[%s230 + $0x44c] sm:$0xf]
        %v522 = vld [vmem:[%s230 + $0x450] sm:$0xf]
        %v523 = vld [vmem:[%s230 + $0x454] sm:$0xf]
        %v524 = vld [vmem:[%s230 + $0x458] sm:$0xf]
        %v525 = vld [vmem:[%s230 + $0x45c] sm:$0xf]
        %v526 = vld [vmem:[%s230 + $0x460] sm:$0xf]
        %v527 = vld [vmem:[%s230 + $0x464] sm:$0xf]
        %v528 = vld [vmem:[%s230 + $0x468] sm:$0xf]
        %v529 = vld [vmem:[%s230 + $0x46c] sm:$0xf]
        %v530 = vld [vmem:[%s230 + $0x470] sm:$0xf]
        %v531 = vld [vmem:[%s230 + $0x474] sm:$0xf]
        %v532 = vld [vmem:[%s230 + $0x478] sm:$0xf]
        %v533 = vld [vmem:[%s230 + $0x47c] sm:$0xf]
        %v534 = vld [vmem:[%s230 + $0x480] sm:$0xf]
        %v535 = vld [vmem:[%s230 + $0x484] sm:$0xf]
        %v536 = vld [vmem:[%s230 + $0x488] sm:$0xf]
        %v537 = vld [vmem:[%s230 + $0x48c] sm:$0xf]
        %v538 = vld [vmem:[%s230 + $0x490] sm:$0xf]
        %v539 = vld [vmem:[%s230 + $0x494] sm:$0xf]
        %v540 = vld [vmem:[%s230 + $0x498] sm:$0xf]
        %v541 = vld [vmem:[%s230 + $0x49c] sm:$0xf]
        %v542 = vld [vmem:[%s230 + $0x4a0] sm:$0xf]
        %v543 = vld [vmem:[%s230 + $0x4a4] sm:$0xf]
        %v544 = vld [vmem:[%s230 + $0x4a8] sm:$0xf]
        %v545 = vld [vmem:[%s230 + $0x4ac] sm:$0xf]
        %v546 = vld [vmem:[%s230 + $0x4b0] sm:$0xf]
        %v547 = vld [vmem:[%s230 + $0x4b4] sm:$0xf]
        %v548 = vld [vmem:[%s230 + $0x4b8] sm:$0xf]
        %v549 = vld [vmem:[%s230 + $0x4bc] sm:$0xf]
        %v550 = vld [vmem:[%s230 + $0x4c0] sm:$0xf]
        %v551 = vld [vmem:[%s230 + $0x4c4] sm:$0xf]
        %v552 = vld [vmem:[%s230 + $0x4c8] sm:$0xf]
        %v553 = vld [vmem:[%s230 + $0x4cc] sm:$0xf]
        %v554 = vld [vmem:[%s230 + $0x4d0] sm:$0xf]
        %v555 = vld [vmem:[%s230 + $0x4d4] sm:$0xf]
        %v556 = vld [vmem:[%s230 + $0x4d8] sm:$0xf]
        %v557 = vld [vmem:[%s230 + $0x4dc] sm:$0xf]
        %v558 = vld [vmem:[%s230 + $0x4e0] sm:$0xf]
        %v559 = vld [vmem:[%s230 + $0x4e4] sm:$0xf]
        %v560 = vld [vmem:[%s230 + $0x4e8] sm:$0xf]
        %v561 = vld [vmem:[%s230 + $0x4ec] sm:$0xf]
        %v562 = vld [vmem:[%s230 + $0x4f0] sm:$0xf]
        %v563 = vld [vmem:[%s230 + $0x4f4] sm:$0xf]
        %v564 = vld [vmem:[%s230 + $0x4f8] sm:$0xf]
        %v565 = vld [vmem:[%s230 + $0x4fc] sm:$0xf]
        %v566 = vld [vmem:[%s230 + $0x500] sm:$0xf]
        %v567 = vld [vmem:[%s230 + $0x504] sm:$0xf]
        %v568 = vld [vmem:[%s230 + $0x508] sm:$0xf]
        %v569 = vld [vmem:[%s230 + $0x50c] sm:$0xf]
        %v570 = vld [vmem:[%s230 + $0x510] sm:$0xf]
        %v571 = vld [vmem:[%s230 + $0x514] sm:$0xf]
        %v572 = vld [vmem:[%s230 + $0x518] sm:$0xf]
        %v573 = vld [vmem:[%s230 + $0x51c] sm:$0xf]
        %v574 = vld [vmem:[%s230 + $0x520] sm:$0xf]
        %v575 = vld [vmem:[%s230 + $0x524] sm:$0xf]
        %v576 = vld [vmem:[%s230 + $0x528] sm:$0xf]
        %v577 = vld [vmem:[%s230 + $0x52c] sm:$0xf]
        %v578 = vld [vmem:[%s230 + $0x530] sm:$0xf]
        %v579 = vld [vmem:[%s230 + $0x534] sm:$0xf]
        %v580 = vld [vmem:[%s230 + $0x538] sm:$0xf]
        %v581 = vld [vmem:[%s230 + $0x53c] sm:$0xf]
        %v582 = vld [vmem:[%s230 + $0x540] sm:$0xf]
        %v583 = vld [vmem:[%s230 + $0x544] sm:$0xf]
        %v584 = vld [vmem:[%s230 + $0x548] sm:$0xf]
        %v585 = vld [vmem:[%s230 + $0x54c] sm:$0xf]
        %v586 = vld [vmem:[%s230 + $0x550] sm:$0xf]
        %v587 = vld [vmem:[%s230 + $0x554] sm:$0xf]
        %v588 = vld [vmem:[%s230 + $0x558] sm:$0xf]
        %v589 = vld [vmem:[%s230 + $0x55c] sm:$0xf]
        %v590 = vld [vmem:[%s230 + $0x560] sm:$0xf]
        %v591 = vld [vmem:[%s230 + $0x564] sm:$0xf]
        %v592 = vld [vmem:[%s230 + $0x568] sm:$0xf]
        %v593 = vld [vmem:[%s230 + $0x56c] sm:$0xf]
        %v594 = vld [vmem:[%s230 + $0x570] sm:$0xf]
        %v595 = vld [vmem:[%s230 + $0x574] sm:$0xf]
        %v596 = vld [vmem:[%s230 + $0x578] sm:$0xf]
        %v597 = vld [vmem:[%s230 + $0x57c] sm:$0xf]
        %v598 = vld [vmem:[%s230 + $0x580] sm:$0xf]
        %v599 = vld [vmem:[%s230 + $0x584] sm:$0xf]
        %v600 = vld [vmem:[%s230 + $0x588] sm:$0xf]
        %v601 = vld [vmem:[%s230 + $0x58c] sm:$0xf]
        %v602 = vld [vmem:[%s230 + $0x590] sm:$0xf]
        %v603 = vld [vmem:[%s230 + $0x594] sm:$0xf]
        %v604 = vld [vmem:[%s230 + $0x598] sm:$0xf]
        %v605 = vld [vmem:[%s230 + $0x59c] sm:$0xf]
        %v606 = vld [vmem:[%s230 + $0x5a0] sm:$0xf]
        %v607 = vld [vmem:[%s230 + $0x5a4] sm:$0xf]
        %v608 = vld [vmem:[%s230 + $0x5a8] sm:$0xf]
        %v609 = vld [vmem:[%s230 + $0x5ac] sm:$0xf]
        %v610 = vld [vmem:[%s230 + $0x5b0] sm:$0xf]
        %v611 = vld [vmem:[%s230 + $0x5b4] sm:$0xf]
        %v612 = vld [vmem:[%s230 + $0x5b8] sm:$0xf]
        %v613 = vld [vmem:[%s230 + $0x5bc] sm:$0xf]
        %v614 = vld [vmem:[%s230 + $0x5c0] sm:$0xf]
        %v615 = vld [vmem:[%s230 + $0x5c4] sm:$0xf]
        %v616 = vld [vmem:[%s230 + $0x5c8] sm:$0xf]
        %v617 = vld [vmem:[%s230 + $0x5cc] sm:$0xf]
        %v618 = vld [vmem:[%s230 + $0x5d0] sm:$0xf]
        %v619 = vld [vmem:[%s230 + $0x5d4] sm:$0xf]
        %v620 = vld [vmem:[%s230 + $0x5d8] sm:$0xf]
        %v621 = vld [vmem:[%s230 + $0x5dc] sm:$0xf]
        %v622 = vld [vmem:[%s230 + $0x5e0] sm:$0xf]
        %v623 = vld [vmem:[%s230 + $0x5e4] sm:$0xf]
        %v624 = vld [vmem:[%s230 + $0x5e8] sm:$0xf]
        %v625 = vld [vmem:[%s230 + $0x5ec] sm:$0xf]
        %v626 = vld [vmem:[%s230 + $0x5f0] sm:$0xf]
        %v627 = vld [vmem:[%s230 + $0x5f4] sm:$0xf]
        %v628 = vld [vmem:[%s230 + $0x5f8] sm:$0xf]
        %v629 = vld [vmem:[%s230 + $0x5fc] sm:$0xf]
        %v630 = vld [vmem:[%s230 + $0x600] sm:$0xf]
        %v631 = vld [vmem:[%s230 + $0x604] sm:$0xf]
        %v632 = vld [vmem:[%s230 + $0x608] sm:$0xf]
        %v633 = vld [vmem:[%s230 + $0x60c] sm:$0xf]
        %v634 = vld [vmem:[%s230 + $0x610] sm:$0xf]
        %v635 = vld [vmem:[%s230 + $0x614] sm:$0xf]
        %v636 = vld [vmem:[%s230 + $0x618] sm:$0xf]
        %v637 = vld [vmem:[%s230 + $0x61c] sm:$0xf]
        %v638 = vld [vmem:[%s230 + $0x620] sm:$0xf]
        %v639 = vld [vmem:[%s230 + $0x624] sm:$0xf]
        %v640 = vld [vmem:[%s230 + $0x628] sm:$0xf]
        %v641 = vld [vmem:[%s230 + $0x62c] sm:$0xf]
        %v642 = vld [vmem:[%s230 + $0x630] sm:$0xf]
        %v643 = vld [vmem:[%s230 + $0x634] sm:$0xf]
        %v644 = vld [vmem:[%s230 + $0x638] sm:$0xf]
        %v645 = vld [vmem:[%s230 + $0x63c] sm:$0xf]
        %v646 = vld [vmem:[%s230 + $0x640] sm:$0xf]
        %v647 = vld [vmem:[%s230 + $0x644] sm:$0xf]
        %v648 = vld [vmem:[%s230 + $0x648] sm:$0xf]
        %v649 = vld [vmem:[%s230 + $0x64c] sm:$0xf]
        %v650 = vld [vmem:[%s230 + $0x650] sm:$0xf]
        %v651 = vld [vmem:[%s230 + $0x654] sm:$0xf]
        %v652 = vld [vmem:[%s230 + $0x658] sm:$0xf]
        %v653 = vld [vmem:[%s230 + $0x65c] sm:$0xf]
        %v654 = vld [vmem:[%s230 + $0x660] sm:$0xf]
        %v655 = vld [vmem:[%s230 + $0x664] sm:$0xf]
        %v656 = vld [vmem:[%s230 + $0x668] sm:$0xf]
        %v657 = vld [vmem:[%s230 + $0x66c] sm:$0xf]
        %v658 = vld [vmem:[%s230 + $0x670] sm:$0xf]
        %v659 = vld [vmem:[%s230 + $0x674] sm:$0xf]
        %v660 = vld [vmem:[%s230 + $0x678] sm:$0xf]
        %v661 = vld [vmem:[%s230 + $0x67c] sm:$0xf]
        %v662 = vld [vmem:[%s230 + $0x680] sm:$0xf]
        %v663 = vld [vmem:[%s230 + $0x684] sm:$0xf]
        %v664 = vld [vmem:[%s230 + $0x688] sm:$0xf]
        %v665 = vld [vmem:[%s230 + $0x68c] sm:$0xf]
        %v666 = vld [vmem:[%s230 + $0x690] sm:$0xf]
        %v667 = vld [vmem:[%s230 + $0x694] sm:$0xf]
        %v668 = vld [vmem:[%s230 + $0x698] sm:$0xf]
        %v669 = vld [vmem:[%s230 + $0x69c] sm:$0xf]
        %v670 = vld [vmem:[%s230 + $0x6a0] sm:$0xf]
        %v671 = vld [vmem:[%s230 + $0x6a4] sm:$0xf]
        %v672 = vld [vmem:[%s230 + $0x6a8] sm:$0xf]
        %v673 = vld [vmem:[%s230 + $0x6ac] sm:$0xf]
        %v674 = vld [vmem:[%s230 + $0x6b0] sm:$0xf]
        %v675 = vld [vmem:[%s230 + $0x6b4] sm:$0xf]
        %v676 = vld [vmem:[%s230 + $0x6b8] sm:$0xf]
        %v677 = vld [vmem:[%s230 + $0x6bc] sm:$0xf]
        %v678 = vld [vmem:[%s230 + $0x6c0] sm:$0xf]
        %v679 = vld [vmem:[%s230 + $0x6c4] sm:$0xf]
        %v680 = vld [vmem:[%s230 + $0x6c8] sm:$0xf]
        %v681 = vld [vmem:[%s230 + $0x6cc] sm:$0xf]
        %v682 = vld [vmem:[%s230 + $0x6d0] sm:$0xf]
        %v683 = vld [vmem:[%s230 + $0x6d4] sm:$0xf]
        %v684 = vld [vmem:[%s230 + $0x6d8] sm:$0xf]
        %v685 = vld [vmem:[%s230 + $0x6dc] sm:$0xf]
        %v686 = vld [vmem:[%s230 + $0x6e0] sm:$0xf]
        %v687 = vld [vmem:[%s230 + $0x6e4] sm:$0xf]
        %v688 = vld [vmem:[%s230 + $0x6e8] sm:$0xf]
        %v689 = vld [vmem:[%s230 + $0x6ec] sm:$0xf]
        %v690 = vld [vmem:[%s230 + $0x6f0] sm:$0xf]
        %v691 = vld [vmem:[%s230 + $0x6f4] sm:$0xf]
        %v692 = vld [vmem:[%s230 + $0x6f8] sm:$0xf]
        %v693 = vld [vmem:[%s230 + $0x6fc] sm:$0xf]
        %v694 = vld [vmem:[%s230 + $0x700] sm:$0xf]
        %v695 = vld [vmem:[%s230 + $0x704] sm:$0xf]
        %v696 = vld [vmem:[%s230 + $0x708] sm:$0xf]
        %v697 = vld [vmem:[%s230 + $0x70c] sm:$0xf]
        %v698 = vld [vmem:[%s230 + $0x710] sm:$0xf]
        %v699 = vld [vmem:[%s230 + $0x714] sm:$0xf]
        %v700 = vld [vmem:[%s230 + $0x718] sm:$0xf]
        %v701 = vld [vmem:[%s230 + $0x71c] sm:$0xf]
        %v702 = vld [vmem:[%s230 + $0x720] sm:$0xf]
        %v703 = vld [vmem:[%s230 + $0x724] sm:$0xf]
        %v704 = vld [vmem:[%s230 + $0x728] sm:$0xf]
        %v705 = vld [vmem:[%s230 + $0x72c] sm:$0xf]
        %v706 = vld [vmem:[%s230 + $0x730] sm:$0xf]
        %v707 = vld [vmem:[%s230 + $0x734] sm:$0xf]
        %v708 = vld [vmem:[%s230 + $0x738] sm:$0xf]
        %v709 = vld [vmem:[%s230 + $0x73c] sm:$0xf]
        %v710 = vld [vmem:[%s230 + $0x740] sm:$0xf]
        %v711 = vld [vmem:[%s230 + $0x744] sm:$0xf]
        %v712 = vld [vmem:[%s230 + $0x748] sm:$0xf]
        %v713 = vld [vmem:[%s230 + $0x74c] sm:$0xf]
        %v714 = vld [vmem:[%s230 + $0x750] sm:$0xf]
        %v715 = vld [vmem:[%s230 + $0x754] sm:$0xf]
        %v716 = vld [vmem:[%s230 + $0x758] sm:$0xf]
        %v717 = vld [vmem:[%s230 + $0x75c] sm:$0xf]
        %v718 = vld [vmem:[%s230 + $0x760] sm:$0xf]
        %v719 = vld [vmem:[%s230 + $0x764] sm:$0xf]
        %v720 = vld [vmem:[%s230 + $0x768] sm:$0xf]
        %v721 = vld [vmem:[%s230 + $0x76c] sm:$0xf]
        %v722 = vld [vmem:[%s230 + $0x770] sm:$0xf]
        %v723 = vld [vmem:[%s230 + $0x774] sm:$0xf]
        %v724 = vld [vmem:[%s230 + $0x778] sm:$0xf]
        %v725 = vld [vmem:[%s230 + $0x77c] sm:$0xf]
        %v726 = vld [vmem:[%s230 + $0x780] sm:$0xf]
        %v727 = vld [vmem:[%s230 + $0x784] sm:$0xf]
        %v728 = vld [vmem:[%s230 + $0x788] sm:$0xf]
        %v729 = vld [vmem:[%s230 + $0x78c] sm:$0xf]
        %v730 = vld [vmem:[%s230 + $0x790] sm:$0xf]
        %v731 = vld [vmem:[%s230 + $0x794] sm:$0xf]
        %v732 = vld [vmem:[%s230 + $0x798] sm:$0xf]
        %v733 = vld [vmem:[%s230 + $0x79c] sm:$0xf]
        %v734 = vld [vmem:[%s230 + $0x7a0] sm:$0xf]
        %v735 = vld [vmem:[%s230 + $0x7a4] sm:$0xf]
        %v736 = vld [vmem:[%s230 + $0x7a8] sm:$0xf]
        %v737 = vld [vmem:[%s230 + $0x7ac] sm:$0xf]
        %v738 = vld [vmem:[%s230 + $0x7b0] sm:$0xf]
        %v739 = vld [vmem:[%s230 + $0x7b4] sm:$0xf]
        %v740 = vld [vmem:[%s230 + $0x7b8] sm:$0xf]
        %v741 = vld [vmem:[%s230 + $0x7bc] sm:$0xf]
        %v742 = vld [vmem:[%s230 + $0x7c0] sm:$0xf]
        %v743 = vld [vmem:[%s230 + $0x7c4] sm:$0xf]
        %v744 = vld [vmem:[%s230 + $0x7c8] sm:$0xf]
        %v745 = vld [vmem:[%s230 + $0x7cc] sm:$0xf]
        %v746 = vld [vmem:[%s230 + $0x7d0] sm:$0xf]
        %v747 = vld [vmem:[%s230 + $0x7d4] sm:$0xf]
        %v748 = vld [vmem:[%s230 + $0x7d8] sm:$0xf]
        %v749 = vld [vmem:[%s230 + $0x7dc] sm:$0xf]
        %v750 = vld [vmem:[%s230 + $0x7e0] sm:$0xf]
        %v751 = vld [vmem:[%s230 + $0x7e4] sm:$0xf]
        %v752 = vld [vmem:[%s230 + $0x7e8] sm:$0xf]
        %v753 = vld [vmem:[%s230 + $0x7ec] sm:$0xf]
        %v754 = vld [vmem:[%s230 + $0x7f0] sm:$0xf]
        %v755 = vld [vmem:[%s230 + $0x7f4] sm:$0xf]
        %v756 = vld [vmem:[%s230 + $0x7f8] sm:$0xf]
        %v757 = vld [vmem:[%s230 + $0x7fc] sm:$0xf]
        %v758 = vld [vmem:[%s230 + $0x800] sm:$0xf]
        %v759 = vld [vmem:[%s230 + $0x804] sm:$0xf]
        %v760 = vld [vmem:[%s230 + $0x808] sm:$0xf]
        %v761 = vld [vmem:[%s230 + $0x80c] sm:$0xf]
        %v762 = vld [vmem:[%s230 + $0x810] sm:$0xf]
        %v763 = vld [vmem:[%s230 + $0x814] sm:$0xf]
        %v764 = vld [vmem:[%s230 + $0x818] sm:$0xf]
        %v765 = vld [vmem:[%s230 + $0x81c] sm:$0xf]
        %v766 = vld [vmem:[%s230 + $0x820] sm:$0xf]
        %v767 = vld [vmem:[%s230 + $0x824] sm:$0xf]
        %v768 = vld [vmem:[%s230 + $0x828] sm:$0xf]
        %v769 = vld [vmem:[%s230 + $0x82c] sm:$0xf]
        %v770 = vld [vmem:[%s230 + $0x830] sm:$0xf]
        %v771 = vld [vmem:[%s230 + $0x834] sm:$0xf]
        %v772 = vld [vmem:[%s230 + $0x838] sm:$0xf]
        %v773 = vld [vmem:[%s230 + $0x83c] sm:$0xf]
        %v774 = vld [vmem:[%s230 + $0x840] sm:$0xf]
        %v775 = vld [vmem:[%s230 + $0x844] sm:$0xf]
        %v776 = vld [vmem:[%s230 + $0x848] sm:$0xf]
        %v777 = vld [vmem:[%s230 + $0x84c] sm:$0xf]
        %v778 = vld [vmem:[%s230 + $0x850] sm:$0xf]
        %v779 = vld [vmem:[%s230 + $0x854] sm:$0xf]
        %v780 = vld [vmem:[%s230 + $0x858] sm:$0xf]
        %v781 = vld [vmem:[%s230 + $0x85c] sm:$0xf]
        %v782 = vld [vmem:[%s230 + $0x860] sm:$0xf]
        %v783 = vld [vmem:[%s230 + $0x864] sm:$0xf]
        %v784 = vld [vmem:[%s230 + $0x868] sm:$0xf]
        %v785 = vld [vmem:[%s230 + $0x86c] sm:$0xf]
        %v786 = vld [vmem:[%s230 + $0x870] sm:$0xf]
        %v787 = vld [vmem:[%s230 + $0x874] sm:$0xf]
        %v788 = vld [vmem:[%s230 + $0x878] sm:$0xf]
        %v789 = vld [vmem:[%s230 + $0x87c] sm:$0xf]
        %v790 = vld [vmem:[%s230 + $0x880] sm:$0xf]
        %v791 = vld [vmem:[%s230 + $0x884] sm:$0xf]
        %v792 = vld [vmem:[%s230 + $0x888] sm:$0xf]
        %v793 = vld [vmem:[%s230 + $0x88c] sm:$0xf]
        %v794 = vld [vmem:[%s230 + $0x890] sm:$0xf]
        %v795 = vld [vmem:[%s230 + $0x894] sm:$0xf]
        %v796 = vld [vmem:[%s230 + $0x898] sm:$0xf]
        %v797 = vld [vmem:[%s230 + $0x89c] sm:$0xf]
        %v798 = vld [vmem:[%s230 + $0x8a0] sm:$0xf]
        %v799 = vld [vmem:[%s230 + $0x8a4] sm:$0xf]
        %v800 = vld [vmem:[%s230 + $0x8a8] sm:$0xf]
        %v801 = vld [vmem:[%s230 + $0x8ac] sm:$0xf]
        %v802 = vld [vmem:[%s230 + $0x8b0] sm:$0xf]
        %v803 = vld [vmem:[%s230 + $0x8b4] sm:$0xf]
        %v804 = vld [vmem:[%s230 + $0x8b8] sm:$0xf]
        %v805 = vld [vmem:[%s230 + $0x8bc] sm:$0xf]
        %v806 = vld [vmem:[%s230 + $0x8c0] sm:$0xf]
        %v807 = vld [vmem:[%s230 + $0x8c4] sm:$0xf]
        %v808 = vld [vmem:[%s230 + $0x8c8] sm:$0xf]
        %v809 = vld [vmem:[%s230 + $0x8cc] sm:$0xf]
        %v810 = vld [vmem:[%s230 + $0x8d0] sm:$0xf]
        %v811 = vld [vmem:[%s230 + $0x8d4] sm:$0xf]
        %v812 = vld [vmem:[%s230 + $0x8d8] sm:$0xf]
        %v813 = vld [vmem:[%s230 + $0x8dc] sm:$0xf]
        %v814 = vld [vmem:[%s230 + $0x8e0] sm:$0xf]
        %v815 = vld [vmem:[%s230 + $0x8e4] sm:$0xf]
        %v816 = vld [vmem:[%s230 + $0x8e8] sm:$0xf]
        %v817 = vld [vmem:[%s230 + $0x8ec] sm:$0xf]
        %v818 = vld [vmem:[%s230 + $0x8f0] sm:$0xf]
        %v819 = vld [vmem:[%s230 + $0x8f4] sm:$0xf]
        %v820 = vld [vmem:[%s230 + $0x8f8] sm:$0xf]
        %v821 = vld [vmem:[%s230 + $0x8fc] sm:$0xf]
        %v822 = vld [vmem:[%s230 + $0x900] sm:$0xf]
        %v823 = vld [vmem:[%s230 + $0x904] sm:$0xf]
        %v824 = vld [vmem:[%s230 + $0x908] sm:$0xf]
        %v825 = vld [vmem:[%s230 + $0x90c] sm:$0xf]
        %v826 = vld [vmem:[%s230 + $0x910] sm:$0xf]
        %v827 = vld [vmem:[%s230 + $0x914] sm:$0xf]
        %v828 = vld [vmem:[%s230 + $0x918] sm:$0xf]
        %v829 = vld [vmem:[%s230 + $0x91c] sm:$0xf]
        %v830 = vld [vmem:[%s230 + $0x920] sm:$0xf]
        %v831 = vld [vmem:[%s230 + $0x924] sm:$0xf]
        %v832 = vld [vmem:[%s230 + $0x928] sm:$0xf]
        %v833 = vld [vmem:[%s230 + $0x92c] sm:$0xf]
        %v834 = vld [vmem:[%s230 + $0x930] sm:$0xf]
        %v835 = vld [vmem:[%s230 + $0x934] sm:$0xf]
        %v836 = vld [vmem:[%s230 + $0x938] sm:$0xf]
        %v837 = vld [vmem:[%s230 + $0x93c] sm:$0xf]
        %v838 = vld [vmem:[%s230 + $0x940] sm:$0xf]
        %v839 = vld [vmem:[%s230 + $0x944] sm:$0xf]
        %v840 = vld [vmem:[%s230 + $0x948] sm:$0xf]
        %v841 = vld [vmem:[%s230 + $0x94c] sm:$0xf]
        %v842 = vld [vmem:[%s230 + $0x950] sm:$0xf]
        %v843 = vld [vmem:[%s230 + $0x954] sm:$0xf]
        %v844 = vld [vmem:[%s230 + $0x958] sm:$0xf]
        %v845 = vld [vmem:[%s230 + $0x95c] sm:$0xf]
        %v846 = vld [vmem:[%s230 + $0x960] sm:$0xf]
        %v847 = vld [vmem:[%s230 + $0x964] sm:$0xf]
        %v848 = vld [vmem:[%s230 + $0x968] sm:$0xf]
        %v849 = vld [vmem:[%s230 + $0x96c] sm:$0xf]
        %v850 = vld [vmem:[%s230 + $0x970] sm:$0xf]
        %v851 = vld [vmem:[%s230 + $0x974] sm:$0xf]
        %v852 = vld [vmem:[%s230 + $0x978] sm:$0xf]
        %v853 = vld [vmem:[%s230 + $0x97c] sm:$0xf]
        %v854 = vld [vmem:[%s230 + $0x980] sm:$0xf]
        %v855 = vld [vmem:[%s230 + $0x984] sm:$0xf]
        %v856 = vld [vmem:[%s230 + $0x988] sm:$0xf]
        %v857 = vld [vmem:[%s230 + $0x98c] sm:$0xf]
        %v858 = vld [vmem:[%s230 + $0x990] sm:$0xf]
        %v859 = vld [vmem:[%s230 + $0x994] sm:$0xf]
        %v860 = vld [vmem:[%s230 + $0x998] sm:$0xf]
        %v861 = vld [vmem:[%s230 + $0x99c] sm:$0xf]
        %v862 = vld [vmem:[%s230 + $0x9a0] sm:$0xf]
        %v863 = vld [vmem:[%s230 + $0x9a4] sm:$0xf]
        %v864 = vld [vmem:[%s230 + $0x9a8] sm:$0xf]
        %v865 = vld [vmem:[%s230 + $0x9ac] sm:$0xf]
        %v866 = vld [vmem:[%s230 + $0x9b0] sm:$0xf]
        %v867 = vld [vmem:[%s230 + $0x9b4] sm:$0xf]
        %v868 = vld [vmem:[%s230 + $0x9b8] sm:$0xf]
        %v869 = vld [vmem:[%s230 + $0x9bc] sm:$0xf]
        %v870 = vld [vmem:[%s230 + $0x9c0] sm:$0xf]
        %v871 = vld [vmem:[%s230 + $0x9c4] sm:$0xf]
        %v872 = vld [vmem:[%s230 + $0x9c8] sm:$0xf]
        %v873 = vld [vmem:[%s230 + $0x9cc] sm:$0xf]
        %v874 = vld [vmem:[%s230 + $0x9d0] sm:$0xf]
        %v875 = vld [vmem:[%s230 + $0x9d4] sm:$0xf]
        %v876 = vld [vmem:[%s230 + $0x9d8] sm:$0xf]
        %v877 = vld [vmem:[%s230 + $0x9dc] sm:$0xf]
        %v878 = vld [vmem:[%s230 + $0x9e0] sm:$0xf]
        %v879 = vld [vmem:[%s230 + $0x9e4] sm:$0xf]
        %v880 = vld [vmem:[%s230 + $0x9e8] sm:$0xf]
        %v881 = vld [vmem:[%s230 + $0x9ec] sm:$0xf]
        %v882 = vld [vmem:[%s230 + $0x9f0] sm:$0xf]
        %v883 = vld [vmem:[%s230 + $0x9f4] sm:$0xf]
        %v884 = vld [vmem:[%s230 + $0x9f8] sm:$0xf]
        %v885 = vld [vmem:[%s230 + $0x9fc] sm:$0xf]
        %v886 = vld [vmem:[%s230 + $0xa00] sm:$0xf]
        %v887 = vld [vmem:[%s230 + $0xa04] sm:$0xf]
        %v888 = vld [vmem:[%s230 + $0xa08] sm:$0xf]
        %v889 = vld [vmem:[%s230 + $0xa0c] sm:$0xf]
        %v890 = vld [vmem:[%s230 + $0xa10] sm:$0xf]
        %v891 = vld [vmem:[%s230 + $0xa14] sm:$0xf]
        %v892 = vld [vmem:[%s230 + $0xa18] sm:$0xf]
        %v893 = vld [vmem:[%s230 + $0xa1c] sm:$0xf]
        %v894 = vld [vmem:[%s230 + $0xa20] sm:$0xf]
        %v895 = vld [vmem:[%s230 + $0xa24] sm:$0xf]
        %v896 = vld [vmem:[%s230 + $0xa28] sm:$0xf]
        %v897 = vld [vmem:[%s230 + $0xa2c] sm:$0xf]
        %v898 = vld [vmem:[%s230 + $0xa30] sm:$0xf]
        %v899 = vld [vmem:[%s230 + $0xa34] sm:$0xf]
        %v900 = vld [vmem:[%s230 + $0xa38] sm:$0xf]
        %v901 = vld [vmem:[%s230 + $0xa3c] sm:$0xf]
        %v902 = vld [vmem:[%s230 + $0xa40] sm:$0xf]
        %v903 = vld [vmem:[%s230 + $0xa44] sm:$0xf]
        %v904 = vld [vmem:[%s230 + $0xa48] sm:$0xf]
        %v905 = vld [vmem:[%s230 + $0xa4c] sm:$0xf]
        %v906 = vld [vmem:[%s230 + $0xa50] sm:$0xf]
        %v907 = vld [vmem:[%s230 + $0xa54] sm:$0xf]
        %v908 = vld [vmem:[%s230 + $0xa58] sm:$0xf]
        %v909 = vld [vmem:[%s230 + $0xa5c] sm:$0xf]
        %v910 = vld [vmem:[%s230 + $0xa60] sm:$0xf]
        %v911 = vld [vmem:[%s230 + $0xa64] sm:$0xf]
        %v912 = vld [vmem:[%s230 + $0xa68] sm:$0xf]
        %v913 = vld [vmem:[%s230 + $0xa6c] sm:$0xf]
        %v914 = vld [vmem:[%s230 + $0xa70] sm:$0xf]
        %v915 = vld [vmem:[%s230 + $0xa74] sm:$0xf]
        %v916 = vld [vmem:[%s230 + $0xa78] sm:$0xf]
        %v917 = vld [vmem:[%s230 + $0xa7c] sm:$0xf]
        %v918 = vld [vmem:[%s230 + $0xa80] sm:$0xf]
        %v919 = vld [vmem:[%s230 + $0xa84] sm:$0xf]
        %v920 = vld [vmem:[%s230 + $0xa88] sm:$0xf]
        %v921 = vld [vmem:[%s230 + $0xa8c] sm:$0xf]
        %v922 = vld [vmem:[%s230 + $0xa90] sm:$0xf]
        %v923 = vld [vmem:[%s230 + $0xa94] sm:$0xf]
        %v924 = vld [vmem:[%s230 + $0xa98] sm:$0xf]
        %v925 = vld [vmem:[%s230 + $0xa9c] sm:$0xf]
        %v926 = vld [vmem:[%s230 + $0xaa0] sm:$0xf]
        %v927 = vld [vmem:[%s230 + $0xaa4] sm:$0xf]
        %v928 = vld [vmem:[%s230 + $0xaa8] sm:$0xf]
        %v929 = vld [vmem:[%s230 + $0xaac] sm:$0xf]
        %v930 = vld [vmem:[%s230 + $0xab0] sm:$0xf]
        %v931 = vld [vmem:[%s230 + $0xab4] sm:$0xf]
        %v932 = vld [vmem:[%s230 + $0xab8] sm:$0xf]
        %v933 = vld [vmem:[%s230 + $0xabc] sm:$0xf]
        %v934 = vld [vmem:[%s230 + $0xac0] sm:$0xf]
        %v935 = vld [vmem:[%s230 + $0xac4] sm:$0xf]
        %v936 = vld [vmem:[%s230 + $0xac8] sm:$0xf]
        %v937 = vld [vmem:[%s230 + $0xacc] sm:$0xf]
        %v938 = vld [vmem:[%s230 + $0xad0] sm:$0xf]
        %v939 = vld [vmem:[%s230 + $0xad4] sm:$0xf]
        %v940 = vld [vmem:[%s230 + $0xad8] sm:$0xf]
        %v941 = vld [vmem:[%s230 + $0xadc] sm:$0xf]
        %v942 = vld [vmem:[%s230 + $0xae0] sm:$0xf]
        %v943 = vld [vmem:[%s230 + $0xae4] sm:$0xf]
        %v944 = vld [vmem:[%s230 + $0xae8] sm:$0xf]
        %v945 = vld [vmem:[%s230 + $0xaec] sm:$0xf]
        %v946 = vld [vmem:[%s230 + $0xaf0] sm:$0xf]
        %v947 = vld [vmem:[%s230 + $0xaf4] sm:$0xf]
        %v948 = vld [vmem:[%s230 + $0xaf8] sm:$0xf]
        %v949 = vld [vmem:[%s230 + $0xafc] sm:$0xf]
        %v950 = vld [vmem:[%s230 + $0xb00] sm:$0xf]
        %v951 = vld [vmem:[%s230 + $0xb04] sm:$0xf]
        %v952 = vld [vmem:[%s230 + $0xb08] sm:$0xf]
        %v953 = vld [vmem:[%s230 + $0xb0c] sm:$0xf]
        %v954 = vld [vmem:[%s230 + $0xb10] sm:$0xf]
        %v955 = vld [vmem:[%s230 + $0xb14] sm:$0xf]
        %v956 = vld [vmem:[%s230 + $0xb18] sm:$0xf]
        %v957 = vld [vmem:[%s230 + $0xb1c] sm:$0xf]
        %v958 = vld [vmem:[%s230 + $0xb20] sm:$0xf]
        %v959 = vld [vmem:[%s230 + $0xb24] sm:$0xf]
        %v960 = vld [vmem:[%s230 + $0xb28] sm:$0xf]
        %v961 = vld [vmem:[%s230 + $0xb2c] sm:$0xf]
        %v962 = vld [vmem:[%s230 + $0xb30] sm:$0xf]
        %v963 = vld [vmem:[%s230 + $0xb34] sm:$0xf]
        %v964 = vld [vmem:[%s230 + $0xb38] sm:$0xf]
        %v965 = vld [vmem:[%s230 + $0xb3c] sm:$0xf]
        %v966 = vld [vmem:[%s230 + $0xb40] sm:$0xf]
        %v967 = vld [vmem:[%s230 + $0xb44] sm:$0xf]
        %v968 = vld [vmem:[%s230 + $0xb48] sm:$0xf]
        %v969 = vld [vmem:[%s230 + $0xb4c] sm:$0xf]
        %v970 = vld [vmem:[%s230 + $0xb50] sm:$0xf]
        %v971 = vld [vmem:[%s230 + $0xb54] sm:$0xf]
        %v972 = vld [vmem:[%s230 + $0xb58] sm:$0xf]
        %v973 = vld [vmem:[%s230 + $0xb5c] sm:$0xf]
        %v974 = vld [vmem:[%s230 + $0xb60] sm:$0xf]
        %v975 = vld [vmem:[%s230 + $0xb64] sm:$0xf]
        %v976 = vld [vmem:[%s230 + $0xb68] sm:$0xf]
        %v977 = vld [vmem:[%s230 + $0xb6c] sm:$0xf]
        %v978 = vld [vmem:[%s230 + $0xb70] sm:$0xf]
        %v979 = vld [vmem:[%s230 + $0xb74] sm:$0xf]
        %v980 = vld [vmem:[%s230 + $0xb78] sm:$0xf]
        %v981 = vld [vmem:[%s230 + $0xb7c] sm:$0xf]
        %v982 = vld [vmem:[%s230 + $0xb80] sm:$0xf]
        %v983 = vld [vmem:[%s230 + $0xb84] sm:$0xf]
        %v984 = vld [vmem:[%s230 + $0xb88] sm:$0xf]
        %v985 = vld [vmem:[%s230 + $0xb8c] sm:$0xf]
        %v986 = vld [vmem:[%s230 + $0xb90] sm:$0xf]
        %v987 = vld [vmem:[%s230 + $0xb94] sm:$0xf]
        %v988 = vld [vmem:[%s230 + $0xb98] sm:$0xf]
        %v989 = vld [vmem:[%s230 + $0xb9c] sm:$0xf]
        %v990 = vld [vmem:[%s230 + $0xba0] sm:$0xf]
        %v991 = vld [vmem:[%s230 + $0xba4] sm:$0xf]
        %v992 = vld [vmem:[%s230 + $0xba8] sm:$0xf]
        %v993 = vld [vmem:[%s230 + $0xbac] sm:$0xf]
        %v994 = vld [vmem:[%s230 + $0xbb0] sm:$0xf]
        %v995 = vld [vmem:[%s230 + $0xbb4] sm:$0xf]
        %v996 = vld [vmem:[%s230 + $0xbb8] sm:$0xf]
        %v997 = vld [vmem:[%s230 + $0xbbc] sm:$0xf]
        %v998 = vld [vmem:[%s230 + $0xbc0] sm:$0xf]
        %v999 = vld [vmem:[%s230 + $0xbc4] sm:$0xf]
        %v1000 = vld [vmem:[%s230 + $0xbc8] sm:$0xf]
        %v1001 = vld [vmem:[%s230 + $0xbcc] sm:$0xf]
        %v1002 = vld [vmem:[%s230 + $0xbd0] sm:$0xf]
        %v1003 = vld [vmem:[%s230 + $0xbd4] sm:$0xf]
        %v1004 = vld [vmem:[%s230 + $0xbd8] sm:$0xf]
        %v1005 = vld [vmem:[%s230 + $0xbdc] sm:$0xf]
        %v1006 = vld [vmem:[%s230 + $0xbe0] sm:$0xf]
        %v1007 = vld [vmem:[%s230 + $0xbe4] sm:$0xf]
        %v1008 = vld [vmem:[%s230 + $0xbe8] sm:$0xf]
        %v1009 = vld [vmem:[%s230 + $0xbec] sm:$0xf]
        %v1010 = vld [vmem:[%s230 + $0xbf0] sm:$0xf]
        %v1011 = vld [vmem:[%s230 + $0xbf4] sm:$0xf]
        %v1012 = vld [vmem:[%s230 + $0xbf8] sm:$0xf]
        %v1013 = vld [vmem:[%s230 + $0xbfc] sm:$0xf]
        %v1014 = vld [vmem:[%s230 + $0xc00] sm:$0xf]
        %v1015 = vld [vmem:[%s230 + $0xc04] sm:$0xf]
        %v1016 = vld [vmem:[%s230 + $0xc08] sm:$0xf]
        %v1017 = vld [vmem:[%s230 + $0xc0c] sm:$0xf]
        %v1018 = vld [vmem:[%s230 + $0xc10] sm:$0xf]
        %v1019 = vld [vmem:[%s230 + $0xc14] sm:$0xf]
        %v1020 = vld [vmem:[%s230 + $0xc18] sm:$0xf]
        %v1021 = vld [vmem:[%s230 + $0xc1c] sm:$0xf]
        %v1022 = vld [vmem:[%s230 + $0xc20] sm:$0xf]
        %v1023 = vld [vmem:[%s230 + $0xc24] sm:$0xf]
        %v1024 = vld [vmem:[%s230 + $0xc28] sm:$0xf]
        %v1025 = vld [vmem:[%s230 + $0xc2c] sm:$0xf]
        %v1026 = vld [vmem:[%s230 + $0xc30] sm:$0xf]
        %v1027 = vld [vmem:[%s230 + $0xc34] sm:$0xf]
        %v1028 = vld [vmem:[%s230 + $0xc38] sm:$0xf]
        %v1029 = vld [vmem:[%s230 + $0xc3c] sm:$0xf]
        %v1030 = vld [vmem:[%s230 + $0xc40] sm:$0xf]
        %v1031 = vld [vmem:[%s230 + $0xc44] sm:$0xf]
        %v1032 = vld [vmem:[%s230 + $0xc48] sm:$0xf]
        %v1033 = vld [vmem:[%s230 + $0xc4c] sm:$0xf]
        %v1034 = vld [vmem:[%s230 + $0xc50] sm:$0xf]
        %v1035 = vld [vmem:[%s230 + $0xc54] sm:$0xf]
        %v1036 = vld [vmem:[%s230 + $0xc58] sm:$0xf]
        %v1037 = vld [vmem:[%s230 + $0xc5c] sm:$0xf]
        %v1038 = vld [vmem:[%s230 + $0xc60] sm:$0xf]
        %v1039 = vld [vmem:[%s230 + $0xc64] sm:$0xf]
        %v1040 = vld [vmem:[%s230 + $0xc68] sm:$0xf]
        %v1041 = vld [vmem:[%s230 + $0xc6c] sm:$0xf]
        %v1042 = vld [vmem:[%s230 + $0xc70] sm:$0xf]
        %v1043 = vld [vmem:[%s230 + $0xc74] sm:$0xf]
        %v1044 = vld [vmem:[%s230 + $0xc78] sm:$0xf]
        %v1045 = vld [vmem:[%s230 + $0xc7c] sm:$0xf]
        %v1046 = vld [vmem:[%s230 + $0xc80] sm:$0xf]
        %v1047 = vld [vmem:[%s230 + $0xc84] sm:$0xf]
        %v1048 = vld [vmem:[%s230 + $0xc88] sm:$0xf]
        %v1049 = vld [vmem:[%s230 + $0xc8c] sm:$0xf]
        %v1050 = vld [vmem:[%s230 + $0xc90] sm:$0xf]
        %v1051 = vld [vmem:[%s230 + $0xc94] sm:$0xf]
        %v1052 = vld [vmem:[%s230 + $0xc98] sm:$0xf]
        %v1053 = vld [vmem:[%s230 + $0xc9c] sm:$0xf]
        %v1054 = vld [vmem:[%s230 + $0xca0] sm:$0xf]
        %v1055 = vld [vmem:[%s230 + $0xca4] sm:$0xf]
        %v1056 = vld [vmem:[%s230 + $0xca8] sm:$0xf]
        %v1057 = vld [vmem:[%s230 + $0xcac] sm:$0xf]
        %v1058 = vld [vmem:[%s230 + $0xcb0] sm:$0xf]
        %v1059 = vld [vmem:[%s230 + $0xcb4] sm:$0xf]
        %v1060 = vld [vmem:[%s230 + $0xcb8] sm:$0xf]
        %v1061 = vld [vmem:[%s230 + $0xcbc] sm:$0xf]
        %v1062 = vld [vmem:[%s230 + $0xcc0] sm:$0xf]
        %v1063 = vld [vmem:[%s230 + $0xcc4] sm:$0xf]
        %v1064 = vld [vmem:[%s230 + $0xcc8] sm:$0xf]
        %v1065 = vld [vmem:[%s230 + $0xccc] sm:$0xf]
        %v1066 = vld [vmem:[%s230 + $0xcd0] sm:$0xf]
        %v1067 = vld [vmem:[%s230 + $0xcd4] sm:$0xf]
        %v1068 = vld [vmem:[%s230 + $0xcd8] sm:$0xf]
        %v1069 = vld [vmem:[%s230 + $0xcdc] sm:$0xf]
        %v1070 = vld [vmem:[%s230 + $0xce0] sm:$0xf]
        %v1071 = vld [vmem:[%s230 + $0xce4] sm:$0xf]
        %v1072 = vld [vmem:[%s230 + $0xce8] sm:$0xf]
        %v1073 = vld [vmem:[%s230 + $0xcec] sm:$0xf]
        %v1074 = vld [vmem:[%s230 + $0xcf0] sm:$0xf]
        %v1075 = vld [vmem:[%s230 + $0xcf4] sm:$0xf]
        %v1076 = vld [vmem:[%s230 + $0xcf8] sm:$0xf]
        %v1077 = vld [vmem:[%s230 + $0xcfc] sm:$0xf]
        %v1078 = vld [vmem:[%s230 + $0xd00] sm:$0xf]
        %v1079 = vld [vmem:[%s230 + $0xd04] sm:$0xf]
        %v1080 = vld [vmem:[%s230 + $0xd08] sm:$0xf]
        %v1081 = vld [vmem:[%s230 + $0xd0c] sm:$0xf]
        %v1082 = vld [vmem:[%s230 + $0xd10] sm:$0xf]
        %v1083 = vld [vmem:[%s230 + $0xd14] sm:$0xf]
        %v1084 = vld [vmem:[%s230 + $0xd18] sm:$0xf]
        %v1085 = vld [vmem:[%s230 + $0xd1c] sm:$0xf]
        %v1086 = vld [vmem:[%s230 + $0xd20] sm:$0xf]
        %v1087 = vld [vmem:[%s230 + $0xd24] sm:$0xf]
        %v1088 = vld [vmem:[%s230 + $0xd28] sm:$0xf]
        %v1089 = vld [vmem:[%s230 + $0xd2c] sm:$0xf]
        %v1090 = vld [vmem:[%s230 + $0xd30] sm:$0xf]
        %v1091 = vld [vmem:[%s230 + $0xd34] sm:$0xf]
        %v1092 = vld [vmem:[%s230 + $0xd38] sm:$0xf]
        %v1093 = vld [vmem:[%s230 + $0xd3c] sm:$0xf]
        %v1094 = vld [vmem:[%s230 + $0xd40] sm:$0xf]
        %v1095 = vld [vmem:[%s230 + $0xd44] sm:$0xf]
        %v1096 = vld [vmem:[%s230 + $0xd48] sm:$0xf]
        %v1097 = vld [vmem:[%s230 + $0xd4c] sm:$0xf]
        %v1098 = vld [vmem:[%s230 + $0xd50] sm:$0xf]
        %v1099 = vld [vmem:[%s230 + $0xd54] sm:$0xf]
        %v1100 = vld [vmem:[%s230 + $0xd58] sm:$0xf]
        %v1101 = vld [vmem:[%s230 + $0xd5c] sm:$0xf]
        %v1102 = vld [vmem:[%s230 + $0xd60] sm:$0xf]
        %v1103 = vld [vmem:[%s230 + $0xd64] sm:$0xf]
        %v1104 = vld [vmem:[%s230 + $0xd68] sm:$0xf]
        %v1105 = vld [vmem:[%s230 + $0xd6c] sm:$0xf]
        %v1106 = vld [vmem:[%s230 + $0xd70] sm:$0xf]
        %v1107 = vld [vmem:[%s230 + $0xd74] sm:$0xf]
        %v1108 = vld [vmem:[%s230 + $0xd78] sm:$0xf]
        %v1109 = vld [vmem:[%s230 + $0xd7c] sm:$0xf]
        %v1117 = vcombine.high %v239, %v239
        %v1119 = vunpack.c.l.s4 1966171168
        %v1120 = vunpack.c.0.s8 %v1119
        %v1121 = vlaneseq
        %v1122 = vshrl.u32 %v1121, 7
        %v1123 = vsub.s32 %v1120, %v1122
        %v1124 = vrot.slane %v239, %v1123
        %v1126 = vunpack.c.l.s4 1966171168
        %v1127 = vunpack.c.0.s8 %v1126
        %v1128 = vlaneseq
        %v1129 = vshrl.u32 %v1128, 7
        %v1130 = vsub.s32 %v1127, %v1129
        %v1131 = vrot.slane %v1117, %v1130
        %v1132 = vcombine.high %v1124, %v1124
        %v1133 = vcombine.high %v1131, %v1131
        %v1135 = vunpack.c.l.s4 1966171168
        %v1136 = vunpack.c.0.s8 %v1135
        %v1137 = vlaneseq
        %v1138 = vshrl.u32 %v1137, 7
        %v1139 = vsub.s32 %v1136, %v1138
        %v1140 = vrot.slane %v1124, %v1139
        %v1142 = vunpack.c.l.s4 1966171168
        %v1143 = vunpack.c.0.s8 %v1142
        %v1144 = vlaneseq
        %v1145 = vshrl.u32 %v1144, 7
        %v1146 = vsub.s32 %v1143, %v1145
        %v1147 = vrot.slane %v1131, %v1146
        %v1149 = vunpack.c.l.s4 1966171168
        %v1150 = vunpack.c.0.s8 %v1149
        %v1151 = vlaneseq
        %v1152 = vshrl.u32 %v1151, 7
        %v1153 = vsub.s32 %v1150, %v1152
        %v1154 = vrot.slane %v1132, %v1153
        %v1156 = vunpack.c.l.s4 1966171168
        %v1157 = vunpack.c.0.s8 %v1156
        %v1158 = vlaneseq
        %v1159 = vshrl.u32 %v1158, 7
        %v1160 = vsub.s32 %v1157, %v1159
        %v1161 = vrot.slane %v1133, %v1160
        %v1162 = vcombine.high %v1140, %v1140
        %v1163 = vcombine.high %v1147, %v1147
        %v1164 = vcombine.high %v1154, %v1154
        %v1165 = vcombine.high %v1161, %v1161
        %v1166 = vcombine.high %v240, %v240
        %v1168 = vunpack.c.l.s4 1966171168
        %v1169 = vunpack.c.0.s8 %v1168
        %v1170 = vlaneseq
        %v1171 = vshrl.u32 %v1170, 7
        %v1172 = vsub.s32 %v1169, %v1171
        %v1173 = vrot.slane %v240, %v1172
        %v1175 = vunpack.c.l.s4 1966171168
        %v1176 = vunpack.c.0.s8 %v1175
        %v1177 = vlaneseq
        %v1178 = vshrl.u32 %v1177, 7
        %v1179 = vsub.s32 %v1176, %v1178
        %v1180 = vrot.slane %v1166, %v1179
        %v1181 = vcombine.high %v1173, %v1173
        %v1182 = vcombine.high %v1180, %v1180
        %v1184 = vunpack.c.l.s4 1966171168
        %v1185 = vunpack.c.0.s8 %v1184
        %v1186 = vlaneseq
        %v1187 = vshrl.u32 %v1186, 7
        %v1188 = vsub.s32 %v1185, %v1187
        %v1189 = vrot.slane %v1173, %v1188
        %v1191 = vunpack.c.l.s4 1966171168
        %v1192 = vunpack.c.0.s8 %v1191
        %v1193 = vlaneseq
        %v1194 = vshrl.u32 %v1193, 7
        %v1195 = vsub.s32 %v1192, %v1194
        %v1196 = vrot.slane %v1180, %v1195
        %v1198 = vunpack.c.l.s4 1966171168
        %v1199 = vunpack.c.0.s8 %v1198
        %v1200 = vlaneseq
        %v1201 = vshrl.u32 %v1200, 7
        %v1202 = vsub.s32 %v1199, %v1201
        %v1203 = vrot.slane %v1181, %v1202
        %v1205 = vunpack.c.l.s4 1966171168
        %v1206 = vunpack.c.0.s8 %v1205
        %v1207 = vlaneseq
        %v1208 = vshrl.u32 %v1207, 7
        %v1209 = vsub.s32 %v1206, %v1208
        %v1210 = vrot.slane %v1182, %v1209
        %v1211 = vcombine.high %v1189, %v1189
        %v1212 = vcombine.high %v1196, %v1196
        %v1213 = vcombine.high %v1203, %v1203
        %v1214 = vcombine.high %v1210, %v1210
        %v1215 = vcombine.high %v241, %v241
        %v1217 = vunpack.c.l.s4 1966171168
        %v1218 = vunpack.c.0.s8 %v1217
        %v1219 = vlaneseq
        %v1220 = vshrl.u32 %v1219, 7
        %v1221 = vsub.s32 %v1218, %v1220
        %v1222 = vrot.slane %v241, %v1221
        %v1224 = vunpack.c.l.s4 1966171168
        %v1225 = vunpack.c.0.s8 %v1224
        %v1226 = vlaneseq
        %v1227 = vshrl.u32 %v1226, 7
        %v1228 = vsub.s32 %v1225, %v1227
        %v1229 = vrot.slane %v1215, %v1228
        %v1230 = vcombine.high %v1222, %v1222
        %v1231 = vcombine.high %v1229, %v1229
        %v1233 = vunpack.c.l.s4 1966171168
        %v1234 = vunpack.c.0.s8 %v1233
        %v1235 = vlaneseq
        %v1236 = vshrl.u32 %v1235, 7
        %v1237 = vsub.s32 %v1234, %v1236
        %v1238 = vrot.slane %v1222, %v1237
        %v1240 = vunpack.c.l.s4 1966171168
        %v1241 = vunpack.c.0.s8 %v1240
        %v1242 = vlaneseq
        %v1243 = vshrl.u32 %v1242, 7
        %v1244 = vsub.s32 %v1241, %v1243
        %v1245 = vrot.slane %v1229, %v1244
        %v1247 = vunpack.c.l.s4 1966171168
        %v1248 = vunpack.c.0.s8 %v1247
        %v1249 = vlaneseq
        %v1250 = vshrl.u32 %v1249, 7
        %v1251 = vsub.s32 %v1248, %v1250
        %v1252 = vrot.slane %v1230, %v1251
        %v1254 = vunpack.c.l.s4 1966171168
        %v1255 = vunpack.c.0.s8 %v1254
        %v1256 = vlaneseq
        %v1257 = vshrl.u32 %v1256, 7
        %v1258 = vsub.s32 %v1255, %v1257
        %v1259 = vrot.slane %v1231, %v1258
        %v1260 = vcombine.high %v1238, %v1238
        %v1261 = vcombine.high %v1245, %v1245
        %v1262 = vcombine.high %v1252, %v1252
        %v1263 = vcombine.high %v1259, %v1259
        %v1264 = vcombine.high %v242, %v242
        %v1266 = vunpack.c.l.s4 1966171168
        %v1267 = vunpack.c.0.s8 %v1266
        %v1268 = vlaneseq
        %v1269 = vshrl.u32 %v1268, 7
        %v1270 = vsub.s32 %v1267, %v1269
        %v1271 = vrot.slane %v242, %v1270
        %v1273 = vunpack.c.l.s4 1966171168
        %v1274 = vunpack.c.0.s8 %v1273
        %v1275 = vlaneseq
        %v1276 = vshrl.u32 %v1275, 7
        %v1277 = vsub.s32 %v1274, %v1276
        %v1278 = vrot.slane %v1264, %v1277
        %v1279 = vcombine.high %v1271, %v1271
        %v1280 = vcombine.high %v1278, %v1278
        %v1282 = vunpack.c.l.s4 1966171168
        %v1283 = vunpack.c.0.s8 %v1282
        %v1284 = vlaneseq
        %v1285 = vshrl.u32 %v1284, 7
        %v1286 = vsub.s32 %v1283, %v1285
        %v1287 = vrot.slane %v1271, %v1286
        %v1289 = vunpack.c.l.s4 1966171168
        %v1290 = vunpack.c.0.s8 %v1289
        %v1291 = vlaneseq
        %v1292 = vshrl.u32 %v1291, 7
        %v1293 = vsub.s32 %v1290, %v1292
        %v1294 = vrot.slane %v1278, %v1293
        %v1296 = vunpack.c.l.s4 1966171168
        %v1297 = vunpack.c.0.s8 %v1296
        %v1298 = vlaneseq
        %v1299 = vshrl.u32 %v1298, 7
        %v1300 = vsub.s32 %v1297, %v1299
        %v1301 = vrot.slane %v1279, %v1300
        %v1303 = vunpack.c.l.s4 1966171168
        %v1304 = vunpack.c.0.s8 %v1303
        %v1305 = vlaneseq
        %v1306 = vshrl.u32 %v1305, 7
        %v1307 = vsub.s32 %v1304, %v1306
        %v1308 = vrot.slane %v1280, %v1307
        %v1309 = vcombine.high %v1287, %v1287
        %v1310 = vcombine.high %v1294, %v1294
        %v1311 = vcombine.high %v1301, %v1301
        %v1312 = vcombine.high %v1308, %v1308
        %v1313 = vcombine.high %v243, %v243
        %v1315 = vunpack.c.l.s4 1966171168
        %v1316 = vunpack.c.0.s8 %v1315
        %v1317 = vlaneseq
        %v1318 = vshrl.u32 %v1317, 7
        %v1319 = vsub.s32 %v1316, %v1318
        %v1320 = vrot.slane %v243, %v1319
        %v1322 = vunpack.c.l.s4 1966171168
        %v1323 = vunpack.c.0.s8 %v1322
        %v1324 = vlaneseq
        %v1325 = vshrl.u32 %v1324, 7
        %v1326 = vsub.s32 %v1323, %v1325
        %v1327 = vrot.slane %v1313, %v1326
        %v1328 = vcombine.high %v1320, %v1320
        %v1329 = vcombine.high %v1327, %v1327
        %v1331 = vunpack.c.l.s4 1966171168
        %v1332 = vunpack.c.0.s8 %v1331
        %v1333 = vlaneseq
        %v1334 = vshrl.u32 %v1333, 7
        %v1335 = vsub.s32 %v1332, %v1334
        %v1336 = vrot.slane %v1320, %v1335
        %v1338 = vunpack.c.l.s4 1966171168
        %v1339 = vunpack.c.0.s8 %v1338
        %v1340 = vlaneseq
        %v1341 = vshrl.u32 %v1340, 7
        %v1342 = vsub.s32 %v1339, %v1341
        %v1343 = vrot.slane %v1327, %v1342
        %v1345 = vunpack.c.l.s4 1966171168
        %v1346 = vunpack.c.0.s8 %v1345
        %v1347 = vlaneseq
        %v1348 = vshrl.u32 %v1347, 7
        %v1349 = vsub.s32 %v1346, %v1348
        %v1350 = vrot.slane %v1328, %v1349
        %v1352 = vunpack.c.l.s4 1966171168
        %v1353 = vunpack.c.0.s8 %v1352
        %v1354 = vlaneseq
        %v1355 = vshrl.u32 %v1354, 7
        %v1356 = vsub.s32 %v1353, %v1355
        %v1357 = vrot.slane %v1329, %v1356
        %v1358 = vcombine.high %v1336, %v1336
        %v1359 = vcombine.high %v1343, %v1343
        %v1360 = vcombine.high %v1350, %v1350
        %v1361 = vcombine.high %v1357, %v1357
        %v1362 = vcombine.high %v244, %v244
        %v1364 = vunpack.c.l.s4 1966171168
        %v1365 = vunpack.c.0.s8 %v1364
        %v1366 = vlaneseq
        %v1367 = vshrl.u32 %v1366, 7
        %v1368 = vsub.s32 %v1365, %v1367
        %v1369 = vrot.slane %v244, %v1368
        %v1371 = vunpack.c.l.s4 1966171168
        %v1372 = vunpack.c.0.s8 %v1371
        %v1373 = vlaneseq
        %v1374 = vshrl.u32 %v1373, 7
        %v1375 = vsub.s32 %v1372, %v1374
        %v1376 = vrot.slane %v1362, %v1375
        %v1377 = vcombine.high %v1369, %v1369
        %v1378 = vcombine.high %v1376, %v1376
        %v1380 = vunpack.c.l.s4 1966171168
        %v1381 = vunpack.c.0.s8 %v1380
        %v1382 = vlaneseq
        %v1383 = vshrl.u32 %v1382, 7
        %v1384 = vsub.s32 %v1381, %v1383
        %v1385 = vrot.slane %v1369, %v1384
        %v1387 = vunpack.c.l.s4 1966171168
        %v1388 = vunpack.c.0.s8 %v1387
        %v1389 = vlaneseq
        %v1390 = vshrl.u32 %v1389, 7
        %v1391 = vsub.s32 %v1388, %v1390
        %v1392 = vrot.slane %v1376, %v1391
        %v1394 = vunpack.c.l.s4 1966171168
        %v1395 = vunpack.c.0.s8 %v1394
        %v1396 = vlaneseq
        %v1397 = vshrl.u32 %v1396, 7
        %v1398 = vsub.s32 %v1395, %v1397
        %v1399 = vrot.slane %v1377, %v1398
        %v1401 = vunpack.c.l.s4 1966171168
        %v1402 = vunpack.c.0.s8 %v1401
        %v1403 = vlaneseq
        %v1404 = vshrl.u32 %v1403, 7
        %v1405 = vsub.s32 %v1402, %v1404
        %v1406 = vrot.slane %v1378, %v1405
        %v1407 = vcombine.high %v1385, %v1385
        %v1408 = vcombine.high %v1392, %v1392
        %v1409 = vcombine.high %v1399, %v1399
        %v1410 = vcombine.high %v1406, %v1406
        %v1411 = vcombine.high %v245, %v245
        %v1413 = vunpack.c.l.s4 1966171168
        %v1414 = vunpack.c.0.s8 %v1413
        %v1415 = vlaneseq
        %v1416 = vshrl.u32 %v1415, 7
        %v1417 = vsub.s32 %v1414, %v1416
        %v1418 = vrot.slane %v245, %v1417
        %v1420 = vunpack.c.l.s4 1966171168
        %v1421 = vunpack.c.0.s8 %v1420
        %v1422 = vlaneseq
        %v1423 = vshrl.u32 %v1422, 7
        %v1424 = vsub.s32 %v1421, %v1423
        %v1425 = vrot.slane %v1411, %v1424
        %v1426 = vcombine.high %v1418, %v1418
        %v1427 = vcombine.high %v1425, %v1425
        %v1429 = vunpack.c.l.s4 1966171168
        %v1430 = vunpack.c.0.s8 %v1429
        %v1431 = vlaneseq
        %v1432 = vshrl.u32 %v1431, 7
        %v1433 = vsub.s32 %v1430, %v1432
        %v1434 = vrot.slane %v1418, %v1433
        %v1436 = vunpack.c.l.s4 1966171168
        %v1437 = vunpack.c.0.s8 %v1436
        %v1438 = vlaneseq
        %v1439 = vshrl.u32 %v1438, 7
        %v1440 = vsub.s32 %v1437, %v1439
        %v1441 = vrot.slane %v1425, %v1440
        %v1443 = vunpack.c.l.s4 1966171168
        %v1444 = vunpack.c.0.s8 %v1443
        %v1445 = vlaneseq
        %v1446 = vshrl.u32 %v1445, 7
        %v1447 = vsub.s32 %v1444, %v1446
        %v1448 = vrot.slane %v1426, %v1447
        %v1450 = vunpack.c.l.s4 1966171168
        %v1451 = vunpack.c.0.s8 %v1450
        %v1452 = vlaneseq
        %v1453 = vshrl.u32 %v1452, 7
        %v1454 = vsub.s32 %v1451, %v1453
        %v1455 = vrot.slane %v1427, %v1454
        %v1456 = vcombine.high %v1434, %v1434
        %v1457 = vcombine.high %v1448, %v1448
        %v2376 = vunpack.c.l.b16 %v246
        %v2377 = vunpack.c.l.b16 %v247
        %v2378 = vunpack.c.l.b16 %v248
        %v2379 = vunpack.c.l.b16 %v249
        %v2380 = vunpack.c.l.b16 %v250
        %v2381 = vunpack.c.l.b16 %v251
        %v2382 = vunpack.c.l.b16 %v252
        %v2383 = vunpack.c.l.b16 %v253
        %v2384 = vunpack.c.l.b16 %v254
        %v2385 = vunpack.c.l.b16 %v255
        %v2386 = vunpack.c.l.b16 %v256
        %v2387 = vunpack.c.l.b16 %v257
        %v2388 = vunpack.c.l.b16 %v258
        %v2389 = vunpack.c.l.b16 %v259
        %v2390 = vunpack.c.l.b16 %v260
        %v2391 = vunpack.c.l.b16 %v261
        %v2392 = vunpack.c.l.b16 %v262
        %v2393 = vunpack.c.l.b16 %v263
        %v2394 = vunpack.c.l.b16 %v264
        %v2395 = vunpack.c.l.b16 %v265
        %v2396 = vunpack.c.l.b16 %v266
        %v2397 = vunpack.c.l.b16 %v267
        %v2398 = vunpack.c.l.b16 %v268
        %v2399 = vunpack.c.l.b16 %v269
        %v2400 = vunpack.c.l.b16 %v270
        %v2401 = vunpack.c.l.b16 %v271
        %v2402 = vunpack.c.l.b16 %v272
        %v2403 = vunpack.c.l.b16 %v273
        %v2404 = vunpack.c.l.b16 %v274
        %v2405 = vunpack.c.l.b16 %v275
        %v2406 = vunpack.c.l.b16 %v276
        %v2407 = vunpack.c.l.b16 %v277
        %v2408 = vunpack.c.l.b16 %v278
        %v2409 = vunpack.c.l.b16 %v279
        %v2410 = vunpack.c.l.b16 %v280
        %v2411 = vunpack.c.l.b16 %v281
        %v2412 = vunpack.c.l.b16 %v282
        %v2413 = vunpack.c.l.b16 %v283
        %v2414 = vunpack.c.l.b16 %v284
        %v2415 = vunpack.c.l.b16 %v285
        %v2416 = vunpack.c.l.b16 %v286
        %v2417 = vunpack.c.l.b16 %v287
        %v2418 = vunpack.c.l.b16 %v288
        %v2419 = vunpack.c.l.b16 %v289
        %v2420 = vunpack.c.l.b16 %v290
        %v2421 = vunpack.c.l.b16 %v291
        %v2422 = vunpack.c.l.b16 %v292
        %v2423 = vunpack.c.l.b16 %v293
        %v2424 = vunpack.c.l.b16 %v294
        %v2425 = vunpack.c.l.b16 %v295
        %v2426 = vunpack.c.l.b16 %v296
        %v2427 = vunpack.c.l.b16 %v297
        %v2428 = vunpack.c.l.b16 %v298
        %v2429 = vunpack.c.l.b16 %v299
        %v2430 = vunpack.c.l.b16 %v300
        %v2431 = vunpack.c.l.b16 %v301
        %v2432 = vunpack.c.l.b16 %v302
        %v2433 = vunpack.c.l.b16 %v303
        %v2434 = vunpack.c.l.b16 %v304
        %v2435 = vunpack.c.l.b16 %v305
        %v2436 = vunpack.c.l.b16 %v306
        %v2437 = vunpack.c.l.b16 %v307
        %v2438 = vunpack.c.l.b16 %v308
        %v2439 = vunpack.c.l.b16 %v309
        %v2440 = vunpack.c.l.b16 %v310
        %v2441 = vunpack.c.l.b16 %v311
        %v2442 = vunpack.c.l.b16 %v312
        %v2443 = vunpack.c.l.b16 %v313
        %v2444 = vunpack.c.l.b16 %v314
        %v2445 = vunpack.c.l.b16 %v315
        %v2446 = vunpack.c.l.b16 %v316
        %v2447 = vunpack.c.l.b16 %v317
        %v2448 = vunpack.c.l.b16 %v318
        %v2449 = vunpack.c.l.b16 %v319
        %v2450 = vunpack.c.l.b16 %v320
        %v2451 = vunpack.c.l.b16 %v321
        %v2452 = vunpack.c.l.b16 %v322
        %v2453 = vunpack.c.l.b16 %v323
        %v2454 = vunpack.c.l.b16 %v324
        %v2455 = vunpack.c.l.b16 %v325
        %v2456 = vunpack.c.l.b16 %v326
        %v2457 = vunpack.c.l.b16 %v327
        %v2458 = vunpack.c.l.b16 %v328
        %v2459 = vunpack.c.l.b16 %v329
        %v2460 = vunpack.c.l.b16 %v330
        %v2461 = vunpack.c.l.b16 %v331
        %v2462 = vunpack.c.l.b16 %v332
        %v2463 = vunpack.c.l.b16 %v333
        %v2464 = vunpack.c.l.b16 %v334
        %v2465 = vunpack.c.l.b16 %v335
        %v2466 = vunpack.c.l.b16 %v336
        %v2467 = vunpack.c.l.b16 %v337
        %v2468 = vunpack.c.l.b16 %v338
        %v2469 = vunpack.c.l.b16 %v339
        %v2470 = vunpack.c.l.b16 %v340
        %v2471 = vunpack.c.l.b16 %v341
        %v2472 = vunpack.c.l.b16 %v342
        %v2473 = vunpack.c.l.b16 %v343
        %v2474 = vunpack.c.l.b16 %v344
        %v2475 = vunpack.c.l.b16 %v345
        %v2476 = vunpack.c.l.b16 %v346
        %v2477 = vunpack.c.l.b16 %v347
        %v2478 = vunpack.c.l.b16 %v348
        %v2479 = vunpack.c.l.b16 %v349
        %v2480 = vunpack.c.l.b16 %v350
        %v2481 = vunpack.c.l.b16 %v351
        %v2482 = vunpack.c.l.b16 %v352
        %v2483 = vunpack.c.l.b16 %v353
        %v2484 = vunpack.c.l.b16 %v354
        %v2485 = vunpack.c.l.b16 %v355
        %v2486 = vunpack.c.l.b16 %v356
        %v2487 = vunpack.c.l.b16 %v357
        %v2488 = vunpack.c.l.b16 %v358
        %v2489 = vunpack.c.l.b16 %v359
        %v2490 = vunpack.c.l.b16 %v360
        %v2491 = vunpack.c.l.b16 %v361
        %v2492 = vunpack.c.l.b16 %v362
        %v2493 = vunpack.c.l.b16 %v363
        %v2494 = vunpack.c.l.b16 %v364
        %v2495 = vunpack.c.l.b16 %v365
        %v2496 = vunpack.c.l.b16 %v366
        %v2497 = vunpack.c.l.b16 %v367
        %v2498 = vunpack.c.l.b16 %v368
        %v2499 = vunpack.c.l.b16 %v369
        %v2500 = vunpack.c.l.b16 %v370
        %v2501 = vunpack.c.l.b16 %v371
        %v2502 = vunpack.c.l.b16 %v372
        %v2503 = vunpack.c.l.b16 %v373
        %v2504 = vunpack.c.l.b16 %v374
        %v2505 = vunpack.c.l.b16 %v375
        %v2506 = vunpack.c.l.b16 %v376
        %v2507 = vunpack.c.l.b16 %v377
        %v2508 = vunpack.c.l.b16 %v378
        %v2509 = vunpack.c.l.b16 %v379
        %v2510 = vunpack.c.l.b16 %v380
        %v2511 = vunpack.c.l.b16 %v381
        %v2512 = vunpack.c.l.b16 %v382
        %v2513 = vunpack.c.l.b16 %v383
        %v2514 = vunpack.c.l.b16 %v384
        %v2515 = vunpack.c.l.b16 %v385
        %v2516 = vunpack.c.l.b16 %v386
        %v2517 = vunpack.c.l.b16 %v387
        %v2518 = vunpack.c.l.b16 %v388
        %v2519 = vunpack.c.l.b16 %v389
        %v2520 = vunpack.c.l.b16 %v390
        %v2521 = vunpack.c.l.b16 %v391
        %v2522 = vunpack.c.l.b16 %v392
        %v2523 = vunpack.c.l.b16 %v393
        %v2524 = vunpack.c.l.b16 %v394
        %v2525 = vunpack.c.l.b16 %v395
        %v2526 = vunpack.c.l.b16 %v396
        %v2527 = vunpack.c.l.b16 %v397
        %v2528 = vunpack.c.l.b16 %v398
        %v2529 = vunpack.c.l.b16 %v399
        %v2530 = vunpack.c.l.b16 %v400
        %v2531 = vunpack.c.l.b16 %v401
        %v2532 = vunpack.c.l.b16 %v402
        %v2533 = vunpack.c.l.b16 %v403
        %v2534 = vunpack.c.l.b16 %v404
        %v2535 = vunpack.c.l.b16 %v405
        %v2536 = vunpack.c.l.b16 %v406
        %v2537 = vunpack.c.l.b16 %v407
        %v2538 = vunpack.c.l.b16 %v408
        %v2539 = vunpack.c.l.b16 %v409
        %v2540 = vunpack.c.l.b16 %v410
        %v2541 = vunpack.c.l.b16 %v411
        %v2542 = vunpack.c.l.b16 %v412
        %v2543 = vunpack.c.l.b16 %v413
        %v2544 = vunpack.c.l.b16 %v414
        %v2545 = vunpack.c.l.b16 %v415
        %v2546 = vunpack.c.l.b16 %v416
        %v2547 = vunpack.c.l.b16 %v417
        %v2548 = vunpack.c.l.b16 %v418
        %v2549 = vunpack.c.l.b16 %v419
        %v2550 = vunpack.c.l.b16 %v420
        %v2551 = vunpack.c.l.b16 %v421
        %v2552 = vunpack.c.l.b16 %v422
        %v2553 = vunpack.c.l.b16 %v423
        %v2554 = vunpack.c.l.b16 %v424
        %v2555 = vunpack.c.l.b16 %v425
        %v2556 = vunpack.c.l.b16 %v426
        %v2557 = vunpack.c.l.b16 %v427
        %v2558 = vunpack.c.l.b16 %v428
        %v2559 = vunpack.c.l.b16 %v429
        %v2560 = vunpack.c.l.b16 %v430
        %v2561 = vunpack.c.l.b16 %v431
        %v2562 = vunpack.c.l.b16 %v432
        %v2563 = vunpack.c.l.b16 %v433
        %v2564 = vunpack.c.l.b16 %v434
        %v2565 = vunpack.c.l.b16 %v435
        %v2566 = vunpack.c.l.b16 %v436
        %v2567 = vunpack.c.l.b16 %v437
        %v2568 = vunpack.c.l.b16 %v438
        %v2569 = vunpack.c.l.b16 %v439
        %v2570 = vunpack.c.l.b16 %v440
        %v2571 = vunpack.c.l.b16 %v441
        %v2572 = vunpack.c.l.b16 %v442
        %v2573 = vunpack.c.l.b16 %v443
        %v2574 = vunpack.c.l.b16 %v444
        %v2575 = vunpack.c.l.b16 %v445
        %v2576 = vunpack.c.l.b16 %v446
        %v2577 = vunpack.c.l.b16 %v447
        %v2578 = vunpack.c.l.b16 %v448
        %v2579 = vunpack.c.l.b16 %v449
        %v2580 = vunpack.c.l.b16 %v450
        %v2581 = vunpack.c.l.b16 %v451
        %v2582 = vunpack.c.l.b16 %v452
        %v2583 = vunpack.c.l.b16 %v453
        %v2584 = vunpack.c.l.b16 %v454
        %v2585 = vunpack.c.l.b16 %v455
        %v2586 = vunpack.c.l.b16 %v456
        %v2587 = vunpack.c.l.b16 %v457
        %v2588 = vunpack.c.l.b16 %v458
        %v2589 = vunpack.c.l.b16 %v459
        %v2590 = vunpack.c.l.b16 %v460
        %v2591 = vunpack.c.l.b16 %v461
        %v2592 = vunpack.c.l.b16 %v462
        %v2593 = vunpack.c.l.b16 %v463
        %v2594 = vunpack.c.l.b16 %v464
        %v2595 = vunpack.c.l.b16 %v465
        %v2596 = vunpack.c.l.b16 %v466
        %v2597 = vunpack.c.l.b16 %v467
        %v2598 = vunpack.c.l.b16 %v468
        %v2599 = vunpack.c.l.b16 %v469
        %v2600 = vunpack.c.l.b16 %v470
        %v2601 = vunpack.c.l.b16 %v471
        %v2602 = vunpack.c.l.b16 %v472
        %v2603 = vunpack.c.l.b16 %v473
        %v2604 = vunpack.c.l.b16 %v474
        %v2605 = vunpack.c.l.b16 %v475
        %v2606 = vunpack.c.l.b16 %v476
        %v2607 = vunpack.c.l.b16 %v477
        %v2608 = vunpack.c.l.b16 %v478
        %v2609 = vunpack.c.l.b16 %v479
        %v2610 = vunpack.c.l.b16 %v480
        %v2611 = vunpack.c.l.b16 %v481
        %v2612 = vunpack.c.l.b16 %v482
        %v2613 = vunpack.c.l.b16 %v483
        %v2614 = vunpack.c.l.b16 %v484
        %v2615 = vunpack.c.l.b16 %v485
        %v2616 = vunpack.c.l.b16 %v486
        %v2617 = vunpack.c.l.b16 %v487
        %v2618 = vunpack.c.l.b16 %v488
        %v2619 = vunpack.c.l.b16 %v489
        %v2620 = vunpack.c.l.b16 %v490
        %v2621 = vunpack.c.l.b16 %v491
        %v2622 = vunpack.c.l.b16 %v492
        %v2623 = vunpack.c.l.b16 %v493
        %v2624 = vunpack.c.l.b16 %v494
        %v2625 = vunpack.c.l.b16 %v495
        %v2626 = vunpack.c.l.b16 %v496
        %v2627 = vunpack.c.l.b16 %v497
        %v2628 = vunpack.c.l.b16 %v498
        %v2629 = vunpack.c.l.b16 %v499
        %v2630 = vunpack.c.l.b16 %v500
        %v2631 = vunpack.c.l.b16 %v501
        %v2632 = vunpack.c.l.b16 %v502
        %v2633 = vunpack.c.l.b16 %v503
        %v2634 = vunpack.c.l.b16 %v504
        %v2635 = vunpack.c.l.b16 %v505
        %v2636 = vunpack.c.l.b16 %v506
        %v2637 = vunpack.c.l.b16 %v507
        %v2638 = vunpack.c.l.b16 %v508
        %v2639 = vunpack.c.l.b16 %v509
        %v2640 = vunpack.c.l.b16 %v510
        %v2641 = vunpack.c.l.b16 %v511
        %v2642 = vunpack.c.l.b16 %v512
        %v2643 = vunpack.c.l.b16 %v513
        %v2644 = vunpack.c.l.b16 %v514
        %v2645 = vunpack.c.l.b16 %v515
        %v2646 = vunpack.c.l.b16 %v516
        %v2647 = vunpack.c.l.b16 %v517
        %v2648 = vunpack.c.l.b16 %v518
        %v2649 = vunpack.c.l.b16 %v519
        %v2650 = vunpack.c.l.b16 %v520
        %v2651 = vunpack.c.l.b16 %v521
        %v2652 = vunpack.c.l.b16 %v522
        %v2653 = vunpack.c.l.b16 %v523
        %v2654 = vunpack.c.l.b16 %v524
        %v2655 = vunpack.c.l.b16 %v525
        %v2656 = vunpack.c.l.b16 %v526
        %v2657 = vunpack.c.l.b16 %v527
        %v2658 = vunpack.c.l.b16 %v528
        %v2659 = vunpack.c.l.b16 %v529
        %v2660 = vunpack.c.l.b16 %v530
        %v2661 = vunpack.c.l.b16 %v531
        %v2662 = vunpack.c.l.b16 %v532
        %v2663 = vunpack.c.l.b16 %v533
        %v2664 = vunpack.c.l.b16 %v534
        %v2665 = vunpack.c.l.b16 %v535
        %v2666 = vunpack.c.l.b16 %v536
        %v2667 = vunpack.c.l.b16 %v537
        %v2668 = vunpack.c.l.b16 %v538
        %v2669 = vunpack.c.l.b16 %v539
        %v2670 = vunpack.c.l.b16 %v540
        %v2671 = vunpack.c.l.b16 %v541
        %v2672 = vunpack.c.l.b16 %v542
        %v2673 = vunpack.c.l.b16 %v543
        %v2674 = vunpack.c.l.b16 %v544
        %v2675 = vunpack.c.l.b16 %v545
        %v2676 = vunpack.c.l.b16 %v546
        %v2677 = vunpack.c.l.b16 %v547
        %v2678 = vunpack.c.l.b16 %v548
        %v2679 = vunpack.c.l.b16 %v549
        %v2680 = vunpack.c.l.b16 %v550
        %v2681 = vunpack.c.l.b16 %v551
        %v2682 = vunpack.c.l.b16 %v552
        %v2683 = vunpack.c.l.b16 %v553
        %v2684 = vunpack.c.l.b16 %v554
        %v2685 = vunpack.c.l.b16 %v555
        %v2686 = vunpack.c.l.b16 %v556
        %v2687 = vunpack.c.l.b16 %v557
        %v2688 = vunpack.c.l.b16 %v558
        %v2689 = vunpack.c.l.b16 %v559
        %v2690 = vunpack.c.l.b16 %v560
        %v2691 = vunpack.c.l.b16 %v561
        %v2692 = vunpack.c.l.b16 %v562
        %v2693 = vunpack.c.l.b16 %v563
        %v2694 = vunpack.c.l.b16 %v564
        %v2695 = vunpack.c.l.b16 %v565
        %v2696 = vunpack.c.l.b16 %v566
        %v2697 = vunpack.c.l.b16 %v567
        %v2698 = vunpack.c.l.b16 %v568
        %v2699 = vunpack.c.l.b16 %v569
        %v2700 = vunpack.c.l.b16 %v570
        %v2701 = vunpack.c.l.b16 %v571
        %v2702 = vunpack.c.l.b16 %v572
        %v2703 = vunpack.c.l.b16 %v573
        %v2704 = vunpack.c.l.b16 %v574
        %v2705 = vunpack.c.l.b16 %v575
        %v2706 = vunpack.c.l.b16 %v576
        %v2707 = vunpack.c.l.b16 %v577
        %v2708 = vunpack.c.l.b16 %v578
        %v2709 = vunpack.c.l.b16 %v579
        %v2710 = vunpack.c.l.b16 %v580
        %v2711 = vunpack.c.l.b16 %v581
        %v2712 = vunpack.c.l.b16 %v582
        %v2713 = vunpack.c.l.b16 %v583
        %v2714 = vunpack.c.l.b16 %v584
        %v2715 = vunpack.c.l.b16 %v585
        %v2716 = vunpack.c.l.b16 %v586
        %v2717 = vunpack.c.l.b16 %v587
        %v2718 = vunpack.c.l.b16 %v588
        %v2719 = vunpack.c.l.b16 %v589
        %v2720 = vunpack.c.l.b16 %v590
        %v2721 = vunpack.c.l.b16 %v591
        %v2722 = vunpack.c.l.b16 %v592
        %v2723 = vunpack.c.l.b16 %v593
        %v2724 = vunpack.c.l.b16 %v594
        %v2725 = vunpack.c.l.b16 %v595
        %v2726 = vunpack.c.l.b16 %v596
        %v2727 = vunpack.c.l.b16 %v597
        %v2728 = vunpack.c.l.b16 %v598
        %v2729 = vunpack.c.l.b16 %v599
        %v2730 = vunpack.c.l.b16 %v600
        %v2731 = vunpack.c.l.b16 %v601
        %v2732 = vunpack.c.l.b16 %v602
        %v2733 = vunpack.c.l.b16 %v603
        %v2734 = vunpack.c.l.b16 %v604
        %v2735 = vunpack.c.l.b16 %v605
        %v2736 = vunpack.c.l.b16 %v606
        %v2737 = vunpack.c.l.b16 %v607
        %v2738 = vunpack.c.l.b16 %v608
        %v2739 = vunpack.c.l.b16 %v609
        %v2740 = vunpack.c.l.b16 %v610
        %v2741 = vunpack.c.l.b16 %v611
        %v2742 = vunpack.c.l.b16 %v612
        %v2743 = vunpack.c.l.b16 %v613
        %v2744 = vunpack.c.l.b16 %v614
        %v2745 = vunpack.c.l.b16 %v615
        %v2746 = vunpack.c.l.b16 %v616
        %v2747 = vunpack.c.l.b16 %v617
        %v2748 = vunpack.c.l.b16 %v618
        %v2749 = vunpack.c.l.b16 %v619
        %v2750 = vunpack.c.l.b16 %v620
        %v2751 = vunpack.c.l.b16 %v621
        %v2752 = vunpack.c.l.b16 %v622
        %v2753 = vunpack.c.l.b16 %v623
        %v2754 = vunpack.c.l.b16 %v624
        %v2755 = vunpack.c.l.b16 %v625
        %v2756 = vunpack.c.l.b16 %v626
        %v2757 = vunpack.c.l.b16 %v627
        %v2758 = vunpack.c.l.b16 %v628
        %v2759 = vunpack.c.l.b16 %v629
        %v2760 = vunpack.c.l.b16 %v630
        %v2761 = vunpack.c.l.b16 %v631
        %v2762 = vunpack.c.l.b16 %v632
        %v2763 = vunpack.c.l.b16 %v633
        %v2764 = vunpack.c.l.b16 %v634
        %v2765 = vunpack.c.l.b16 %v635
        %v2766 = vunpack.c.l.b16 %v636
        %v2767 = vunpack.c.l.b16 %v637
        %v2768 = vunpack.c.l.b16 %v638
        %v2769 = vunpack.c.l.b16 %v639
        %v2770 = vunpack.c.l.b16 %v640
        %v2771 = vunpack.c.l.b16 %v641
        %v2772 = vunpack.c.l.b16 %v642
        %v2773 = vunpack.c.l.b16 %v643
        %v2774 = vunpack.c.l.b16 %v644
        %v2775 = vunpack.c.l.b16 %v645
        %v2776 = vunpack.c.l.b16 %v646
        %v2777 = vunpack.c.l.b16 %v647
        %v2778 = vunpack.c.l.b16 %v648
        %v2779 = vunpack.c.l.b16 %v649
        %v2780 = vunpack.c.l.b16 %v650
        %v2781 = vunpack.c.l.b16 %v651
        %v2782 = vunpack.c.l.b16 %v652
        %v2783 = vunpack.c.l.b16 %v653
        %v2784 = vunpack.c.l.b16 %v654
        %v2785 = vunpack.c.l.b16 %v655
        %v2786 = vunpack.c.l.b16 %v656
        %v2787 = vunpack.c.l.b16 %v657
        %v2788 = vunpack.c.l.b16 %v658
        %v2789 = vunpack.c.l.b16 %v659
        %v2790 = vunpack.c.l.b16 %v660
        %v2791 = vunpack.c.l.b16 %v661
        %v2792 = vunpack.c.l.b16 %v662
        %v2793 = vunpack.c.l.b16 %v663
        %v2794 = vunpack.c.l.b16 %v664
        %v2795 = vunpack.c.l.b16 %v665
        %v2796 = vunpack.c.l.b16 %v666
        %v2797 = vunpack.c.l.b16 %v667
        %v2798 = vunpack.c.l.b16 %v668
        %v2799 = vunpack.c.l.b16 %v669
        %v2800 = vunpack.c.l.b16 %v670
        %v2801 = vunpack.c.l.b16 %v671
        %v2802 = vunpack.c.l.b16 %v672
        %v2803 = vunpack.c.l.b16 %v673
        %v2804 = vunpack.c.l.b16 %v674
        %v2805 = vunpack.c.l.b16 %v675
        %v2806 = vunpack.c.l.b16 %v676
        %v2807 = vunpack.c.l.b16 %v677
        %v2808 = vunpack.c.l.b16 %v678
        %v2809 = vunpack.c.l.b16 %v679
        %v2810 = vunpack.c.l.b16 %v680
        %v2811 = vunpack.c.l.b16 %v681
        %v2812 = vunpack.c.l.b16 %v682
        %v2813 = vunpack.c.l.b16 %v683
        %v2814 = vunpack.c.l.b16 %v684
        %v2815 = vunpack.c.l.b16 %v685
        %v2816 = vunpack.c.l.b16 %v686
        %v2817 = vunpack.c.l.b16 %v687
        %v2818 = vunpack.c.l.b16 %v688
        %v2819 = vunpack.c.l.b16 %v689
        %v2820 = vunpack.c.l.b16 %v690
        %v2821 = vunpack.c.l.b16 %v691
        %v2822 = vunpack.c.l.b16 %v692
        %v2823 = vunpack.c.l.b16 %v693
        %v2824 = vunpack.c.l.b16 %v694
        %v2825 = vunpack.c.l.b16 %v695
        %v2826 = vunpack.c.l.b16 %v696
        %v2827 = vunpack.c.l.b16 %v697
        %v2828 = vunpack.c.l.b16 %v698
        %v2829 = vunpack.c.l.b16 %v699
        %v2830 = vunpack.c.l.b16 %v700
        %v2831 = vunpack.c.l.b16 %v701
        %v2832 = vunpack.c.l.b16 %v702
        %v2833 = vunpack.c.l.b16 %v703
        %v2834 = vunpack.c.l.b16 %v704
        %v2835 = vunpack.c.l.b16 %v705
        %v2836 = vunpack.c.l.b16 %v706
        %v2837 = vunpack.c.l.b16 %v707
        %v2838 = vunpack.c.l.b16 %v708
        %v2839 = vunpack.c.l.b16 %v709
        %v2840 = vunpack.c.l.b16 %v710
        %v2841 = vunpack.c.l.b16 %v711
        %v2842 = vunpack.c.l.b16 %v712
        %v2843 = vunpack.c.l.b16 %v713
        %v2844 = vunpack.c.l.b16 %v714
        %v2845 = vunpack.c.l.b16 %v715
        %v2846 = vunpack.c.l.b16 %v716
        %v2847 = vunpack.c.l.b16 %v717
        %v2848 = vunpack.c.l.b16 %v718
        %v2849 = vunpack.c.l.b16 %v719
        %v2850 = vunpack.c.l.b16 %v720
        %v2851 = vunpack.c.l.b16 %v721
        %v2852 = vunpack.c.l.b16 %v722
        %v2853 = vunpack.c.l.b16 %v723
        %v2854 = vunpack.c.l.b16 %v724
        %v2855 = vunpack.c.l.b16 %v725
        %v2856 = vunpack.c.l.b16 %v726
        %v2857 = vunpack.c.l.b16 %v727
        %v2858 = vunpack.c.l.b16 %v728
        %v2859 = vunpack.c.l.b16 %v729
        %v2860 = vunpack.c.l.b16 %v730
        %v2861 = vunpack.c.l.b16 %v731
        %v2862 = vunpack.c.l.b16 %v732
        %v2863 = vunpack.c.l.b16 %v733
        %v2864 = vunpack.c.l.b16 %v734
        %v2865 = vunpack.c.l.b16 %v735
        %v2866 = vunpack.c.l.b16 %v736
        %v2867 = vunpack.c.l.b16 %v737
        %v2868 = vunpack.c.l.b16 %v738
        %v2869 = vunpack.c.l.b16 %v739
        %v2870 = vunpack.c.l.b16 %v740
        %v2871 = vunpack.c.l.b16 %v741
        %v2872 = vunpack.c.l.b16 %v742
        %v2873 = vunpack.c.l.b16 %v743
        %v2874 = vunpack.c.l.b16 %v744
        %v2875 = vunpack.c.l.b16 %v745
        %v2876 = vunpack.c.l.b16 %v746
        %v2877 = vunpack.c.l.b16 %v747
        %v2878 = vunpack.c.l.b16 %v748
        %v2879 = vunpack.c.l.b16 %v749
        %v2880 = vunpack.c.l.b16 %v750
        %v2881 = vunpack.c.l.b16 %v751
        %v2882 = vunpack.c.l.b16 %v752
        %v2883 = vunpack.c.l.b16 %v753
        %v2884 = vunpack.c.l.b16 %v754
        %v2885 = vunpack.c.l.b16 %v755
        %v2886 = vunpack.c.l.b16 %v756
        %v2887 = vunpack.c.l.b16 %v757
        %v2888 = vunpack.c.l.b16 %v758
        %v2889 = vunpack.c.l.b16 %v759
        %v2890 = vunpack.c.l.b16 %v760
        %v2891 = vunpack.c.l.b16 %v761
        %v2892 = vunpack.c.l.b16 %v762
        %v2893 = vunpack.c.l.b16 %v763
        %v2894 = vunpack.c.l.b16 %v764
        %v2895 = vunpack.c.l.b16 %v765
        %v2896 = vunpack.c.l.b16 %v766
        %v2897 = vunpack.c.l.b16 %v767
        %v2898 = vunpack.c.l.b16 %v768
        %v2899 = vunpack.c.l.b16 %v769
        %v2900 = vunpack.c.l.b16 %v770
        %v2901 = vunpack.c.l.b16 %v771
        %v2902 = vunpack.c.l.b16 %v772
        %v2903 = vunpack.c.l.b16 %v773
        %v2904 = vunpack.c.l.b16 %v774
        %v2905 = vunpack.c.l.b16 %v775
        %v2906 = vunpack.c.l.b16 %v776
        %v2907 = vunpack.c.l.b16 %v777
        %v2908 = vunpack.c.l.b16 %v778
        %v2909 = vunpack.c.l.b16 %v779
        %v2910 = vunpack.c.l.b16 %v780
        %v2911 = vunpack.c.l.b16 %v781
        %v2912 = vunpack.c.l.b16 %v782
        %v2913 = vunpack.c.l.b16 %v783
        %v2914 = vunpack.c.l.b16 %v784
        %v2915 = vunpack.c.l.b16 %v785
        %v2916 = vunpack.c.l.b16 %v786
        %v2917 = vunpack.c.l.b16 %v787
        %v2918 = vunpack.c.l.b16 %v788
        %v2919 = vunpack.c.l.b16 %v789
        %v2920 = vunpack.c.l.b16 %v790
        %v2921 = vunpack.c.l.b16 %v791
        %v2922 = vunpack.c.l.b16 %v792
        %v2923 = vunpack.c.l.b16 %v793
        %v2924 = vunpack.c.l.b16 %v794
        %v2925 = vunpack.c.l.b16 %v795
        %v2926 = vunpack.c.l.b16 %v796
        %v2927 = vunpack.c.l.b16 %v797
        %v2928 = vunpack.c.l.b16 %v798
        %v2929 = vunpack.c.l.b16 %v799
        %v2930 = vunpack.c.l.b16 %v800
        %v2931 = vunpack.c.l.b16 %v801
        %v2932 = vunpack.c.l.b16 %v802
        %v2933 = vunpack.c.l.b16 %v803
        %v2934 = vunpack.c.l.b16 %v804
        %v2935 = vunpack.c.l.b16 %v805
        %v2936 = vunpack.c.l.b16 %v806
        %v2937 = vunpack.c.l.b16 %v807
        %v2938 = vunpack.c.l.b16 %v808
        %v2939 = vunpack.c.l.b16 %v809
        %v2940 = vunpack.c.l.b16 %v810
        %v2941 = vunpack.c.l.b16 %v811
        %v2942 = vunpack.c.l.b16 %v812
        %v2943 = vunpack.c.l.b16 %v813
        %v2944 = vunpack.c.l.b16 %v814
        %v2945 = vunpack.c.l.b16 %v815
        %v2946 = vunpack.c.l.b16 %v816
        %v2947 = vunpack.c.l.b16 %v817
        %v2948 = vunpack.c.l.b16 %v818
        %v2949 = vunpack.c.l.b16 %v819
        %v2950 = vunpack.c.l.b16 %v820
        %v2951 = vunpack.c.l.b16 %v821
        %v2952 = vunpack.c.l.b16 %v822
        %v2953 = vunpack.c.l.b16 %v823
        %v2954 = vunpack.c.l.b16 %v824
        %v2955 = vunpack.c.l.b16 %v825
        %v2956 = vunpack.c.l.b16 %v826
        %v2957 = vunpack.c.l.b16 %v827
        %v2958 = vunpack.c.l.b16 %v828
        %v2959 = vunpack.c.l.b16 %v829
        %v2960 = vunpack.c.l.b16 %v830
        %v2961 = vunpack.c.l.b16 %v831
        %v2962 = vunpack.c.l.b16 %v832
        %v2963 = vunpack.c.l.b16 %v833
        %v2964 = vunpack.c.l.b16 %v834
        %v2965 = vunpack.c.l.b16 %v835
        %v2966 = vunpack.c.l.b16 %v836
        %v2967 = vunpack.c.l.b16 %v837
        %v2968 = vunpack.c.l.b16 %v838
        %v2969 = vunpack.c.l.b16 %v839
        %v2970 = vunpack.c.l.b16 %v840
        %v2971 = vunpack.c.l.b16 %v841
        %v2972 = vunpack.c.l.b16 %v842
        %v2973 = vunpack.c.l.b16 %v843
        %v2974 = vunpack.c.l.b16 %v844
        %v2975 = vunpack.c.l.b16 %v845
        %v2976 = vunpack.c.l.b16 %v846
        %v2977 = vunpack.c.l.b16 %v847
        %v2978 = vunpack.c.l.b16 %v848
        %v2979 = vunpack.c.l.b16 %v849
        %v2980 = vunpack.c.l.b16 %v850
        %v2981 = vunpack.c.l.b16 %v851
        %v2982 = vunpack.c.l.b16 %v852
        %v2983 = vunpack.c.l.b16 %v853
        %v2984 = vunpack.c.l.b16 %v854
        %v2985 = vunpack.c.l.b16 %v855
        %v2986 = vunpack.c.l.b16 %v856
        %v2987 = vunpack.c.l.b16 %v857
        %v2988 = vunpack.c.l.b16 %v858
        %v2989 = vunpack.c.l.b16 %v859
        %v2990 = vunpack.c.l.b16 %v860
        %v2991 = vunpack.c.l.b16 %v861
        %v2992 = vunpack.c.l.b16 %v862
        %v2993 = vunpack.c.l.b16 %v863
        %v2994 = vunpack.c.l.b16 %v864
        %v2995 = vunpack.c.l.b16 %v865
        %v2996 = vunpack.c.l.b16 %v866
        %v2997 = vunpack.c.l.b16 %v867
        %v2998 = vunpack.c.l.b16 %v868
        %v2999 = vunpack.c.l.b16 %v869
        %v3000 = vunpack.c.l.b16 %v870
        %v3001 = vunpack.c.l.b16 %v871
        %v3002 = vunpack.c.l.b16 %v872
        %v3003 = vunpack.c.l.b16 %v873
        %v3004 = vunpack.c.l.b16 %v874
        %v3005 = vunpack.c.l.b16 %v875
        %v3006 = vunpack.c.l.b16 %v876
        %v3007 = vunpack.c.l.b16 %v877
        %v3008 = vunpack.c.l.b16 %v878
        %v3009 = vunpack.c.l.b16 %v879
        %v3010 = vunpack.c.l.b16 %v880
        %v3011 = vunpack.c.l.b16 %v881
        %v3012 = vunpack.c.l.b16 %v882
        %v3013 = vunpack.c.l.b16 %v883
        %v3014 = vunpack.c.l.b16 %v884
        %v3015 = vunpack.c.l.b16 %v885
        %v3016 = vunpack.c.l.b16 %v886
        %v3017 = vunpack.c.l.b16 %v887
        %v3018 = vunpack.c.l.b16 %v888
        %v3019 = vunpack.c.l.b16 %v889
        %v3020 = vunpack.c.l.b16 %v890
        %v3021 = vunpack.c.l.b16 %v891
        %v3022 = vunpack.c.l.b16 %v892
        %v3023 = vunpack.c.l.b16 %v893
        %v3024 = vunpack.c.l.b16 %v894
        %v3025 = vunpack.c.l.b16 %v895
        %v3026 = vunpack.c.l.b16 %v896
        %v3027 = vunpack.c.l.b16 %v897
        %v3028 = vunpack.c.l.b16 %v898
        %v3029 = vunpack.c.l.b16 %v899
        %v3030 = vunpack.c.l.b16 %v900
        %v3031 = vunpack.c.l.b16 %v901
        %v3032 = vunpack.c.l.b16 %v902
        %v3033 = vunpack.c.l.b16 %v903
        %v3034 = vunpack.c.l.b16 %v904
        %v3035 = vunpack.c.l.b16 %v905
        %v3036 = vunpack.c.l.b16 %v906
        %v3037 = vunpack.c.l.b16 %v907
        %v3038 = vunpack.c.l.b16 %v908
        %v3039 = vunpack.c.l.b16 %v909
        %v3040 = vunpack.c.l.b16 %v910
        %v3041 = vunpack.c.l.b16 %v911
        %v3042 = vunpack.c.l.b16 %v912
        %v3043 = vunpack.c.l.b16 %v913
        %v3044 = vunpack.c.l.b16 %v914
        %v3045 = vunpack.c.l.b16 %v915
        %v3046 = vunpack.c.l.b16 %v916
        %v3047 = vunpack.c.l.b16 %v917
        %v3048 = vunpack.c.l.b16 %v918
        %v3049 = vunpack.c.l.b16 %v919
        %v3050 = vunpack.c.l.b16 %v920
        %v3051 = vunpack.c.l.b16 %v921
        %v3052 = vunpack.c.l.b16 %v922
        %v3053 = vunpack.c.l.b16 %v923
        %v3054 = vunpack.c.l.b16 %v924
        %v3055 = vunpack.c.l.b16 %v925
        %v3056 = vunpack.c.l.b16 %v926
        %v3057 = vunpack.c.l.b16 %v927
        %v3058 = vunpack.c.l.b16 %v928
        %v3059 = vunpack.c.l.b16 %v929
        %v3060 = vunpack.c.l.b16 %v930
        %v3061 = vunpack.c.l.b16 %v931
        %v3062 = vunpack.c.l.b16 %v932
        %v3063 = vunpack.c.l.b16 %v933
        %v3064 = vunpack.c.l.b16 %v934
        %v3065 = vunpack.c.l.b16 %v935
        %v3066 = vunpack.c.l.b16 %v936
        %v3067 = vunpack.c.l.b16 %v937
        %v3068 = vunpack.c.l.b16 %v938
        %v3069 = vunpack.c.l.b16 %v939
        %v3070 = vunpack.c.l.b16 %v940
        %v3071 = vunpack.c.l.b16 %v941
        %v3072 = vunpack.c.l.b16 %v942
        %v3073 = vunpack.c.l.b16 %v943
        %v3074 = vunpack.c.l.b16 %v944
        %v3075 = vunpack.c.l.b16 %v945
        %v3076 = vunpack.c.l.b16 %v946
        %v3077 = vunpack.c.l.b16 %v947
        %v3078 = vunpack.c.l.b16 %v948
        %v3079 = vunpack.c.l.b16 %v949
        %v3080 = vunpack.c.l.b16 %v950
        %v3081 = vunpack.c.l.b16 %v951
        %v3082 = vunpack.c.l.b16 %v952
        %v3083 = vunpack.c.l.b16 %v953
        %v3084 = vunpack.c.l.b16 %v954
        %v3085 = vunpack.c.l.b16 %v955
        %v3086 = vunpack.c.l.b16 %v956
        %v3087 = vunpack.c.l.b16 %v957
        %v3088 = vunpack.c.l.b16 %v958
        %v3089 = vunpack.c.l.b16 %v959
        %v3090 = vunpack.c.l.b16 %v960
        %v3091 = vunpack.c.l.b16 %v961
        %v3092 = vunpack.c.l.b16 %v962
        %v3093 = vunpack.c.l.b16 %v963
        %v3094 = vunpack.c.l.b16 %v964
        %v3095 = vunpack.c.l.b16 %v965
        %v3096 = vunpack.c.l.b16 %v966
        %v3097 = vunpack.c.l.b16 %v967
        %v3098 = vunpack.c.l.b16 %v968
        %v3099 = vunpack.c.l.b16 %v969
        %v3100 = vunpack.c.l.b16 %v970
        %v3101 = vunpack.c.l.b16 %v971
        %v3102 = vunpack.c.l.b16 %v972
        %v3103 = vunpack.c.l.b16 %v973
        %v3104 = vunpack.c.l.b16 %v974
        %v3105 = vunpack.c.l.b16 %v975
        %v3106 = vunpack.c.l.b16 %v976
        %v3107 = vunpack.c.l.b16 %v977
        %v3108 = vunpack.c.l.b16 %v978
        %v3109 = vunpack.c.l.b16 %v979
        %v3110 = vunpack.c.l.b16 %v980
        %v3111 = vunpack.c.l.b16 %v981
        %v3112 = vunpack.c.l.b16 %v982
        %v3113 = vunpack.c.l.b16 %v983
        %v3114 = vunpack.c.l.b16 %v984
        %v3115 = vunpack.c.l.b16 %v985
        %v3116 = vunpack.c.l.b16 %v986
        %v3117 = vunpack.c.l.b16 %v987
        %v3118 = vunpack.c.l.b16 %v988
        %v3119 = vunpack.c.l.b16 %v989
        %v3120 = vunpack.c.l.b16 %v990
        %v3121 = vunpack.c.l.b16 %v991
        %v3122 = vunpack.c.l.b16 %v992
        %v3123 = vunpack.c.l.b16 %v993
        %v3124 = vunpack.c.l.b16 %v994
        %v3125 = vunpack.c.l.b16 %v995
        %v3126 = vunpack.c.l.b16 %v996
        %v3127 = vunpack.c.l.b16 %v997
        %v3128 = vunpack.c.l.b16 %v998
        %v3129 = vunpack.c.l.b16 %v999
        %v3130 = vunpack.c.l.b16 %v1000
        %v3131 = vunpack.c.l.b16 %v1001
        %v3132 = vunpack.c.l.b16 %v1002
        %v3133 = vunpack.c.l.b16 %v1003
        %v3134 = vunpack.c.l.b16 %v1004
        %v3135 = vunpack.c.l.b16 %v1005
        %v3136 = vunpack.c.l.b16 %v1006
        %v3137 = vunpack.c.l.b16 %v1007
        %v3138 = vunpack.c.l.b16 %v1008
        %v3139 = vunpack.c.l.b16 %v1009
        %v3140 = vunpack.c.l.b16 %v1010
        %v3141 = vunpack.c.l.b16 %v1011
        %v3142 = vunpack.c.l.b16 %v1012
        %v3143 = vunpack.c.l.b16 %v1013
        %v3144 = vunpack.c.l.b16 %v1014
        %v3145 = vunpack.c.l.b16 %v1015
        %v3146 = vunpack.c.l.b16 %v1016
        %v3147 = vunpack.c.l.b16 %v1017
        %v3148 = vunpack.c.l.b16 %v1018
        %v3149 = vunpack.c.l.b16 %v1019
        %v3150 = vunpack.c.l.b16 %v1020
        %v3151 = vunpack.c.l.b16 %v1021
        %v3152 = vunpack.c.l.b16 %v1022
        %v3153 = vunpack.c.l.b16 %v1023
        %v3154 = vunpack.c.l.b16 %v1024
        %v3155 = vunpack.c.l.b16 %v1025
        %v3156 = vunpack.c.l.b16 %v1026
        %v3157 = vunpack.c.l.b16 %v1027
        %v3158 = vunpack.c.l.b16 %v1028
        %v3159 = vunpack.c.l.b16 %v1029
        %v3160 = vunpack.c.l.b16 %v1030
        %v3161 = vunpack.c.l.b16 %v1031
        %v3162 = vunpack.c.l.b16 %v1032
        %v3163 = vunpack.c.l.b16 %v1033
        %v3164 = vunpack.c.l.b16 %v1034
        %v3165 = vunpack.c.l.b16 %v1035
        %v3166 = vunpack.c.l.b16 %v1036
        %v3167 = vunpack.c.l.b16 %v1037
        %v3168 = vunpack.c.l.b16 %v1038
        %v3169 = vunpack.c.l.b16 %v1039
        %v3170 = vunpack.c.l.b16 %v1040
        %v3171 = vunpack.c.l.b16 %v1041
        %v3172 = vunpack.c.l.b16 %v1042
        %v3173 = vunpack.c.l.b16 %v1043
        %v3174 = vunpack.c.l.b16 %v1044
        %v3175 = vunpack.c.l.b16 %v1045
        %v3176 = vunpack.c.l.b16 %v1046
        %v3177 = vunpack.c.l.b16 %v1047
        %v3178 = vunpack.c.l.b16 %v1048
        %v3179 = vunpack.c.l.b16 %v1049
        %v3180 = vunpack.c.l.b16 %v1050
        %v3181 = vunpack.c.l.b16 %v1051
        %v3182 = vunpack.c.l.b16 %v1052
        %v3183 = vunpack.c.l.b16 %v1053
        %v3184 = vunpack.c.l.b16 %v1054
        %v3185 = vunpack.c.l.b16 %v1055
        %v3186 = vunpack.c.l.b16 %v1056
        %v3187 = vunpack.c.l.b16 %v1057
        %v3188 = vunpack.c.l.b16 %v1058
        %v3189 = vunpack.c.l.b16 %v1059
        %v3190 = vunpack.c.l.b16 %v1060
        %v3191 = vunpack.c.l.b16 %v1061
        %v3192 = vunpack.c.l.b16 %v1062
        %v3193 = vunpack.c.l.b16 %v1063
        %v3194 = vunpack.c.l.b16 %v1064
        %v3195 = vunpack.c.l.b16 %v1065
        %v3196 = vunpack.c.l.b16 %v1066
        %v3197 = vunpack.c.l.b16 %v1067
        %v3198 = vunpack.c.l.b16 %v1068
        %v3199 = vunpack.c.l.b16 %v1069
        %v3200 = vunpack.c.l.b16 %v1070
        %v3201 = vunpack.c.l.b16 %v1071
        %v3202 = vunpack.c.l.b16 %v1072
        %v3203 = vunpack.c.l.b16 %v1073
        %v3204 = vunpack.c.l.b16 %v1074
        %v3205 = vunpack.c.l.b16 %v1075
        %v3206 = vunpack.c.l.b16 %v1076
        %v3207 = vunpack.c.l.b16 %v1077
        %v3208 = vunpack.c.l.b16 %v1078
        %v3209 = vunpack.c.l.b16 %v1079
        %v3210 = vunpack.c.l.b16 %v1080
        %v3211 = vunpack.c.l.b16 %v1081
        %v3212 = vunpack.c.l.b16 %v1082
        %v3213 = vunpack.c.l.b16 %v1083
        %v3214 = vunpack.c.l.b16 %v1084
        %v3215 = vunpack.c.l.b16 %v1085
        %v3216 = vunpack.c.l.b16 %v1086
        %v3217 = vunpack.c.l.b16 %v1087
        %v3218 = vunpack.c.l.b16 %v1088
        %v3219 = vunpack.c.l.b16 %v1089
        %v3220 = vunpack.c.l.b16 %v1090
        %v3221 = vunpack.c.l.b16 %v1091
        %v3222 = vunpack.c.l.b16 %v1092
        %v3223 = vunpack.c.l.b16 %v1093
        %v3224 = vunpack.c.l.b16 %v1094
        %v3225 = vunpack.c.l.b16 %v1095
        %v3226 = vunpack.c.l.b16 %v1096
        %v3227 = vunpack.c.l.b16 %v1097
        %v3228 = vunpack.c.l.b16 %v1098
        %v3229 = vunpack.c.l.b16 %v1099
        %v3230 = vunpack.c.l.b16 %v1100
        %v3231 = vunpack.c.l.b16 %v1101
        %v3232 = vunpack.c.l.b16 %v1102
        %v3233 = vunpack.c.l.b16 %v1103
        %v3234 = vunpack.c.l.b16 %v1104
        %v3235 = vunpack.c.l.b16 %v1105
        %v3236 = vunpack.c.l.b16 %v1106
        %v3237 = vunpack.c.l.b16 %v1107
        %v3238 = vunpack.c.l.b16 %v1108
        %v3239 = vunpack.c.l.b16 %v1109
        %v3240 = vpack.c.b16 %v2377, %v2376
        %v3241 = vpack.c.b16 %v2379, %v2378
        %v3242 = vpack.c.b16 %v2381, %v2380
        %v3243 = vpack.c.b16 %v2383, %v2382
        %v3244 = vpack.c.b16 %v2385, %v2384
        %v3245 = vpack.c.b16 %v2387, %v2386
        %v3246 = vpack.c.b16 %v2389, %v2388
        %v3247 = vpack.c.b16 %v2391, %v2390
        %v3248 = vpack.c.b16 %v2393, %v2392
        %v3249 = vpack.c.b16 %v2395, %v2394
        %v3250 = vpack.c.b16 %v2397, %v2396
        %v3251 = vpack.c.b16 %v2399, %v2398
        %v3252 = vpack.c.b16 %v2401, %v2400
        %v3253 = vpack.c.b16 %v2403, %v2402
        %v3254 = vpack.c.b16 %v2405, %v2404
        %v3255 = vpack.c.b16 %v2407, %v2406
        %v3256 = vpack.c.b16 %v2409, %v2408
        %v3257 = vpack.c.b16 %v2411, %v2410
        %v3258 = vpack.c.b16 %v2413, %v2412
        %v3259 = vpack.c.b16 %v2415, %v2414
        %v3260 = vpack.c.b16 %v2417, %v2416
        %v3261 = vpack.c.b16 %v2419, %v2418
        %v3262 = vpack.c.b16 %v2421, %v2420
        %v3263 = vpack.c.b16 %v2423, %v2422
        %v3264 = vpack.c.b16 %v2425, %v2424
        %v3265 = vpack.c.b16 %v2427, %v2426
        %v3266 = vpack.c.b16 %v2429, %v2428
        %v3267 = vpack.c.b16 %v2431, %v2430
        %v3268 = vpack.c.b16 %v2433, %v2432
        %v3269 = vpack.c.b16 %v2435, %v2434
        %v3270 = vpack.c.b16 %v2437, %v2436
        %v3271 = vpack.c.b16 %v2439, %v2438
        %v3272 = vpack.c.b16 %v2441, %v2440
        %v3273 = vpack.c.b16 %v2443, %v2442
        %v3274 = vpack.c.b16 %v2445, %v2444
        %v3275 = vpack.c.b16 %v2447, %v2446
        %v3276 = vpack.c.b16 %v2449, %v2448
        %v3277 = vpack.c.b16 %v2451, %v2450
        %v3278 = vpack.c.b16 %v2453, %v2452
        %v3279 = vpack.c.b16 %v2455, %v2454
        %v3280 = vpack.c.b16 %v2457, %v2456
        %v3281 = vpack.c.b16 %v2459, %v2458
        %v3282 = vpack.c.b16 %v2461, %v2460
        %v3283 = vpack.c.b16 %v2463, %v2462
        %v3284 = vpack.c.b16 %v2465, %v2464
        %v3285 = vpack.c.b16 %v2467, %v2466
        %v3286 = vpack.c.b16 %v2469, %v2468
        %v3287 = vpack.c.b16 %v2471, %v2470
        %v3288 = vpack.c.b16 %v2473, %v2472
        %v3289 = vpack.c.b16 %v2475, %v2474
        %v3290 = vpack.c.b16 %v2477, %v2476
        %v3291 = vpack.c.b16 %v2479, %v2478
        %v3292 = vpack.c.b16 %v2481, %v2480
        %v3293 = vpack.c.b16 %v2483, %v2482
        %v3294 = vpack.c.b16 %v2485, %v2484
        %v3295 = vpack.c.b16 %v2487, %v2486
        %v3296 = vpack.c.b16 %v2489, %v2488
        %v3297 = vpack.c.b16 %v2491, %v2490
        %v3298 = vpack.c.b16 %v2493, %v2492
        %v3299 = vpack.c.b16 %v2495, %v2494
        %v3300 = vpack.c.b16 %v2497, %v2496
        %v3301 = vpack.c.b16 %v2499, %v2498
        %v3302 = vpack.c.b16 %v2501, %v2500
        %v3303 = vpack.c.b16 %v2503, %v2502
        %v3304 = vpack.c.b16 %v2505, %v2504
        %v3305 = vpack.c.b16 %v2507, %v2506
        %v3306 = vpack.c.b16 %v2509, %v2508
        %v3307 = vpack.c.b16 %v2511, %v2510
        %v3308 = vpack.c.b16 %v2513, %v2512
        %v3309 = vpack.c.b16 %v2515, %v2514
        %v3310 = vpack.c.b16 %v2517, %v2516
        %v3311 = vpack.c.b16 %v2519, %v2518
        %v3312 = vpack.c.b16 %v2521, %v2520
        %v3313 = vpack.c.b16 %v2523, %v2522
        %v3314 = vpack.c.b16 %v2525, %v2524
        %v3315 = vpack.c.b16 %v2527, %v2526
        %v3316 = vpack.c.b16 %v2529, %v2528
        %v3317 = vpack.c.b16 %v2531, %v2530
        %v3318 = vpack.c.b16 %v2533, %v2532
        %v3319 = vpack.c.b16 %v2535, %v2534
        %v3320 = vpack.c.b16 %v2537, %v2536
        %v3321 = vpack.c.b16 %v2539, %v2538
        %v3322 = vpack.c.b16 %v2541, %v2540
        %v3323 = vpack.c.b16 %v2543, %v2542
        %v3324 = vpack.c.b16 %v2545, %v2544
        %v3325 = vpack.c.b16 %v2547, %v2546
        %v3326 = vpack.c.b16 %v2549, %v2548
        %v3327 = vpack.c.b16 %v2551, %v2550
        %v3328 = vpack.c.b16 %v2553, %v2552
        %v3329 = vpack.c.b16 %v2555, %v2554
        %v3330 = vpack.c.b16 %v2557, %v2556
        %v3331 = vpack.c.b16 %v2559, %v2558
        %v3332 = vpack.c.b16 %v2561, %v2560
        %v3333 = vpack.c.b16 %v2563, %v2562
        %v3334 = vpack.c.b16 %v2565, %v2564
        %v3335 = vpack.c.b16 %v2567, %v2566
        %v3336 = vpack.c.b16 %v2569, %v2568
        %v3337 = vpack.c.b16 %v2571, %v2570
        %v3338 = vpack.c.b16 %v2573, %v2572
        %v3339 = vpack.c.b16 %v2575, %v2574
        %v3340 = vpack.c.b16 %v2577, %v2576
        %v3341 = vpack.c.b16 %v2579, %v2578
        %v3342 = vpack.c.b16 %v2581, %v2580
        %v3343 = vpack.c.b16 %v2583, %v2582
        %v3344 = vpack.c.b16 %v2585, %v2584
        %v3345 = vpack.c.b16 %v2587, %v2586
        %v3346 = vpack.c.b16 %v2589, %v2588
        %v3347 = vpack.c.b16 %v2591, %v2590
        %v3348 = vpack.c.b16 %v2593, %v2592
        %v3349 = vpack.c.b16 %v2595, %v2594
        %v3350 = vpack.c.b16 %v2597, %v2596
        %v3351 = vpack.c.b16 %v2599, %v2598
        %v3352 = vpack.c.b16 %v2601, %v2600
        %v3353 = vpack.c.b16 %v2603, %v2602
        %v3354 = vpack.c.b16 %v2605, %v2604
        %v3355 = vpack.c.b16 %v2607, %v2606
        %v3356 = vpack.c.b16 %v2609, %v2608
        %v3357 = vpack.c.b16 %v2611, %v2610
        %v3358 = vpack.c.b16 %v2613, %v2612
        %v3359 = vpack.c.b16 %v2615, %v2614
        %v3360 = vpack.c.b16 %v2617, %v2616
        %v3361 = vpack.c.b16 %v2619, %v2618
        %v3362 = vpack.c.b16 %v2621, %v2620
        %v3363 = vpack.c.b16 %v2623, %v2622
        %v3364 = vpack.c.b16 %v2625, %v2624
        %v3365 = vpack.c.b16 %v2627, %v2626
        %v3366 = vpack.c.b16 %v2629, %v2628
        %v3367 = vpack.c.b16 %v2631, %v2630
        %v3368 = vpack.c.b16 %v2633, %v2632
        %v3369 = vpack.c.b16 %v2635, %v2634
        %v3370 = vpack.c.b16 %v2637, %v2636
        %v3371 = vpack.c.b16 %v2639, %v2638
        %v3372 = vpack.c.b16 %v2641, %v2640
        %v3373 = vpack.c.b16 %v2643, %v2642
        %v3374 = vpack.c.b16 %v2645, %v2644
        %v3375 = vpack.c.b16 %v2647, %v2646
        %v3376 = vpack.c.b16 %v2649, %v2648
        %v3377 = vpack.c.b16 %v2651, %v2650
        %v3378 = vpack.c.b16 %v2653, %v2652
        %v3379 = vpack.c.b16 %v2655, %v2654
        %v3380 = vpack.c.b16 %v2657, %v2656
        %v3381 = vpack.c.b16 %v2659, %v2658
        %v3382 = vpack.c.b16 %v2661, %v2660
        %v3383 = vpack.c.b16 %v2663, %v2662
        %v3384 = vpack.c.b16 %v2665, %v2664
        %v3385 = vpack.c.b16 %v2667, %v2666
        %v3386 = vpack.c.b16 %v2669, %v2668
        %v3387 = vpack.c.b16 %v2671, %v2670
        %v3388 = vpack.c.b16 %v2673, %v2672
        %v3389 = vpack.c.b16 %v2675, %v2674
        %v3390 = vpack.c.b16 %v2677, %v2676
        %v3391 = vpack.c.b16 %v2679, %v2678
        %v3392 = vpack.c.b16 %v2681, %v2680
        %v3393 = vpack.c.b16 %v2683, %v2682
        %v3394 = vpack.c.b16 %v2685, %v2684
        %v3395 = vpack.c.b16 %v2687, %v2686
        %v3396 = vpack.c.b16 %v2689, %v2688
        %v3397 = vpack.c.b16 %v2691, %v2690
        %v3398 = vpack.c.b16 %v2693, %v2692
        %v3399 = vpack.c.b16 %v2695, %v2694
        %v3400 = vpack.c.b16 %v2697, %v2696
        %v3401 = vpack.c.b16 %v2699, %v2698
        %v3402 = vpack.c.b16 %v2701, %v2700
        %v3403 = vpack.c.b16 %v2703, %v2702
        %v3404 = vpack.c.b16 %v2705, %v2704
        %v3405 = vpack.c.b16 %v2707, %v2706
        %v3406 = vpack.c.b16 %v2709, %v2708
        %v3407 = vpack.c.b16 %v2711, %v2710
        %v3408 = vpack.c.b16 %v2713, %v2712
        %v3409 = vpack.c.b16 %v2715, %v2714
        %v3410 = vpack.c.b16 %v2717, %v2716
        %v3411 = vpack.c.b16 %v2719, %v2718
        %v3412 = vpack.c.b16 %v2721, %v2720
        %v3413 = vpack.c.b16 %v2723, %v2722
        %v3414 = vpack.c.b16 %v2725, %v2724
        %v3415 = vpack.c.b16 %v2727, %v2726
        %v3416 = vpack.c.b16 %v2729, %v2728
        %v3417 = vpack.c.b16 %v2731, %v2730
        %v3418 = vpack.c.b16 %v2733, %v2732
        %v3419 = vpack.c.b16 %v2735, %v2734
        %v3420 = vpack.c.b16 %v2737, %v2736
        %v3421 = vpack.c.b16 %v2739, %v2738
        %v3422 = vpack.c.b16 %v2741, %v2740
        %v3423 = vpack.c.b16 %v2743, %v2742
        %v3424 = vpack.c.b16 %v2745, %v2744
        %v3425 = vpack.c.b16 %v2747, %v2746
        %v3426 = vpack.c.b16 %v2749, %v2748
        %v3427 = vpack.c.b16 %v2751, %v2750
        %v3428 = vpack.c.b16 %v2753, %v2752
        %v3429 = vpack.c.b16 %v2755, %v2754
        %v3430 = vpack.c.b16 %v2757, %v2756
        %v3431 = vpack.c.b16 %v2759, %v2758
        %v3432 = vpack.c.b16 %v2761, %v2760
        %v3433 = vpack.c.b16 %v2763, %v2762
        %v3434 = vpack.c.b16 %v2765, %v2764
        %v3435 = vpack.c.b16 %v2767, %v2766
        %v3436 = vpack.c.b16 %v2769, %v2768
        %v3437 = vpack.c.b16 %v2771, %v2770
        %v3438 = vpack.c.b16 %v2773, %v2772
        %v3439 = vpack.c.b16 %v2775, %v2774
        %v3440 = vpack.c.b16 %v2777, %v2776
        %v3441 = vpack.c.b16 %v2779, %v2778
        %v3442 = vpack.c.b16 %v2781, %v2780
        %v3443 = vpack.c.b16 %v2783, %v2782
        %v3444 = vpack.c.b16 %v2785, %v2784
        %v3445 = vpack.c.b16 %v2787, %v2786
        %v3446 = vpack.c.b16 %v2789, %v2788
        %v3447 = vpack.c.b16 %v2791, %v2790
        %v3448 = vpack.c.b16 %v2793, %v2792
        %v3449 = vpack.c.b16 %v2795, %v2794
        %v3450 = vpack.c.b16 %v2797, %v2796
        %v3451 = vpack.c.b16 %v2799, %v2798
        %v3452 = vpack.c.b16 %v2801, %v2800
        %v3453 = vpack.c.b16 %v2803, %v2802
        %v3454 = vpack.c.b16 %v2805, %v2804
        %v3455 = vpack.c.b16 %v2807, %v2806
        %v3456 = vpack.c.b16 %v2809, %v2808
        %v3457 = vpack.c.b16 %v2811, %v2810
        %v3458 = vpack.c.b16 %v2813, %v2812
        %v3459 = vpack.c.b16 %v2815, %v2814
        %v3460 = vpack.c.b16 %v2817, %v2816
        %v3461 = vpack.c.b16 %v2819, %v2818
        %v3462 = vpack.c.b16 %v2821, %v2820
        %v3463 = vpack.c.b16 %v2823, %v2822
        %v3464 = vpack.c.b16 %v2825, %v2824
        %v3465 = vpack.c.b16 %v2827, %v2826
        %v3466 = vpack.c.b16 %v2829, %v2828
        %v3467 = vpack.c.b16 %v2831, %v2830
        %v3468 = vpack.c.b16 %v2833, %v2832
        %v3469 = vpack.c.b16 %v2835, %v2834
        %v3470 = vpack.c.b16 %v2837, %v2836
        %v3471 = vpack.c.b16 %v2839, %v2838
        %v3472 = vpack.c.b16 %v2841, %v2840
        %v3473 = vpack.c.b16 %v2843, %v2842
        %v3474 = vpack.c.b16 %v2845, %v2844
        %v3475 = vpack.c.b16 %v2847, %v2846
        %v3476 = vpack.c.b16 %v2849, %v2848
        %v3477 = vpack.c.b16 %v2851, %v2850
        %v3478 = vpack.c.b16 %v2853, %v2852
        %v3479 = vpack.c.b16 %v2855, %v2854
        %v3480 = vpack.c.b16 %v2857, %v2856
        %v3481 = vpack.c.b16 %v2859, %v2858
        %v3482 = vpack.c.b16 %v2861, %v2860
        %v3483 = vpack.c.b16 %v2863, %v2862
        %v3484 = vpack.c.b16 %v2865, %v2864
        %v3485 = vpack.c.b16 %v2867, %v2866
        %v3486 = vpack.c.b16 %v2869, %v2868
        %v3487 = vpack.c.b16 %v2871, %v2870
        %v3488 = vpack.c.b16 %v2873, %v2872
        %v3489 = vpack.c.b16 %v2875, %v2874
        %v3490 = vpack.c.b16 %v2877, %v2876
        %v3491 = vpack.c.b16 %v2879, %v2878
        %v3492 = vpack.c.b16 %v2881, %v2880
        %v3493 = vpack.c.b16 %v2883, %v2882
        %v3494 = vpack.c.b16 %v2885, %v2884
        %v3495 = vpack.c.b16 %v2887, %v2886
        %v3496 = vpack.c.b16 %v2889, %v2888
        %v3497 = vpack.c.b16 %v2891, %v2890
        %v3498 = vpack.c.b16 %v2893, %v2892
        %v3499 = vpack.c.b16 %v2895, %v2894
        %v3500 = vpack.c.b16 %v2897, %v2896
        %v3501 = vpack.c.b16 %v2899, %v2898
        %v3502 = vpack.c.b16 %v2901, %v2900
        %v3503 = vpack.c.b16 %v2903, %v2902
        %v3504 = vpack.c.b16 %v2905, %v2904
        %v3505 = vpack.c.b16 %v2907, %v2906
        %v3506 = vpack.c.b16 %v2909, %v2908
        %v3507 = vpack.c.b16 %v2911, %v2910
        %v3508 = vpack.c.b16 %v2913, %v2912
        %v3509 = vpack.c.b16 %v2915, %v2914
        %v3510 = vpack.c.b16 %v2917, %v2916
        %v3511 = vpack.c.b16 %v2919, %v2918
        %v3512 = vpack.c.b16 %v2921, %v2920
        %v3513 = vpack.c.b16 %v2923, %v2922
        %v3514 = vpack.c.b16 %v2925, %v2924
        %v3515 = vpack.c.b16 %v2927, %v2926
        %v3516 = vpack.c.b16 %v2929, %v2928
        %v3517 = vpack.c.b16 %v2931, %v2930
        %v3518 = vpack.c.b16 %v2933, %v2932
        %v3519 = vpack.c.b16 %v2935, %v2934
        %v3520 = vpack.c.b16 %v2937, %v2936
        %v3521 = vpack.c.b16 %v2939, %v2938
        %v3522 = vpack.c.b16 %v2941, %v2940
        %v3523 = vpack.c.b16 %v2943, %v2942
        %v3524 = vpack.c.b16 %v2945, %v2944
        %v3525 = vpack.c.b16 %v2947, %v2946
        %v3526 = vpack.c.b16 %v2949, %v2948
        %v3527 = vpack.c.b16 %v2951, %v2950
        %v3528 = vpack.c.b16 %v2953, %v2952
        %v3529 = vpack.c.b16 %v2955, %v2954
        %v3530 = vpack.c.b16 %v2957, %v2956
        %v3531 = vpack.c.b16 %v2959, %v2958
        %v3532 = vpack.c.b16 %v2961, %v2960
        %v3533 = vpack.c.b16 %v2963, %v2962
        %v3534 = vpack.c.b16 %v2965, %v2964
        %v3535 = vpack.c.b16 %v2967, %v2966
        %v3536 = vpack.c.b16 %v2969, %v2968
        %v3537 = vpack.c.b16 %v2971, %v2970
        %v3538 = vpack.c.b16 %v2973, %v2972
        %v3539 = vpack.c.b16 %v2975, %v2974
        %v3540 = vpack.c.b16 %v2977, %v2976
        %v3541 = vpack.c.b16 %v2979, %v2978
        %v3542 = vpack.c.b16 %v2981, %v2980
        %v3543 = vpack.c.b16 %v2983, %v2982
        %v3544 = vpack.c.b16 %v2985, %v2984
        %v3545 = vpack.c.b16 %v2987, %v2986
        %v3546 = vpack.c.b16 %v2989, %v2988
        %v3547 = vpack.c.b16 %v2991, %v2990
        %v3548 = vpack.c.b16 %v2993, %v2992
        %v3549 = vpack.c.b16 %v2995, %v2994
        %v3550 = vpack.c.b16 %v2997, %v2996
        %v3551 = vpack.c.b16 %v2999, %v2998
        %v3552 = vpack.c.b16 %v3001, %v3000
        %v3553 = vpack.c.b16 %v3003, %v3002
        %v3554 = vpack.c.b16 %v3005, %v3004
        %v3555 = vpack.c.b16 %v3007, %v3006
        %v3556 = vpack.c.b16 %v3009, %v3008
        %v3557 = vpack.c.b16 %v3011, %v3010
        %v3558 = vpack.c.b16 %v3013, %v3012
        %v3559 = vpack.c.b16 %v3015, %v3014
        %v3560 = vpack.c.b16 %v3017, %v3016
        %v3561 = vpack.c.b16 %v3019, %v3018
        %v3562 = vpack.c.b16 %v3021, %v3020
        %v3563 = vpack.c.b16 %v3023, %v3022
        %v3564 = vpack.c.b16 %v3025, %v3024
        %v3565 = vpack.c.b16 %v3027, %v3026
        %v3566 = vpack.c.b16 %v3029, %v3028
        %v3567 = vpack.c.b16 %v3031, %v3030
        %v3568 = vpack.c.b16 %v3033, %v3032
        %v3569 = vpack.c.b16 %v3035, %v3034
        %v3570 = vpack.c.b16 %v3037, %v3036
        %v3571 = vpack.c.b16 %v3039, %v3038
        %v3572 = vpack.c.b16 %v3041, %v3040
        %v3573 = vpack.c.b16 %v3043, %v3042
        %v3574 = vpack.c.b16 %v3045, %v3044
        %v3575 = vpack.c.b16 %v3047, %v3046
        %v3576 = vpack.c.b16 %v3049, %v3048
        %v3577 = vpack.c.b16 %v3051, %v3050
        %v3578 = vpack.c.b16 %v3053, %v3052
        %v3579 = vpack.c.b16 %v3055, %v3054
        %v3580 = vpack.c.b16 %v3057, %v3056
        %v3581 = vpack.c.b16 %v3059, %v3058
        %v3582 = vpack.c.b16 %v3061, %v3060
        %v3583 = vpack.c.b16 %v3063, %v3062
        %v3584 = vpack.c.b16 %v3065, %v3064
        %v3585 = vpack.c.b16 %v3067, %v3066
        %v3586 = vpack.c.b16 %v3069, %v3068
        %v3587 = vpack.c.b16 %v3071, %v3070
        %v3588 = vpack.c.b16 %v3073, %v3072
        %v3589 = vpack.c.b16 %v3075, %v3074
        %v3590 = vpack.c.b16 %v3077, %v3076
        %v3591 = vpack.c.b16 %v3079, %v3078
        %v3592 = vpack.c.b16 %v3081, %v3080
        %v3593 = vpack.c.b16 %v3083, %v3082
        %v3594 = vpack.c.b16 %v3085, %v3084
        %v3595 = vpack.c.b16 %v3087, %v3086
        %v3596 = vpack.c.b16 %v3089, %v3088
        %v3597 = vpack.c.b16 %v3091, %v3090
        %v3598 = vpack.c.b16 %v3093, %v3092
        %v3599 = vpack.c.b16 %v3095, %v3094
        %v3600 = vpack.c.b16 %v3097, %v3096
        %v3601 = vpack.c.b16 %v3099, %v3098
        %v3602 = vpack.c.b16 %v3101, %v3100
        %v3603 = vpack.c.b16 %v3103, %v3102
        %v3604 = vpack.c.b16 %v3105, %v3104
        %v3605 = vpack.c.b16 %v3107, %v3106
        %v3606 = vpack.c.b16 %v3109, %v3108
        %v3607 = vpack.c.b16 %v3111, %v3110
        %v3608 = vpack.c.b16 %v3113, %v3112
        %v3609 = vpack.c.b16 %v3115, %v3114
        %v3610 = vpack.c.b16 %v3117, %v3116
        %v3611 = vpack.c.b16 %v3119, %v3118
        %v3612 = vpack.c.b16 %v3121, %v3120
        %v3613 = vpack.c.b16 %v3123, %v3122
        %v3614 = vpack.c.b16 %v3125, %v3124
        %v3615 = vpack.c.b16 %v3127, %v3126
        %v3616 = vpack.c.b16 %v3129, %v3128
        %v3617 = vpack.c.b16 %v3131, %v3130
        %v3618 = vpack.c.b16 %v3133, %v3132
        %v3619 = vpack.c.b16 %v3135, %v3134
        %v3620 = vpack.c.b16 %v3137, %v3136
        %v3621 = vpack.c.b16 %v3139, %v3138
        %v3622 = vpack.c.b16 %v3141, %v3140
        %v3623 = vpack.c.b16 %v3143, %v3142
        %v3624 = vpack.c.b16 %v3145, %v3144
        %v3625 = vpack.c.b16 %v3147, %v3146
        %v3626 = vpack.c.b16 %v3149, %v3148
        %v3627 = vpack.c.b16 %v3151, %v3150
        %v3628 = vpack.c.b16 %v3153, %v3152
        %v3629 = vpack.c.b16 %v3155, %v3154
        %v3630 = vpack.c.b16 %v3157, %v3156
        %v3631 = vpack.c.b16 %v3159, %v3158
        %v3632 = vpack.c.b16 %v3161, %v3160
        %v3633 = vpack.c.b16 %v3163, %v3162
        %v3634 = vpack.c.b16 %v3165, %v3164
        %v3635 = vpack.c.b16 %v3167, %v3166
        %v3636 = vpack.c.b16 %v3169, %v3168
        %v3637 = vpack.c.b16 %v3171, %v3170
        %v3638 = vpack.c.b16 %v3173, %v3172
        %v3639 = vpack.c.b16 %v3175, %v3174
        %v3640 = vpack.c.b16 %v3177, %v3176
        %v3641 = vpack.c.b16 %v3179, %v3178
        %v3642 = vpack.c.b16 %v3181, %v3180
        %v3643 = vpack.c.b16 %v3183, %v3182
        %v3644 = vpack.c.b16 %v3185, %v3184
        %v3645 = vpack.c.b16 %v3187, %v3186
        %v3646 = vpack.c.b16 %v3189, %v3188
        %v3647 = vpack.c.b16 %v3191, %v3190
        %v3648 = vpack.c.b16 %v3193, %v3192
        %v3649 = vpack.c.b16 %v3195, %v3194
        %v3650 = vpack.c.b16 %v3197, %v3196
        %v3651 = vpack.c.b16 %v3199, %v3198
        %v3652 = vpack.c.b16 %v3201, %v3200
        %v3653 = vpack.c.b16 %v3203, %v3202
        %v3654 = vpack.c.b16 %v3205, %v3204
        %v3655 = vpack.c.b16 %v3207, %v3206
        %v3656 = vpack.c.b16 %v3209, %v3208
        %v3657 = vpack.c.b16 %v3211, %v3210
        %v3658 = vpack.c.b16 %v3213, %v3212
        %v3659 = vpack.c.b16 %v3215, %v3214
        %v3660 = vpack.c.b16 %v3217, %v3216
        %v3661 = vpack.c.b16 %v3219, %v3218
        %v3662 = vpack.c.b16 %v3221, %v3220
        %v3663 = vpack.c.b16 %v3223, %v3222
        %v3664 = vpack.c.b16 %v3225, %v3224
        %v3665 = vpack.c.b16 %v3227, %v3226
        %v3666 = vpack.c.b16 %v3229, %v3228
        %v3667 = vpack.c.b16 %v3231, %v3230
        %v3668 = vpack.c.b16 %v3233, %v3232
        %v3669 = vpack.c.b16 %v3235, %v3234
        %v3670 = vpack.c.b16 %v3237, %v3236
        %v3671 = vpack.c.b16 %v3239, %v3238
        %4104 = vmatprep.subr.bf16.mxu0 0
        %4105 = vmatpush1.bf16.msra.mxu0 %v3240
        %4106 = vmatprep.subr.bf16.mxu0 0
        %4107 = vmatpush1.bf16.msra.mxu0 %v3241
        %4108 = vmatprep.subr.bf16.mxu0 0
        %4109 = vmatpush1.bf16.msra.mxu0 %v3242
        %4110 = vmatprep.subr.bf16.mxu0 0
        %4111 = vmatpush1.bf16.msra.mxu0 %v3243
        %4112 = vmatprep.subr.bf16.mxu0 0
        %4113 = vmatpush1.bf16.msra.mxu0 %v3244
        %4114 = vmatprep.subr.bf16.mxu0 0
        %4115 = vmatpush1.bf16.msra.mxu0 %v3245
        %4116 = vmatprep.subr.bf16.mxu0 0
        %4117 = vmatpush1.bf16.msra.mxu0 %v3246
        %4118 = vmatprep.subr.bf16.mxu0 0
        %4119 = vmatpush1.bf16.msra.mxu0 %v3247
        %4120 = vmatprep.subr.bf16.mxu0 0
        %4121 = vmatpush1.bf16.msra.mxu0 %v3248
        %4122 = vmatprep.subr.bf16.mxu0 0
        %4123 = vmatpush1.bf16.msra.mxu0 %v3249
        %4124 = vmatprep.subr.bf16.mxu0 0
        %4125 = vmatpush1.bf16.msra.mxu0 %v3250
        %4126 = vmatprep.subr.bf16.mxu0 0
        %4127 = vmatpush1.bf16.msra.mxu0 %v3251
        %4128 = vmatprep.subr.bf16.mxu0 0
        %4129 = vmatpush1.bf16.msra.mxu0 %v3252
        %4130 = vmatprep.subr.bf16.mxu0 0
        %4131 = vmatpush1.bf16.msra.mxu0 %v3253
        %4132 = vmatprep.subr.bf16.mxu0 0
        %4133 = vmatpush1.bf16.msra.mxu0 %v3254
        %4134 = vmatprep.subr.bf16.mxu0 0
        %4135 = vmatpush1.bf16.msra.mxu0 %v3255
        %4136 = vmatprep.mubr.bf16.mxu0 %v1154
        %4137 = vmatmul.mubr.bf16.gmra.mrb[0].mxu0 %v1140
        %v4138 = vpop.f32.mrb[0].mxu0
        %v4139 = vadd.f32 0.0, %v4138
        %v4140 = vpop.f32.mrb[0].mxu0
        %v4141 = vpop.f32.mrb[0].mxu0
        %v4142 = vpop.f32.mrb[0].mxu0
        %4143 = vdwg.mxu0
        %4144 = vmatprep.subr.bf16.mxu0 0
        %4145 = vmatpush1.bf16.msra.mxu0 %v3256
        %4146 = vmatprep.subr.bf16.mxu0 0
        %4147 = vmatpush1.bf16.msra.mxu0 %v3257
        %4148 = vmatprep.subr.bf16.mxu0 0
        %4149 = vmatpush1.bf16.msra.mxu0 %v3258
        %4150 = vmatprep.subr.bf16.mxu0 0
        %4151 = vmatpush1.bf16.msra.mxu0 %v3259
        %4152 = vmatprep.subr.bf16.mxu0 0
        %4153 = vmatpush1.bf16.msra.mxu0 %v3260
        %4154 = vmatprep.subr.bf16.mxu0 0
        %4155 = vmatpush1.bf16.msra.mxu0 %v3261
        %4156 = vmatprep.subr.bf16.mxu0 0
        %4157 = vmatpush1.bf16.msra.mxu0 %v3262
        %4158 = vmatprep.subr.bf16.mxu0 0
        %4159 = vmatpush1.bf16.msra.mxu0 %v3263
        %4160 = vmatprep.subr.bf16.mxu0 0
        %4161 = vmatpush1.bf16.msra.mxu0 %v3264
        %4162 = vmatprep.subr.bf16.mxu0 0
        %4163 = vmatpush1.bf16.msra.mxu0 %v3265
        %4164 = vmatprep.subr.bf16.mxu0 0
        %4165 = vmatpush1.bf16.msra.mxu0 %v3266
        %4166 = vmatprep.subr.bf16.mxu0 0
        %4167 = vmatpush1.bf16.msra.mxu0 %v3267
        %4168 = vmatprep.subr.bf16.mxu0 0
        %4169 = vmatpush1.bf16.msra.mxu0 %v3268
        %4170 = vmatprep.subr.bf16.mxu0 0
        %4171 = vmatpush1.bf16.msra.mxu0 %v3269
        %4172 = vmatprep.subr.bf16.mxu0 0
        %4173 = vmatpush1.bf16.msra.mxu0 %v3270
        %4174 = vmatprep.subr.bf16.mxu0 0
        %4175 = vmatpush1.bf16.msra.mxu0 %v3271
        %4176 = vmatprep.mubr.bf16.mxu0 %v1164
        %4177 = vmatmul.mubr.bf16.gmra.mrb[0].mxu0 %v1162
        %v4178 = vpop.f32.mrb[0].mxu0
        %v4179 = vadd.f32 %v4139, %v4178
        %v4180 = vpop.f32.mrb[0].mxu0
        %v4181 = vpop.f32.mrb[0].mxu0
        %v4182 = vpop.f32.mrb[0].mxu0
        %4183 = vdwg.mxu0
        %4184 = vmatprep.subr.bf16.mxu0 0
        %4185 = vmatpush1.bf16.msra.mxu0 %v3272
        %4186 = vmatprep.subr.bf16.mxu0 0
        %4187 = vmatpush1.bf16.msra.mxu0 %v3273
        %4188 = vmatprep.subr.bf16.mxu0 0
        %4189 = vmatpush1.bf16.msra.mxu0 %v3274
        %4190 = vmatprep.subr.bf16.mxu0 0
        %4191 = vmatpush1.bf16.msra.mxu0 %v3275
        %4192 = vmatprep.subr.bf16.mxu0 0
        %4193 = vmatpush1.bf16.msra.mxu0 %v3276
        %4194 = vmatprep.subr.bf16.mxu0 0
        %4195 = vmatpush1.bf16.msra.mxu0 %v3277
        %4196 = vmatprep.subr.bf16.mxu0 0
        %4197 = vmatpush1.bf16.msra.mxu0 %v3278
        %4198 = vmatprep.subr.bf16.mxu0 0
        %4199 = vmatpush1.bf16.msra.mxu0 %v3279
        %4200 = vmatprep.subr.bf16.mxu0 0
        %4201 = vmatpush1.bf16.msra.mxu0 %v3280
        %4202 = vmatprep.subr.bf16.mxu0 0
        %4203 = vmatpush1.bf16.msra.mxu0 %v3281
        %4204 = vmatprep.subr.bf16.mxu0 0
        %4205 = vmatpush1.bf16.msra.mxu0 %v3282
        %4206 = vmatprep.subr.bf16.mxu0 0
        %4207 = vmatpush1.bf16.msra.mxu0 %v3283
        %4208 = vmatprep.subr.bf16.mxu0 0
        %4209 = vmatpush1.bf16.msra.mxu0 %v3284
        %4210 = vmatprep.subr.bf16.mxu0 0
        %4211 = vmatpush1.bf16.msra.mxu0 %v3285
        %4212 = vmatprep.subr.bf16.mxu0 0
        %4213 = vmatpush1.bf16.msra.mxu0 %v3286
        %4214 = vmatprep.subr.bf16.mxu0 0
        %4215 = vmatpush1.bf16.msra.mxu0 %v3287
        %4216 = vmatprep.mubr.bf16.mxu0 %v1161
        %4217 = vmatmul.mubr.bf16.gmra.mrb[0].mxu0 %v1147
        %v4218 = vpop.f32.mrb[0].mxu0
        %v4219 = vadd.f32 %v4179, %v4218
        %v4220 = vpop.f32.mrb[0].mxu0
        %v4221 = vpop.f32.mrb[0].mxu0
        %v4222 = vpop.f32.mrb[0].mxu0
        %4223 = vdwg.mxu0
        %4224 = vmatprep.subr.bf16.mxu0 0
        %4225 = vmatpush1.bf16.msra.mxu0 %v3288
        %4226 = vmatprep.subr.bf16.mxu0 0
        %4227 = vmatpush1.bf16.msra.mxu0 %v3289
        %4228 = vmatprep.subr.bf16.mxu0 0
        %4229 = vmatpush1.bf16.msra.mxu0 %v3290
        %4230 = vmatprep.subr.bf16.mxu0 0
        %4231 = vmatpush1.bf16.msra.mxu0 %v3291
        %4232 = vmatprep.subr.bf16.mxu0 0
        %4233 = vmatpush1.bf16.msra.mxu0 %v3292
        %4234 = vmatprep.subr.bf16.mxu0 0
        %4235 = vmatpush1.bf16.msra.mxu0 %v3293
        %4236 = vmatprep.subr.bf16.mxu0 0
        %4237 = vmatpush1.bf16.msra.mxu0 %v3294
        %4238 = vmatprep.subr.bf16.mxu0 0
        %4239 = vmatpush1.bf16.msra.mxu0 %v3295
        %4240 = vmatprep.subr.bf16.mxu0 0
        %4241 = vmatpush1.bf16.msra.mxu0 %v3296
        %4242 = vmatprep.subr.bf16.mxu0 0
        %4243 = vmatpush1.bf16.msra.mxu0 %v3297
        %4244 = vmatprep.subr.bf16.mxu0 0
        %4245 = vmatpush1.bf16.msra.mxu0 %v3298
        %4246 = vmatprep.subr.bf16.mxu0 0
        %4247 = vmatpush1.bf16.msra.mxu0 %v3299
        %4248 = vmatprep.subr.bf16.mxu0 0
        %4249 = vmatpush1.bf16.msra.mxu0 %v3300
        %4250 = vmatprep.subr.bf16.mxu0 0
        %4251 = vmatpush1.bf16.msra.mxu0 %v3301
        %4252 = vmatprep.subr.bf16.mxu0 0
        %4253 = vmatpush1.bf16.msra.mxu0 %v3302
        %4254 = vmatprep.subr.bf16.mxu0 0
        %4255 = vmatpush1.bf16.msra.mxu0 %v3303
        %4256 = vmatprep.mubr.bf16.mxu0 %v1165
        %4257 = vmatmul.mubr.bf16.gmra.mrb[0].mxu0 %v1163
        %v4258 = vpop.f32.mrb[0].mxu0
        %v4259 = vadd.f32 %v4219, %v4258
        %v4260 = vpop.f32.mrb[0].mxu0
        %v4261 = vpop.f32.mrb[0].mxu0
        %v4262 = vpop.f32.mrb[0].mxu0
        %4263 = vdwg.mxu0
        %4264 = vmatprep.subr.bf16.mxu0 0
        %4265 = vmatpush1.bf16.msra.mxu0 %v3304
        %4266 = vmatprep.subr.bf16.mxu0 0
        %4267 = vmatpush1.bf16.msra.mxu0 %v3305
        %4268 = vmatprep.subr.bf16.mxu0 0
        %4269 = vmatpush1.bf16.msra.mxu0 %v3306
        %4270 = vmatprep.subr.bf16.mxu0 0
        %4271 = vmatpush1.bf16.msra.mxu0 %v3307
        %4272 = vmatprep.subr.bf16.mxu0 0
        %4273 = vmatpush1.bf16.msra.mxu0 %v3308
        %4274 = vmatprep.subr.bf16.mxu0 0
        %4275 = vmatpush1.bf16.msra.mxu0 %v3309
        %4276 = vmatprep.subr.bf16.mxu0 0
        %4277 = vmatpush1.bf16.msra.mxu0 %v3310
        %4278 = vmatprep.subr.bf16.mxu0 0
        %4279 = vmatpush1.bf16.msra.mxu0 %v3311
        %4280 = vmatprep.subr.bf16.mxu0 0
        %4281 = vmatpush1.bf16.msra.mxu0 %v3312
        %4282 = vmatprep.subr.bf16.mxu0 0
        %4283 = vmatpush1.bf16.msra.mxu0 %v3313
        %4284 = vmatprep.subr.bf16.mxu0 0
        %4285 = vmatpush1.bf16.msra.mxu0 %v3314
        %4286 = vmatprep.subr.bf16.mxu0 0
        %4287 = vmatpush1.bf16.msra.mxu0 %v3315
        %4288 = vmatprep.subr.bf16.mxu0 0
        %4289 = vmatpush1.bf16.msra.mxu0 %v3316
        %4290 = vmatprep.subr.bf16.mxu0 0
        %4291 = vmatpush1.bf16.msra.mxu0 %v3317
        %4292 = vmatprep.subr.bf16.mxu0 0
        %4293 = vmatpush1.bf16.msra.mxu0 %v3318
        %4294 = vmatprep.subr.bf16.mxu0 0
        %4295 = vmatpush1.bf16.msra.mxu0 %v3319
        %4296 = vmatprep.mubr.bf16.mxu0 %v1203
        %4297 = vmatmul.mubr.bf16.gmra.mrb[0].mxu0 %v1189
        %v4298 = vpop.f32.mrb[0].mxu0
        %v4299 = vadd.f32 %v4259, %v4298
        %v4300 = vpop.f32.mrb[0].mxu0
        %v4301 = vpop.f32.mrb[0].mxu0
        %v4302 = vpop.f32.mrb[0].mxu0
        %4303 = vdwg.mxu0
        %4304 = vmatprep.subr.bf16.mxu0 0
        %4305 = vmatpush1.bf16.msra.mxu0 %v3320
        %4306 = vmatprep.subr.bf16.mxu0 0
        %4307 = vmatpush1.bf16.msra.mxu0 %v3321
        %4308 = vmatprep.subr.bf16.mxu0 0
        %4309 = vmatpush1.bf16.msra.mxu0 %v3322
        %4310 = vmatprep.subr.bf16.mxu0 0
        %4311 = vmatpush1.bf16.msra.mxu0 %v3323
        %4312 = vmatprep.subr.bf16.mxu0 0
        %4313 = vmatpush1.bf16.msra.mxu0 %v3324
        %4314 = vmatprep.subr.bf16.mxu0 0
        %4315 = vmatpush1.bf16.msra.mxu0 %v3325
        %4316 = vmatprep.subr.bf16.mxu0 0
        %4317 = vmatpush1.bf16.msra.mxu0 %v3326
        %4318 = vmatprep.subr.bf16.mxu0 0
        %4319 = vmatpush1.bf16.msra.mxu0 %v3327
        %4320 = vmatprep.subr.bf16.mxu0 0
        %4321 = vmatpush1.bf16.msra.mxu0 %v3328
        %4322 = vmatprep.subr.bf16.mxu0 0
        %4323 = vmatpush1.bf16.msra.mxu0 %v3329
        %4324 = vmatprep.subr.bf16.mxu0 0
        %4325 = vmatpush1.bf16.msra.mxu0 %v3330
        %4326 = vmatprep.subr.bf16.mxu0 0
        %4327 = vmatpush1.bf16.msra.mxu0 %v3331
        %4328 = vmatprep.subr.bf16.mxu0 0
        %4329 = vmatpush1.bf16.msra.mxu0 %v3332
        %4330 = vmatprep.subr.bf16.mxu0 0
        %4331 = vmatpush1.bf16.msra.mxu0 %v3333
        %4332 = vmatprep.subr.bf16.mxu0 0
        %4333 = vmatpush1.bf16.msra.mxu0 %v3334
        %4334 = vmatprep.subr.bf16.mxu0 0
        %4335 = vmatpush1.bf16.msra.mxu0 %v3335
        %4336 = vmatprep.mubr.bf16.mxu0 %v1213
        %4337 = vmatmul.mubr.bf16.gmra.mrb[0].mxu0 %v1211
        %v4338 = vpop.f32.mrb[0].mxu0
        %v4339 = vadd.f32 %v4299, %v4338
        %v4340 = vpop.f32.mrb[0].mxu0
        %v4341 = vpop.f32.mrb[0].mxu0
        %v4342 = vpop.f32.mrb[0].mxu0
        %4343 = vdwg.mxu0
        %4344 = vmatprep.subr.bf16.mxu0 0
        %4345 = vmatpush1.bf16.msra.mxu0 %v3336
        %4346 = vmatprep.subr.bf16.mxu0 0
        %4347 = vmatpush1.bf16.msra.mxu0 %v3337
        %4348 = vmatprep.subr.bf16.mxu0 0
        %4349 = vmatpush1.bf16.msra.mxu0 %v3338
        %4350 = vmatprep.subr.bf16.mxu0 0
        %4351 = vmatpush1.bf16.msra.mxu0 %v3339
        %4352 = vmatprep.subr.bf16.mxu0 0
        %4353 = vmatpush1.bf16.msra.mxu0 %v3340
        %4354 = vmatprep.subr.bf16.mxu0 0
        %4355 = vmatpush1.bf16.msra.mxu0 %v3341
        %4356 = vmatprep.subr.bf16.mxu0 0
        %4357 = vmatpush1.bf16.msra.mxu0 %v3342
        %4358 = vmatprep.subr.bf16.mxu0 0
        %4359 = vmatpush1.bf16.msra.mxu0 %v3343
        %4360 = vmatprep.subr.bf16.mxu0 0
        %4361 = vmatpush1.bf16.msra.mxu0 %v3344
        %4362 = vmatprep.subr.bf16.mxu0 0
        %4363 = vmatpush1.bf16.msra.mxu0 %v3345
        %4364 = vmatprep.subr.bf16.mxu0 0
        %4365 = vmatpush1.bf16.msra.mxu0 %v3346
        %4366 = vmatprep.subr.bf16.mxu0 0
        %4367 = vmatpush1.bf16.msra.mxu0 %v3347
        %4368 = vmatprep.subr.bf16.mxu0 0
        %4369 = vmatpush1.bf16.msra.mxu0 %v3348
        %4370 = vmatprep.subr.bf16.mxu0 0
        %4371 = vmatpush1.bf16.msra.mxu0 %v3349
        %4372 = vmatprep.subr.bf16.mxu0 0
        %4373 = vmatpush1.bf16.msra.mxu0 %v3350
        %4374 = vmatprep.subr.bf16.mxu0 0
        %4375 = vmatpush1.bf16.msra.mxu0 %v3351
        %4376 = vmatprep.mubr.bf16.mxu0 %v1210
        %4377 = vmatmul.mubr.bf16.gmra.mrb[0].mxu0 %v1196
        %v4378 = vpop.f32.mrb[0].mxu0
        %v4379 = vadd.f32 %v4339, %v4378
        %v4380 = vpop.f32.mrb[0].mxu0
        %v4381 = vpop.f32.mrb[0].mxu0
        %v4382 = vpop.f32.mrb[0].mxu0
        %4383 = vdwg.mxu0
        %4384 = vmatprep.subr.bf16.mxu0 0
        %4385 = vmatpush1.bf16.msra.mxu0 %v3352
        %4386 = vmatprep.subr.bf16.mxu0 0
        %4387 = vmatpush1.bf16.msra.mxu0 %v3353
        %4388 = vmatprep.subr.bf16.mxu0 0
        %4389 = vmatpush1.bf16.msra.mxu0 %v3354
        %4390 = vmatprep.subr.bf16.mxu0 0
        %4391 = vmatpush1.bf16.msra.mxu0 %v3355
        %4392 = vmatprep.subr.bf16.mxu0 0
        %4393 = vmatpush1.bf16.msra.mxu0 %v3356
        %4394 = vmatprep.subr.bf16.mxu0 0
        %4395 = vmatpush1.bf16.msra.mxu0 %v3357
        %4396 = vmatprep.subr.bf16.mxu0 0
        %4397 = vmatpush1.bf16.msra.mxu0 %v3358
        %4398 = vmatprep.subr.bf16.mxu0 0
        %4399 = vmatpush1.bf16.msra.mxu0 %v3359
        %4400 = vmatprep.subr.bf16.mxu0 0
        %4401 = vmatpush1.bf16.msra.mxu0 %v3360
        %4402 = vmatprep.subr.bf16.mxu0 0
        %4403 = vmatpush1.bf16.msra.mxu0 %v3361
        %4404 = vmatprep.subr.bf16.mxu0 0
        %4405 = vmatpush1.bf16.msra.mxu0 %v3362
        %4406 = vmatprep.subr.bf16.mxu0 0
        %4407 = vmatpush1.bf16.msra.mxu0 %v3363
        %4408 = vmatprep.subr.bf16.mxu0 0
        %4409 = vmatpush1.bf16.msra.mxu0 %v3364
        %4410 = vmatprep.subr.bf16.mxu0 0
        %4411 = vmatpush1.bf16.msra.mxu0 %v3365
        %4412 = vmatprep.subr.bf16.mxu0 0
        %4413 = vmatpush1.bf16.msra.mxu0 %v3366
        %4414 = vmatprep.subr.bf16.mxu0 0
        %4415 = vmatpush1.bf16.msra.mxu0 %v3367
        %4416 = vmatprep.mubr.bf16.mxu0 %v1214
        %4417 = vmatmul.mubr.bf16.gmra.mrb[0].mxu0 %v1212
        %v4418 = vpop.f32.mrb[0].mxu0
        %v4419 = vadd.f32 %v4379, %v4418
        %v4420 = vpop.f32.mrb[0].mxu0
        %v4421 = vpop.f32.mrb[0].mxu0
        %v4422 = vpop.f32.mrb[0].mxu0
        %4423 = vdwg.mxu0
        %4424 = vmatprep.subr.bf16.mxu0 0
        %4425 = vmatpush1.bf16.msra.mxu0 %v3368
        %4426 = vmatprep.subr.bf16.mxu0 0
        %4427 = vmatpush1.bf16.msra.mxu0 %v3369
        %4428 = vmatprep.subr.bf16.mxu0 0
        %4429 = vmatpush1.bf16.msra.mxu0 %v3370
        %4430 = vmatprep.subr.bf16.mxu0 0
        %4431 = vmatpush1.bf16.msra.mxu0 %v3371
        %4432 = vmatprep.subr.bf16.mxu0 0
        %4433 = vmatpush1.bf16.msra.mxu0 %v3372
        %4434 = vmatprep.subr.bf16.mxu0 0
        %4435 = vmatpush1.bf16.msra.mxu0 %v3373
        %4436 = vmatprep.subr.bf16.mxu0 0
        %4437 = vmatpush1.bf16.msra.mxu0 %v3374
        %4438 = vmatprep.subr.bf16.mxu0 0
        %4439 = vmatpush1.bf16.msra.mxu0 %v3375
        %4440 = vmatprep.subr.bf16.mxu0 0
        %4441 = vmatpush1.bf16.msra.mxu0 %v3376
        %4442 = vmatprep.subr.bf16.mxu0 0
        %4443 = vmatpush1.bf16.msra.mxu0 %v3377
        %4444 = vmatprep.subr.bf16.mxu0 0
        %4445 = vmatpush1.bf16.msra.mxu0 %v3378
        %4446 = vmatprep.subr.bf16.mxu0 0
        %4447 = vmatpush1.bf16.msra.mxu0 %v3379
        %4448 = vmatprep.subr.bf16.mxu0 0
        %4449 = vmatpush1.bf16.msra.mxu0 %v3380
        %4450 = vmatprep.subr.bf16.mxu0 0
        %4451 = vmatpush1.bf16.msra.mxu0 %v3381
        %4452 = vmatprep.subr.bf16.mxu0 0
        %4453 = vmatpush1.bf16.msra.mxu0 %v3382
        %4454 = vmatprep.subr.bf16.mxu0 0
        %4455 = vmatpush1.bf16.msra.mxu0 %v3383
        %4456 = vmatprep.mubr.bf16.mxu0 %v1252
        %4457 = vmatmul.mubr.bf16.gmra.mrb[0].mxu0 %v1238
        %v4458 = vpop.f32.mrb[0].mxu0
        %v4459 = vadd.f32 %v4419, %v4458
        %v4460 = vpop.f32.mrb[0].mxu0
        %v4461 = vpop.f32.mrb[0].mxu0
        %v4462 = vpop.f32.mrb[0].mxu0
        %4463 = vdwg.mxu0
        %4464 = vmatprep.subr.bf16.mxu0 0
        %4465 = vmatpush1.bf16.msra.mxu0 %v3384
        %4466 = vmatprep.subr.bf16.mxu0 0
        %4467 = vmatpush1.bf16.msra.mxu0 %v3385
        %4468 = vmatprep.subr.bf16.mxu0 0
        %4469 = vmatpush1.bf16.msra.mxu0 %v3386
        %4470 = vmatprep.subr.bf16.mxu0 0
        %4471 = vmatpush1.bf16.msra.mxu0 %v3387
        %4472 = vmatprep.subr.bf16.mxu0 0
        %4473 = vmatpush1.bf16.msra.mxu0 %v3388
        %4474 = vmatprep.subr.bf16.mxu0 0
        %4475 = vmatpush1.bf16.msra.mxu0 %v3389
        %4476 = vmatprep.subr.bf16.mxu0 0
        %4477 = vmatpush1.bf16.msra.mxu0 %v3390
        %4478 = vmatprep.subr.bf16.mxu0 0
        %4479 = vmatpush1.bf16.msra.mxu0 %v3391
        %4480 = vmatprep.subr.bf16.mxu0 0
        %4481 = vmatpush1.bf16.msra.mxu0 %v3392
        %4482 = vmatprep.subr.bf16.mxu0 0
        %4483 = vmatpush1.bf16.msra.mxu0 %v3393
        %4484 = vmatprep.subr.bf16.mxu0 0
        %4485 = vmatpush1.bf16.msra.mxu0 %v3394
        %4486 = vmatprep.subr.bf16.mxu0 0
        %4487 = vmatpush1.bf16.msra.mxu0 %v3395
        %4488 = vmatprep.subr.bf16.mxu0 0
        %4489 = vmatpush1.bf16.msra.mxu0 %v3396
        %4490 = vmatprep.subr.bf16.mxu0 0
        %4491 = vmatpush1.bf16.msra.mxu0 %v3397
        %4492 = vmatprep.subr.bf16.mxu0 0
        %4493 = vmatpush1.bf16.msra.mxu0 %v3398
        %4494 = vmatprep.subr.bf16.mxu0 0
        %4495 = vmatpush1.bf16.msra.mxu0 %v3399
        %4496 = vmatprep.mubr.bf16.mxu0 %v1262
        %4497 = vmatmul.mubr.bf16.gmra.mrb[0].mxu0 %v1260
        %v4498 = vpop.f32.mrb[0].mxu0
        %v4499 = vadd.f32 %v4459, %v4498
        %v4500 = vpop.f32.mrb[0].mxu0
        %v4501 = vpop.f32.mrb[0].mxu0
        %v4502 = vpop.f32.mrb[0].mxu0
        %4503 = vdwg.mxu0
        %4504 = vmatprep.subr.bf16.mxu0 0
        %4505 = vmatpush1.bf16.msra.mxu0 %v3400
        %4506 = vmatprep.subr.bf16.mxu0 0
        %4507 = vmatpush1.bf16.msra.mxu0 %v3401
        %4508 = vmatprep.subr.bf16.mxu0 0
        %4509 = vmatpush1.bf16.msra.mxu0 %v3402
        %4510 = vmatprep.subr.bf16.mxu0 0
        %4511 = vmatpush1.bf16.msra.mxu0 %v3403
        %4512 = vmatprep.subr.bf16.mxu0 0
        %4513 = vmatpush1.bf16.msra.mxu0 %v3404
        %4514 = vmatprep.subr.bf16.mxu0 0
        %4515 = vmatpush1.bf16.msra.mxu0 %v3405
        %4516 = vmatprep.subr.bf16.mxu0 0
        %4517 = vmatpush1.bf16.msra.mxu0 %v3406
        %4518 = vmatprep.subr.bf16.mxu0 0
        %4519 = vmatpush1.bf16.msra.mxu0 %v3407
        %4520 = vmatprep.subr.bf16.mxu0 0
        %4521 = vmatpush1.bf16.msra.mxu0 %v3408
        %4522 = vmatprep.subr.bf16.mxu0 0
        %4523 = vmatpush1.bf16.msra.mxu0 %v3409
        %4524 = vmatprep.subr.bf16.mxu0 0
        %4525 = vmatpush1.bf16.msra.mxu0 %v3410
        %4526 = vmatprep.subr.bf16.mxu0 0
        %4527 = vmatpush1.bf16.msra.mxu0 %v3411
        %4528 = vmatprep.subr.bf16.mxu0 0
        %4529 = vmatpush1.bf16.msra.mxu0 %v3412
        %4530 = vmatprep.subr.bf16.mxu0 0
        %4531 = vmatpush1.bf16.msra.mxu0 %v3413
        %4532 = vmatprep.subr.bf16.mxu0 0
        %4533 = vmatpush1.bf16.msra.mxu0 %v3414
        %4534 = vmatprep.subr.bf16.mxu0 0
        %4535 = vmatpush1.bf16.msra.mxu0 %v3415
        %4536 = vmatprep.mubr.bf16.mxu0 %v1259
        %4537 = vmatmul.mubr.bf16.gmra.mrb[0].mxu0 %v1245
        %v4538 = vpop.f32.mrb[0].mxu0
        %v4539 = vadd.f32 %v4499, %v4538
        %v4540 = vpop.f32.mrb[0].mxu0
        %v4541 = vpop.f32.mrb[0].mxu0
        %v4542 = vpop.f32.mrb[0].mxu0
        %4543 = vdwg.mxu0
        %4544 = vmatprep.subr.bf16.mxu0 0
        %4545 = vmatpush1.bf16.msra.mxu0 %v3416
        %4546 = vmatprep.subr.bf16.mxu0 0
        %4547 = vmatpush1.bf16.msra.mxu0 %v3417
        %4548 = vmatprep.subr.bf16.mxu0 0
        %4549 = vmatpush1.bf16.msra.mxu0 %v3418
        %4550 = vmatprep.subr.bf16.mxu0 0
        %4551 = vmatpush1.bf16.msra.mxu0 %v3419
        %4552 = vmatprep.subr.bf16.mxu0 0
        %4553 = vmatpush1.bf16.msra.mxu0 %v3420
        %4554 = vmatprep.subr.bf16.mxu0 0
        %4555 = vmatpush1.bf16.msra.mxu0 %v3421
        %4556 = vmatprep.subr.bf16.mxu0 0
        %4557 = vmatpush1.bf16.msra.mxu0 %v3422
        %4558 = vmatprep.subr.bf16.mxu0 0
        %4559 = vmatpush1.bf16.msra.mxu0 %v3423
        %4560 = vmatprep.subr.bf16.mxu0 0
        %4561 = vmatpush1.bf16.msra.mxu0 %v3424
        %4562 = vmatprep.subr.bf16.mxu0 0
        %4563 = vmatpush1.bf16.msra.mxu0 %v3425
        %4564 = vmatprep.subr.bf16.mxu0 0
        %4565 = vmatpush1.bf16.msra.mxu0 %v3426
        %4566 = vmatprep.subr.bf16.mxu0 0
        %4567 = vmatpush1.bf16.msra.mxu0 %v3427
        %4568 = vmatprep.subr.bf16.mxu0 0
        %4569 = vmatpush1.bf16.msra.mxu0 %v3428
        %4570 = vmatprep.subr.bf16.mxu0 0
        %4571 = vmatpush1.bf16.msra.mxu0 %v3429
        %4572 = vmatprep.subr.bf16.mxu0 0
        %4573 = vmatpush1.bf16.msra.mxu0 %v3430
        %4574 = vmatprep.subr.bf16.mxu0 0
        %4575 = vmatpush1.bf16.msra.mxu0 %v3431
        %4576 = vmatprep.mubr.bf16.mxu0 %v1263
        %4577 = vmatmul.mubr.bf16.gmra.mrb[0].mxu0 %v1261
        %v4578 = vpop.f32.mrb[0].mxu0
        %v4579 = vadd.f32 %v4539, %v4578
        %v4580 = vpop.f32.mrb[0].mxu0
        %v4581 = vpop.f32.mrb[0].mxu0
        %v4582 = vpop.f32.mrb[0].mxu0
        %4583 = vdwg.mxu0
        %4584 = vmatprep.subr.bf16.mxu0 0
        %4585 = vmatpush1.bf16.msra.mxu0 %v3432
        %4586 = vmatprep.subr.bf16.mxu0 0
        %4587 = vmatpush1.bf16.msra.mxu0 %v3433
        %4588 = vmatprep.subr.bf16.mxu0 0
        %4589 = vmatpush1.bf16.msra.mxu0 %v3434
        %4590 = vmatprep.subr.bf16.mxu0 0
        %4591 = vmatpush1.bf16.msra.mxu0 %v3435
        %4592 = vmatprep.subr.bf16.mxu0 0
        %4593 = vmatpush1.bf16.msra.mxu0 %v3436
        %4594 = vmatprep.subr.bf16.mxu0 0
        %4595 = vmatpush1.bf16.msra.mxu0 %v3437
        %4596 = vmatprep.subr.bf16.mxu0 0
        %4597 = vmatpush1.bf16.msra.mxu0 %v3438
        %4598 = vmatprep.subr.bf16.mxu0 0
        %4599 = vmatpush1.bf16.msra.mxu0 %v3439
        %4600 = vmatprep.subr.bf16.mxu0 0
        %4601 = vmatpush1.bf16.msra.mxu0 %v3440
        %4602 = vmatprep.subr.bf16.mxu0 0
        %4603 = vmatpush1.bf16.msra.mxu0 %v3441
        %4604 = vmatprep.subr.bf16.mxu0 0
        %4605 = vmatpush1.bf16.msra.mxu0 %v3442
        %4606 = vmatprep.subr.bf16.mxu0 0
        %4607 = vmatpush1.bf16.msra.mxu0 %v3443
        %4608 = vmatprep.subr.bf16.mxu0 0
        %4609 = vmatpush1.bf16.msra.mxu0 %v3444
        %4610 = vmatprep.subr.bf16.mxu0 0
        %4611 = vmatpush1.bf16.msra.mxu0 %v3445
        %4612 = vmatprep.subr.bf16.mxu0 0
        %4613 = vmatpush1.bf16.msra.mxu0 %v3446
        %4614 = vmatprep.subr.bf16.mxu0 0
        %4615 = vmatpush1.bf16.msra.mxu0 %v3447
        %4616 = vmatprep.mubr.bf16.mxu0 %v1301
        %4617 = vmatmul.mubr.bf16.gmra.mrb[0].mxu0 %v1287
        %v4618 = vpop.f32.mrb[0].mxu0
        %v4619 = vadd.f32 %v4579, %v4618
        %v4620 = vpop.f32.mrb[0].mxu0
        %v4621 = vpop.f32.mrb[0].mxu0
        %v4622 = vpop.f32.mrb[0].mxu0
        %4623 = vdwg.mxu0
        %4624 = vmatprep.subr.bf16.mxu0 0
        %4625 = vmatpush1.bf16.msra.mxu0 %v3448
        %4626 = vmatprep.subr.bf16.mxu0 0
        %4627 = vmatpush1.bf16.msra.mxu0 %v3449
        %4628 = vmatprep.subr.bf16.mxu0 0
        %4629 = vmatpush1.bf16.msra.mxu0 %v3450
        %4630 = vmatprep.subr.bf16.mxu0 0
        %4631 = vmatpush1.bf16.msra.mxu0 %v3451
        %4632 = vmatprep.subr.bf16.mxu0 0
        %4633 = vmatpush1.bf16.msra.mxu0 %v3452
        %4634 = vmatprep.subr.bf16.mxu0 0
        %4635 = vmatpush1.bf16.msra.mxu0 %v3453
        %4636 = vmatprep.subr.bf16.mxu0 0
        %4637 = vmatpush1.bf16.msra.mxu0 %v3454
        %4638 = vmatprep.subr.bf16.mxu0 0
        %4639 = vmatpush1.bf16.msra.mxu0 %v3455
        %4640 = vmatprep.subr.bf16.mxu0 0
        %4641 = vmatpush1.bf16.msra.mxu0 %v3456
        %4642 = vmatprep.subr.bf16.mxu0 0
        %4643 = vmatpush1.bf16.msra.mxu0 %v3457
        %4644 = vmatprep.subr.bf16.mxu0 0
        %4645 = vmatpush1.bf16.msra.mxu0 %v3458
        %4646 = vmatprep.subr.bf16.mxu0 0
        %4647 = vmatpush1.bf16.msra.mxu0 %v3459
        %4648 = vmatprep.subr.bf16.mxu0 0
        %4649 = vmatpush1.bf16.msra.mxu0 %v3460
        %4650 = vmatprep.subr.bf16.mxu0 0
        %4651 = vmatpush1.bf16.msra.mxu0 %v3461
        %4652 = vmatprep.subr.bf16.mxu0 0
        %4653 = vmatpush1.bf16.msra.mxu0 %v3462
        %4654 = vmatprep.subr.bf16.mxu0 0
        %4655 = vmatpush1.bf16.msra.mxu0 %v3463
        %4656 = vmatprep.mubr.bf16.mxu0 %v1311
        %4657 = vmatmul.mubr.bf16.gmra.mrb[0].mxu0 %v1309
        %v4658 = vpop.f32.mrb[0].mxu0
        %v4659 = vadd.f32 %v4619, %v4658
        %v4660 = vpop.f32.mrb[0].mxu0
        %v4661 = vpop.f32.mrb[0].mxu0
        %v4662 = vpop.f32.mrb[0].mxu0
        %4663 = vdwg.mxu0
        %4664 = vmatprep.subr.bf16.mxu0 0
        %4665 = vmatpush1.bf16.msra.mxu0 %v3464
        %4666 = vmatprep.subr.bf16.mxu0 0
        %4667 = vmatpush1.bf16.msra.mxu0 %v3465
        %4668 = vmatprep.subr.bf16.mxu0 0
        %4669 = vmatpush1.bf16.msra.mxu0 %v3466
        %4670 = vmatprep.subr.bf16.mxu0 0
        %4671 = vmatpush1.bf16.msra.mxu0 %v3467
        %4672 = vmatprep.subr.bf16.mxu0 0
        %4673 = vmatpush1.bf16.msra.mxu0 %v3468
        %4674 = vmatprep.subr.bf16.mxu0 0
        %4675 = vmatpush1.bf16.msra.mxu0 %v3469
        %4676 = vmatprep.subr.bf16.mxu0 0
        %4677 = vmatpush1.bf16.msra.mxu0 %v3470
        %4678 = vmatprep.subr.bf16.mxu0 0
        %4679 = vmatpush1.bf16.msra.mxu0 %v3471
        %4680 = vmatprep.subr.bf16.mxu0 0
        %4681 = vmatpush1.bf16.msra.mxu0 %v3472
        %4682 = vmatprep.subr.bf16.mxu0 0
        %4683 = vmatpush1.bf16.msra.mxu0 %v3473
        %4684 = vmatprep.subr.bf16.mxu0 0
        %4685 = vmatpush1.bf16.msra.mxu0 %v3474
        %4686 = vmatprep.subr.bf16.mxu0 0
        %4687 = vmatpush1.bf16.msra.mxu0 %v3475
        %4688 = vmatprep.subr.bf16.mxu0 0
        %4689 = vmatpush1.bf16.msra.mxu0 %v3476
        %4690 = vmatprep.subr.bf16.mxu0 0
        %4691 = vmatpush1.bf16.msra.mxu0 %v3477
        %4692 = vmatprep.subr.bf16.mxu0 0
        %4693 = vmatpush1.bf16.msra.mxu0 %v3478
        %4694 = vmatprep.subr.bf16.mxu0 0
        %4695 = vmatpush1.bf16.msra.mxu0 %v3479
        %4696 = vmatprep.mubr.bf16.mxu0 %v1308
        %4697 = vmatmul.mubr.bf16.gmra.mrb[0].mxu0 %v1294
        %v4698 = vpop.f32.mrb[0].mxu0
        %v4699 = vadd.f32 %v4659, %v4698
        %v4700 = vpop.f32.mrb[0].mxu0
        %v4701 = vpop.f32.mrb[0].mxu0
        %v4702 = vpop.f32.mrb[0].mxu0
        %4703 = vdwg.mxu0
        %4704 = vmatprep.subr.bf16.mxu0 0
        %4705 = vmatpush1.bf16.msra.mxu0 %v3480
        %4706 = vmatprep.subr.bf16.mxu0 0
        %4707 = vmatpush1.bf16.msra.mxu0 %v3481
        %4708 = vmatprep.subr.bf16.mxu0 0
        %4709 = vmatpush1.bf16.msra.mxu0 %v3482
        %4710 = vmatprep.subr.bf16.mxu0 0
        %4711 = vmatpush1.bf16.msra.mxu0 %v3483
        %4712 = vmatprep.subr.bf16.mxu0 0
        %4713 = vmatpush1.bf16.msra.mxu0 %v3484
        %4714 = vmatprep.subr.bf16.mxu0 0
        %4715 = vmatpush1.bf16.msra.mxu0 %v3485
        %4716 = vmatprep.subr.bf16.mxu0 0
        %4717 = vmatpush1.bf16.msra.mxu0 %v3486
        %4718 = vmatprep.subr.bf16.mxu0 0
        %4719 = vmatpush1.bf16.msra.mxu0 %v3487
        %4720 = vmatprep.subr.bf16.mxu0 0
        %4721 = vmatpush1.bf16.msra.mxu0 %v3488
        %4722 = vmatprep.subr.bf16.mxu0 0
        %4723 = vmatpush1.bf16.msra.mxu0 %v3489
        %4724 = vmatprep.subr.bf16.mxu0 0
        %4725 = vmatpush1.bf16.msra.mxu0 %v3490
        %4726 = vmatprep.subr.bf16.mxu0 0
        %4727 = vmatpush1.bf16.msra.mxu0 %v3491
        %4728 = vmatprep.subr.bf16.mxu0 0
        %4729 = vmatpush1.bf16.msra.mxu0 %v3492
        %4730 = vmatprep.subr.bf16.mxu0 0
        %4731 = vmatpush1.bf16.msra.mxu0 %v3493
        %4732 = vmatprep.subr.bf16.mxu0 0
        %4733 = vmatpush1.bf16.msra.mxu0 %v3494
        %4734 = vmatprep.subr.bf16.mxu0 0
        %4735 = vmatpush1.bf16.msra.mxu0 %v3495
        %4736 = vmatprep.mubr.bf16.mxu0 %v1312
        %4737 = vmatmul.mubr.bf16.gmra.mrb[0].mxu0 %v1310
        %v4738 = vpop.f32.mrb[0].mxu0
        %v4739 = vadd.f32 %v4699, %v4738
        %v4740 = vpop.f32.mrb[0].mxu0
        %v4741 = vpop.f32.mrb[0].mxu0
        %v4742 = vpop.f32.mrb[0].mxu0
        %4743 = vdwg.mxu0
        %4744 = vmatprep.subr.bf16.mxu0 0
        %4745 = vmatpush1.bf16.msra.mxu0 %v3496
        %4746 = vmatprep.subr.bf16.mxu0 0
        %4747 = vmatpush1.bf16.msra.mxu0 %v3497
        %4748 = vmatprep.subr.bf16.mxu0 0
        %4749 = vmatpush1.bf16.msra.mxu0 %v3498
        %4750 = vmatprep.subr.bf16.mxu0 0
        %4751 = vmatpush1.bf16.msra.mxu0 %v3499
        %4752 = vmatprep.subr.bf16.mxu0 0
        %4753 = vmatpush1.bf16.msra.mxu0 %v3500
        %4754 = vmatprep.subr.bf16.mxu0 0
        %4755 = vmatpush1.bf16.msra.mxu0 %v3501
        %4756 = vmatprep.subr.bf16.mxu0 0
        %4757 = vmatpush1.bf16.msra.mxu0 %v3502
        %4758 = vmatprep.subr.bf16.mxu0 0
        %4759 = vmatpush1.bf16.msra.mxu0 %v3503
        %4760 = vmatprep.subr.bf16.mxu0 0
        %4761 = vmatpush1.bf16.msra.mxu0 %v3504
        %4762 = vmatprep.subr.bf16.mxu0 0
        %4763 = vmatpush1.bf16.msra.mxu0 %v3505
        %4764 = vmatprep.subr.bf16.mxu0 0
        %4765 = vmatpush1.bf16.msra.mxu0 %v3506
        %4766 = vmatprep.subr.bf16.mxu0 0
        %4767 = vmatpush1.bf16.msra.mxu0 %v3507
        %4768 = vmatprep.subr.bf16.mxu0 0
        %4769 = vmatpush1.bf16.msra.mxu0 %v3508
        %4770 = vmatprep.subr.bf16.mxu0 0
        %4771 = vmatpush1.bf16.msra.mxu0 %v3509
        %4772 = vmatprep.subr.bf16.mxu0 0
        %4773 = vmatpush1.bf16.msra.mxu0 %v3510
        %4774 = vmatprep.subr.bf16.mxu0 0
        %4775 = vmatpush1.bf16.msra.mxu0 %v3511
        %4776 = vmatprep.mubr.bf16.mxu0 %v1350
        %4777 = vmatmul.mubr.bf16.gmra.mrb[0].mxu0 %v1336
        %v4778 = vpop.f32.mrb[0].mxu0
        %v4779 = vadd.f32 %v4739, %v4778
        %v4780 = vpop.f32.mrb[0].mxu0
        %v4781 = vpop.f32.mrb[0].mxu0
        %v4782 = vpop.f32.mrb[0].mxu0
        %4783 = vdwg.mxu0
        %4784 = vmatprep.subr.bf16.mxu0 0
        %4785 = vmatpush1.bf16.msra.mxu0 %v3512
        %4786 = vmatprep.subr.bf16.mxu0 0
        %4787 = vmatpush1.bf16.msra.mxu0 %v3513
        %4788 = vmatprep.subr.bf16.mxu0 0
        %4789 = vmatpush1.bf16.msra.mxu0 %v3514
        %4790 = vmatprep.subr.bf16.mxu0 0
        %4791 = vmatpush1.bf16.msra.mxu0 %v3515
        %4792 = vmatprep.subr.bf16.mxu0 0
        %4793 = vmatpush1.bf16.msra.mxu0 %v3516
        %4794 = vmatprep.subr.bf16.mxu0 0
        %4795 = vmatpush1.bf16.msra.mxu0 %v3517
        %4796 = vmatprep.subr.bf16.mxu0 0
        %4797 = vmatpush1.bf16.msra.mxu0 %v3518
        %4798 = vmatprep.subr.bf16.mxu0 0
        %4799 = vmatpush1.bf16.msra.mxu0 %v3519
        %4800 = vmatprep.subr.bf16.mxu0 0
        %4801 = vmatpush1.bf16.msra.mxu0 %v3520
        %4802 = vmatprep.subr.bf16.mxu0 0
        %4803 = vmatpush1.bf16.msra.mxu0 %v3521
        %4804 = vmatprep.subr.bf16.mxu0 0
        %4805 = vmatpush1.bf16.msra.mxu0 %v3522
        %4806 = vmatprep.subr.bf16.mxu0 0
        %4807 = vmatpush1.bf16.msra.mxu0 %v3523
        %4808 = vmatprep.subr.bf16.mxu0 0
        %4809 = vmatpush1.bf16.msra.mxu0 %v3524
        %4810 = vmatprep.subr.bf16.mxu0 0
        %4811 = vmatpush1.bf16.msra.mxu0 %v3525
        %4812 = vmatprep.subr.bf16.mxu0 0
        %4813 = vmatpush1.bf16.msra.mxu0 %v3526
        %4814 = vmatprep.subr.bf16.mxu0 0
        %4815 = vmatpush1.bf16.msra.mxu0 %v3527
        %4816 = vmatprep.mubr.bf16.mxu0 %v1360
        %4817 = vmatmul.mubr.bf16.gmra.mrb[0].mxu0 %v1358
        %v4818 = vpop.f32.mrb[0].mxu0
        %v4819 = vadd.f32 %v4779, %v4818
        %v4820 = vpop.f32.mrb[0].mxu0
        %v4821 = vpop.f32.mrb[0].mxu0
        %v4822 = vpop.f32.mrb[0].mxu0
        %4823 = vdwg.mxu0
        %4824 = vmatprep.subr.bf16.mxu0 0
        %4825 = vmatpush1.bf16.msra.mxu0 %v3528
        %4826 = vmatprep.subr.bf16.mxu0 0
        %4827 = vmatpush1.bf16.msra.mxu0 %v3529
        %4828 = vmatprep.subr.bf16.mxu0 0
        %4829 = vmatpush1.bf16.msra.mxu0 %v3530
        %4830 = vmatprep.subr.bf16.mxu0 0
        %4831 = vmatpush1.bf16.msra.mxu0 %v3531
        %4832 = vmatprep.subr.bf16.mxu0 0
        %4833 = vmatpush1.bf16.msra.mxu0 %v3532
        %4834 = vmatprep.subr.bf16.mxu0 0
        %4835 = vmatpush1.bf16.msra.mxu0 %v3533
        %4836 = vmatprep.subr.bf16.mxu0 0
        %4837 = vmatpush1.bf16.msra.mxu0 %v3534
        %4838 = vmatprep.subr.bf16.mxu0 0
        %4839 = vmatpush1.bf16.msra.mxu0 %v3535
        %4840 = vmatprep.subr.bf16.mxu0 0
        %4841 = vmatpush1.bf16.msra.mxu0 %v3536
        %4842 = vmatprep.subr.bf16.mxu0 0
        %4843 = vmatpush1.bf16.msra.mxu0 %v3537
        %4844 = vmatprep.subr.bf16.mxu0 0
        %4845 = vmatpush1.bf16.msra.mxu0 %v3538
        %4846 = vmatprep.subr.bf16.mxu0 0
        %4847 = vmatpush1.bf16.msra.mxu0 %v3539
        %4848 = vmatprep.subr.bf16.mxu0 0
        %4849 = vmatpush1.bf16.msra.mxu0 %v3540
        %4850 = vmatprep.subr.bf16.mxu0 0
        %4851 = vmatpush1.bf16.msra.mxu0 %v3541
        %4852 = vmatprep.subr.bf16.mxu0 0
        %4853 = vmatpush1.bf16.msra.mxu0 %v3542
        %4854 = vmatprep.subr.bf16.mxu0 0
        %4855 = vmatpush1.bf16.msra.mxu0 %v3543
        %4856 = vmatprep.mubr.bf16.mxu0 %v1357
        %4857 = vmatmul.mubr.bf16.gmra.mrb[0].mxu0 %v1343
        %v4858 = vpop.f32.mrb[0].mxu0
        %v4859 = vadd.f32 %v4819, %v4858
        %v4860 = vpop.f32.mrb[0].mxu0
        %v4861 = vpop.f32.mrb[0].mxu0
        %v4862 = vpop.f32.mrb[0].mxu0
        %4863 = vdwg.mxu0
        %4864 = vmatprep.subr.bf16.mxu0 0
        %4865 = vmatpush1.bf16.msra.mxu0 %v3544
        %4866 = vmatprep.subr.bf16.mxu0 0
        %4867 = vmatpush1.bf16.msra.mxu0 %v3545
        %4868 = vmatprep.subr.bf16.mxu0 0
        %4869 = vmatpush1.bf16.msra.mxu0 %v3546
        %4870 = vmatprep.subr.bf16.mxu0 0
        %4871 = vmatpush1.bf16.msra.mxu0 %v3547
        %4872 = vmatprep.subr.bf16.mxu0 0
        %4873 = vmatpush1.bf16.msra.mxu0 %v3548
        %4874 = vmatprep.subr.bf16.mxu0 0
        %4875 = vmatpush1.bf16.msra.mxu0 %v3549
        %4876 = vmatprep.subr.bf16.mxu0 0
        %4877 = vmatpush1.bf16.msra.mxu0 %v3550
        %4878 = vmatprep.subr.bf16.mxu0 0
        %4879 = vmatpush1.bf16.msra.mxu0 %v3551
        %4880 = vmatprep.subr.bf16.mxu0 0
        %4881 = vmatpush1.bf16.msra.mxu0 %v3552
        %4882 = vmatprep.subr.bf16.mxu0 0
        %4883 = vmatpush1.bf16.msra.mxu0 %v3553
        %4884 = vmatprep.subr.bf16.mxu0 0
        %4885 = vmatpush1.bf16.msra.mxu0 %v3554
        %4886 = vmatprep.subr.bf16.mxu0 0
        %4887 = vmatpush1.bf16.msra.mxu0 %v3555
        %4888 = vmatprep.subr.bf16.mxu0 0
        %4889 = vmatpush1.bf16.msra.mxu0 %v3556
        %4890 = vmatprep.subr.bf16.mxu0 0
        %4891 = vmatpush1.bf16.msra.mxu0 %v3557
        %4892 = vmatprep.subr.bf16.mxu0 0
        %4893 = vmatpush1.bf16.msra.mxu0 %v3558
        %4894 = vmatprep.subr.bf16.mxu0 0
        %4895 = vmatpush1.bf16.msra.mxu0 %v3559
        %4896 = vmatprep.mubr.bf16.mxu0 %v1361
        %4897 = vmatmul.mubr.bf16.gmra.mrb[0].mxu0 %v1359
        %v4898 = vpop.f32.mrb[0].mxu0
        %v4899 = vadd.f32 %v4859, %v4898
        %v4900 = vpop.f32.mrb[0].mxu0
        %v4901 = vpop.f32.mrb[0].mxu0
        %v4902 = vpop.f32.mrb[0].mxu0
        %4903 = vdwg.mxu0
        %4904 = vmatprep.subr.bf16.mxu0 0
        %4905 = vmatpush1.bf16.msra.mxu0 %v3560
        %4906 = vmatprep.subr.bf16.mxu0 0
        %4907 = vmatpush1.bf16.msra.mxu0 %v3561
        %4908 = vmatprep.subr.bf16.mxu0 0
        %4909 = vmatpush1.bf16.msra.mxu0 %v3562
        %4910 = vmatprep.subr.bf16.mxu0 0
        %4911 = vmatpush1.bf16.msra.mxu0 %v3563
        %4912 = vmatprep.subr.bf16.mxu0 0
        %4913 = vmatpush1.bf16.msra.mxu0 %v3564
        %4914 = vmatprep.subr.bf16.mxu0 0
        %4915 = vmatpush1.bf16.msra.mxu0 %v3565
        %4916 = vmatprep.subr.bf16.mxu0 0
        %4917 = vmatpush1.bf16.msra.mxu0 %v3566
        %4918 = vmatprep.subr.bf16.mxu0 0
        %4919 = vmatpush1.bf16.msra.mxu0 %v3567
        %4920 = vmatprep.subr.bf16.mxu0 0
        %4921 = vmatpush1.bf16.msra.mxu0 %v3568
        %4922 = vmatprep.subr.bf16.mxu0 0
        %4923 = vmatpush1.bf16.msra.mxu0 %v3569
        %4924 = vmatprep.subr.bf16.mxu0 0
        %4925 = vmatpush1.bf16.msra.mxu0 %v3570
        %4926 = vmatprep.subr.bf16.mxu0 0
        %4927 = vmatpush1.bf16.msra.mxu0 %v3571
        %4928 = vmatprep.subr.bf16.mxu0 0
        %4929 = vmatpush1.bf16.msra.mxu0 %v3572
        %4930 = vmatprep.subr.bf16.mxu0 0
        %4931 = vmatpush1.bf16.msra.mxu0 %v3573
        %4932 = vmatprep.subr.bf16.mxu0 0
        %4933 = vmatpush1.bf16.msra.mxu0 %v3574
        %4934 = vmatprep.subr.bf16.mxu0 0
        %4935 = vmatpush1.bf16.msra.mxu0 %v3575
        %4936 = vmatprep.mubr.bf16.mxu0 %v1399
        %4937 = vmatmul.mubr.bf16.gmra.mrb[0].mxu0 %v1385
        %v4938 = vpop.f32.mrb[0].mxu0
        %v4939 = vadd.f32 %v4899, %v4938
        %v4940 = vpop.f32.mrb[0].mxu0
        %v4941 = vpop.f32.mrb[0].mxu0
        %v4942 = vpop.f32.mrb[0].mxu0
        %4943 = vdwg.mxu0
        %4944 = vmatprep.subr.bf16.mxu0 0
        %4945 = vmatpush1.bf16.msra.mxu0 %v3576
        %4946 = vmatprep.subr.bf16.mxu0 0
        %4947 = vmatpush1.bf16.msra.mxu0 %v3577
        %4948 = vmatprep.subr.bf16.mxu0 0
        %4949 = vmatpush1.bf16.msra.mxu0 %v3578
        %4950 = vmatprep.subr.bf16.mxu0 0
        %4951 = vmatpush1.bf16.msra.mxu0 %v3579
        %4952 = vmatprep.subr.bf16.mxu0 0
        %4953 = vmatpush1.bf16.msra.mxu0 %v3580
        %4954 = vmatprep.subr.bf16.mxu0 0
        %4955 = vmatpush1.bf16.msra.mxu0 %v3581
        %4956 = vmatprep.subr.bf16.mxu0 0
        %4957 = vmatpush1.bf16.msra.mxu0 %v3582
        %4958 = vmatprep.subr.bf16.mxu0 0
        %4959 = vmatpush1.bf16.msra.mxu0 %v3583
        %4960 = vmatprep.subr.bf16.mxu0 0
        %4961 = vmatpush1.bf16.msra.mxu0 %v3584
        %4962 = vmatprep.subr.bf16.mxu0 0
        %4963 = vmatpush1.bf16.msra.mxu0 %v3585
        %4964 = vmatprep.subr.bf16.mxu0 0
        %4965 = vmatpush1.bf16.msra.mxu0 %v3586
        %4966 = vmatprep.subr.bf16.mxu0 0
        %4967 = vmatpush1.bf16.msra.mxu0 %v3587
        %4968 = vmatprep.subr.bf16.mxu0 0
        %4969 = vmatpush1.bf16.msra.mxu0 %v3588
        %4970 = vmatprep.subr.bf16.mxu0 0
        %4971 = vmatpush1.bf16.msra.mxu0 %v3589
        %4972 = vmatprep.subr.bf16.mxu0 0
        %4973 = vmatpush1.bf16.msra.mxu0 %v3590
        %4974 = vmatprep.subr.bf16.mxu0 0
        %4975 = vmatpush1.bf16.msra.mxu0 %v3591
        %4976 = vmatprep.mubr.bf16.mxu0 %v1409
        %4977 = vmatmul.mubr.bf16.gmra.mrb[0].mxu0 %v1407
        %v4978 = vpop.f32.mrb[0].mxu0
        %v4979 = vadd.f32 %v4939, %v4978
        %v4980 = vpop.f32.mrb[0].mxu0
        %v4981 = vpop.f32.mrb[0].mxu0
        %v4982 = vpop.f32.mrb[0].mxu0
        %4983 = vdwg.mxu0
        %4984 = vmatprep.subr.bf16.mxu0 0
        %4985 = vmatpush1.bf16.msra.mxu0 %v3592
        %4986 = vmatprep.subr.bf16.mxu0 0
        %4987 = vmatpush1.bf16.msra.mxu0 %v3593
        %4988 = vmatprep.subr.bf16.mxu0 0
        %4989 = vmatpush1.bf16.msra.mxu0 %v3594
        %4990 = vmatprep.subr.bf16.mxu0 0
        %4991 = vmatpush1.bf16.msra.mxu0 %v3595
        %4992 = vmatprep.subr.bf16.mxu0 0
        %4993 = vmatpush1.bf16.msra.mxu0 %v3596
        %4994 = vmatprep.subr.bf16.mxu0 0
        %4995 = vmatpush1.bf16.msra.mxu0 %v3597
        %4996 = vmatprep.subr.bf16.mxu0 0
        %4997 = vmatpush1.bf16.msra.mxu0 %v3598
        %4998 = vmatprep.subr.bf16.mxu0 0
        %4999 = vmatpush1.bf16.msra.mxu0 %v3599
        %5000 = vmatprep.subr.bf16.mxu0 0
        %5001 = vmatpush1.bf16.msra.mxu0 %v3600
        %5002 = vmatprep.subr.bf16.mxu0 0
        %5003 = vmatpush1.bf16.msra.mxu0 %v3601
        %5004 = vmatprep.subr.bf16.mxu0 0
        %5005 = vmatpush1.bf16.msra.mxu0 %v3602
        %5006 = vmatprep.subr.bf16.mxu0 0
        %5007 = vmatpush1.bf16.msra.mxu0 %v3603
        %5008 = vmatprep.subr.bf16.mxu0 0
        %5009 = vmatpush1.bf16.msra.mxu0 %v3604
        %5010 = vmatprep.subr.bf16.mxu0 0
        %5011 = vmatpush1.bf16.msra.mxu0 %v3605
        %5012 = vmatprep.subr.bf16.mxu0 0
        %5013 = vmatpush1.bf16.msra.mxu0 %v3606
        %5014 = vmatprep.subr.bf16.mxu0 0
        %5015 = vmatpush1.bf16.msra.mxu0 %v3607
        %5016 = vmatprep.mubr.bf16.mxu0 %v1406
        %5017 = vmatmul.mubr.bf16.gmra.mrb[0].mxu0 %v1392
        %v5018 = vpop.f32.mrb[0].mxu0
        %v5019 = vadd.f32 %v4979, %v5018
        %v5020 = vpop.f32.mrb[0].mxu0
        %v5021 = vpop.f32.mrb[0].mxu0
        %v5022 = vpop.f32.mrb[0].mxu0
        %5023 = vdwg.mxu0
        %5024 = vmatprep.subr.bf16.mxu0 0
        %5025 = vmatpush1.bf16.msra.mxu0 %v3608
        %5026 = vmatprep.subr.bf16.mxu0 0
        %5027 = vmatpush1.bf16.msra.mxu0 %v3609
        %5028 = vmatprep.subr.bf16.mxu0 0
        %5029 = vmatpush1.bf16.msra.mxu0 %v3610
        %5030 = vmatprep.subr.bf16.mxu0 0
        %5031 = vmatpush1.bf16.msra.mxu0 %v3611
        %5032 = vmatprep.subr.bf16.mxu0 0
        %5033 = vmatpush1.bf16.msra.mxu0 %v3612
        %5034 = vmatprep.subr.bf16.mxu0 0
        %5035 = vmatpush1.bf16.msra.mxu0 %v3613
        %5036 = vmatprep.subr.bf16.mxu0 0
        %5037 = vmatpush1.bf16.msra.mxu0 %v3614
        %5038 = vmatprep.subr.bf16.mxu0 0
        %5039 = vmatpush1.bf16.msra.mxu0 %v3615
        %5040 = vmatprep.subr.bf16.mxu0 0
        %5041 = vmatpush1.bf16.msra.mxu0 %v3616
        %5042 = vmatprep.subr.bf16.mxu0 0
        %5043 = vmatpush1.bf16.msra.mxu0 %v3617
        %5044 = vmatprep.subr.bf16.mxu0 0
        %5045 = vmatpush1.bf16.msra.mxu0 %v3618
        %5046 = vmatprep.subr.bf16.mxu0 0
        %5047 = vmatpush1.bf16.msra.mxu0 %v3619
        %5048 = vmatprep.subr.bf16.mxu0 0
        %5049 = vmatpush1.bf16.msra.mxu0 %v3620
        %5050 = vmatprep.subr.bf16.mxu0 0
        %5051 = vmatpush1.bf16.msra.mxu0 %v3621
        %5052 = vmatprep.subr.bf16.mxu0 0
        %5053 = vmatpush1.bf16.msra.mxu0 %v3622
        %5054 = vmatprep.subr.bf16.mxu0 0
        %5055 = vmatpush1.bf16.msra.mxu0 %v3623
        %5056 = vmatprep.mubr.bf16.mxu0 %v1410
        %5057 = vmatmul.mubr.bf16.gmra.mrb[0].mxu0 %v1408
        %v5058 = vpop.f32.mrb[0].mxu0
        %v5059 = vadd.f32 %v5019, %v5058
        %v5060 = vpop.f32.mrb[0].mxu0
        %v5061 = vpop.f32.mrb[0].mxu0
        %v5062 = vpop.f32.mrb[0].mxu0
        %5063 = vdwg.mxu0
        %5064 = vmatprep.subr.bf16.mxu0 0
        %5065 = vmatpush1.bf16.msra.mxu0 %v3624
        %5066 = vmatprep.subr.bf16.mxu0 0
        %5067 = vmatpush1.bf16.msra.mxu0 %v3625
        %5068 = vmatprep.subr.bf16.mxu0 0
        %5069 = vmatpush1.bf16.msra.mxu0 %v3626
        %5070 = vmatprep.subr.bf16.mxu0 0
        %5071 = vmatpush1.bf16.msra.mxu0 %v3627
        %5072 = vmatprep.subr.bf16.mxu0 0
        %5073 = vmatpush1.bf16.msra.mxu0 %v3628
        %5074 = vmatprep.subr.bf16.mxu0 0
        %5075 = vmatpush1.bf16.msra.mxu0 %v3629
        %5076 = vmatprep.subr.bf16.mxu0 0
        %5077 = vmatpush1.bf16.msra.mxu0 %v3630
        %5078 = vmatprep.subr.bf16.mxu0 0
        %5079 = vmatpush1.bf16.msra.mxu0 %v3631
        %5080 = vmatprep.subr.bf16.mxu0 0
        %5081 = vmatpush1.bf16.msra.mxu0 %v3632
        %5082 = vmatprep.subr.bf16.mxu0 0
        %5083 = vmatpush1.bf16.msra.mxu0 %v3633
        %5084 = vmatprep.subr.bf16.mxu0 0
        %5085 = vmatpush1.bf16.msra.mxu0 %v3634
        %5086 = vmatprep.subr.bf16.mxu0 0
        %5087 = vmatpush1.bf16.msra.mxu0 %v3635
        %5088 = vmatprep.subr.bf16.mxu0 0
        %5089 = vmatpush1.bf16.msra.mxu0 %v3636
        %5090 = vmatprep.subr.bf16.mxu0 0
        %5091 = vmatpush1.bf16.msra.mxu0 %v3637
        %5092 = vmatprep.subr.bf16.mxu0 0
        %5093 = vmatpush1.bf16.msra.mxu0 %v3638
        %5094 = vmatprep.subr.bf16.mxu0 0
        %5095 = vmatpush1.bf16.msra.mxu0 %v3639
        %5096 = vmatprep.mubr.bf16.mxu0 %v1448
        %5097 = vmatmul.mubr.bf16.gmra.mrb[0].mxu0 %v1434
        %v5098 = vpop.f32.mrb[0].mxu0
        %v5099 = vadd.f32 %v5059, %v5098
        %v5100 = vpop.f32.mrb[0].mxu0
        %v5101 = vpop.f32.mrb[0].mxu0
        %v5102 = vpop.f32.mrb[0].mxu0
        %5103 = vdwg.mxu0
        %5104 = vmatprep.subr.bf16.mxu0 0
        %5105 = vmatpush1.bf16.msra.mxu0 %v3640
        %5106 = vmatprep.subr.bf16.mxu0 0
        %5107 = vmatpush1.bf16.msra.mxu0 %v3641
        %5108 = vmatprep.subr.bf16.mxu0 0
        %5109 = vmatpush1.bf16.msra.mxu0 %v3642
        %5110 = vmatprep.subr.bf16.mxu0 0
        %5111 = vmatpush1.bf16.msra.mxu0 %v3643
        %5112 = vmatprep.subr.bf16.mxu0 0
        %5113 = vmatpush1.bf16.msra.mxu0 %v3644
        %5114 = vmatprep.subr.bf16.mxu0 0
        %5115 = vmatpush1.bf16.msra.mxu0 %v3645
        %5116 = vmatprep.subr.bf16.mxu0 0
        %5117 = vmatpush1.bf16.msra.mxu0 %v3646
        %5118 = vmatprep.subr.bf16.mxu0 0
        %5119 = vmatpush1.bf16.msra.mxu0 %v3647
        %5120 = vmatprep.subr.bf16.mxu0 0
        %5121 = vmatpush1.bf16.msra.mxu0 %v3648
        %5122 = vmatprep.subr.bf16.mxu0 0
        %5123 = vmatpush1.bf16.msra.mxu0 %v3649
        %5124 = vmatprep.subr.bf16.mxu0 0
        %5125 = vmatpush1.bf16.msra.mxu0 %v3650
        %5126 = vmatprep.subr.bf16.mxu0 0
        %5127 = vmatpush1.bf16.msra.mxu0 %v3651
        %5128 = vmatprep.subr.bf16.mxu0 0
        %5129 = vmatpush1.bf16.msra.mxu0 %v3652
        %5130 = vmatprep.subr.bf16.mxu0 0
        %5131 = vmatpush1.bf16.msra.mxu0 %v3653
        %5132 = vmatprep.subr.bf16.mxu0 0
        %5133 = vmatpush1.bf16.msra.mxu0 %v3654
        %5134 = vmatprep.subr.bf16.mxu0 0
        %5135 = vmatpush1.bf16.msra.mxu0 %v3655
        %5136 = vmatprep.mubr.bf16.mxu0 %v1457
        %5137 = vmatmul.mubr.bf16.gmra.mrb[0].mxu0 %v1456
        %v5138 = vpop.f32.mrb[0].mxu0
        %v5139 = vadd.f32 %v5099, %v5138
        %v5140 = vpop.f32.mrb[0].mxu0
        %v5141 = vpop.f32.mrb[0].mxu0
        %v5142 = vpop.f32.mrb[0].mxu0
        %5143 = vdwg.mxu0
        %5144 = vmatprep.subr.bf16.mxu0 0
        %5145 = vmatpush1.bf16.msra.mxu0 %v3656
        %5146 = vmatprep.subr.bf16.mxu0 0
        %5147 = vmatpush1.bf16.msra.mxu0 %v3657
        %5148 = vmatprep.subr.bf16.mxu0 0
        %5149 = vmatpush1.bf16.msra.mxu0 %v3658
        %5150 = vmatprep.subr.bf16.mxu0 0
        %5151 = vmatpush1.bf16.msra.mxu0 %v3659
        %5152 = vmatprep.subr.bf16.mxu0 0
        %5153 = vmatpush1.bf16.msra.mxu0 %v3660
        %5154 = vmatprep.subr.bf16.mxu0 0
        %5155 = vmatpush1.bf16.msra.mxu0 %v3661
        %5156 = vmatprep.subr.bf16.mxu0 0
        %5157 = vmatpush1.bf16.msra.mxu0 %v3662
        %5158 = vmatprep.subr.bf16.mxu0 0
        %5159 = vmatpush1.bf16.msra.mxu0 %v3663
        %5160 = vmatprep.subr.bf16.mxu0 0
        %5161 = vmatpush1.bf16.msra.mxu0 %v3664
        %5162 = vmatprep.subr.bf16.mxu0 0
        %5163 = vmatpush1.bf16.msra.mxu0 %v3665
        %5164 = vmatprep.subr.bf16.mxu0 0
        %5165 = vmatpush1.bf16.msra.mxu0 %v3666
        %5166 = vmatprep.subr.bf16.mxu0 0
        %5167 = vmatpush1.bf16.msra.mxu0 %v3667
        %5168 = vmatprep.subr.bf16.mxu0 0
        %5169 = vmatpush1.bf16.msra.mxu0 %v3668
        %5170 = vmatprep.subr.bf16.mxu0 0
        %5171 = vmatpush1.bf16.msra.mxu0 %v3669
        %5172 = vmatprep.subr.bf16.mxu0 0
        %5173 = vmatpush1.bf16.msra.mxu0 %v3670
        %5174 = vmatprep.subr.bf16.mxu0 0
        %5175 = vmatpush1.bf16.msra.mxu0 %v3671
        %5176 = vmatprep.mubr.bf16.mxu0 %v1455
        %5177 = vmatmul.mubr.bf16.gmra.mrb[0].mxu0 %v1441
        %v5178 = vpop.f32.mrb[0].mxu0
        %v5179 = vadd.f32 %v5139, %v5178
        %v5180 = vpop.f32.mrb[0].mxu0
        %v5181 = vpop.f32.mrb[0].mxu0
        %v5182 = vpop.f32.mrb[0].mxu0
        %5183 = vdwg.mxu0
        %v5184 = vadd.f32 %v238, %v5179
        %5185 = vst [vmem:[#allocation2] sm:$0x3] %v5184
        %p5186 = scmp.eq.s32.totalorder %s17, 2
        // Predicated region
        $region45: #{vision_feature_extractor.5} parent=39 // pred_check
          %p5187 = pneg %p5186
        $region46: #{vision_feature_extractor.5} parent=39 // pred_check_branch
          %5189 = sbr.rel (%p5187) target = $region48
        $region47: #{vision_feature_extractor.5} parent=39 // pred_region
          %v5190 = vld [vmem:[#allocation2] sm:$0x3]
          %v5191 = vld [vmem:[%s2] sm:$0x1]
          %v5193 = vlaneseq
          %v5194 = vshrl.u32 %v5193, 7
          %v5195 = vsub.s32 0, %v5194
          %v5196 = vrot.slane %v5191, %v5195
          %v5198 = vadd.f32 %v5190, %v5196
          %vm5199 = vcmask 1041408
          %v5200 = vsel %vm5199, %v5198, 0.0
          %v5201 = vrot.slane %v5200, 4
          %v5202 = vadd.f32 %v5200, %v5201
          %v5203 = vrot.slane %v5202, 2
          %v5204 = vadd.f32 %v5202, %v5203
          %v5205 = vrot.slane %v5204, 1
          %v5206 = vadd.f32 %v5204, %v5205
          %v5207 = vrcp.pop 2.0
          %v5208 = vmul.f32 %v5206, %v5207
          %v5209 = vsub.f32 %v5198, %v5208
          %v5210 = vmul.f32 %v5209, %v5209
          %v5211 = vsel %vm5199, %v5210, 0.0
          %v5212 = vrot.slane %v5211, 4
          %v5213 = vadd.f32 %v5211, %v5212
          %v5214 = vrot.slane %v5213, 2
          %v5215 = vadd.f32 %v5213, %v5214
          %v5216 = vrot.slane %v5215, 1
          %v5217 = vadd.f32 %v5215, %v5216
          %v5218 = vmul.f32 %v5217, %v5207
          %v5219 = vadd.f32 %v5218, 1e-05
          %v5220 = vrsqrt.pop %v5219
          %v5221 = vmul.f32 %v5209, %v5220
          %v5222 = vld [vmem:[%s3] sm:$0x1]
          %v5224 = vlaneseq
          %v5225 = vshrl.u32 %v5224, 7
          %v5226 = vsub.s32 0, %v5225
          %v5227 = vrot.slane %v5222, %v5226
          %v5229 = vmul.f32 %v5221, %v5227
          %v5230 = vld [vmem:[%s4] sm:$0x1]
          %v5232 = vlaneseq
          %v5233 = vshrl.u32 %v5232, 7
          %v5234 = vsub.s32 0, %v5233
          %v5235 = vrot.slane %v5230, %v5234
          %v5237 = vadd.f32 %v5229, %v5235
          %5238 = vst [vmem:[#allocation2] sm:$0x3] %v5237
        $region48: #{vision_feature_extractor.5} parent=39 // pred_fallthru
          _
        // Predicated region
        $region49: #{vision_feature_extractor.5} parent=39 // pred_check
          %p5239 = pneg %p145
        $region50: #{vision_feature_extractor.5} parent=39 // pred_check_branch
          %5241 = sbr.rel (%p5239) target = $region52
        $region51: #{vision_feature_extractor.5} parent=39 // pred_region
          %s5243 = ssub.s32 32, 32
          %5244 = vsyncadd [#allocation3], %s5243
          %s5246 = sshll.u32 [#allocation2], 4
          %s5247 = int_to_ptr.vmem [resolvable:$true] %s5246
          %5249 = dma.vmem_to_hbm [thread:$0]  %s5247, 32, %s5, [#allocation3]
        $region52: #{vision_feature_extractor.5} parent=39 // pred_fallthru
          _
        // Predicated region
        $region53: #{vision_feature_extractor.5} parent=39 // pred_check
          %p5250 = pneg %p145
        $region54: #{vision_feature_extractor.5} parent=39 // pred_check_branch
          %5252 = sbr.rel (%p5250) target = $region56
        $region55: #{vision_feature_extractor.5} parent=39 // pred_region
          %5253 = dma.done [#allocation3], 32
        $region56: #{vision_feature_extractor.5} parent=39 // pred_fallthru
          _
      $region40: #{vision_feature_extractor.5} parent=5 // pred_fallthru
        _
      %p5254 = scmp.le.s32.totalorder 2, %s12
      // Predicated region
      $region57: #{vision_feature_extractor.5} parent=5 // pred_check
        %p5255 = pneg %p5254
      $region58: #{vision_feature_extractor.5} parent=5 // pred_check_branch
        %5257 = sbr.rel (%p5255) target = $region60
      $region59: #{vision_feature_extractor.5} parent=5 // pred_region
        %s5258 = ssub.s32 %s12, 2
      $region60: #{vision_feature_extractor.5} parent=5 // pred_fallthru
        _
    $region6: #{vision_feature_extractor.5} parent=1 // loop_footer
      %s16 = sadd.s32 1, %s12
    $region7: #{vision_feature_extractor.5} parent=1 // loop_footer_branch
      %11 = sbr.rel target = $region3
    $region8: #{vision_feature_extractor.5} parent=1 // loop_exit
      _
    %5259 = vsyncpa [#allocation3], 1
    %s5260 = scalar_lea.sflag [#allocation3], 1
    %5261 = vsyncpa %s5260, 1

</llo_original>
